<compile_context>
chip_gen: v7x
topology: tpu7x:2x2x1
jax: 0.10.0
libtpu: 0.0.40
codegen_flags: <defaults>
</compile_context>

<pallas_src>
import functools

import jax
import jax.numpy as jnp
from jax.experimental import pallas as pl
from jax.experimental.pallas import tpu as pltpu


# ----------------------------------------------------------------------------
# Pallas kernels
# ----------------------------------------------------------------------------
def _conv3x3_relu_kernel(p_ref, w_ref, b_ref, o_ref):
    # p_ref: (1, T, 9*Cin) bf16   w_ref: (9*Cin, Cout) bf16   b_ref: (1, Cout) f32
    # o_ref: (1, T, Cout) bf16
    acc = jnp.dot(p_ref[0], w_ref[...], preferred_element_type=jnp.float32)
    acc = jnp.maximum(acc + b_ref[...], 0.0)          # fused bias + ReLU in f32
    o_ref[0] = acc.astype(o_ref.dtype)


def _maxpool2x2_kernel(x_ref, o_ref):
    # x_ref: (1, H, W//2, 2*C) -- the two W-neighbours of each output pixel are
    # packed side-by-side on the lane dim (lane-dense, C>=64).
    x = x_ref[0]                                       # (H, w2, 2*C)
    h, w2, c2 = x.shape
    c = c2 // 2
    wmax = jnp.maximum(x[..., :c], x[..., c:])         # max over W pair -> (H, w2, C)
    wmax = wmax.reshape(h // 2, 2, w2, c)              # split major dim only (free)
    o_ref[0] = jnp.maximum(wmax[:, 0], wmax[:, 1])     # max over H pair -> (h2, w2, C)


def _mse_kernel(a_ref, b_ref, o_ref, acc_ref, *, inv_n):
    # a_ref/b_ref: (1, hw, C)    o_ref: (1, 1) f32    acc_ref: (1, C) f32 scratch
    @pl.when(pl.program_id(0) == 0)
    def _init():
        acc_ref[...] = jnp.zeros_like(acc_ref)

    d = a_ref[0].astype(jnp.float32) - b_ref[0].astype(jnp.float32)   # (hw, C)
    acc_ref[...] += jnp.sum(d * d, axis=0, keepdims=True)             # sublane reduce

    @pl.when(pl.program_id(0) == pl.num_programs(0) - 1)
    def _finalize():
        # single lane reduction + single (masked) scalar store for the whole grid
        o_ref[...] = jnp.sum(acc_ref[...], axis=1, keepdims=True) * inv_n


# ----------------------------------------------------------------------------
# Wrappers around pallas_call
# ----------------------------------------------------------------------------
def _pick_hw_tile(hw, max_tile=1024):
    """Largest hw tile <= max_tile that divides hw and is a multiple of 8."""
    if hw <= max_tile:
        return hw
    start = max_tile - (max_tile % 8)
    for t in range(start, 7, -8):
        if hw % t == 0:
            return t
    return hw  # fallback: single tile


def conv3x3_relu(x, w, b):
    """x: (B, H, W, Cin) bf16, w: (3,3,Cin,Cout) f32, b: (Cout,) f32 -> (B,H,W,Cout) bf16."""
    B, H, W, Cin = x.shape
    Cout = w.shape[-1]
    hw = H * W
    K9 = 9 * Cin

    # im2col as a single lane-dense (B, hw, 9*Cin) bf16 slab (XLA glue).
    # TODO(synk): build the 9 shifted views in-kernel from the padded activation to
    # also remove the 9x HBM read amplification of the im2col slab.
    xp = jnp.pad(x.astype(jnp.bfloat16), ((0, 0), (1, 1), (1, 1), (0, 0)))
    patches = jnp.concatenate(
        [xp[:, dy:dy + H, dx:dx + W, :] for dy in range(3) for dx in range(3)],
        axis=-1).reshape(B, hw, K9)
    w2 = w.reshape(K9, Cout).astype(jnp.bfloat16)      # (dy, dx, cin) order matches slab
    b2 = b.reshape(1, Cout).astype(jnp.float32)

    T = _pick_hw_tile(hw)
    out = pl.pallas_call(
        _conv3x3_relu_kernel,
        out_shape=jax.ShapeDtypeStruct((B, hw, Cout), jnp.bfloat16),
        grid=(B, hw // T),
        in_specs=[
            pl.BlockSpec((1, T, K9), lambda i, j: (i, j, 0)),
            pl.BlockSpec((K9, Cout), lambda i, j: (0, 0)),   # weights resident
            pl.BlockSpec((1, Cout), lambda i, j: (0, 0)),
        ],
        out_specs=pl.BlockSpec((1, T, Cout), lambda i, j: (i, j, 0)),
        compiler_params=pltpu.CompilerParams(
            dimension_semantics=("parallel", "parallel"),
            vmem_limit_bytes=48 * 1024 * 1024),
    )(patches, w2, b2)
    return out.reshape(B, H, W, Cout)


def maxpool2x2(x):
    """x: (B, H, W, C) bf16 -> (B, H//2, W//2, C), kernel=2, stride=2."""
    B, H, W, C = x.shape
    h2, w2 = H // 2, W // 2
    # Pure reshape: adjacent W pixels become the two lane-halves of a 2*C lane dim.
    xr = x.reshape(B, H, w2, 2 * C)
    return pl.pallas_call(
        _maxpool2x2_kernel,
        out_shape=jax.ShapeDtypeStruct((B, h2, w2, C), x.dtype),
        grid=(B,),
        in_specs=[pl.BlockSpec((1, H, w2, 2 * C), lambda i: (i, 0, 0, 0))],
        out_specs=pl.BlockSpec((1, h2, w2, C), lambda i: (i, 0, 0, 0)),
        compiler_params=pltpu.CompilerParams(
            dimension_semantics=("parallel",)),
    )(xr)


def mse_loss(a, b):
    """a, b: (B, hw, C) -> scalar mean squared error (f32)."""
    B, hw, C = a.shape
    inv_n = 1.0 / float(B * hw * C)
    out = pl.pallas_call(
        functools.partial(_mse_kernel, inv_n=inv_n),
        out_shape=jax.ShapeDtypeStruct((1, 1), jnp.float32),
        grid=(B,),
        in_specs=[pl.BlockSpec((1, hw, C), lambda i: (i, 0, 0)),
                  pl.BlockSpec((1, hw, C), lambda i: (i, 0, 0))],
        out_specs=pl.BlockSpec((1, 1), lambda i: (0, 0)),
        scratch_shapes=[pltpu.VMEM((1, C), jnp.float32)],
        compiler_params=pltpu.CompilerParams(
            dimension_semantics=("arbitrary",)),
    )(a, b)
    return out[0, 0]


# ----------------------------------------------------------------------------
# VGG16 features[:16] (conv1_1 .. relu3_3) and the perceptual loss
# ----------------------------------------------------------------------------
_VGG_CFG = [("conv1_1", 3, 64), ("conv1_2", 64, 64),
            ("conv2_1", 64, 128), ("conv2_2", 128, 128),
            ("conv3_1", 128, 256), ("conv3_2", 256, 256), ("conv3_3", 256, 256)]


def init_vgg_params(key):
    # TODO(synk): real VGG16_Weights.DEFAULT cannot be loaded here (no file/network);
    # weights are deterministic He-initialized stand-ins with identical shapes.
    params = {}
    for name, cin, cout in _VGG_CFG:
        key, wk, bk = jax.random.split(key, 3)
        w = jax.random.normal(wk, (3, 3, cin, cout), jnp.float32) * jnp.sqrt(2.0 / (9 * cin))
        b = jax.random.normal(bk, (cout,), jnp.float32) * 0.01
        params[name] = (w, b)
    return params


def vgg_features(x_nhwc, params):
    x = conv3x3_relu(x_nhwc, *params["conv1_1"])
    x = conv3x3_relu(x, *params["conv1_2"])
    x = maxpool2x2(x)
    x = conv3x3_relu(x, *params["conv2_1"])
    x = conv3x3_relu(x, *params["conv2_2"])
    x = maxpool2x2(x)
    x = conv3x3_relu(x, *params["conv3_1"])
    x = conv3x3_relu(x, *params["conv3_2"])
    x = conv3x3_relu(x, *params["conv3_3"])
    return x


def perceptual_loss(output, target, params):
    """output, target: NCHW (B, 3, H, W), matching the PyTorch module."""
    B = output.shape[0]
    o = jnp.transpose(output, (0, 2, 3, 1)).astype(jnp.bfloat16)
    t = jnp.transpose(target, (0, 2, 3, 1)).astype(jnp.bfloat16)
    # Run VGG once on the concatenated 2B batch (halves launches / weight DMAs,
    # doubles parallel grid work for megacore).
    feats = vgg_features(jnp.concatenate([o, t], axis=0), params)
    Bf, Hf, Wf, Cf = feats.shape
    fo = feats[:B].reshape(B, Hf * Wf, Cf)
    ft = feats[B:].reshape(B, Hf * Wf, Cf)
    return mse_loss(fo, ft)


# ----------------------------------------------------------------------------
# Pure-JAX reference with matching bf16 semantics (for a sanity check)
# ----------------------------------------------------------------------------
def _ref_conv(x, w, b):
    y = jax.lax.conv_general_dilated(
        x.astype(jnp.bfloat16), w.astype(jnp.bfloat16), (1, 1), "SAME",
        dimension_numbers=("NHWC", "HWIO", "NHWC"),
        preferred_element_type=jnp.float32)
    y = jnp.maximum(y + b.astype(jnp.float32), 0.0)
    return y.astype(jnp.bfloat16)


def _ref_pool(x):
    B, H, W, C = x.shape
    return jnp.max(x.reshape(B, H // 2, 2, W // 2, 2, C), axis=(2, 4))


def _ref_features(x, params):
    x = _ref_conv(x, *params["conv1_1"])
    x = _ref_conv(x, *params["conv1_2"])
    x = _ref_pool(x)
    x = _ref_conv(x, *params["conv2_1"])
    x = _ref_conv(x, *params["conv2_2"])
    x = _ref_pool(x)
    x = _ref_conv(x, *params["conv3_1"])
    x = _ref_conv(x, *params["conv3_2"])
    x = _ref_conv(x, *params["conv3_3"])
    return x


def _ref_loss(output, target, params):
    o = jnp.transpose(output, (0, 2, 3, 1)).astype(jnp.bfloat16)
    t = jnp.transpose(target, (0, 2, 3, 1)).astype(jnp.bfloat16)
    fo = _ref_features(o, params).astype(jnp.float32)
    ft = _ref_features(t, params).astype(jnp.float32)
    return jnp.mean((fo - ft) ** 2)


# ----------------------------------------------------------------------------
if __name__ == "__main__":
    key = jax.random.PRNGKey(0)
    kp, ko, kt = jax.random.split(key, 3)
    params = init_vgg_params(kp)

    B, C, H, W = 2, 3, 16, 16  # small NCHW inputs, 3 channels as VGG expects
    output = jax.random.uniform(ko, (B, C, H, W), jnp.float32)
    target = jax.random.uniform(kt, (B, C, H, W), jnp.float32)

    loss_fn = jax.jit(perceptual_loss)
    loss = jax.block_until_ready(loss_fn(output, target, params))

    ref = jax.block_until_ready(_ref_loss(output, target, params))
    rel_err = abs(float(loss) - float(ref)) / max(abs(float(ref)), 1e-8)
    assert bool(jnp.isfinite(loss)), "non-finite loss"
    assert rel_err < 2e-2, f"mismatch: pallas={float(loss)} ref={float(ref)} rel={rel_err}"

    print("KERNEL_OK")
</pallas_src>

<mosaic_0001>
module attributes {stable_mosaic.version = 11 : i64} {
  func.func @_conv3x3_relu_kernel(%arg0: i32, %arg1: i32, %arg2: memref<1x256x27xbf16, #tpu.memory_space<vmem>>, %arg3: memref<27x64xbf16, #tpu.memory_space<vmem>>, %arg4: memref<1x64xf32, #tpu.memory_space<vmem>>, %arg5: memref<1x256x64xbf16, #tpu.memory_space<vmem>>) attributes {dimension_semantics = [#tpu.dimension_semantics<parallel>, #tpu.dimension_semantics<parallel>], iteration_bounds = array<i64: 4, 1>, scalar_prefetch = 0 : i64, scratch_operands = 0 : i64, tpu.core_type = #tpu.core_type<tc>, window_params = [{transform_indices = @transform_0, window_bounds = array<i64: 1, 256, 27>}, {pipeline_mode = #tpu.pipeline_mode<synchronous>, transform_indices = @transform_1, window_bounds = array<i64: 27, 64>}, {pipeline_mode = #tpu.pipeline_mode<synchronous>, transform_indices = @transform_2, window_bounds = array<i64: 1, 64>}, {transform_indices = @transform_3, window_bounds = array<i64: 1, 256, 64>}]} {
    %c0 = arith.constant 0 : index
    %c0_0 = arith.constant 0 : index
    %c0_1 = arith.constant 0 : index
    %0 = vector.load %arg2[%c0, %c0_0, %c0_1] : memref<1x256x27xbf16, #tpu.memory_space<vmem>>, vector<1x256x27xbf16>
    %1 = vector.shape_cast %0 : vector<1x256x27xbf16> to vector<256x27xbf16>
    %c0_2 = arith.constant 0 : index
    %c0_3 = arith.constant 0 : index
    %2 = vector.load %arg3[%c0_2, %c0_3] : memref<27x64xbf16, #tpu.memory_space<vmem>>, vector<27x64xbf16>
    %cst = arith.constant dense<0.000000e+00> : vector<256x64xf32>
    %3 = tpu.matmul %1, %2, %cst {dimension_numbers = #tpu.dot_dimension_numbers<[1], [0], [0], [1], [0, 0, 1, 1], [], []>} : vector<256x27xbf16>, vector<27x64xbf16>, vector<256x64xf32> -> vector<256x64xf32>
    %c0_4 = arith.constant 0 : index
    %c0_5 = arith.constant 0 : index
    %4 = vector.load %arg4[%c0_4, %c0_5] : memref<1x64xf32, #tpu.memory_space<vmem>>, vector<1x64xf32>
    %5 = vector.broadcast %4 : vector<1x64xf32> to vector<256x64xf32>
    %6 = arith.addf %3, %5 : vector<256x64xf32>
    %cst_6 = arith.constant 0.000000e+00 : f32
    %7 = vector.broadcast %cst_6 : f32 to vector<256x64xf32>
    %8 = arith.maximumf %6, %7 : vector<256x64xf32>
    %9 = arith.truncf %8 : vector<256x64xf32> to vector<256x64xbf16>
    %c0_7 = arith.constant 0 : index
    %c0_8 = arith.constant 0 : index
    %c0_9 = arith.constant 0 : index
    %10 = vector.load %arg5[%c0_7, %c0_8, %c0_9] : memref<1x256x64xbf16, #tpu.memory_space<vmem>>, vector<1x256x64xbf16>
    %11 = vector.shape_cast %10 : vector<1x256x64xbf16> to vector<256x64xbf16>
    %12 = vector.shape_cast %9 : vector<256x64xbf16> to vector<1x256x64xbf16>
    tpu.vector_store %arg5[%c0_7, %c0_8, %c0_9], %12 {strides = array<i32>} : memref<1x256x64xbf16, #tpu.memory_space<vmem>>, vector<1x256x64xbf16>,
    return
  }
  func.func @transform_0(%arg0: i32, %arg1: i32) -> (i32, i32, i32) {
    %c0_i32 = arith.constant 0 : i32
    %c0_i32_0 = arith.constant 0 : i32
    return %arg0, %arg1, %c0_i32 : i32, i32, i32
  }
  func.func @transform_1(%arg0: i32, %arg1: i32) -> (i32, i32) {
    %c0_i32 = arith.constant 0 : i32
    %c0_i32_0 = arith.constant 0 : i32
    %c0_i32_1 = arith.constant 0 : i32
    return %c0_i32, %c0_i32_0 : i32, i32
  }
  func.func @transform_2(%arg0: i32, %arg1: i32) -> (i32, i32) {
    %c0_i32 = arith.constant 0 : i32
    %c0_i32_0 = arith.constant 0 : i32
    %c0_i32_1 = arith.constant 0 : i32
    return %c0_i32, %c0_i32_0 : i32, i32
  }
  func.func @transform_3(%arg0: i32, %arg1: i32) -> (i32, i32, i32) {
    %c0_i32 = arith.constant 0 : i32
    %c0_i32_0 = arith.constant 0 : i32
    return %arg0, %arg1, %c0_i32 : i32, i32, i32
  }
}

module attributes {stable_mosaic.version = 11 : i64} {
  func.func @_conv3x3_relu_kernel(%arg0: i32, %arg1: i32, %arg2: memref<1x256x576xbf16, #tpu.memory_space<vmem>>, %arg3: memref<576x64xbf16, #tpu.memory_space<vmem>>, %arg4: memref<1x64xf32, #tpu.memory_space<vmem>>, %arg5: memref<1x256x64xbf16, #tpu.memory_space<vmem>>) attributes {dimension_semantics = [#tpu.dimension_semantics<parallel>, #tpu.dimension_semantics<parallel>], iteration_bounds = array<i64: 4, 1>, scalar_prefetch = 0 : i64, scratch_operands = 0 : i64, tpu.core_type = #tpu.core_type<tc>, window_params = [{transform_indices = @transform_0, window_bounds = array<i64: 1, 256, 576>}, {pipeline_mode = #tpu.pipeline_mode<synchronous>, transform_indices = @transform_1, window_bounds = array<i64: 576, 64>}, {pipeline_mode = #tpu.pipeline_mode<synchronous>, transform_indices = @transform_2, window_bounds = array<i64: 1, 64>}, {transform_indices = @transform_3, window_bounds = array<i64: 1, 256, 64>}]} {
    %c0 = arith.constant 0 : index
    %c0_0 = arith.constant 0 : index
    %c0_1 = arith.constant 0 : index
    %0 = vector.load %arg2[%c0, %c0_0, %c0_1] : memref<1x256x576xbf16, #tpu.memory_space<vmem>>, vector<1x256x576xbf16>
    %1 = vector.shape_cast %0 : vector<1x256x576xbf16> to vector<256x576xbf16>
    %c0_2 = arith.constant 0 : index
    %c0_3 = arith.constant 0 : index
    %2 = vector.load %arg3[%c0_2, %c0_3] : memref<576x64xbf16, #tpu.memory_space<vmem>>, vector<576x64xbf16>
    %cst = arith.constant dense<0.000000e+00> : vector<256x64xf32>
    %3 = tpu.matmul %1, %2, %cst {dimension_numbers = #tpu.dot_dimension_numbers<[1], [0], [0], [1], [0, 0, 1, 1], [], []>} : vector<256x576xbf16>, vector<576x64xbf16>, vector<256x64xf32> -> vector<256x64xf32>
    %c0_4 = arith.constant 0 : index
    %c0_5 = arith.constant 0 : index
    %4 = vector.load %arg4[%c0_4, %c0_5] : memref<1x64xf32, #tpu.memory_space<vmem>>, vector<1x64xf32>
    %5 = vector.broadcast %4 : vector<1x64xf32> to vector<256x64xf32>
    %6 = arith.addf %3, %5 : vector<256x64xf32>
    %cst_6 = arith.constant 0.000000e+00 : f32
    %7 = vector.broadcast %cst_6 : f32 to vector<256x64xf32>
    %8 = arith.maximumf %6, %7 : vector<256x64xf32>
    %9 = arith.truncf %8 : vector<256x64xf32> to vector<256x64xbf16>
    %c0_7 = arith.constant 0 : index
    %c0_8 = arith.constant 0 : index
    %c0_9 = arith.constant 0 : index
    %10 = vector.load %arg5[%c0_7, %c0_8, %c0_9] : memref<1x256x64xbf16, #tpu.memory_space<vmem>>, vector<1x256x64xbf16>
    %11 = vector.shape_cast %10 : vector<1x256x64xbf16> to vector<256x64xbf16>
    %12 = vector.shape_cast %9 : vector<256x64xbf16> to vector<1x256x64xbf16>
    tpu.vector_store %arg5[%c0_7, %c0_8, %c0_9], %12 {strides = array<i32>} : memref<1x256x64xbf16, #tpu.memory_space<vmem>>, vector<1x256x64xbf16>,
    return
  }
  func.func @transform_0(%arg0: i32, %arg1: i32) -> (i32, i32, i32) {
    %c0_i32 = arith.constant 0 : i32
    %c0_i32_0 = arith.constant 0 : i32
    return %arg0, %arg1, %c0_i32 : i32, i32, i32
  }
  func.func @transform_1(%arg0: i32, %arg1: i32) -> (i32, i32) {
    %c0_i32 = arith.constant 0 : i32
    %c0_i32_0 = arith.constant 0 : i32
    %c0_i32_1 = arith.constant 0 : i32
    return %c0_i32, %c0_i32_0 : i32, i32
  }
  func.func @transform_2(%arg0: i32, %arg1: i32) -> (i32, i32) {
    %c0_i32 = arith.constant 0 : i32
    %c0_i32_0 = arith.constant 0 : i32
    %c0_i32_1 = arith.constant 0 : i32
    return %c0_i32, %c0_i32_0 : i32, i32
  }
  func.func @transform_3(%arg0: i32, %arg1: i32) -> (i32, i32, i32) {
    %c0_i32 = arith.constant 0 : i32
    %c0_i32_0 = arith.constant 0 : i32
    return %arg0, %arg1, %c0_i32 : i32, i32, i32
  }
}

module attributes {stable_mosaic.version = 11 : i64} {
  func.func @_maxpool2x2_kernel(%arg0: i32, %arg1: memref<1x16x8x128xbf16, #tpu.memory_space<vmem>>, %arg2: memref<1x8x8x64xbf16, #tpu.memory_space<vmem>>) attributes {dimension_semantics = [#tpu.dimension_semantics<parallel>], iteration_bounds = array<i64: 4>, scalar_prefetch = 0 : i64, scratch_operands = 0 : i64, tpu.core_type = #tpu.core_type<tc>, window_params = [{transform_indices = @transform_0, window_bounds = array<i64: 1, 16, 8, 128>}, {transform_indices = @transform_1, window_bounds = array<i64: 1, 8, 8, 64>}]} {
    %c0 = arith.constant 0 : index
    %c0_0 = arith.constant 0 : index
    %c0_1 = arith.constant 0 : index
    %c0_2 = arith.constant 0 : index
    %0 = vector.load %arg1[%c0, %c0_0, %c0_1, %c0_2] : memref<1x16x8x128xbf16, #tpu.memory_space<vmem>>, vector<1x16x8x128xbf16>
    %1 = vector.shape_cast %0 : vector<1x16x8x128xbf16> to vector<16x8x128xbf16>
    %2 = vector.extract_strided_slice %1 {offsets = [0, 0, 0], sizes = [16, 8, 64], strides = [1, 1, 1]} : vector<16x8x128xbf16> to vector<16x8x64xbf16>
    %3 = vector.extract_strided_slice %1 {offsets = [0, 0, 64], sizes = [16, 8, 64], strides = [1, 1, 1]} : vector<16x8x128xbf16> to vector<16x8x64xbf16>
    %4 = arith.maximumf %2, %3 : vector<16x8x64xbf16>
    %5 = vector.shape_cast %4 : vector<16x8x64xbf16> to vector<8x2x8x64xbf16>
    %6 = vector.extract_strided_slice %5 {offsets = [0, 0, 0, 0], sizes = [8, 1, 8, 64], strides = [1, 1, 1, 1]} : vector<8x2x8x64xbf16> to vector<8x1x8x64xbf16>
    %7 = vector.shape_cast %6 : vector<8x1x8x64xbf16> to vector<8x8x64xbf16>
    %8 = vector.extract_strided_slice %5 {offsets = [0, 1, 0, 0], sizes = [8, 1, 8, 64], strides = [1, 1, 1, 1]} : vector<8x2x8x64xbf16> to vector<8x1x8x64xbf16>
    %9 = vector.shape_cast %8 : vector<8x1x8x64xbf16> to vector<8x8x64xbf16>
    %10 = arith.maximumf %7, %9 : vector<8x8x64xbf16>
    %c0_3 = arith.constant 0 : index
    %c0_4 = arith.constant 0 : index
    %c0_5 = arith.constant 0 : index
    %c0_6 = arith.constant 0 : index
    %11 = vector.load %arg2[%c0_3, %c0_4, %c0_5, %c0_6] : memref<1x8x8x64xbf16, #tpu.memory_space<vmem>>, vector<1x8x8x64xbf16>
    %12 = vector.shape_cast %11 : vector<1x8x8x64xbf16> to vector<8x8x64xbf16>
    %13 = vector.shape_cast %10 : vector<8x8x64xbf16> to vector<1x8x8x64xbf16>
    tpu.vector_store %arg2[%c0_3, %c0_4, %c0_5, %c0_6], %13 {strides = array<i32>} : memref<1x8x8x64xbf16, #tpu.memory_space<vmem>>, vector<1x8x8x64xbf16>,
    return
  }
  func.func @transform_0(%arg0: i32) -> (i32, i32, i32, i32) {
    %c0_i32 = arith.constant 0 : i32
    %c0_i32_0 = arith.constant 0 : i32
    %c0_i32_1 = arith.constant 0 : i32
    %c0_i32_2 = arith.constant 0 : i32
    return %arg0, %c0_i32, %c0_i32_0, %c0_i32_1 : i32, i32, i32, i32
  }
  func.func @transform_1(%arg0: i32) -> (i32, i32, i32, i32) {
    %c0_i32 = arith.constant 0 : i32
    %c0_i32_0 = arith.constant 0 : i32
    %c0_i32_1 = arith.constant 0 : i32
    %c0_i32_2 = arith.constant 0 : i32
    return %arg0, %c0_i32, %c0_i32_0, %c0_i32_1 : i32, i32, i32, i32
  }
}

module attributes {stable_mosaic.version = 11 : i64} {
  func.func @_conv3x3_relu_kernel(%arg0: i32, %arg1: i32, %arg2: memref<1x64x576xbf16, #tpu.memory_space<vmem>>, %arg3: memref<576x128xbf16, #tpu.memory_space<vmem>>, %arg4: memref<1x128xf32, #tpu.memory_space<vmem>>, %arg5: memref<1x64x128xbf16, #tpu.memory_space<vmem>>) attributes {dimension_semantics = [#tpu.dimension_semantics<parallel>, #tpu.dimension_semantics<parallel>], iteration_bounds = array<i64: 4, 1>, scalar_prefetch = 0 : i64, scratch_operands = 0 : i64, tpu.core_type = #tpu.core_type<tc>, window_params = [{transform_indices = @transform_0, window_bounds = array<i64: 1, 64, 576>}, {pipeline_mode = #tpu.pipeline_mode<synchronous>, transform_indices = @transform_1, window_bounds = array<i64: 576, 128>}, {pipeline_mode = #tpu.pipeline_mode<synchronous>, transform_indices = @transform_2, window_bounds = array<i64: 1, 128>}, {transform_indices = @transform_3, window_bounds = array<i64: 1, 64, 128>}]} {
    %c0 = arith.constant 0 : index
    %c0_0 = arith.constant 0 : index
    %c0_1 = arith.constant 0 : index
    %0 = vector.load %arg2[%c0, %c0_0, %c0_1] : memref<1x64x576xbf16, #tpu.memory_space<vmem>>, vector<1x64x576xbf16>
    %1 = vector.shape_cast %0 : vector<1x64x576xbf16> to vector<64x576xbf16>
    %c0_2 = arith.constant 0 : index
    %c0_3 = arith.constant 0 : index
    %2 = vector.load %arg3[%c0_2, %c0_3] : memref<576x128xbf16, #tpu.memory_space<vmem>>, vector<576x128xbf16>
    %cst = arith.constant dense<0.000000e+00> : vector<64x128xf32>
    %3 = tpu.matmul %1, %2, %cst {dimension_numbers = #tpu.dot_dimension_numbers<[1], [0], [0], [1], [0, 0, 1, 1], [], []>} : vector<64x576xbf16>, vector<576x128xbf16>, vector<64x128xf32> -> vector<64x128xf32>
    %c0_4 = arith.constant 0 : index
    %c0_5 = arith.constant 0 : index
    %4 = vector.load %arg4[%c0_4, %c0_5] : memref<1x128xf32, #tpu.memory_space<vmem>>, vector<1x128xf32>
    %5 = vector.broadcast %4 : vector<1x128xf32> to vector<64x128xf32>
    %6 = arith.addf %3, %5 : vector<64x128xf32>
    %cst_6 = arith.constant 0.000000e+00 : f32
    %7 = vector.broadcast %cst_6 : f32 to vector<64x128xf32>
    %8 = arith.maximumf %6, %7 : vector<64x128xf32>
    %9 = arith.truncf %8 : vector<64x128xf32> to vector<64x128xbf16>
    %c0_7 = arith.constant 0 : index
    %c0_8 = arith.constant 0 : index
    %c0_9 = arith.constant 0 : index
    %10 = vector.load %arg5[%c0_7, %c0_8, %c0_9] : memref<1x64x128xbf16, #tpu.memory_space<vmem>>, vector<1x64x128xbf16>
    %11 = vector.shape_cast %10 : vector<1x64x128xbf16> to vector<64x128xbf16>
    %12 = vector.shape_cast %9 : vector<64x128xbf16> to vector<1x64x128xbf16>
    tpu.vector_store %arg5[%c0_7, %c0_8, %c0_9], %12 {strides = array<i32>} : memref<1x64x128xbf16, #tpu.memory_space<vmem>>, vector<1x64x128xbf16>,
    return
  }
  func.func @transform_0(%arg0: i32, %arg1: i32) -> (i32, i32, i32) {
    %c0_i32 = arith.constant 0 : i32
    %c0_i32_0 = arith.constant 0 : i32
    return %arg0, %arg1, %c0_i32 : i32, i32, i32
  }
  func.func @transform_1(%arg0: i32, %arg1: i32) -> (i32, i32) {
    %c0_i32 = arith.constant 0 : i32
    %c0_i32_0 = arith.constant 0 : i32
    %c0_i32_1 = arith.constant 0 : i32
    return %c0_i32, %c0_i32_0 : i32, i32
  }
  func.func @transform_2(%arg0: i32, %arg1: i32) -> (i32, i32) {
    %c0_i32 = arith.constant 0 : i32
    %c0_i32_0 = arith.constant 0 : i32
    %c0_i32_1 = arith.constant 0 : i32
    return %c0_i32, %c0_i32_0 : i32, i32
  }
  func.func @transform_3(%arg0: i32, %arg1: i32) -> (i32, i32, i32) {
    %c0_i32 = arith.constant 0 : i32
    %c0_i32_0 = arith.constant 0 : i32
    return %arg0, %arg1, %c0_i32 : i32, i32, i32
  }
}

module attributes {stable_mosaic.version = 11 : i64} {
  func.func @_conv3x3_relu_kernel(%arg0: i32, %arg1: i32, %arg2: memref<1x64x1152xbf16, #tpu.memory_space<vmem>>, %arg3: memref<1152x128xbf16, #tpu.memory_space<vmem>>, %arg4: memref<1x128xf32, #tpu.memory_space<vmem>>, %arg5: memref<1x64x128xbf16, #tpu.memory_space<vmem>>) attributes {dimension_semantics = [#tpu.dimension_semantics<parallel>, #tpu.dimension_semantics<parallel>], iteration_bounds = array<i64: 4, 1>, scalar_prefetch = 0 : i64, scratch_operands = 0 : i64, tpu.core_type = #tpu.core_type<tc>, window_params = [{transform_indices = @transform_0, window_bounds = array<i64: 1, 64, 1152>}, {pipeline_mode = #tpu.pipeline_mode<synchronous>, transform_indices = @transform_1, window_bounds = array<i64: 1152, 128>}, {pipeline_mode = #tpu.pipeline_mode<synchronous>, transform_indices = @transform_2, window_bounds = array<i64: 1, 128>}, {transform_indices = @transform_3, window_bounds = array<i64: 1, 64, 128>}]} {
    %c0 = arith.constant 0 : index
    %c0_0 = arith.constant 0 : index
    %c0_1 = arith.constant 0 : index
    %0 = vector.load %arg2[%c0, %c0_0, %c0_1] : memref<1x64x1152xbf16, #tpu.memory_space<vmem>>, vector<1x64x1152xbf16>
    %1 = vector.shape_cast %0 : vector<1x64x1152xbf16> to vector<64x1152xbf16>
    %c0_2 = arith.constant 0 : index
    %c0_3 = arith.constant 0 : index
    %2 = vector.load %arg3[%c0_2, %c0_3] : memref<1152x128xbf16, #tpu.memory_space<vmem>>, vector<1152x128xbf16>
    %cst = arith.constant dense<0.000000e+00> : vector<64x128xf32>
    %3 = tpu.matmul %1, %2, %cst {dimension_numbers = #tpu.dot_dimension_numbers<[1], [0], [0], [1], [0, 0, 1, 1], [], []>} : vector<64x1152xbf16>, vector<1152x128xbf16>, vector<64x128xf32> -> vector<64x128xf32>
    %c0_4 = arith.constant 0 : index
    %c0_5 = arith.constant 0 : index
    %4 = vector.load %arg4[%c0_4, %c0_5] : memref<1x128xf32, #tpu.memory_space<vmem>>, vector<1x128xf32>
    %5 = vector.broadcast %4 : vector<1x128xf32> to vector<64x128xf32>
    %6 = arith.addf %3, %5 : vector<64x128xf32>
    %cst_6 = arith.constant 0.000000e+00 : f32
    %7 = vector.broadcast %cst_6 : f32 to vector<64x128xf32>
    %8 = arith.maximumf %6, %7 : vector<64x128xf32>
    %9 = arith.truncf %8 : vector<64x128xf32> to vector<64x128xbf16>
    %c0_7 = arith.constant 0 : index
    %c0_8 = arith.constant 0 : index
    %c0_9 = arith.constant 0 : index
    %10 = vector.load %arg5[%c0_7, %c0_8, %c0_9] : memref<1x64x128xbf16, #tpu.memory_space<vmem>>, vector<1x64x128xbf16>
    %11 = vector.shape_cast %10 : vector<1x64x128xbf16> to vector<64x128xbf16>
    %12 = vector.shape_cast %9 : vector<64x128xbf16> to vector<1x64x128xbf16>
    tpu.vector_store %arg5[%c0_7, %c0_8, %c0_9], %12 {strides = array<i32>} : memref<1x64x128xbf16, #tpu.memory_space<vmem>>, vector<1x64x128xbf16>,
    return
  }
  func.func @transform_0(%arg0: i32, %arg1: i32) -> (i32, i32, i32) {
    %c0_i32 = arith.constant 0 : i32
    %c0_i32_0 = arith.constant 0 : i32
    return %arg0, %arg1, %c0_i32 : i32, i32, i32
  }
  func.func @transform_1(%arg0: i32, %arg1: i32) -> (i32, i32) {
    %c0_i32 = arith.constant 0 : i32
    %c0_i32_0 = arith.constant 0 : i32
    %c0_i32_1 = arith.constant 0 : i32
    return %c0_i32, %c0_i32_0 : i32, i32
  }
  func.func @transform_2(%arg0: i32, %arg1: i32) -> (i32, i32) {
    %c0_i32 = arith.constant 0 : i32
    %c0_i32_0 = arith.constant 0 : i32
    %c0_i32_1 = arith.constant 0 : i32
    return %c0_i32, %c0_i32_0 : i32, i32
  }
  func.func @transform_3(%arg0: i32, %arg1: i32) -> (i32, i32, i32) {
    %c0_i32 = arith.constant 0 : i32
    %c0_i32_0 = arith.constant 0 : i32
    return %arg0, %arg1, %c0_i32 : i32, i32, i32
  }
}

module attributes {stable_mosaic.version = 11 : i64} {
  func.func @_maxpool2x2_kernel(%arg0: i32, %arg1: memref<1x8x4x256xbf16, #tpu.memory_space<vmem>>, %arg2: memref<1x4x4x128xbf16, #tpu.memory_space<vmem>>) attributes {dimension_semantics = [#tpu.dimension_semantics<parallel>], iteration_bounds = array<i64: 4>, scalar_prefetch = 0 : i64, scratch_operands = 0 : i64, tpu.core_type = #tpu.core_type<tc>, window_params = [{transform_indices = @transform_0, window_bounds = array<i64: 1, 8, 4, 256>}, {transform_indices = @transform_1, window_bounds = array<i64: 1, 4, 4, 128>}]} {
    %c0 = arith.constant 0 : index
    %c0_0 = arith.constant 0 : index
    %c0_1 = arith.constant 0 : index
    %c0_2 = arith.constant 0 : index
    %0 = vector.load %arg1[%c0, %c0_0, %c0_1, %c0_2] : memref<1x8x4x256xbf16, #tpu.memory_space<vmem>>, vector<1x8x4x256xbf16>
    %1 = vector.shape_cast %0 : vector<1x8x4x256xbf16> to vector<8x4x256xbf16>
    %2 = vector.extract_strided_slice %1 {offsets = [0, 0, 0], sizes = [8, 4, 128], strides = [1, 1, 1]} : vector<8x4x256xbf16> to vector<8x4x128xbf16>
    %3 = vector.extract_strided_slice %1 {offsets = [0, 0, 128], sizes = [8, 4, 128], strides = [1, 1, 1]} : vector<8x4x256xbf16> to vector<8x4x128xbf16>
    %4 = arith.maximumf %2, %3 : vector<8x4x128xbf16>
    %5 = vector.shape_cast %4 : vector<8x4x128xbf16> to vector<4x2x4x128xbf16>
    %6 = vector.extract_strided_slice %5 {offsets = [0, 0, 0, 0], sizes = [4, 1, 4, 128], strides = [1, 1, 1, 1]} : vector<4x2x4x128xbf16> to vector<4x1x4x128xbf16>
    %7 = vector.shape_cast %6 : vector<4x1x4x128xbf16> to vector<4x4x128xbf16>
    %8 = vector.extract_strided_slice %5 {offsets = [0, 1, 0, 0], sizes = [4, 1, 4, 128], strides = [1, 1, 1, 1]} : vector<4x2x4x128xbf16> to vector<4x1x4x128xbf16>
    %9 = vector.shape_cast %8 : vector<4x1x4x128xbf16> to vector<4x4x128xbf16>
    %10 = arith.maximumf %7, %9 : vector<4x4x128xbf16>
    %c0_3 = arith.constant 0 : index
    %c0_4 = arith.constant 0 : index
    %c0_5 = arith.constant 0 : index
    %c0_6 = arith.constant 0 : index
    %11 = vector.load %arg2[%c0_3, %c0_4, %c0_5, %c0_6] : memref<1x4x4x128xbf16, #tpu.memory_space<vmem>>, vector<1x4x4x128xbf16>
    %12 = vector.shape_cast %11 : vector<1x4x4x128xbf16> to vector<4x4x128xbf16>
    %13 = vector.shape_cast %10 : vector<4x4x128xbf16> to vector<1x4x4x128xbf16>
    tpu.vector_store %arg2[%c0_3, %c0_4, %c0_5, %c0_6], %13 {strides = array<i32>} : memref<1x4x4x128xbf16, #tpu.memory_space<vmem>>, vector<1x4x4x128xbf16>,
    return
  }
  func.func @transform_0(%arg0: i32) -> (i32, i32, i32, i32) {
    %c0_i32 = arith.constant 0 : i32
    %c0_i32_0 = arith.constant 0 : i32
    %c0_i32_1 = arith.constant 0 : i32
    %c0_i32_2 = arith.constant 0 : i32
    return %arg0, %c0_i32, %c0_i32_0, %c0_i32_1 : i32, i32, i32, i32
  }
  func.func @transform_1(%arg0: i32) -> (i32, i32, i32, i32) {
    %c0_i32 = arith.constant 0 : i32
    %c0_i32_0 = arith.constant 0 : i32
    %c0_i32_1 = arith.constant 0 : i32
    %c0_i32_2 = arith.constant 0 : i32
    return %arg0, %c0_i32, %c0_i32_0, %c0_i32_1 : i32, i32, i32, i32
  }
}

module attributes {stable_mosaic.version = 11 : i64} {
  func.func @_conv3x3_relu_kernel(%arg0: i32, %arg1: i32, %arg2: memref<1x16x1152xbf16, #tpu.memory_space<vmem>>, %arg3: memref<1152x256xbf16, #tpu.memory_space<vmem>>, %arg4: memref<1x256xf32, #tpu.memory_space<vmem>>, %arg5: memref<1x16x256xbf16, #tpu.memory_space<vmem>>) attributes {dimension_semantics = [#tpu.dimension_semantics<parallel>, #tpu.dimension_semantics<parallel>], iteration_bounds = array<i64: 4, 1>, scalar_prefetch = 0 : i64, scratch_operands = 0 : i64, tpu.core_type = #tpu.core_type<tc>, window_params = [{transform_indices = @transform_0, window_bounds = array<i64: 1, 16, 1152>}, {pipeline_mode = #tpu.pipeline_mode<synchronous>, transform_indices = @transform_1, window_bounds = array<i64: 1152, 256>}, {pipeline_mode = #tpu.pipeline_mode<synchronous>, transform_indices = @transform_2, window_bounds = array<i64: 1, 256>}, {transform_indices = @transform_3, window_bounds = array<i64: 1, 16, 256>}]} {
    %c0 = arith.constant 0 : index
    %c0_0 = arith.constant 0 : index
    %c0_1 = arith.constant 0 : index
    %0 = vector.load %arg2[%c0, %c0_0, %c0_1] : memref<1x16x1152xbf16, #tpu.memory_space<vmem>>, vector<1x16x1152xbf16>
    %1 = vector.shape_cast %0 : vector<1x16x1152xbf16> to vector<16x1152xbf16>
    %c0_2 = arith.constant 0 : index
    %c0_3 = arith.constant 0 : index
    %2 = vector.load %arg3[%c0_2, %c0_3] : memref<1152x256xbf16, #tpu.memory_space<vmem>>, vector<1152x256xbf16>
    %cst = arith.constant dense<0.000000e+00> : vector<16x256xf32>
    %3 = tpu.matmul %1, %2, %cst {dimension_numbers = #tpu.dot_dimension_numbers<[1], [0], [0], [1], [0, 0, 1, 1], [], []>} : vector<16x1152xbf16>, vector<1152x256xbf16>, vector<16x256xf32> -> vector<16x256xf32>
    %c0_4 = arith.constant 0 : index
    %c0_5 = arith.constant 0 : index
    %4 = vector.load %arg4[%c0_4, %c0_5] : memref<1x256xf32, #tpu.memory_space<vmem>>, vector<1x256xf32>
    %5 = vector.broadcast %4 : vector<1x256xf32> to vector<16x256xf32>
    %6 = arith.addf %3, %5 : vector<16x256xf32>
    %cst_6 = arith.constant 0.000000e+00 : f32
    %7 = vector.broadcast %cst_6 : f32 to vector<16x256xf32>
    %8 = arith.maximumf %6, %7 : vector<16x256xf32>
    %9 = arith.truncf %8 : vector<16x256xf32> to vector<16x256xbf16>
    %c0_7 = arith.constant 0 : index
    %c0_8 = arith.constant 0 : index
    %c0_9 = arith.constant 0 : index
    %10 = vector.load %arg5[%c0_7, %c0_8, %c0_9] : memref<1x16x256xbf16, #tpu.memory_space<vmem>>, vector<1x16x256xbf16>
    %11 = vector.shape_cast %10 : vector<1x16x256xbf16> to vector<16x256xbf16>
    %12 = vector.shape_cast %9 : vector<16x256xbf16> to vector<1x16x256xbf16>
    tpu.vector_store %arg5[%c0_7, %c0_8, %c0_9], %12 {strides = array<i32>} : memref<1x16x256xbf16, #tpu.memory_space<vmem>>, vector<1x16x256xbf16>,
    return
  }
  func.func @transform_0(%arg0: i32, %arg1: i32) -> (i32, i32, i32) {
    %c0_i32 = arith.constant 0 : i32
    %c0_i32_0 = arith.constant 0 : i32
    return %arg0, %arg1, %c0_i32 : i32, i32, i32
  }
  func.func @transform_1(%arg0: i32, %arg1: i32) -> (i32, i32) {
    %c0_i32 = arith.constant 0 : i32
    %c0_i32_0 = arith.constant 0 : i32
    %c0_i32_1 = arith.constant 0 : i32
    return %c0_i32, %c0_i32_0 : i32, i32
  }
  func.func @transform_2(%arg0: i32, %arg1: i32) -> (i32, i32) {
    %c0_i32 = arith.constant 0 : i32
    %c0_i32_0 = arith.constant 0 : i32
    %c0_i32_1 = arith.constant 0 : i32
    return %c0_i32, %c0_i32_0 : i32, i32
  }
  func.func @transform_3(%arg0: i32, %arg1: i32) -> (i32, i32, i32) {
    %c0_i32 = arith.constant 0 : i32
    %c0_i32_0 = arith.constant 0 : i32
    return %arg0, %arg1, %c0_i32 : i32, i32, i32
  }
}

module attributes {stable_mosaic.version = 11 : i64} {
  func.func @_conv3x3_relu_kernel(%arg0: i32, %arg1: i32, %arg2: memref<1x16x2304xbf16, #tpu.memory_space<vmem>>, %arg3: memref<2304x256xbf16, #tpu.memory_space<vmem>>, %arg4: memref<1x256xf32, #tpu.memory_space<vmem>>, %arg5: memref<1x16x256xbf16, #tpu.memory_space<vmem>>) attributes {dimension_semantics = [#tpu.dimension_semantics<parallel>, #tpu.dimension_semantics<parallel>], iteration_bounds = array<i64: 4, 1>, scalar_prefetch = 0 : i64, scratch_operands = 0 : i64, tpu.core_type = #tpu.core_type<tc>, window_params = [{transform_indices = @transform_0, window_bounds = array<i64: 1, 16, 2304>}, {pipeline_mode = #tpu.pipeline_mode<synchronous>, transform_indices = @transform_1, window_bounds = array<i64: 2304, 256>}, {pipeline_mode = #tpu.pipeline_mode<synchronous>, transform_indices = @transform_2, window_bounds = array<i64: 1, 256>}, {transform_indices = @transform_3, window_bounds = array<i64: 1, 16, 256>}]} {
    %c0 = arith.constant 0 : index
    %c0_0 = arith.constant 0 : index
    %c0_1 = arith.constant 0 : index
    %0 = vector.load %arg2[%c0, %c0_0, %c0_1] : memref<1x16x2304xbf16, #tpu.memory_space<vmem>>, vector<1x16x2304xbf16>
    %1 = vector.shape_cast %0 : vector<1x16x2304xbf16> to vector<16x2304xbf16>
    %c0_2 = arith.constant 0 : index
    %c0_3 = arith.constant 0 : index
    %2 = vector.load %arg3[%c0_2, %c0_3] : memref<2304x256xbf16, #tpu.memory_space<vmem>>, vector<2304x256xbf16>
    %cst = arith.constant dense<0.000000e+00> : vector<16x256xf32>
    %3 = tpu.matmul %1, %2, %cst {dimension_numbers = #tpu.dot_dimension_numbers<[1], [0], [0], [1], [0, 0, 1, 1], [], []>} : vector<16x2304xbf16>, vector<2304x256xbf16>, vector<16x256xf32> -> vector<16x256xf32>
    %c0_4 = arith.constant 0 : index
    %c0_5 = arith.constant 0 : index
    %4 = vector.load %arg4[%c0_4, %c0_5] : memref<1x256xf32, #tpu.memory_space<vmem>>, vector<1x256xf32>
    %5 = vector.broadcast %4 : vector<1x256xf32> to vector<16x256xf32>
    %6 = arith.addf %3, %5 : vector<16x256xf32>
    %cst_6 = arith.constant 0.000000e+00 : f32
    %7 = vector.broadcast %cst_6 : f32 to vector<16x256xf32>
    %8 = arith.maximumf %6, %7 : vector<16x256xf32>
    %9 = arith.truncf %8 : vector<16x256xf32> to vector<16x256xbf16>
    %c0_7 = arith.constant 0 : index
    %c0_8 = arith.constant 0 : index
    %c0_9 = arith.constant 0 : index
    %10 = vector.load %arg5[%c0_7, %c0_8, %c0_9] : memref<1x16x256xbf16, #tpu.memory_space<vmem>>, vector<1x16x256xbf16>
    %11 = vector.shape_cast %10 : vector<1x16x256xbf16> to vector<16x256xbf16>
    %12 = vector.shape_cast %9 : vector<16x256xbf16> to vector<1x16x256xbf16>
    tpu.vector_store %arg5[%c0_7, %c0_8, %c0_9], %12 {strides = array<i32>} : memref<1x16x256xbf16, #tpu.memory_space<vmem>>, vector<1x16x256xbf16>,
    return
  }
  func.func @transform_0(%arg0: i32, %arg1: i32) -> (i32, i32, i32) {
    %c0_i32 = arith.constant 0 : i32
    %c0_i32_0 = arith.constant 0 : i32
    return %arg0, %arg1, %c0_i32 : i32, i32, i32
  }
  func.func @transform_1(%arg0: i32, %arg1: i32) -> (i32, i32) {
    %c0_i32 = arith.constant 0 : i32
    %c0_i32_0 = arith.constant 0 : i32
    %c0_i32_1 = arith.constant 0 : i32
    return %c0_i32, %c0_i32_0 : i32, i32
  }
  func.func @transform_2(%arg0: i32, %arg1: i32) -> (i32, i32) {
    %c0_i32 = arith.constant 0 : i32
    %c0_i32_0 = arith.constant 0 : i32
    %c0_i32_1 = arith.constant 0 : i32
    return %c0_i32, %c0_i32_0 : i32, i32
  }
  func.func @transform_3(%arg0: i32, %arg1: i32) -> (i32, i32, i32) {
    %c0_i32 = arith.constant 0 : i32
    %c0_i32_0 = arith.constant 0 : i32
    return %arg0, %arg1, %c0_i32 : i32, i32, i32
  }
}

module attributes {stable_mosaic.version = 11 : i64} {
  func.func @_mse_kernel(%arg0: i32, %arg1: memref<1x16x256xbf16, #tpu.memory_space<vmem>>, %arg2: memref<1x16x256xbf16, #tpu.memory_space<vmem>>, %arg3: memref<1x1xf32, #tpu.memory_space<vmem>>, %arg4: memref<1x256xf32, #tpu.memory_space<vmem>>) attributes {dimension_semantics = [#tpu.dimension_semantics<arbitrary>], iteration_bounds = array<i64: 2>, scalar_prefetch = 0 : i64, scratch_operands = 1 : i64, tpu.core_type = #tpu.core_type<tc>, window_params = [{transform_indices = @transform_0, window_bounds = array<i64: 1, 16, 256>}, {transform_indices = @transform_1, window_bounds = array<i64: 1, 16, 256>}, {pipeline_mode = #tpu.pipeline_mode<synchronous>, transform_indices = @transform_2, window_bounds = array<i64: 1, 1>}]} {
    %c0_i32 = arith.constant 0 : i32
    %0 = arith.cmpi eq, %arg0, %c0_i32 : i32
    %1 = arith.extui %0 : i1 to i32
    %c0_i32_0 = arith.constant 0 : i32
    %2 = arith.cmpi ne, %1, %c0_i32_0 : i32
    scf.if %2 {
      %cst_11 = arith.constant 0.000000e+00 : f32
      %19 = vector.broadcast %cst_11 : f32 to vector<1x256xf32>
      %c0_12 = arith.constant 0 : index
      %c0_13 = arith.constant 0 : index
      %20 = vector.load %arg4[%c0_12, %c0_13] : memref<1x256xf32, #tpu.memory_space<vmem>>, vector<1x256xf32>
      tpu.vector_store %arg4[%c0_12, %c0_13], %19 {strides = array<i32>} : memref<1x256xf32, #tpu.memory_space<vmem>>, vector<1x256xf32>,
    } else {
    }
    %c0 = arith.constant 0 : index
    %c0_1 = arith.constant 0 : index
    %c0_2 = arith.constant 0 : index
    %3 = vector.load %arg1[%c0, %c0_1, %c0_2] : memref<1x16x256xbf16, #tpu.memory_space<vmem>>, vector<1x16x256xbf16>
    %4 = vector.shape_cast %3 : vector<1x16x256xbf16> to vector<16x256xbf16>
    %5 = arith.extf %4 : vector<16x256xbf16> to vector<16x256xf32>
    %c0_3 = arith.constant 0 : index
    %c0_4 = arith.constant 0 : index
    %c0_5 = arith.constant 0 : index
    %6 = vector.load %arg2[%c0_3, %c0_4, %c0_5] : memref<1x16x256xbf16, #tpu.memory_space<vmem>>, vector<1x16x256xbf16>
    %7 = vector.shape_cast %6 : vector<1x16x256xbf16> to vector<16x256xbf16>
    %8 = arith.extf %7 : vector<16x256xbf16> to vector<16x256xf32>
    %9 = arith.subf %5, %8 : vector<16x256xf32>
    %c0_6 = arith.constant 0 : index
    %c0_7 = arith.constant 0 : index
    %10 = vector.load %arg4[%c0_6, %c0_7] : memref<1x256xf32, #tpu.memory_space<vmem>>, vector<1x256xf32>
    %11 = arith.mulf %9, %9 : vector<16x256xf32>
    %cst = arith.constant dense<0.000000e+00> : vector<256xf32>
    %12 = vector.multi_reduction <add>, %11, %cst [0] : vector<16x256xf32> to vector<256xf32>
    %13 = vector.shape_cast %12 : vector<256xf32> to vector<1x256xf32>
    %14 = arith.addf %10, %13 : vector<1x256xf32>
    %c0_8 = arith.constant 0 : index
    %c0_9 = arith.constant 0 : index
    %15 = vector.load %arg4[%c0_8, %c0_9] : memref<1x256xf32, #tpu.memory_space<vmem>>, vector<1x256xf32>
    tpu.vector_store %arg4[%c0_8, %c0_9], %14 {strides = array<i32>} : memref<1x256xf32, #tpu.memory_space<vmem>>, vector<1x256xf32>,
    %c1_i32 = arith.constant 1 : i32
    %16 = arith.cmpi eq, %arg0, %c1_i32 : i32
    %17 = arith.extui %16 : i1 to i32
    %c0_i32_10 = arith.constant 0 : i32
    %18 = arith.cmpi ne, %17, %c0_i32_10 : i32
    scf.if %18 {
      %c0_11 = arith.constant 0 : index
      %c0_12 = arith.constant 0 : index
      %19 = vector.load %arg4[%c0_11, %c0_12] : memref<1x256xf32, #tpu.memory_space<vmem>>, vector<1x256xf32>
      %cst_13 = arith.constant dense<0.000000e+00> : vector<1xf32>
      %20 = vector.multi_reduction <add>, %19, %cst_13 [1] : vector<1x256xf32> to vector<1xf32>
      %21 = vector.shape_cast %20 : vector<1xf32> to vector<1x1xf32>
      %cst_14 = arith.constant 1.22070313E-4 : f32
      %22 = vector.broadcast %cst_14 : f32 to vector<1x1xf32>
      %23 = arith.mulf %21, %22 : vector<1x1xf32>
      %c0_15 = arith.constant 0 : index
      %c0_16 = arith.constant 0 : index
      %24 = vector.load %arg3[%c0_15, %c0_16] : memref<1x1xf32, #tpu.memory_space<vmem>>, vector<1x1xf32>
      tpu.vector_store %arg3[%c0_15, %c0_16], %23 {strides = array<i32>} : memref<1x1xf32, #tpu.memory_space<vmem>>, vector<1x1xf32>,
    } else {
    }
    return
  }
  func.func @transform_0(%arg0: i32) -> (i32, i32, i32) {
    %c0_i32 = arith.constant 0 : i32
    %c0_i32_0 = arith.constant 0 : i32
    %c0_i32_1 = arith.constant 0 : i32
    return %arg0, %c0_i32, %c0_i32_0 : i32, i32, i32
  }
  func.func @transform_1(%arg0: i32) -> (i32, i32, i32) {
    %c0_i32 = arith.constant 0 : i32
    %c0_i32_0 = arith.constant 0 : i32
    %c0_i32_1 = arith.constant 0 : i32
    return %arg0, %c0_i32, %c0_i32_0 : i32, i32, i32
  }
  func.func @transform_2(%arg0: i32) -> (i32, i32) {
    %c0_i32 = arith.constant 0 : i32
    %c0_i32_0 = arith.constant 0 : i32
    %c0_i32_1 = arith.constant 0 : i32
    return %c0_i32, %c0_i32_0 : i32, i32
  }
}

</mosaic_0001>

<llo_original>
// kernel: perceptual_loss.10
$region0: #{perceptual_loss.10}
  #allocation0 [shape = 'u32[]', space=smem, size = 0x4, offset = 0x4, fixed_abs, tag = 'smem constant byte address 0x4 - core index']
  #allocation1 [shape = 'u32[144,128]{1,0:T(1,128)}', space=vmem, size = 0x12000, scoped, tag = 'internal scratch']
  %s0 = inlined_call_operand.vmem [shape: bf16[4,256,27], index: 0, kind: input, shape index: {}]
  %s1 = inlined_call_operand.vmem [shape: bf16[27,64], index: 1, kind: input, shape index: {}]
  %s2 = inlined_call_operand.vmem [shape: f32[1,64], index: 2, kind: input, shape index: {}]
  %s3 = inlined_call_operand.vmem [shape: bf16[4,256,64], index: 3, kind: output, shape index: {}]
  %s4 = sld [smem:[#allocation0]]
  $region45: #{perceptual_loss.10} parent=0
    _
  %s6 = ssub.s32 1, %s4
  %s7 = scalar_select 0, %s6, %s4
  loop: start=0, step=1, limit=6
  $region2: #{perceptual_loss.10} parent=0 // loop_pre_header
    _
  $region3: #{perceptual_loss.10} parent=0 // loop_header
    %s9 = sphi 0, %s13
    %p10 = scmp.ge.s32.totalorder %s9, 6
    %s16 = sphi 0, %s28
    %s17 = sphi 0, %s24
    %s18 = sphi 0, %s16
    %s19 = sphi 0, %s17
    %s20 = sphi 0, %s18
    %s21 = sphi 0, %s19
    %s33 = sphi 0, %s35
    %s36 = sphi 0, %s33
    %s37 = sphi 0, %s36
    %s53 = sphi 0, %s37
    %s57 = sphi 0, %s57
    %s59 = sphi 0, %s57
    %s60 = sphi 0, %s59
    %s74 = sphi 0, %s60
    %s78 = sphi 0, %s78
    %s80 = sphi 0, %s78
    %s81 = sphi 0, %s80
    %s95 = sphi 0, %s81
    %s103 = sphi 0, %s105
    %s106 = sphi 0, %s103
    %s107 = sphi 0, %s106
    %s123 = sphi 0, %s107
  $region4: #{perceptual_loss.10} parent=0 // loop_header_branch
    %12 = sbr.rel (%p10) target = $region8
  $region5: #{perceptual_loss.10} parent=0 // loop_body
    %s14 = ssub.s32 %s9, 1
    %s15 = ssub.s32 %s9, 2
    %s22 = sadd.s32 1, %s17
    %p23 = scmp.ge.s32.totalorder %s22, 1
    %s24 = scalar_select %p23, 0, %s22
    %s25 = sadd.s32 1, %s16
    %s26 = scalar_select %p23, %s25, %s16
    %p27 = scmp.ge.s32.totalorder %s26, 4
    %s28 = scalar_select %p27, 0, %s26
    %s29 = ssub.s32 %s16, %s28
    %s30 = ssub.s32 %s17, %s24
    %s31 = sor.u32 %s29, %s30
    %p32 = scmp.eq.s32.totalorder %s31, 0
    %s34 = sadd.s32 %s33, 1
    %s35 = scalar_select %p32, %s33, %s34
    %p38 = pneg %p32
    %p39 = scmp.eq.s32.totalorder %s9, 3
    %p40 = por %p38, %p39
    %p41 = scmp.ne.s32.totalorder %s33, %s36
    %p42 = scmp.eq.s32.totalorder %s9, 0
    %p43 = por %p41, %p42
    %p44 = scmp.ne.s32.totalorder %s33, %s36
    %p45 = scmp.eq.s32.totalorder %s14, 3
    %p46 = por %p44, %p45
    %p47 = scmp.ne.s32.totalorder %s36, %s37
    %p48 = scmp.eq.s32.totalorder %s14, 0
    %p49 = por %p47, %p48
    %p50 = scmp.ne.s32.totalorder %s36, %s37
    %p51 = scmp.eq.s32.totalorder %s15, 3
    %p52 = por %p50, %p51
    %p54 = scmp.ne.s32.totalorder %s37, %s53
    %p55 = scmp.eq.s32.totalorder %s15, 0
    %p56 = por %p54, %p55
    %s58 = sadd.s32 %s57, 1
    %p61 = scmp.eq.s32.totalorder %s9, 3
    %p62 = scmp.ne.s32.totalorder %s57, %s59
    %p63 = scmp.eq.s32.totalorder %s9, 0
    %p64 = por %p62, %p63
    %p65 = scmp.ne.s32.totalorder %s57, %s59
    %p66 = scmp.eq.s32.totalorder %s14, 3
    %p67 = por %p65, %p66
    %p68 = scmp.ne.s32.totalorder %s59, %s60
    %p69 = scmp.eq.s32.totalorder %s14, 0
    %p70 = por %p68, %p69
    %p71 = scmp.ne.s32.totalorder %s59, %s60
    %p72 = scmp.eq.s32.totalorder %s15, 3
    %p73 = por %p71, %p72
    %p75 = scmp.ne.s32.totalorder %s60, %s74
    %p76 = scmp.eq.s32.totalorder %s15, 0
    %p77 = por %p75, %p76
    %s79 = sadd.s32 %s78, 1
    %p82 = scmp.eq.s32.totalorder %s9, 3
    %p83 = scmp.ne.s32.totalorder %s78, %s80
    %p84 = scmp.eq.s32.totalorder %s9, 0
    %p85 = por %p83, %p84
    %p86 = scmp.ne.s32.totalorder %s78, %s80
    %p87 = scmp.eq.s32.totalorder %s14, 3
    %p88 = por %p86, %p87
    %p89 = scmp.ne.s32.totalorder %s80, %s81
    %p90 = scmp.eq.s32.totalorder %s14, 0
    %p91 = por %p89, %p90
    %p92 = scmp.ne.s32.totalorder %s80, %s81
    %p93 = scmp.eq.s32.totalorder %s15, 3
    %p94 = por %p92, %p93
    %p96 = scmp.ne.s32.totalorder %s81, %s95
    %p97 = scmp.eq.s32.totalorder %s15, 0
    %p98 = por %p96, %p97
    %s99 = ssub.s32 %s16, %s28
    %s100 = ssub.s32 %s17, %s24
    %s101 = sor.u32 %s99, %s100
    %p102 = scmp.eq.s32.totalorder %s101, 0
    %s104 = sadd.s32 %s103, 1
    %s105 = scalar_select %p102, %s103, %s104
    %p108 = pneg %p102
    %p109 = scmp.eq.s32.totalorder %s9, 3
    %p110 = por %p108, %p109
    %p111 = scmp.ne.s32.totalorder %s103, %s106
    %p112 = scmp.eq.s32.totalorder %s9, 0
    %p113 = por %p111, %p112
    %p114 = scmp.ne.s32.totalorder %s103, %s106
    %p115 = scmp.eq.s32.totalorder %s14, 3
    %p116 = por %p114, %p115
    %p117 = scmp.ne.s32.totalorder %s106, %s107
    %p118 = scmp.eq.s32.totalorder %s14, 0
    %p119 = por %p117, %p118
    %p120 = scmp.ne.s32.totalorder %s106, %s107
    %p121 = scmp.eq.s32.totalorder %s15, 3
    %p122 = por %p120, %p121
    %p124 = scmp.ne.s32.totalorder %s107, %s123
    %p125 = scmp.eq.s32.totalorder %s15, 0
    %p126 = por %p124, %p125
    %p127 = scmp.le.s32.totalorder 1, %s9
    %p128 = scmp.lt.s32.totalorder %s9, 5
    %p129 = pnand %p127, %p128
    %p130 = pneg %p129
    // Predicated region
    $region9: #{perceptual_loss.10} parent=5 // pred_check
      _
    $region10: #{perceptual_loss.10} parent=5 // pred_check_branch
      %132 = sbr.rel (%p129) target = $region12
    $region11: #{perceptual_loss.10} parent=5 // pred_region
      %s133 = ssub.s32 %s9, 1
      // Predicated region
      $region13: #{perceptual_loss.10} parent=11 // pred_check
        %p134 = pneg %p70
      $region14: #{perceptual_loss.10} parent=11 // pred_check_branch
        %136 = sbr.rel (%p134) target = $region16
      $region15: #{perceptual_loss.10} parent=11 // pred_region
        _
      $region16: #{perceptual_loss.10} parent=11 // pred_fallthru
        _
      // Predicated region
      $region17: #{perceptual_loss.10} parent=11 // pred_check
        %p137 = pneg %p91
      $region18: #{perceptual_loss.10} parent=11 // pred_check_branch
        %139 = sbr.rel (%p137) target = $region20
      $region19: #{perceptual_loss.10} parent=11 // pred_region
        _
      $region20: #{perceptual_loss.10} parent=11 // pred_fallthru
        _
    $region12: #{perceptual_loss.10} parent=5 // pred_fallthru
      _
    %p140 = scmp.lt.s32.totalorder %s9, 4
    // Predicated region
    $region21: #{perceptual_loss.10} parent=5 // pred_check
      %p141 = pneg %p140
    $region22: #{perceptual_loss.10} parent=5 // pred_check_branch
      %143 = sbr.rel (%p141) target = $region24
    $region23: #{perceptual_loss.10} parent=5 // pred_region
      // Predicated region
      $region25: #{perceptual_loss.10} parent=23 // pred_check
        %p144 = pneg %p43
      $region26: #{perceptual_loss.10} parent=23 // pred_check_branch
        %146 = sbr.rel (%p144) target = $region28
      $region27: #{perceptual_loss.10} parent=23 // pred_region
        %s147 = smul.u32 32, %s17
        %p148 = scmp.lt.s32.totalorder %s16, 3
        %s149 = scalar_select %p148, %s16, 3
        %p150 = scmp.lt.s32.totalorder %s147, 31
        %s151 = scalar_select %p150, %s147, 31
        %s152 = smul.addr %s149, 32
        %s153 = sadd.s32 %s151, %s152
        %s154 = smul.addr %s153, 4
        %s155 = scalar_lea.vmem %s0, %s154
        %s156 = smul.u32 32, %s17
      $region28: #{perceptual_loss.10} parent=23 // pred_fallthru
        _
    $region24: #{perceptual_loss.10} parent=5 // pred_fallthru
      _
    %p157 = scmp.le.s32.totalorder 1, %s9
    %p158 = scmp.lt.s32.totalorder %s9, 5
    %p159 = pnand %p157, %p158
    %p160 = pneg %p159
    // Predicated region
    $region29: #{perceptual_loss.10} parent=5 // pred_check
      _
    $region30: #{perceptual_loss.10} parent=5 // pred_check_branch
      %162 = sbr.rel (%p159) target = $region32
    $region31: #{perceptual_loss.10} parent=5 // pred_region
      %s163 = ssub.s32 %s9, 1
      %s164 = smul.u32 32, %s19
      %p165 = scmp.lt.s32.totalorder %s18, 3
      %s166 = scalar_select %p165, %s18, 3
      %p167 = scmp.lt.s32.totalorder %s164, 31
      %s168 = scalar_select %p167, %s164, 31
      %s169 = smul.addr %s166, 32
      %s170 = sadd.s32 %s168, %s169
      %s171 = smul.addr %s170, 4
      %s172 = scalar_lea.vmem %s0, %s171
      %p173 = pneg %p49
      %p174 = pneg %p46
      %p175 = pneg %p70
      %p176 = pneg %p67
      %p177 = pneg %p91
      %p178 = pneg %p88
      %p179 = pneg %p119
      %p180 = pneg %p116
      %s181 = smul.u32 32, %s19
      %p182 = scmp.lt.s32.totalorder %s18, 3
      %s183 = scalar_select %p182, %s18, 3
      %p184 = scmp.lt.s32.totalorder %s181, 31
      %s185 = scalar_select %p184, %s181, 31
      %s186 = smul.addr %s183, 32
      %s187 = sadd.s32 %s185, %s186
      %s188 = smul.addr %s187, 4
      %s189 = scalar_lea.vmem %s3, %s188
      %s190 = smul.u32 32, %s19
      %p191 = scmp.lt.s32.totalorder %s18, 3
      %s192 = scalar_select %p191, %s18, 3
      %p193 = scmp.lt.s32.totalorder %s190, 31
      %s194 = scalar_select %p193, %s190, 31
      %s195 = smul.addr %s192, 32
      %s196 = sadd.s32 %s194, %s195
      %s197 = smul.addr %s196, 4
      %s198 = scalar_lea.vmem %s0, %s197
      %s199 = smul.u32 32, %s19
      %s200 = smul.u32 32, %s19
      %p201 = scmp.lt.s32.totalorder %s18, 3
      %s202 = scalar_select %p201, %s18, 3
      %p203 = scmp.lt.s32.totalorder %s200, 31
      %s204 = scalar_select %p203, %s200, 31
      %s205 = smul.addr %s202, 32
      %s206 = sadd.s32 %s204, %s205
      %s207 = smul.addr %s206, 4
      %s208 = scalar_lea.vmem %s3, %s207
      %s209 = smul.u32 32, %s19
      %v211 = vld [vmem:[%s198] sm:$0xf]
      %v212 = vld [vmem:[%s198 + $0x4] sm:$0xf]
      %v213 = vld [vmem:[%s198 + $0x8] sm:$0xf]
      %v214 = vld [vmem:[%s198 + $0xc] sm:$0xf]
      %v215 = vld [vmem:[%s198 + $0x10] sm:$0xf]
      %v216 = vld [vmem:[%s198 + $0x14] sm:$0xf]
      %v217 = vld [vmem:[%s198 + $0x18] sm:$0xf]
      %v218 = vld [vmem:[%s198 + $0x1c] sm:$0xf]
      %v219 = vld [vmem:[%s198 + $0x20] sm:$0xf]
      %v220 = vld [vmem:[%s198 + $0x24] sm:$0xf]
      %v221 = vld [vmem:[%s198 + $0x28] sm:$0xf]
      %v222 = vld [vmem:[%s198 + $0x2c] sm:$0xf]
      %v223 = vld [vmem:[%s198 + $0x30] sm:$0xf]
      %v224 = vld [vmem:[%s198 + $0x34] sm:$0xf]
      %v225 = vld [vmem:[%s198 + $0x38] sm:$0xf]
      %v226 = vld [vmem:[%s198 + $0x3c] sm:$0xf]
      %v227 = vld [vmem:[%s198 + $0x40] sm:$0xf]
      %v228 = vld [vmem:[%s198 + $0x44] sm:$0xf]
      %v229 = vld [vmem:[%s198 + $0x48] sm:$0xf]
      %v230 = vld [vmem:[%s198 + $0x4c] sm:$0xf]
      %v231 = vld [vmem:[%s198 + $0x50] sm:$0xf]
      %v232 = vld [vmem:[%s198 + $0x54] sm:$0xf]
      %v233 = vld [vmem:[%s198 + $0x58] sm:$0xf]
      %v234 = vld [vmem:[%s198 + $0x5c] sm:$0xf]
      %v235 = vld [vmem:[%s198 + $0x60] sm:$0xf]
      %v236 = vld [vmem:[%s198 + $0x64] sm:$0xf]
      %v237 = vld [vmem:[%s198 + $0x68] sm:$0xf]
      %v238 = vld [vmem:[%s198 + $0x6c] sm:$0xf]
      %v239 = vld [vmem:[%s198 + $0x70] sm:$0xf]
      %v240 = vld [vmem:[%s198 + $0x74] sm:$0xf]
      %v241 = vld [vmem:[%s198 + $0x78] sm:$0xf]
      %v242 = vld [vmem:[%s198 + $0x7c] sm:$0xf]
      %v243 = vld [vmem:[%s1] sm:$0xf]
      %v244 = vld [vmem:[%s1 + $0x4] sm:$0xf]
      %v245 = vld [vmem:[%s1 + $0x8] sm:$0xf]
      %v246 = vld [vmem:[%s1 + $0xc] sm:$0x3]
      %v247 = vld [vmem:[%s2] sm:$0x1]
      %v249 = vlaneseq
      %v250 = vshrl.u32 %v249, 7
      %v251 = vsub.s32 0, %v250
      %v252 = vrot.slane %v247, %v251
      %v286 = vunpack.c.l.b16 %v211
      %v287 = vunpack.c.l.b16 %v212
      %v288 = vunpack.c.l.b16 %v213
      %v289 = vunpack.c.l.b16 %v214
      %v290 = vunpack.c.l.b16 %v215
      %v291 = vunpack.c.l.b16 %v216
      %v292 = vunpack.c.l.b16 %v217
      %v293 = vunpack.c.l.b16 %v218
      %v294 = vunpack.c.l.b16 %v219
      %v295 = vunpack.c.l.b16 %v220
      %v296 = vunpack.c.l.b16 %v221
      %v297 = vunpack.c.l.b16 %v222
      %v298 = vunpack.c.l.b16 %v223
      %v299 = vunpack.c.l.b16 %v224
      %v300 = vunpack.c.l.b16 %v225
      %v301 = vunpack.c.l.b16 %v226
      %v302 = vunpack.c.l.b16 %v227
      %v303 = vunpack.c.l.b16 %v228
      %v304 = vunpack.c.l.b16 %v229
      %v305 = vunpack.c.l.b16 %v230
      %v306 = vunpack.c.l.b16 %v231
      %v307 = vunpack.c.l.b16 %v232
      %v308 = vunpack.c.l.b16 %v233
      %v309 = vunpack.c.l.b16 %v234
      %v310 = vunpack.c.l.b16 %v235
      %v311 = vunpack.c.l.b16 %v236
      %v312 = vunpack.c.l.b16 %v237
      %v313 = vunpack.c.l.b16 %v238
      %v314 = vunpack.c.l.b16 %v239
      %v315 = vunpack.c.l.b16 %v240
      %v316 = vunpack.c.l.b16 %v241
      %v317 = vunpack.c.l.b16 %v242
      %v318 = vpack.c.b16 %v287, %v286
      %v319 = vpack.c.b16 %v289, %v288
      %v320 = vpack.c.b16 %v291, %v290
      %v321 = vpack.c.b16 %v293, %v292
      %v322 = vpack.c.b16 %v295, %v294
      %v323 = vpack.c.b16 %v297, %v296
      %v324 = vpack.c.b16 %v299, %v298
      %v325 = vpack.c.b16 %v301, %v300
      %v326 = vpack.c.b16 %v303, %v302
      %v327 = vpack.c.b16 %v305, %v304
      %v328 = vpack.c.b16 %v307, %v306
      %v329 = vpack.c.b16 %v309, %v308
      %v330 = vpack.c.b16 %v311, %v310
      %v331 = vpack.c.b16 %v313, %v312
      %v332 = vpack.c.b16 %v315, %v314
      %v333 = vpack.c.b16 %v317, %v316
      %v338 = vunpack.c.l.b16 %v243
      %v339 = vunpack.c.l.b16 %v244
      %v340 = vunpack.c.l.b16 %v245
      %v341 = vunpack.c.l.b16 %v246
      %v342 = vpack.c.b16 %v339, %v338
      %v343 = vpack.c.b16 %v341, %v340
      %vm345 = vcmask 220160
      %v347 = vsel %vm345, %v318, 0
      %v350 = vsel %vm345, %v319, 0
      %v353 = vsel %vm345, %v320, 0
      %v356 = vsel %vm345, %v321, 0
      %v359 = vsel %vm345, %v322, 0
      %v362 = vsel %vm345, %v323, 0
      %v365 = vsel %vm345, %v324, 0
      %v368 = vsel %vm345, %v325, 0
      %v371 = vsel %vm345, %v326, 0
      %v374 = vsel %vm345, %v327, 0
      %v377 = vsel %vm345, %v328, 0
      %v380 = vsel %vm345, %v329, 0
      %v383 = vsel %vm345, %v330, 0
      %v386 = vsel %vm345, %v331, 0
      %v389 = vsel %vm345, %v332, 0
      %v392 = vsel %vm345, %v333, 0
      %vm394 = vcmask 1044480
      %vm395 = vcmask 1045504
      %v396 = vsel %vm394, 4294967295, 65535
      %v397 = vsel %vm395, %v396, 0
      %v399 = vand.u32 %v343, %v397
      %401 = vmatprep.subr.bf16.mxu0 0
      %402 = vmatpush1.bf16.msra.mxu0 %v342
      %403 = vmatprep.subr.bf16.mxu0 0
      %404 = vmatpush1.bf16.msra.mxu0 %v399
      %405 = vmatprep.subr.bf16.mxu0 0
      %406 = vmatpush1.bf16.msra.mxu0 0
      %407 = vmatprep.subr.bf16.mxu0 0
      %408 = vmatpush1.bf16.msra.mxu0 0
      %409 = vmatprep.subr.bf16.mxu0 0
      %410 = vmatpush1.bf16.msra.mxu0 0
      %411 = vmatprep.subr.bf16.mxu0 0
      %412 = vmatpush1.bf16.msra.mxu0 0
      %413 = vmatprep.subr.bf16.mxu0 0
      %414 = vmatpush1.bf16.msra.mxu0 0
      %415 = vmatprep.subr.bf16.mxu0 0
      %416 = vmatpush1.bf16.msra.mxu0 0
      %417 = vmatprep.subr.bf16.mxu0 0
      %418 = vmatpush1.bf16.msra.mxu0 0
      %419 = vmatprep.subr.bf16.mxu0 0
      %420 = vmatpush1.bf16.msra.mxu0 0
      %421 = vmatprep.subr.bf16.mxu0 0
      %422 = vmatpush1.bf16.msra.mxu0 0
      %423 = vmatprep.subr.bf16.mxu0 0
      %424 = vmatpush1.bf16.msra.mxu0 0
      %425 = vmatprep.subr.bf16.mxu0 0
      %426 = vmatpush1.bf16.msra.mxu0 0
      %427 = vmatprep.subr.bf16.mxu0 0
      %428 = vmatpush1.bf16.msra.mxu0 0
      %429 = vmatprep.subr.bf16.mxu0 0
      %430 = vmatpush1.bf16.msra.mxu0 0
      %431 = vmatprep.subr.bf16.mxu0 0
      %432 = vmatpush1.bf16.msra.mxu0 0
      %433 = vmatprep.mubr.bf16.mxu0 0
      %434 = vmatmul.mubr.bf16.gmra.mrb[0].mxu0 %v347
      %v435 = vpop.f32.mrb[0].mxu0
      %v436 = vadd.f32 %v252, %v435
      %v437 = vpop.f32.mrb[0].mxu0
      %v438 = vpop.f32.mrb[0].mxu0
      %v439 = vadd.f32 %v252, %v438
      %v440 = vpop.f32.mrb[0].mxu0
      %441 = vmatprep.mubr.bf16.mxu0 0
      %442 = vmatmul.mubr.bf16.gmra.mrb[0].mxu0 %v350
      %v443 = vpop.f32.mrb[0].mxu0
      %v444 = vadd.f32 %v252, %v443
      %v445 = vpop.f32.mrb[0].mxu0
      %v446 = vpop.f32.mrb[0].mxu0
      %v447 = vadd.f32 %v252, %v446
      %v448 = vpop.f32.mrb[0].mxu0
      %449 = vmatprep.mubr.bf16.mxu0 0
      %450 = vmatmul.mubr.bf16.gmra.mrb[0].mxu0 %v353
      %v451 = vpop.f32.mrb[0].mxu0
      %v452 = vadd.f32 %v252, %v451
      %v453 = vpop.f32.mrb[0].mxu0
      %v454 = vpop.f32.mrb[0].mxu0
      %v455 = vadd.f32 %v252, %v454
      %v456 = vpop.f32.mrb[0].mxu0
      %457 = vmatprep.mubr.bf16.mxu0 0
      %458 = vmatmul.mubr.bf16.gmra.mrb[0].mxu0 %v356
      %v459 = vpop.f32.mrb[0].mxu0
      %v460 = vadd.f32 %v252, %v459
      %v461 = vpop.f32.mrb[0].mxu0
      %v462 = vpop.f32.mrb[0].mxu0
      %v463 = vadd.f32 %v252, %v462
      %v464 = vpop.f32.mrb[0].mxu0
      %465 = vmatprep.mubr.bf16.mxu0 0
      %466 = vmatmul.mubr.bf16.gmra.mrb[0].mxu0 %v359
      %v467 = vpop.f32.mrb[0].mxu0
      %v468 = vadd.f32 %v252, %v467
      %v469 = vpop.f32.mrb[0].mxu0
      %v470 = vpop.f32.mrb[0].mxu0
      %v471 = vadd.f32 %v252, %v470
      %v472 = vpop.f32.mrb[0].mxu0
      %473 = vmatprep.mubr.bf16.mxu0 0
      %474 = vmatmul.mubr.bf16.gmra.mrb[0].mxu0 %v362
      %v475 = vpop.f32.mrb[0].mxu0
      %v476 = vadd.f32 %v252, %v475
      %v477 = vpop.f32.mrb[0].mxu0
      %v478 = vpop.f32.mrb[0].mxu0
      %v479 = vadd.f32 %v252, %v478
      %v480 = vpop.f32.mrb[0].mxu0
      %481 = vmatprep.mubr.bf16.mxu0 0
      %482 = vmatmul.mubr.bf16.gmra.mrb[0].mxu0 %v365
      %v483 = vpop.f32.mrb[0].mxu0
      %v484 = vadd.f32 %v252, %v483
      %v485 = vpop.f32.mrb[0].mxu0
      %v486 = vpop.f32.mrb[0].mxu0
      %v487 = vadd.f32 %v252, %v486
      %v488 = vpop.f32.mrb[0].mxu0
      %489 = vmatprep.mubr.bf16.mxu0 0
      %490 = vmatmul.mubr.bf16.gmra.mrb[0].mxu0 %v368
      %v491 = vpop.f32.mrb[0].mxu0
      %v492 = vadd.f32 %v252, %v491
      %v493 = vpop.f32.mrb[0].mxu0
      %v494 = vpop.f32.mrb[0].mxu0
      %v495 = vadd.f32 %v252, %v494
      %v496 = vpop.f32.mrb[0].mxu0
      %497 = vmatprep.mubr.bf16.mxu0 0
      %498 = vmatmul.mubr.bf16.gmra.mrb[0].mxu0 %v371
      %v499 = vpop.f32.mrb[0].mxu0
      %v500 = vadd.f32 %v252, %v499
      %v501 = vpop.f32.mrb[0].mxu0
      %v502 = vpop.f32.mrb[0].mxu0
      %v503 = vadd.f32 %v252, %v502
      %v504 = vpop.f32.mrb[0].mxu0
      %505 = vmatprep.mubr.bf16.mxu0 0
      %506 = vmatmul.mubr.bf16.gmra.mrb[0].mxu0 %v374
      %v507 = vpop.f32.mrb[0].mxu0
      %v508 = vadd.f32 %v252, %v507
      %v509 = vpop.f32.mrb[0].mxu0
      %v510 = vpop.f32.mrb[0].mxu0
      %v511 = vadd.f32 %v252, %v510
      %v512 = vpop.f32.mrb[0].mxu0
      %513 = vmatprep.mubr.bf16.mxu0 0
      %514 = vmatmul.mubr.bf16.gmra.mrb[0].mxu0 %v377
      %v515 = vpop.f32.mrb[0].mxu0
      %v516 = vadd.f32 %v252, %v515
      %v517 = vpop.f32.mrb[0].mxu0
      %v518 = vpop.f32.mrb[0].mxu0
      %v519 = vadd.f32 %v252, %v518
      %v520 = vpop.f32.mrb[0].mxu0
      %521 = vmatprep.mubr.bf16.mxu0 0
      %522 = vmatmul.mubr.bf16.gmra.mrb[0].mxu0 %v380
      %v523 = vpop.f32.mrb[0].mxu0
      %v524 = vadd.f32 %v252, %v523
      %v525 = vpop.f32.mrb[0].mxu0
      %v526 = vpop.f32.mrb[0].mxu0
      %v527 = vadd.f32 %v252, %v526
      %v528 = vpop.f32.mrb[0].mxu0
      %529 = vmatprep.mubr.bf16.mxu0 0
      %530 = vmatmul.mubr.bf16.gmra.mrb[0].mxu0 %v383
      %v531 = vpop.f32.mrb[0].mxu0
      %v532 = vadd.f32 %v252, %v531
      %v533 = vpop.f32.mrb[0].mxu0
      %v534 = vpop.f32.mrb[0].mxu0
      %v535 = vadd.f32 %v252, %v534
      %v536 = vpop.f32.mrb[0].mxu0
      %537 = vmatprep.mubr.bf16.mxu0 0
      %538 = vmatmul.mubr.bf16.gmra.mrb[0].mxu0 %v386
      %v539 = vpop.f32.mrb[0].mxu0
      %v540 = vadd.f32 %v252, %v539
      %v541 = vpop.f32.mrb[0].mxu0
      %v542 = vpop.f32.mrb[0].mxu0
      %v543 = vadd.f32 %v252, %v542
      %v544 = vpop.f32.mrb[0].mxu0
      %545 = vmatprep.mubr.bf16.mxu0 0
      %546 = vmatmul.mubr.bf16.gmra.mrb[0].mxu0 %v389
      %v547 = vpop.f32.mrb[0].mxu0
      %v548 = vadd.f32 %v252, %v547
      %v549 = vpop.f32.mrb[0].mxu0
      %v550 = vpop.f32.mrb[0].mxu0
      %v551 = vadd.f32 %v252, %v550
      %v552 = vpop.f32.mrb[0].mxu0
      %553 = vmatprep.mubr.bf16.mxu0 0
      %554 = vmatmul.mubr.bf16.gmra.mrb[0].mxu0 %v392
      %v555 = vpop.f32.mrb[0].mxu0
      %v556 = vadd.f32 %v252, %v555
      %v557 = vpop.f32.mrb[0].mxu0
      %v558 = vpop.f32.mrb[0].mxu0
      %v559 = vadd.f32 %v252, %v558
      %v560 = vpop.f32.mrb[0].mxu0
      %561 = vdwg.mxu0
      %v562 = vmax.f32 %v436, 0.0
      %v563 = vmax.f32 %v439, 0.0
      %v564 = vmax.f32 %v444, 0.0
      %v565 = vmax.f32 %v447, 0.0
      %v566 = vmax.f32 %v452, 0.0
      %v567 = vmax.f32 %v455, 0.0
      %v568 = vmax.f32 %v460, 0.0
      %v569 = vmax.f32 %v463, 0.0
      %v570 = vmax.f32 %v468, 0.0
      %v571 = vmax.f32 %v471, 0.0
      %v572 = vmax.f32 %v476, 0.0
      %v573 = vmax.f32 %v479, 0.0
      %v574 = vmax.f32 %v484, 0.0
      %v575 = vmax.f32 %v487, 0.0
      %v576 = vmax.f32 %v492, 0.0
      %v577 = vmax.f32 %v495, 0.0
      %v578 = vmax.f32 %v500, 0.0
      %v579 = vmax.f32 %v503, 0.0
      %v580 = vmax.f32 %v508, 0.0
      %v581 = vmax.f32 %v511, 0.0
      %v582 = vmax.f32 %v516, 0.0
      %v583 = vmax.f32 %v519, 0.0
      %v584 = vmax.f32 %v524, 0.0
      %v585 = vmax.f32 %v527, 0.0
      %v586 = vmax.f32 %v532, 0.0
      %v587 = vmax.f32 %v535, 0.0
      %v588 = vmax.f32 %v540, 0.0
      %v589 = vmax.f32 %v543, 0.0
      %v590 = vmax.f32 %v548, 0.0
      %v591 = vmax.f32 %v551, 0.0
      %v592 = vmax.f32 %v556, 0.0
      %v593 = vmax.f32 %v559, 0.0
      %v594 = vpack.c.bf16 %v563, %v562
      %v595 = vpack.c.bf16 %v565, %v564
      %v596 = vpack.c.bf16 %v567, %v566
      %v597 = vpack.c.bf16 %v569, %v568
      %v598 = vpack.c.bf16 %v571, %v570
      %v599 = vpack.c.bf16 %v573, %v572
      %v600 = vpack.c.bf16 %v575, %v574
      %v601 = vpack.c.bf16 %v577, %v576
      %v602 = vpack.c.bf16 %v579, %v578
      %v603 = vpack.c.bf16 %v581, %v580
      %v604 = vpack.c.bf16 %v583, %v582
      %v605 = vpack.c.bf16 %v585, %v584
      %v606 = vpack.c.bf16 %v587, %v586
      %v607 = vpack.c.bf16 %v589, %v588
      %v608 = vpack.c.bf16 %v591, %v590
      %v609 = vpack.c.bf16 %v593, %v592
      %v626 = vunpack.c.l.b16 %v594
      %v627 = vunpack.c.h.b16 %v594
      %v628 = vunpack.c.l.b16 %v595
      %v629 = vunpack.c.h.b16 %v595
      %v630 = vunpack.c.l.b16 %v596
      %v631 = vunpack.c.h.b16 %v596
      %v632 = vunpack.c.l.b16 %v597
      %v633 = vunpack.c.h.b16 %v597
      %v634 = vunpack.c.l.b16 %v598
      %v635 = vunpack.c.h.b16 %v598
      %v636 = vunpack.c.l.b16 %v599
      %v637 = vunpack.c.h.b16 %v599
      %v638 = vunpack.c.l.b16 %v600
      %v639 = vunpack.c.h.b16 %v600
      %v640 = vunpack.c.l.b16 %v601
      %v641 = vunpack.c.h.b16 %v601
      %v642 = vunpack.c.l.b16 %v602
      %v643 = vunpack.c.h.b16 %v602
      %v644 = vunpack.c.l.b16 %v603
      %v645 = vunpack.c.h.b16 %v603
      %v646 = vunpack.c.l.b16 %v604
      %v647 = vunpack.c.h.b16 %v604
      %v648 = vunpack.c.l.b16 %v605
      %v649 = vunpack.c.h.b16 %v605
      %v650 = vunpack.c.l.b16 %v606
      %v651 = vunpack.c.h.b16 %v606
      %v652 = vunpack.c.l.b16 %v607
      %v653 = vunpack.c.h.b16 %v607
      %v654 = vunpack.c.l.b16 %v608
      %v655 = vunpack.c.h.b16 %v608
      %v656 = vunpack.c.l.b16 %v609
      %v657 = vunpack.c.h.b16 %v609
      %v658 = vpack.c.b16 %v626, %v626
      %v659 = vpack.c.b16 %v627, %v627
      %v660 = vpack.c.b16 %v628, %v628
      %v661 = vpack.c.b16 %v629, %v629
      %v662 = vpack.c.b16 %v630, %v630
      %v663 = vpack.c.b16 %v631, %v631
      %v664 = vpack.c.b16 %v632, %v632
      %v665 = vpack.c.b16 %v633, %v633
      %v666 = vpack.c.b16 %v634, %v634
      %v667 = vpack.c.b16 %v635, %v635
      %v668 = vpack.c.b16 %v636, %v636
      %v669 = vpack.c.b16 %v637, %v637
      %v670 = vpack.c.b16 %v638, %v638
      %v671 = vpack.c.b16 %v639, %v639
      %v672 = vpack.c.b16 %v640, %v640
      %v673 = vpack.c.b16 %v641, %v641
      %v674 = vpack.c.b16 %v642, %v642
      %v675 = vpack.c.b16 %v643, %v643
      %v676 = vpack.c.b16 %v644, %v644
      %v677 = vpack.c.b16 %v645, %v645
      %v678 = vpack.c.b16 %v646, %v646
      %v679 = vpack.c.b16 %v647, %v647
      %v680 = vpack.c.b16 %v648, %v648
      %v681 = vpack.c.b16 %v649, %v649
      %v682 = vpack.c.b16 %v650, %v650
      %v683 = vpack.c.b16 %v651, %v651
      %v684 = vpack.c.b16 %v652, %v652
      %v685 = vpack.c.b16 %v653, %v653
      %v686 = vpack.c.b16 %v654, %v654
      %v687 = vpack.c.b16 %v655, %v655
      %v688 = vpack.c.b16 %v656, %v656
      %v689 = vpack.c.b16 %v657, %v657
      %vm722 = vcmask 519168
      %723 = vst.msk [vmem:[%s208] sm:$0xf] %vm722, %v658
      %724 = vst.msk [vmem:[%s208 + $0x4] sm:$0xf] %vm722, %v659
      %725 = vst.msk [vmem:[%s208 + $0x8] sm:$0xf] %vm722, %v660
      %726 = vst.msk [vmem:[%s208 + $0xc] sm:$0xf] %vm722, %v661
      %727 = vst.msk [vmem:[%s208 + $0x10] sm:$0xf] %vm722, %v662
      %728 = vst.msk [vmem:[%s208 + $0x14] sm:$0xf] %vm722, %v663
      %729 = vst.msk [vmem:[%s208 + $0x18] sm:$0xf] %vm722, %v664
      %730 = vst.msk [vmem:[%s208 + $0x1c] sm:$0xf] %vm722, %v665
      %731 = vst.msk [vmem:[%s208 + $0x20] sm:$0xf] %vm722, %v666
      %732 = vst.msk [vmem:[%s208 + $0x24] sm:$0xf] %vm722, %v667
      %733 = vst.msk [vmem:[%s208 + $0x28] sm:$0xf] %vm722, %v668
      %734 = vst.msk [vmem:[%s208 + $0x2c] sm:$0xf] %vm722, %v669
      %735 = vst.msk [vmem:[%s208 + $0x30] sm:$0xf] %vm722, %v670
      %736 = vst.msk [vmem:[%s208 + $0x34] sm:$0xf] %vm722, %v671
      %737 = vst.msk [vmem:[%s208 + $0x38] sm:$0xf] %vm722, %v672
      %738 = vst.msk [vmem:[%s208 + $0x3c] sm:$0xf] %vm722, %v673
      %739 = vst.msk [vmem:[%s208 + $0x40] sm:$0xf] %vm722, %v674
      %740 = vst.msk [vmem:[%s208 + $0x44] sm:$0xf] %vm722, %v675
      %741 = vst.msk [vmem:[%s208 + $0x48] sm:$0xf] %vm722, %v676
      %742 = vst.msk [vmem:[%s208 + $0x4c] sm:$0xf] %vm722, %v677
      %743 = vst.msk [vmem:[%s208 + $0x50] sm:$0xf] %vm722, %v678
      %744 = vst.msk [vmem:[%s208 + $0x54] sm:$0xf] %vm722, %v679
      %745 = vst.msk [vmem:[%s208 + $0x58] sm:$0xf] %vm722, %v680
      %746 = vst.msk [vmem:[%s208 + $0x5c] sm:$0xf] %vm722, %v681
      %747 = vst.msk [vmem:[%s208 + $0x60] sm:$0xf] %vm722, %v682
      %748 = vst.msk [vmem:[%s208 + $0x64] sm:$0xf] %vm722, %v683
      %749 = vst.msk [vmem:[%s208 + $0x68] sm:$0xf] %vm722, %v684
      %750 = vst.msk [vmem:[%s208 + $0x6c] sm:$0xf] %vm722, %v685
      %751 = vst.msk [vmem:[%s208 + $0x70] sm:$0xf] %vm722, %v686
      %752 = vst.msk [vmem:[%s208 + $0x74] sm:$0xf] %vm722, %v687
      %753 = vst.msk [vmem:[%s208 + $0x78] sm:$0xf] %vm722, %v688
      %754 = vst.msk [vmem:[%s208 + $0x7c] sm:$0xf] %vm722, %v689
      %s755 = smul.u32 32, %s19
      %p756 = scmp.lt.s32.totalorder %s18, 3
      %s757 = scalar_select %p756, %s18, 3
      %p758 = scmp.lt.s32.totalorder %s755, 31
      %s759 = scalar_select %p758, %s755, 31
      %s760 = smul.addr %s757, 32
      %s761 = sadd.s32 %s759, %s760
      %s762 = smul.addr %s761, 4
      %s763 = scalar_lea.vmem %s3, %s762
      // Predicated region
      $region33: #{perceptual_loss.10} parent=31 // pred_check
        %p764 = pneg %p116
      $region34: #{perceptual_loss.10} parent=31 // pred_check_branch
        %766 = sbr.rel (%p764) target = $region36
      $region35: #{perceptual_loss.10} parent=31 // pred_region
        %s767 = smul.u32 32, %s19
      $region36: #{perceptual_loss.10} parent=31 // pred_fallthru
        _
    $region32: #{perceptual_loss.10} parent=5 // pred_fallthru
      _
    %p768 = scmp.le.s32.totalorder 2, %s9
    // Predicated region
    $region37: #{perceptual_loss.10} parent=5 // pred_check
      %p769 = pneg %p768
    $region38: #{perceptual_loss.10} parent=5 // pred_check_branch
      %771 = sbr.rel (%p769) target = $region40
    $region39: #{perceptual_loss.10} parent=5 // pred_region
      %s772 = ssub.s32 %s9, 2
      // Predicated region
      $region41: #{perceptual_loss.10} parent=39 // pred_check
        %p773 = pneg %p122
      $region42: #{perceptual_loss.10} parent=39 // pred_check_branch
        %775 = sbr.rel (%p773) target = $region44
      $region43: #{perceptual_loss.10} parent=39 // pred_region
        %s776 = smul.u32 32, %s21
        %p777 = scmp.lt.s32.totalorder %s20, 3
        %s778 = scalar_select %p777, %s20, 3
        %p779 = scmp.lt.s32.totalorder %s776, 31
        %s780 = scalar_select %p779, %s776, 31
        %s781 = smul.addr %s778, 32
        %s782 = sadd.s32 %s780, %s781
        %s783 = smul.addr %s782, 4
        %s784 = scalar_lea.vmem %s3, %s783
      $region44: #{perceptual_loss.10} parent=39 // pred_fallthru
        _
    $region40: #{perceptual_loss.10} parent=5 // pred_fallthru
      _
  $region6: #{perceptual_loss.10} parent=0 // loop_footer
    %s13 = sadd.s32 1, %s9
  $region7: #{perceptual_loss.10} parent=0 // loop_footer_branch
    %8 = sbr.rel target = $region3
  $region8: #{perceptual_loss.10} parent=0 // loop_exit
    _

// kernel: perceptual_loss.11
$region0: #{perceptual_loss.11}
  #allocation0 [shape = 'u32[]', space=smem, size = 0x4, offset = 0x4, fixed_abs, tag = 'smem constant byte address 0x4 - core index']
  #allocation1 [shape = 'u32[144,128]{1,0:T(1,128)}', space=vmem, size = 0x12000, scoped, tag = 'internal scratch']
  %s0 = inlined_call_operand.vmem [shape: bf16[4,256,576], index: 0, kind: input, shape index: {}]
  %s1 = inlined_call_operand.vmem [shape: bf16[576,64], index: 1, kind: input, shape index: {}]
  %s2 = inlined_call_operand.vmem [shape: f32[1,64], index: 2, kind: input, shape index: {}]
  %s3 = inlined_call_operand.vmem [shape: bf16[4,256,64], index: 3, kind: output, shape index: {}]
  %s4 = sld [smem:[#allocation0]]
  $region45: #{perceptual_loss.11} parent=0
    _
  %s6 = ssub.s32 1, %s4
  %s7 = scalar_select 0, %s6, %s4
  loop: start=0, step=1, limit=6
  $region2: #{perceptual_loss.11} parent=0 // loop_pre_header
    _
  $region3: #{perceptual_loss.11} parent=0 // loop_header
    %s9 = sphi 0, %s13
    %p10 = scmp.ge.s32.totalorder %s9, 6
    %s16 = sphi 0, %s28
    %s17 = sphi 0, %s24
    %s18 = sphi 0, %s16
    %s19 = sphi 0, %s17
    %s20 = sphi 0, %s18
    %s21 = sphi 0, %s19
    %s33 = sphi 0, %s35
    %s36 = sphi 0, %s33
    %s37 = sphi 0, %s36
    %s53 = sphi 0, %s37
    %s57 = sphi 0, %s57
    %s59 = sphi 0, %s57
    %s60 = sphi 0, %s59
    %s74 = sphi 0, %s60
    %s78 = sphi 0, %s78
    %s80 = sphi 0, %s78
    %s81 = sphi 0, %s80
    %s95 = sphi 0, %s81
    %s103 = sphi 0, %s105
    %s106 = sphi 0, %s103
    %s107 = sphi 0, %s106
    %s123 = sphi 0, %s107
  $region4: #{perceptual_loss.11} parent=0 // loop_header_branch
    %12 = sbr.rel (%p10) target = $region8
  $region5: #{perceptual_loss.11} parent=0 // loop_body
    %s14 = ssub.s32 %s9, 1
    %s15 = ssub.s32 %s9, 2
    %s22 = sadd.s32 1, %s17
    %p23 = scmp.ge.s32.totalorder %s22, 1
    %s24 = scalar_select %p23, 0, %s22
    %s25 = sadd.s32 1, %s16
    %s26 = scalar_select %p23, %s25, %s16
    %p27 = scmp.ge.s32.totalorder %s26, 4
    %s28 = scalar_select %p27, 0, %s26
    %s29 = ssub.s32 %s16, %s28
    %s30 = ssub.s32 %s17, %s24
    %s31 = sor.u32 %s29, %s30
    %p32 = scmp.eq.s32.totalorder %s31, 0
    %s34 = sadd.s32 %s33, 1
    %s35 = scalar_select %p32, %s33, %s34
    %p38 = pneg %p32
    %p39 = scmp.eq.s32.totalorder %s9, 3
    %p40 = por %p38, %p39
    %p41 = scmp.ne.s32.totalorder %s33, %s36
    %p42 = scmp.eq.s32.totalorder %s9, 0
    %p43 = por %p41, %p42
    %p44 = scmp.ne.s32.totalorder %s33, %s36
    %p45 = scmp.eq.s32.totalorder %s14, 3
    %p46 = por %p44, %p45
    %p47 = scmp.ne.s32.totalorder %s36, %s37
    %p48 = scmp.eq.s32.totalorder %s14, 0
    %p49 = por %p47, %p48
    %p50 = scmp.ne.s32.totalorder %s36, %s37
    %p51 = scmp.eq.s32.totalorder %s15, 3
    %p52 = por %p50, %p51
    %p54 = scmp.ne.s32.totalorder %s37, %s53
    %p55 = scmp.eq.s32.totalorder %s15, 0
    %p56 = por %p54, %p55
    %s58 = sadd.s32 %s57, 1
    %p61 = scmp.eq.s32.totalorder %s9, 3
    %p62 = scmp.ne.s32.totalorder %s57, %s59
    %p63 = scmp.eq.s32.totalorder %s9, 0
    %p64 = por %p62, %p63
    %p65 = scmp.ne.s32.totalorder %s57, %s59
    %p66 = scmp.eq.s32.totalorder %s14, 3
    %p67 = por %p65, %p66
    %p68 = scmp.ne.s32.totalorder %s59, %s60
    %p69 = scmp.eq.s32.totalorder %s14, 0
    %p70 = por %p68, %p69
    %p71 = scmp.ne.s32.totalorder %s59, %s60
    %p72 = scmp.eq.s32.totalorder %s15, 3
    %p73 = por %p71, %p72
    %p75 = scmp.ne.s32.totalorder %s60, %s74
    %p76 = scmp.eq.s32.totalorder %s15, 0
    %p77 = por %p75, %p76
    %s79 = sadd.s32 %s78, 1
    %p82 = scmp.eq.s32.totalorder %s9, 3
    %p83 = scmp.ne.s32.totalorder %s78, %s80
    %p84 = scmp.eq.s32.totalorder %s9, 0
    %p85 = por %p83, %p84
    %p86 = scmp.ne.s32.totalorder %s78, %s80
    %p87 = scmp.eq.s32.totalorder %s14, 3
    %p88 = por %p86, %p87
    %p89 = scmp.ne.s32.totalorder %s80, %s81
    %p90 = scmp.eq.s32.totalorder %s14, 0
    %p91 = por %p89, %p90
    %p92 = scmp.ne.s32.totalorder %s80, %s81
    %p93 = scmp.eq.s32.totalorder %s15, 3
    %p94 = por %p92, %p93
    %p96 = scmp.ne.s32.totalorder %s81, %s95
    %p97 = scmp.eq.s32.totalorder %s15, 0
    %p98 = por %p96, %p97
    %s99 = ssub.s32 %s16, %s28
    %s100 = ssub.s32 %s17, %s24
    %s101 = sor.u32 %s99, %s100
    %p102 = scmp.eq.s32.totalorder %s101, 0
    %s104 = sadd.s32 %s103, 1
    %s105 = scalar_select %p102, %s103, %s104
    %p108 = pneg %p102
    %p109 = scmp.eq.s32.totalorder %s9, 3
    %p110 = por %p108, %p109
    %p111 = scmp.ne.s32.totalorder %s103, %s106
    %p112 = scmp.eq.s32.totalorder %s9, 0
    %p113 = por %p111, %p112
    %p114 = scmp.ne.s32.totalorder %s103, %s106
    %p115 = scmp.eq.s32.totalorder %s14, 3
    %p116 = por %p114, %p115
    %p117 = scmp.ne.s32.totalorder %s106, %s107
    %p118 = scmp.eq.s32.totalorder %s14, 0
    %p119 = por %p117, %p118
    %p120 = scmp.ne.s32.totalorder %s106, %s107
    %p121 = scmp.eq.s32.totalorder %s15, 3
    %p122 = por %p120, %p121
    %p124 = scmp.ne.s32.totalorder %s107, %s123
    %p125 = scmp.eq.s32.totalorder %s15, 0
    %p126 = por %p124, %p125
    %p127 = scmp.le.s32.totalorder 1, %s9
    %p128 = scmp.lt.s32.totalorder %s9, 5
    %p129 = pnand %p127, %p128
    %p130 = pneg %p129
    // Predicated region
    $region9: #{perceptual_loss.11} parent=5 // pred_check
      _
    $region10: #{perceptual_loss.11} parent=5 // pred_check_branch
      %132 = sbr.rel (%p129) target = $region12
    $region11: #{perceptual_loss.11} parent=5 // pred_region
      %s133 = ssub.s32 %s9, 1
      // Predicated region
      $region13: #{perceptual_loss.11} parent=11 // pred_check
        %p134 = pneg %p70
      $region14: #{perceptual_loss.11} parent=11 // pred_check_branch
        %136 = sbr.rel (%p134) target = $region16
      $region15: #{perceptual_loss.11} parent=11 // pred_region
        _
      $region16: #{perceptual_loss.11} parent=11 // pred_fallthru
        _
      // Predicated region
      $region17: #{perceptual_loss.11} parent=11 // pred_check
        %p137 = pneg %p91
      $region18: #{perceptual_loss.11} parent=11 // pred_check_branch
        %139 = sbr.rel (%p137) target = $region20
      $region19: #{perceptual_loss.11} parent=11 // pred_region
        _
      $region20: #{perceptual_loss.11} parent=11 // pred_fallthru
        _
    $region12: #{perceptual_loss.11} parent=5 // pred_fallthru
      _
    %p140 = scmp.lt.s32.totalorder %s9, 4
    // Predicated region
    $region21: #{perceptual_loss.11} parent=5 // pred_check
      %p141 = pneg %p140
    $region22: #{perceptual_loss.11} parent=5 // pred_check_branch
      %143 = sbr.rel (%p141) target = $region24
    $region23: #{perceptual_loss.11} parent=5 // pred_region
      // Predicated region
      $region25: #{perceptual_loss.11} parent=23 // pred_check
        %p144 = pneg %p43
      $region26: #{perceptual_loss.11} parent=23 // pred_check_branch
        %146 = sbr.rel (%p144) target = $region28
      $region27: #{perceptual_loss.11} parent=23 // pred_region
        %s147 = smul.u32 32, %s17
        %p148 = scmp.lt.s32.totalorder %s16, 3
        %s149 = scalar_select %p148, %s16, 3
        %p150 = scmp.lt.s32.totalorder %s147, 31
        %s151 = scalar_select %p150, %s147, 31
        %s152 = smul.addr %s151, 5
        %s153 = smul.addr %s149, 160
        %s154 = sadd.s32 %s152, %s153
        %s155 = smul.addr %s154, 4
        %s156 = scalar_lea.vmem %s0, %s155
        %s157 = smul.u32 32, %s17
      $region28: #{perceptual_loss.11} parent=23 // pred_fallthru
        _
    $region24: #{perceptual_loss.11} parent=5 // pred_fallthru
      _
    %p158 = scmp.le.s32.totalorder 1, %s9
    %p159 = scmp.lt.s32.totalorder %s9, 5
    %p160 = pnand %p158, %p159
    %p161 = pneg %p160
    // Predicated region
    $region29: #{perceptual_loss.11} parent=5 // pred_check
      _
    $region30: #{perceptual_loss.11} parent=5 // pred_check_branch
      %163 = sbr.rel (%p160) target = $region32
    $region31: #{perceptual_loss.11} parent=5 // pred_region
      %s164 = ssub.s32 %s9, 1
      %s165 = smul.u32 32, %s19
      %p166 = scmp.lt.s32.totalorder %s18, 3
      %s167 = scalar_select %p166, %s18, 3
      %p168 = scmp.lt.s32.totalorder %s165, 31
      %s169 = scalar_select %p168, %s165, 31
      %s170 = smul.addr %s169, 5
      %s171 = smul.addr %s167, 160
      %s172 = sadd.s32 %s170, %s171
      %s173 = smul.addr %s172, 4
      %s174 = scalar_lea.vmem %s0, %s173
      %p175 = pneg %p49
      %p176 = pneg %p46
      %p177 = pneg %p70
      %p178 = pneg %p67
      %p179 = pneg %p91
      %p180 = pneg %p88
      %p181 = pneg %p119
      %p182 = pneg %p116
      %s183 = smul.u32 32, %s19
      %p184 = scmp.lt.s32.totalorder %s18, 3
      %s185 = scalar_select %p184, %s18, 3
      %p186 = scmp.lt.s32.totalorder %s183, 31
      %s187 = scalar_select %p186, %s183, 31
      %s188 = smul.addr %s185, 32
      %s189 = sadd.s32 %s187, %s188
      %s190 = smul.addr %s189, 4
      %s191 = scalar_lea.vmem %s3, %s190
      %s192 = smul.u32 32, %s19
      %p193 = scmp.lt.s32.totalorder %s18, 3
      %s194 = scalar_select %p193, %s18, 3
      %p195 = scmp.lt.s32.totalorder %s192, 31
      %s196 = scalar_select %p195, %s192, 31
      %s197 = smul.addr %s196, 5
      %s198 = smul.addr %s194, 160
      %s199 = sadd.s32 %s197, %s198
      %s200 = smul.addr %s199, 4
      %s201 = scalar_lea.vmem %s0, %s200
      %s202 = smul.u32 32, %s19
      %s203 = smul.u32 32, %s19
      %p204 = scmp.lt.s32.totalorder %s18, 3
      %s205 = scalar_select %p204, %s18, 3
      %p206 = scmp.lt.s32.totalorder %s203, 31
      %s207 = scalar_select %p206, %s203, 31
      %s208 = smul.addr %s205, 32
      %s209 = sadd.s32 %s207, %s208
      %s210 = smul.addr %s209, 4
      %s211 = scalar_lea.vmem %s3, %s210
      %s212 = smul.u32 32, %s19
      %v214 = vld [vmem:[%s201] sm:$0xff]
      %v215 = vld [vmem:[%s201 + $0x8] sm:$0xff]
      %v216 = vld [vmem:[%s201 + $0x10] sm:$0xf]
      %v217 = vld [vmem:[%s201 + $0x14] sm:$0xff]
      %v218 = vld [vmem:[%s201 + $0x1c] sm:$0xff]
      %v219 = vld [vmem:[%s201 + $0x24] sm:$0xf]
      %v220 = vld [vmem:[%s201 + $0x28] sm:$0xff]
      %v221 = vld [vmem:[%s201 + $0x30] sm:$0xff]
      %v222 = vld [vmem:[%s201 + $0x38] sm:$0xf]
      %v223 = vld [vmem:[%s201 + $0x3c] sm:$0xff]
      %v224 = vld [vmem:[%s201 + $0x44] sm:$0xff]
      %v225 = vld [vmem:[%s201 + $0x4c] sm:$0xf]
      %v226 = vld [vmem:[%s201 + $0x50] sm:$0xff]
      %v227 = vld [vmem:[%s201 + $0x58] sm:$0xff]
      %v228 = vld [vmem:[%s201 + $0x60] sm:$0xf]
      %v229 = vld [vmem:[%s201 + $0x64] sm:$0xff]
      %v230 = vld [vmem:[%s201 + $0x6c] sm:$0xff]
      %v231 = vld [vmem:[%s201 + $0x74] sm:$0xf]
      %v232 = vld [vmem:[%s201 + $0x78] sm:$0xff]
      %v233 = vld [vmem:[%s201 + $0x80] sm:$0xff]
      %v234 = vld [vmem:[%s201 + $0x88] sm:$0xf]
      %v235 = vld [vmem:[%s201 + $0x8c] sm:$0xff]
      %v236 = vld [vmem:[%s201 + $0x94] sm:$0xff]
      %v237 = vld [vmem:[%s201 + $0x9c] sm:$0xf]
      %v238 = vld [vmem:[%s201 + $0xa0] sm:$0xff]
      %v239 = vld [vmem:[%s201 + $0xa8] sm:$0xff]
      %v240 = vld [vmem:[%s201 + $0xb0] sm:$0xf]
      %v241 = vld [vmem:[%s201 + $0xb4] sm:$0xff]
      %v242 = vld [vmem:[%s201 + $0xbc] sm:$0xff]
      %v243 = vld [vmem:[%s201 + $0xc4] sm:$0xf]
      %v244 = vld [vmem:[%s201 + $0xc8] sm:$0xff]
      %v245 = vld [vmem:[%s201 + $0xd0] sm:$0xff]
      %v246 = vld [vmem:[%s201 + $0xd8] sm:$0xf]
      %v247 = vld [vmem:[%s201 + $0xdc] sm:$0xff]
      %v248 = vld [vmem:[%s201 + $0xe4] sm:$0xff]
      %v249 = vld [vmem:[%s201 + $0xec] sm:$0xf]
      %v250 = vld [vmem:[%s201 + $0xf0] sm:$0xff]
      %v251 = vld [vmem:[%s201 + $0xf8] sm:$0xff]
      %v252 = vld [vmem:[%s201 + $0x100] sm:$0xf]
      %v253 = vld [vmem:[%s201 + $0x104] sm:$0xff]
      %v254 = vld [vmem:[%s201 + $0x10c] sm:$0xff]
      %v255 = vld [vmem:[%s201 + $0x114] sm:$0xf]
      %v256 = vld [vmem:[%s201 + $0x118] sm:$0xff]
      %v257 = vld [vmem:[%s201 + $0x120] sm:$0xff]
      %v258 = vld [vmem:[%s201 + $0x128] sm:$0xf]
      %v259 = vld [vmem:[%s201 + $0x12c] sm:$0xff]
      %v260 = vld [vmem:[%s201 + $0x134] sm:$0xff]
      %v261 = vld [vmem:[%s201 + $0x13c] sm:$0xf]
      %v262 = vld [vmem:[%s201 + $0x140] sm:$0xff]
      %v263 = vld [vmem:[%s201 + $0x148] sm:$0xff]
      %v264 = vld [vmem:[%s201 + $0x150] sm:$0xf]
      %v265 = vld [vmem:[%s201 + $0x154] sm:$0xff]
      %v266 = vld [vmem:[%s201 + $0x15c] sm:$0xff]
      %v267 = vld [vmem:[%s201 + $0x164] sm:$0xf]
      %v268 = vld [vmem:[%s201 + $0x168] sm:$0xff]
      %v269 = vld [vmem:[%s201 + $0x170] sm:$0xff]
      %v270 = vld [vmem:[%s201 + $0x178] sm:$0xf]
      %v271 = vld [vmem:[%s201 + $0x17c] sm:$0xff]
      %v272 = vld [vmem:[%s201 + $0x184] sm:$0xff]
      %v273 = vld [vmem:[%s201 + $0x18c] sm:$0xf]
      %v274 = vld [vmem:[%s201 + $0x190] sm:$0xff]
      %v275 = vld [vmem:[%s201 + $0x198] sm:$0xff]
      %v276 = vld [vmem:[%s201 + $0x1a0] sm:$0xf]
      %v277 = vld [vmem:[%s201 + $0x1a4] sm:$0xff]
      %v278 = vld [vmem:[%s201 + $0x1ac] sm:$0xff]
      %v279 = vld [vmem:[%s201 + $0x1b4] sm:$0xf]
      %v280 = vld [vmem:[%s201 + $0x1b8] sm:$0xff]
      %v281 = vld [vmem:[%s201 + $0x1c0] sm:$0xff]
      %v282 = vld [vmem:[%s201 + $0x1c8] sm:$0xf]
      %v283 = vld [vmem:[%s201 + $0x1cc] sm:$0xff]
      %v284 = vld [vmem:[%s201 + $0x1d4] sm:$0xff]
      %v285 = vld [vmem:[%s201 + $0x1dc] sm:$0xf]
      %v286 = vld [vmem:[%s201 + $0x1e0] sm:$0xff]
      %v287 = vld [vmem:[%s201 + $0x1e8] sm:$0xff]
      %v288 = vld [vmem:[%s201 + $0x1f0] sm:$0xf]
      %v289 = vld [vmem:[%s201 + $0x1f4] sm:$0xff]
      %v290 = vld [vmem:[%s201 + $0x1fc] sm:$0xff]
      %v291 = vld [vmem:[%s201 + $0x204] sm:$0xf]
      %v292 = vld [vmem:[%s201 + $0x208] sm:$0xff]
      %v293 = vld [vmem:[%s201 + $0x210] sm:$0xff]
      %v294 = vld [vmem:[%s201 + $0x218] sm:$0xf]
      %v295 = vld [vmem:[%s201 + $0x21c] sm:$0xff]
      %v296 = vld [vmem:[%s201 + $0x224] sm:$0xff]
      %v297 = vld [vmem:[%s201 + $0x22c] sm:$0xf]
      %v298 = vld [vmem:[%s201 + $0x230] sm:$0xff]
      %v299 = vld [vmem:[%s201 + $0x238] sm:$0xff]
      %v300 = vld [vmem:[%s201 + $0x240] sm:$0xf]
      %v301 = vld [vmem:[%s201 + $0x244] sm:$0xff]
      %v302 = vld [vmem:[%s201 + $0x24c] sm:$0xff]
      %v303 = vld [vmem:[%s201 + $0x254] sm:$0xf]
      %v304 = vld [vmem:[%s201 + $0x258] sm:$0xff]
      %v305 = vld [vmem:[%s201 + $0x260] sm:$0xff]
      %v306 = vld [vmem:[%s201 + $0x268] sm:$0xf]
      %v307 = vld [vmem:[%s201 + $0x26c] sm:$0xff]
      %v308 = vld [vmem:[%s201 + $0x274] sm:$0xff]
      %v309 = vld [vmem:[%s201 + $0x27c] sm:$0xf]
      %v310 = vld [vmem:[%s1] sm:$0xf]
      %v311 = vld [vmem:[%s1 + $0x4] sm:$0xf]
      %v312 = vld [vmem:[%s1 + $0x8] sm:$0xf]
      %v313 = vld [vmem:[%s1 + $0xc] sm:$0xf]
      %v314 = vld [vmem:[%s1 + $0x10] sm:$0xf]
      %v315 = vld [vmem:[%s1 + $0x14] sm:$0xf]
      %v316 = vld [vmem:[%s1 + $0x18] sm:$0xf]
      %v317 = vld [vmem:[%s1 + $0x1c] sm:$0xf]
      %v318 = vld [vmem:[%s1 + $0x20] sm:$0xf]
      %v319 = vld [vmem:[%s1 + $0x24] sm:$0xf]
      %v320 = vld [vmem:[%s1 + $0x28] sm:$0xf]
      %v321 = vld [vmem:[%s1 + $0x2c] sm:$0xf]
      %v322 = vld [vmem:[%s1 + $0x30] sm:$0xf]
      %v323 = vld [vmem:[%s1 + $0x34] sm:$0xf]
      %v324 = vld [vmem:[%s1 + $0x38] sm:$0xf]
      %v325 = vld [vmem:[%s1 + $0x3c] sm:$0xf]
      %v326 = vld [vmem:[%s1 + $0x40] sm:$0xf]
      %v327 = vld [vmem:[%s1 + $0x44] sm:$0xf]
      %v328 = vld [vmem:[%s1 + $0x48] sm:$0xf]
      %v329 = vld [vmem:[%s1 + $0x4c] sm:$0xf]
      %v330 = vld [vmem:[%s1 + $0x50] sm:$0xf]
      %v331 = vld [vmem:[%s1 + $0x54] sm:$0xf]
      %v332 = vld [vmem:[%s1 + $0x58] sm:$0xf]
      %v333 = vld [vmem:[%s1 + $0x5c] sm:$0xf]
      %v334 = vld [vmem:[%s1 + $0x60] sm:$0xf]
      %v335 = vld [vmem:[%s1 + $0x64] sm:$0xf]
      %v336 = vld [vmem:[%s1 + $0x68] sm:$0xf]
      %v337 = vld [vmem:[%s1 + $0x6c] sm:$0xf]
      %v338 = vld [vmem:[%s1 + $0x70] sm:$0xf]
      %v339 = vld [vmem:[%s1 + $0x74] sm:$0xf]
      %v340 = vld [vmem:[%s1 + $0x78] sm:$0xf]
      %v341 = vld [vmem:[%s1 + $0x7c] sm:$0xf]
      %v342 = vld [vmem:[%s1 + $0x80] sm:$0xf]
      %v343 = vld [vmem:[%s1 + $0x84] sm:$0xf]
      %v344 = vld [vmem:[%s1 + $0x88] sm:$0xf]
      %v345 = vld [vmem:[%s1 + $0x8c] sm:$0xf]
      %v346 = vld [vmem:[%s1 + $0x90] sm:$0xf]
      %v347 = vld [vmem:[%s1 + $0x94] sm:$0xf]
      %v348 = vld [vmem:[%s1 + $0x98] sm:$0xf]
      %v349 = vld [vmem:[%s1 + $0x9c] sm:$0xf]
      %v350 = vld [vmem:[%s1 + $0xa0] sm:$0xf]
      %v351 = vld [vmem:[%s1 + $0xa4] sm:$0xf]
      %v352 = vld [vmem:[%s1 + $0xa8] sm:$0xf]
      %v353 = vld [vmem:[%s1 + $0xac] sm:$0xf]
      %v354 = vld [vmem:[%s1 + $0xb0] sm:$0xf]
      %v355 = vld [vmem:[%s1 + $0xb4] sm:$0xf]
      %v356 = vld [vmem:[%s1 + $0xb8] sm:$0xf]
      %v357 = vld [vmem:[%s1 + $0xbc] sm:$0xf]
      %v358 = vld [vmem:[%s1 + $0xc0] sm:$0xf]
      %v359 = vld [vmem:[%s1 + $0xc4] sm:$0xf]
      %v360 = vld [vmem:[%s1 + $0xc8] sm:$0xf]
      %v361 = vld [vmem:[%s1 + $0xcc] sm:$0xf]
      %v362 = vld [vmem:[%s1 + $0xd0] sm:$0xf]
      %v363 = vld [vmem:[%s1 + $0xd4] sm:$0xf]
      %v364 = vld [vmem:[%s1 + $0xd8] sm:$0xf]
      %v365 = vld [vmem:[%s1 + $0xdc] sm:$0xf]
      %v366 = vld [vmem:[%s1 + $0xe0] sm:$0xf]
      %v367 = vld [vmem:[%s1 + $0xe4] sm:$0xf]
      %v368 = vld [vmem:[%s1 + $0xe8] sm:$0xf]
      %v369 = vld [vmem:[%s1 + $0xec] sm:$0xf]
      %v370 = vld [vmem:[%s1 + $0xf0] sm:$0xf]
      %v371 = vld [vmem:[%s1 + $0xf4] sm:$0xf]
      %v372 = vld [vmem:[%s1 + $0xf8] sm:$0xf]
      %v373 = vld [vmem:[%s1 + $0xfc] sm:$0xf]
      %v374 = vld [vmem:[%s1 + $0x100] sm:$0xf]
      %v375 = vld [vmem:[%s1 + $0x104] sm:$0xf]
      %v376 = vld [vmem:[%s1 + $0x108] sm:$0xf]
      %v377 = vld [vmem:[%s1 + $0x10c] sm:$0xf]
      %v378 = vld [vmem:[%s1 + $0x110] sm:$0xf]
      %v379 = vld [vmem:[%s1 + $0x114] sm:$0xf]
      %v380 = vld [vmem:[%s1 + $0x118] sm:$0xf]
      %v381 = vld [vmem:[%s1 + $0x11c] sm:$0xf]
      %v382 = vld [vmem:[%s2] sm:$0x1]
      %v384 = vlaneseq
      %v385 = vshrl.u32 %v384, 7
      %v386 = vsub.s32 0, %v385
      %v387 = vrot.slane %v382, %v386
      %v485 = vunpack.c.l.b16 %v214
      %v486 = vunpack.c.h.b16 %v214
      %v487 = vunpack.c.l.b16 %v215
      %v488 = vunpack.c.h.b16 %v215
      %v489 = vunpack.c.l.b16 %v216
      %v490 = vunpack.c.l.b16 %v217
      %v491 = vunpack.c.h.b16 %v217
      %v492 = vunpack.c.l.b16 %v218
      %v493 = vunpack.c.h.b16 %v218
      %v494 = vunpack.c.l.b16 %v219
      %v495 = vunpack.c.l.b16 %v220
      %v496 = vunpack.c.h.b16 %v220
      %v497 = vunpack.c.l.b16 %v221
      %v498 = vunpack.c.h.b16 %v221
      %v499 = vunpack.c.l.b16 %v222
      %v500 = vunpack.c.l.b16 %v223
      %v501 = vunpack.c.h.b16 %v223
      %v502 = vunpack.c.l.b16 %v224
      %v503 = vunpack.c.h.b16 %v224
      %v504 = vunpack.c.l.b16 %v225
      %v505 = vunpack.c.l.b16 %v226
      %v506 = vunpack.c.h.b16 %v226
      %v507 = vunpack.c.l.b16 %v227
      %v508 = vunpack.c.h.b16 %v227
      %v509 = vunpack.c.l.b16 %v228
      %v510 = vunpack.c.l.b16 %v229
      %v511 = vunpack.c.h.b16 %v229
      %v512 = vunpack.c.l.b16 %v230
      %v513 = vunpack.c.h.b16 %v230
      %v514 = vunpack.c.l.b16 %v231
      %v515 = vunpack.c.l.b16 %v232
      %v516 = vunpack.c.h.b16 %v232
      %v517 = vunpack.c.l.b16 %v233
      %v518 = vunpack.c.h.b16 %v233
      %v519 = vunpack.c.l.b16 %v234
      %v520 = vunpack.c.l.b16 %v235
      %v521 = vunpack.c.h.b16 %v235
      %v522 = vunpack.c.l.b16 %v236
      %v523 = vunpack.c.h.b16 %v236
      %v524 = vunpack.c.l.b16 %v237
      %v525 = vunpack.c.l.b16 %v238
      %v526 = vunpack.c.h.b16 %v238
      %v527 = vunpack.c.l.b16 %v239
      %v528 = vunpack.c.h.b16 %v239
      %v529 = vunpack.c.l.b16 %v240
      %v530 = vunpack.c.l.b16 %v241
      %v531 = vunpack.c.h.b16 %v241
      %v532 = vunpack.c.l.b16 %v242
      %v533 = vunpack.c.h.b16 %v242
      %v534 = vunpack.c.l.b16 %v243
      %v535 = vunpack.c.l.b16 %v244
      %v536 = vunpack.c.h.b16 %v244
      %v537 = vunpack.c.l.b16 %v245
      %v538 = vunpack.c.h.b16 %v245
      %v539 = vunpack.c.l.b16 %v246
      %v540 = vunpack.c.l.b16 %v247
      %v541 = vunpack.c.h.b16 %v247
      %v542 = vunpack.c.l.b16 %v248
      %v543 = vunpack.c.h.b16 %v248
      %v544 = vunpack.c.l.b16 %v249
      %v545 = vunpack.c.l.b16 %v250
      %v546 = vunpack.c.h.b16 %v250
      %v547 = vunpack.c.l.b16 %v251
      %v548 = vunpack.c.h.b16 %v251
      %v549 = vunpack.c.l.b16 %v252
      %v550 = vunpack.c.l.b16 %v253
      %v551 = vunpack.c.h.b16 %v253
      %v552 = vunpack.c.l.b16 %v254
      %v553 = vunpack.c.h.b16 %v254
      %v554 = vunpack.c.l.b16 %v255
      %v555 = vunpack.c.l.b16 %v256
      %v556 = vunpack.c.h.b16 %v256
      %v557 = vunpack.c.l.b16 %v257
      %v558 = vunpack.c.h.b16 %v257
      %v559 = vunpack.c.l.b16 %v258
      %v560 = vunpack.c.l.b16 %v259
      %v561 = vunpack.c.h.b16 %v259
      %v562 = vunpack.c.l.b16 %v260
      %v563 = vunpack.c.h.b16 %v260
      %v564 = vunpack.c.l.b16 %v261
      %v565 = vunpack.c.l.b16 %v262
      %v566 = vunpack.c.h.b16 %v262
      %v567 = vunpack.c.l.b16 %v263
      %v568 = vunpack.c.h.b16 %v263
      %v569 = vunpack.c.l.b16 %v264
      %v570 = vunpack.c.l.b16 %v265
      %v571 = vunpack.c.h.b16 %v265
      %v572 = vunpack.c.l.b16 %v266
      %v573 = vunpack.c.h.b16 %v266
      %v574 = vunpack.c.l.b16 %v267
      %v575 = vunpack.c.l.b16 %v268
      %v576 = vunpack.c.h.b16 %v268
      %v577 = vunpack.c.l.b16 %v269
      %v578 = vunpack.c.h.b16 %v269
      %v579 = vunpack.c.l.b16 %v270
      %v580 = vunpack.c.l.b16 %v271
      %v581 = vunpack.c.h.b16 %v271
      %v582 = vunpack.c.l.b16 %v272
      %v583 = vunpack.c.h.b16 %v272
      %v584 = vunpack.c.l.b16 %v273
      %v585 = vunpack.c.l.b16 %v274
      %v586 = vunpack.c.h.b16 %v274
      %v587 = vunpack.c.l.b16 %v275
      %v588 = vunpack.c.h.b16 %v275
      %v589 = vunpack.c.l.b16 %v276
      %v590 = vunpack.c.l.b16 %v277
      %v591 = vunpack.c.h.b16 %v277
      %v592 = vunpack.c.l.b16 %v278
      %v593 = vunpack.c.h.b16 %v278
      %v594 = vunpack.c.l.b16 %v279
      %v595 = vunpack.c.l.b16 %v280
      %v596 = vunpack.c.h.b16 %v280
      %v597 = vunpack.c.l.b16 %v281
      %v598 = vunpack.c.h.b16 %v281
      %v599 = vunpack.c.l.b16 %v282
      %v600 = vunpack.c.l.b16 %v283
      %v601 = vunpack.c.h.b16 %v283
      %v602 = vunpack.c.l.b16 %v284
      %v603 = vunpack.c.h.b16 %v284
      %v604 = vunpack.c.l.b16 %v285
      %v605 = vunpack.c.l.b16 %v286
      %v606 = vunpack.c.h.b16 %v286
      %v607 = vunpack.c.l.b16 %v287
      %v608 = vunpack.c.h.b16 %v287
      %v609 = vunpack.c.l.b16 %v288
      %v610 = vunpack.c.l.b16 %v289
      %v611 = vunpack.c.h.b16 %v289
      %v612 = vunpack.c.l.b16 %v290
      %v613 = vunpack.c.h.b16 %v290
      %v614 = vunpack.c.l.b16 %v291
      %v615 = vunpack.c.l.b16 %v292
      %v616 = vunpack.c.h.b16 %v292
      %v617 = vunpack.c.l.b16 %v293
      %v618 = vunpack.c.h.b16 %v293
      %v619 = vunpack.c.l.b16 %v294
      %v620 = vunpack.c.l.b16 %v295
      %v621 = vunpack.c.h.b16 %v295
      %v622 = vunpack.c.l.b16 %v296
      %v623 = vunpack.c.h.b16 %v296
      %v624 = vunpack.c.l.b16 %v297
      %v625 = vunpack.c.l.b16 %v298
      %v626 = vunpack.c.h.b16 %v298
      %v627 = vunpack.c.l.b16 %v299
      %v628 = vunpack.c.h.b16 %v299
      %v629 = vunpack.c.l.b16 %v300
      %v630 = vunpack.c.l.b16 %v301
      %v631 = vunpack.c.h.b16 %v301
      %v632 = vunpack.c.l.b16 %v302
      %v633 = vunpack.c.h.b16 %v302
      %v634 = vunpack.c.l.b16 %v303
      %v635 = vunpack.c.l.b16 %v304
      %v636 = vunpack.c.h.b16 %v304
      %v637 = vunpack.c.l.b16 %v305
      %v638 = vunpack.c.h.b16 %v305
      %v639 = vunpack.c.l.b16 %v306
      %v640 = vunpack.c.l.b16 %v307
      %v641 = vunpack.c.h.b16 %v307
      %v642 = vunpack.c.l.b16 %v308
      %v643 = vunpack.c.h.b16 %v308
      %v644 = vunpack.c.l.b16 %v309
      %v645 = vpack.c.b16 %v490, %v485
      %v646 = vpack.c.b16 %v491, %v486
      %v647 = vpack.c.b16 %v492, %v487
      %v648 = vpack.c.b16 %v493, %v488
      %v649 = vpack.c.b16 %v494, %v489
      %v650 = vpack.c.b16 %v500, %v495
      %v651 = vpack.c.b16 %v501, %v496
      %v652 = vpack.c.b16 %v502, %v497
      %v653 = vpack.c.b16 %v503, %v498
      %v654 = vpack.c.b16 %v504, %v499
      %v655 = vpack.c.b16 %v510, %v505
      %v656 = vpack.c.b16 %v511, %v506
      %v657 = vpack.c.b16 %v512, %v507
      %v658 = vpack.c.b16 %v513, %v508
      %v659 = vpack.c.b16 %v514, %v509
      %v660 = vpack.c.b16 %v520, %v515
      %v661 = vpack.c.b16 %v521, %v516
      %v662 = vpack.c.b16 %v522, %v517
      %v663 = vpack.c.b16 %v523, %v518
      %v664 = vpack.c.b16 %v524, %v519
      %v665 = vpack.c.b16 %v530, %v525
      %v666 = vpack.c.b16 %v531, %v526
      %v667 = vpack.c.b16 %v532, %v527
      %v668 = vpack.c.b16 %v533, %v528
      %v669 = vpack.c.b16 %v534, %v529
      %v670 = vpack.c.b16 %v540, %v535
      %v671 = vpack.c.b16 %v541, %v536
      %v672 = vpack.c.b16 %v542, %v537
      %v673 = vpack.c.b16 %v543, %v538
      %v674 = vpack.c.b16 %v544, %v539
      %v675 = vpack.c.b16 %v550, %v545
      %v676 = vpack.c.b16 %v551, %v546
      %v677 = vpack.c.b16 %v552, %v547
      %v678 = vpack.c.b16 %v553, %v548
      %v679 = vpack.c.b16 %v554, %v549
      %v680 = vpack.c.b16 %v560, %v555
      %v681 = vpack.c.b16 %v561, %v556
      %v682 = vpack.c.b16 %v562, %v557
      %v683 = vpack.c.b16 %v563, %v558
      %v684 = vpack.c.b16 %v564, %v559
      %v685 = vpack.c.b16 %v570, %v565
      %v686 = vpack.c.b16 %v571, %v566
      %v687 = vpack.c.b16 %v572, %v567
      %v688 = vpack.c.b16 %v573, %v568
      %v689 = vpack.c.b16 %v574, %v569
      %v690 = vpack.c.b16 %v580, %v575
      %v691 = vpack.c.b16 %v581, %v576
      %v692 = vpack.c.b16 %v582, %v577
      %v693 = vpack.c.b16 %v583, %v578
      %v694 = vpack.c.b16 %v584, %v579
      %v695 = vpack.c.b16 %v590, %v585
      %v696 = vpack.c.b16 %v591, %v586
      %v697 = vpack.c.b16 %v592, %v587
      %v698 = vpack.c.b16 %v593, %v588
      %v699 = vpack.c.b16 %v594, %v589
      %v700 = vpack.c.b16 %v600, %v595
      %v701 = vpack.c.b16 %v601, %v596
      %v702 = vpack.c.b16 %v602, %v597
      %v703 = vpack.c.b16 %v603, %v598
      %v704 = vpack.c.b16 %v604, %v599
      %v705 = vpack.c.b16 %v610, %v605
      %v706 = vpack.c.b16 %v611, %v606
      %v707 = vpack.c.b16 %v612, %v607
      %v708 = vpack.c.b16 %v613, %v608
      %v709 = vpack.c.b16 %v614, %v609
      %v710 = vpack.c.b16 %v620, %v615
      %v711 = vpack.c.b16 %v621, %v616
      %v712 = vpack.c.b16 %v622, %v617
      %v713 = vpack.c.b16 %v623, %v618
      %v714 = vpack.c.b16 %v624, %v619
      %v715 = vpack.c.b16 %v630, %v625
      %v716 = vpack.c.b16 %v631, %v626
      %v717 = vpack.c.b16 %v632, %v627
      %v718 = vpack.c.b16 %v633, %v628
      %v719 = vpack.c.b16 %v634, %v629
      %v720 = vpack.c.b16 %v640, %v635
      %v721 = vpack.c.b16 %v641, %v636
      %v722 = vpack.c.b16 %v642, %v637
      %v723 = vpack.c.b16 %v643, %v638
      %v724 = vpack.c.b16 %v644, %v639
      %v861 = vunpack.c.l.b16 %v310
      %v862 = vunpack.c.l.b16 %v311
      %v863 = vunpack.c.l.b16 %v312
      %v864 = vunpack.c.l.b16 %v313
      %v865 = vunpack.c.l.b16 %v314
      %v866 = vunpack.c.l.b16 %v315
      %v867 = vunpack.c.l.b16 %v316
      %v868 = vunpack.c.l.b16 %v317
      %v869 = vunpack.c.l.b16 %v318
      %v870 = vunpack.c.l.b16 %v319
      %v871 = vunpack.c.l.b16 %v320
      %v872 = vunpack.c.l.b16 %v321
      %v873 = vunpack.c.l.b16 %v322
      %v874 = vunpack.c.l.b16 %v323
      %v875 = vunpack.c.l.b16 %v324
      %v876 = vunpack.c.l.b16 %v325
      %v877 = vunpack.c.l.b16 %v326
      %v878 = vunpack.c.l.b16 %v327
      %v879 = vunpack.c.l.b16 %v328
      %v880 = vunpack.c.l.b16 %v329
      %v881 = vunpack.c.l.b16 %v330
      %v882 = vunpack.c.l.b16 %v331
      %v883 = vunpack.c.l.b16 %v332
      %v884 = vunpack.c.l.b16 %v333
      %v885 = vunpack.c.l.b16 %v334
      %v886 = vunpack.c.l.b16 %v335
      %v887 = vunpack.c.l.b16 %v336
      %v888 = vunpack.c.l.b16 %v337
      %v889 = vunpack.c.l.b16 %v338
      %v890 = vunpack.c.l.b16 %v339
      %v891 = vunpack.c.l.b16 %v340
      %v892 = vunpack.c.l.b16 %v341
      %v893 = vunpack.c.l.b16 %v342
      %v894 = vunpack.c.l.b16 %v343
      %v895 = vunpack.c.l.b16 %v344
      %v896 = vunpack.c.l.b16 %v345
      %v897 = vunpack.c.l.b16 %v346
      %v898 = vunpack.c.l.b16 %v347
      %v899 = vunpack.c.l.b16 %v348
      %v900 = vunpack.c.l.b16 %v349
      %v901 = vunpack.c.l.b16 %v350
      %v902 = vunpack.c.l.b16 %v351
      %v903 = vunpack.c.l.b16 %v352
      %v904 = vunpack.c.l.b16 %v353
      %v905 = vunpack.c.l.b16 %v354
      %v906 = vunpack.c.l.b16 %v355
      %v907 = vunpack.c.l.b16 %v356
      %v908 = vunpack.c.l.b16 %v357
      %v909 = vunpack.c.l.b16 %v358
      %v910 = vunpack.c.l.b16 %v359
      %v911 = vunpack.c.l.b16 %v360
      %v912 = vunpack.c.l.b16 %v361
      %v913 = vunpack.c.l.b16 %v362
      %v914 = vunpack.c.l.b16 %v363
      %v915 = vunpack.c.l.b16 %v364
      %v916 = vunpack.c.l.b16 %v365
      %v917 = vunpack.c.l.b16 %v366
      %v918 = vunpack.c.l.b16 %v367
      %v919 = vunpack.c.l.b16 %v368
      %v920 = vunpack.c.l.b16 %v369
      %v921 = vunpack.c.l.b16 %v370
      %v922 = vunpack.c.l.b16 %v371
      %v923 = vunpack.c.l.b16 %v372
      %v924 = vunpack.c.l.b16 %v373
      %v925 = vunpack.c.l.b16 %v374
      %v926 = vunpack.c.l.b16 %v375
      %v927 = vunpack.c.l.b16 %v376
      %v928 = vunpack.c.l.b16 %v377
      %v929 = vunpack.c.l.b16 %v378
      %v930 = vunpack.c.l.b16 %v379
      %v931 = vunpack.c.l.b16 %v380
      %v932 = vunpack.c.l.b16 %v381
      %v933 = vpack.c.b16 %v862, %v861
      %v934 = vpack.c.b16 %v864, %v863
      %v935 = vpack.c.b16 %v866, %v865
      %v936 = vpack.c.b16 %v868, %v867
      %v937 = vpack.c.b16 %v870, %v869
      %v938 = vpack.c.b16 %v872, %v871
      %v939 = vpack.c.b16 %v874, %v873
      %v940 = vpack.c.b16 %v876, %v875
      %v941 = vpack.c.b16 %v878, %v877
      %v942 = vpack.c.b16 %v880, %v879
      %v943 = vpack.c.b16 %v882, %v881
      %v944 = vpack.c.b16 %v884, %v883
      %v945 = vpack.c.b16 %v886, %v885
      %v946 = vpack.c.b16 %v888, %v887
      %v947 = vpack.c.b16 %v890, %v889
      %v948 = vpack.c.b16 %v892, %v891
      %v949 = vpack.c.b16 %v894, %v893
      %v950 = vpack.c.b16 %v896, %v895
      %v951 = vpack.c.b16 %v898, %v897
      %v952 = vpack.c.b16 %v900, %v899
      %v953 = vpack.c.b16 %v902, %v901
      %v954 = vpack.c.b16 %v904, %v903
      %v955 = vpack.c.b16 %v906, %v905
      %v956 = vpack.c.b16 %v908, %v907
      %v957 = vpack.c.b16 %v910, %v909
      %v958 = vpack.c.b16 %v912, %v911
      %v959 = vpack.c.b16 %v914, %v913
      %v960 = vpack.c.b16 %v916, %v915
      %v961 = vpack.c.b16 %v918, %v917
      %v962 = vpack.c.b16 %v920, %v919
      %v963 = vpack.c.b16 %v922, %v921
      %v964 = vpack.c.b16 %v924, %v923
      %v965 = vpack.c.b16 %v926, %v925
      %v966 = vpack.c.b16 %v928, %v927
      %v967 = vpack.c.b16 %v930, %v929
      %v968 = vpack.c.b16 %v932, %v931
      %vm1005 = vcmask 523264
      %v1007 = vsel %vm1005, %v649, 0
      %v1010 = vsel %vm1005, %v654, 0
      %v1013 = vsel %vm1005, %v659, 0
      %v1016 = vsel %vm1005, %v664, 0
      %v1019 = vsel %vm1005, %v669, 0
      %v1022 = vsel %vm1005, %v674, 0
      %v1025 = vsel %vm1005, %v679, 0
      %v1028 = vsel %vm1005, %v684, 0
      %v1031 = vsel %vm1005, %v689, 0
      %v1034 = vsel %vm1005, %v694, 0
      %v1037 = vsel %vm1005, %v699, 0
      %v1040 = vsel %vm1005, %v704, 0
      %v1043 = vsel %vm1005, %v709, 0
      %v1046 = vsel %vm1005, %v714, 0
      %v1049 = vsel %vm1005, %v719, 0
      %v1052 = vsel %vm1005, %v724, 0
      %1054 = vmatprep.subr.bf16.mxu0 0
      %1055 = vmatpush1.bf16.msra.mxu0 %v933
      %1056 = vmatprep.subr.bf16.mxu0 0
      %1057 = vmatpush1.bf16.msra.mxu0 %v934
      %1058 = vmatprep.subr.bf16.mxu0 0
      %1059 = vmatpush1.bf16.msra.mxu0 %v935
      %1060 = vmatprep.subr.bf16.mxu0 0
      %1061 = vmatpush1.bf16.msra.mxu0 %v936
      %1062 = vmatprep.subr.bf16.mxu0 0
      %1063 = vmatpush1.bf16.msra.mxu0 %v937
      %1064 = vmatprep.subr.bf16.mxu0 0
      %1065 = vmatpush1.bf16.msra.mxu0 %v938
      %1066 = vmatprep.subr.bf16.mxu0 0
      %1067 = vmatpush1.bf16.msra.mxu0 %v939
      %1068 = vmatprep.subr.bf16.mxu0 0
      %1069 = vmatpush1.bf16.msra.mxu0 %v940
      %1070 = vmatprep.subr.bf16.mxu0 0
      %1071 = vmatpush1.bf16.msra.mxu0 %v941
      %1072 = vmatprep.subr.bf16.mxu0 0
      %1073 = vmatpush1.bf16.msra.mxu0 %v942
      %1074 = vmatprep.subr.bf16.mxu0 0
      %1075 = vmatpush1.bf16.msra.mxu0 %v943
      %1076 = vmatprep.subr.bf16.mxu0 0
      %1077 = vmatpush1.bf16.msra.mxu0 %v944
      %1078 = vmatprep.subr.bf16.mxu0 0
      %1079 = vmatpush1.bf16.msra.mxu0 %v945
      %1080 = vmatprep.subr.bf16.mxu0 0
      %1081 = vmatpush1.bf16.msra.mxu0 %v946
      %1082 = vmatprep.subr.bf16.mxu0 0
      %1083 = vmatpush1.bf16.msra.mxu0 %v947
      %1084 = vmatprep.subr.bf16.mxu0 0
      %1085 = vmatpush1.bf16.msra.mxu0 %v948
      %1086 = vmatprep.mubr.bf16.mxu0 %v646
      %1087 = vmatmul.mubr.bf16.gmra.mrb[0].mxu0 %v645
      %v1088 = vpop.f32.mrb[0].mxu0
      %v1089 = vadd.f32 %v387, %v1088
      %v1090 = vpop.f32.mrb[0].mxu0
      %v1091 = vpop.f32.mrb[0].mxu0
      %v1092 = vadd.f32 %v387, %v1091
      %v1093 = vpop.f32.mrb[0].mxu0
      %1094 = vmatprep.mubr.bf16.mxu0 %v651
      %1095 = vmatmul.mubr.bf16.gmra.mrb[0].mxu0 %v650
      %v1096 = vpop.f32.mrb[0].mxu0
      %v1097 = vadd.f32 %v387, %v1096
      %v1098 = vpop.f32.mrb[0].mxu0
      %v1099 = vpop.f32.mrb[0].mxu0
      %v1100 = vadd.f32 %v387, %v1099
      %v1101 = vpop.f32.mrb[0].mxu0
      %1102 = vmatprep.mubr.bf16.mxu0 %v656
      %1103 = vmatmul.mubr.bf16.gmra.mrb[0].mxu0 %v655
      %v1104 = vpop.f32.mrb[0].mxu0
      %v1105 = vadd.f32 %v387, %v1104
      %v1106 = vpop.f32.mrb[0].mxu0
      %v1107 = vpop.f32.mrb[0].mxu0
      %v1108 = vadd.f32 %v387, %v1107
      %v1109 = vpop.f32.mrb[0].mxu0
      %1110 = vmatprep.mubr.bf16.mxu0 %v661
      %1111 = vmatmul.mubr.bf16.gmra.mrb[0].mxu0 %v660
      %v1112 = vpop.f32.mrb[0].mxu0
      %v1113 = vadd.f32 %v387, %v1112
      %v1114 = vpop.f32.mrb[0].mxu0
      %v1115 = vpop.f32.mrb[0].mxu0
      %v1116 = vadd.f32 %v387, %v1115
      %v1117 = vpop.f32.mrb[0].mxu0
      %1118 = vmatprep.mubr.bf16.mxu0 %v666
      %1119 = vmatmul.mubr.bf16.gmra.mrb[0].mxu0 %v665
      %v1120 = vpop.f32.mrb[0].mxu0
      %v1121 = vadd.f32 %v387, %v1120
      %v1122 = vpop.f32.mrb[0].mxu0
      %v1123 = vpop.f32.mrb[0].mxu0
      %v1124 = vadd.f32 %v387, %v1123
      %v1125 = vpop.f32.mrb[0].mxu0
      %1126 = vmatprep.mubr.bf16.mxu0 %v671
      %1127 = vmatmul.mubr.bf16.gmra.mrb[0].mxu0 %v670
      %v1128 = vpop.f32.mrb[0].mxu0
      %v1129 = vadd.f32 %v387, %v1128
      %v1130 = vpop.f32.mrb[0].mxu0
      %v1131 = vpop.f32.mrb[0].mxu0
      %v1132 = vadd.f32 %v387, %v1131
      %v1133 = vpop.f32.mrb[0].mxu0
      %1134 = vmatprep.mubr.bf16.mxu0 %v676
      %1135 = vmatmul.mubr.bf16.gmra.mrb[0].mxu0 %v675
      %v1136 = vpop.f32.mrb[0].mxu0
      %v1137 = vadd.f32 %v387, %v1136
      %v1138 = vpop.f32.mrb[0].mxu0
      %v1139 = vpop.f32.mrb[0].mxu0
      %v1140 = vadd.f32 %v387, %v1139
      %v1141 = vpop.f32.mrb[0].mxu0
      %1142 = vmatprep.mubr.bf16.mxu0 %v681
      %1143 = vmatmul.mubr.bf16.gmra.mrb[0].mxu0 %v680
      %v1144 = vpop.f32.mrb[0].mxu0
      %v1145 = vadd.f32 %v387, %v1144
      %v1146 = vpop.f32.mrb[0].mxu0
      %v1147 = vpop.f32.mrb[0].mxu0
      %v1148 = vadd.f32 %v387, %v1147
      %v1149 = vpop.f32.mrb[0].mxu0
      %1150 = vmatprep.mubr.bf16.mxu0 %v686
      %1151 = vmatmul.mubr.bf16.gmra.mrb[0].mxu0 %v685
      %v1152 = vpop.f32.mrb[0].mxu0
      %v1153 = vadd.f32 %v387, %v1152
      %v1154 = vpop.f32.mrb[0].mxu0
      %v1155 = vpop.f32.mrb[0].mxu0
      %v1156 = vadd.f32 %v387, %v1155
      %v1157 = vpop.f32.mrb[0].mxu0
      %1158 = vmatprep.mubr.bf16.mxu0 %v691
      %1159 = vmatmul.mubr.bf16.gmra.mrb[0].mxu0 %v690
      %v1160 = vpop.f32.mrb[0].mxu0
      %v1161 = vadd.f32 %v387, %v1160
      %v1162 = vpop.f32.mrb[0].mxu0
      %v1163 = vpop.f32.mrb[0].mxu0
      %v1164 = vadd.f32 %v387, %v1163
      %v1165 = vpop.f32.mrb[0].mxu0
      %1166 = vmatprep.mubr.bf16.mxu0 %v696
      %1167 = vmatmul.mubr.bf16.gmra.mrb[0].mxu0 %v695
      %v1168 = vpop.f32.mrb[0].mxu0
      %v1169 = vadd.f32 %v387, %v1168
      %v1170 = vpop.f32.mrb[0].mxu0
      %v1171 = vpop.f32.mrb[0].mxu0
      %v1172 = vadd.f32 %v387, %v1171
      %v1173 = vpop.f32.mrb[0].mxu0
      %1174 = vmatprep.mubr.bf16.mxu0 %v701
      %1175 = vmatmul.mubr.bf16.gmra.mrb[0].mxu0 %v700
      %v1176 = vpop.f32.mrb[0].mxu0
      %v1177 = vadd.f32 %v387, %v1176
      %v1178 = vpop.f32.mrb[0].mxu0
      %v1179 = vpop.f32.mrb[0].mxu0
      %v1180 = vadd.f32 %v387, %v1179
      %v1181 = vpop.f32.mrb[0].mxu0
      %1182 = vmatprep.mubr.bf16.mxu0 %v706
      %1183 = vmatmul.mubr.bf16.gmra.mrb[0].mxu0 %v705
      %v1184 = vpop.f32.mrb[0].mxu0
      %v1185 = vadd.f32 %v387, %v1184
      %v1186 = vpop.f32.mrb[0].mxu0
      %v1187 = vpop.f32.mrb[0].mxu0
      %v1188 = vadd.f32 %v387, %v1187
      %v1189 = vpop.f32.mrb[0].mxu0
      %1190 = vmatprep.mubr.bf16.mxu0 %v711
      %1191 = vmatmul.mubr.bf16.gmra.mrb[0].mxu0 %v710
      %v1192 = vpop.f32.mrb[0].mxu0
      %v1193 = vadd.f32 %v387, %v1192
      %v1194 = vpop.f32.mrb[0].mxu0
      %v1195 = vpop.f32.mrb[0].mxu0
      %v1196 = vadd.f32 %v387, %v1195
      %v1197 = vpop.f32.mrb[0].mxu0
      %1198 = vmatprep.mubr.bf16.mxu0 %v716
      %1199 = vmatmul.mubr.bf16.gmra.mrb[0].mxu0 %v715
      %v1200 = vpop.f32.mrb[0].mxu0
      %v1201 = vadd.f32 %v387, %v1200
      %v1202 = vpop.f32.mrb[0].mxu0
      %v1203 = vpop.f32.mrb[0].mxu0
      %v1204 = vadd.f32 %v387, %v1203
      %v1205 = vpop.f32.mrb[0].mxu0
      %1206 = vmatprep.mubr.bf16.mxu0 %v721
      %1207 = vmatmul.mubr.bf16.gmra.mrb[0].mxu0 %v720
      %v1208 = vpop.f32.mrb[0].mxu0
      %v1209 = vadd.f32 %v387, %v1208
      %v1210 = vpop.f32.mrb[0].mxu0
      %v1211 = vpop.f32.mrb[0].mxu0
      %v1212 = vadd.f32 %v387, %v1211
      %v1213 = vpop.f32.mrb[0].mxu0
      %1214 = vdwg.mxu0
      %1215 = vmatprep.subr.bf16.mxu0 0
      %1216 = vmatpush1.bf16.msra.mxu0 %v949
      %1217 = vmatprep.subr.bf16.mxu0 0
      %1218 = vmatpush1.bf16.msra.mxu0 %v950
      %1219 = vmatprep.subr.bf16.mxu0 0
      %1220 = vmatpush1.bf16.msra.mxu0 %v951
      %1221 = vmatprep.subr.bf16.mxu0 0
      %1222 = vmatpush1.bf16.msra.mxu0 %v952
      %1223 = vmatprep.subr.bf16.mxu0 0
      %1224 = vmatpush1.bf16.msra.mxu0 %v953
      %1225 = vmatprep.subr.bf16.mxu0 0
      %1226 = vmatpush1.bf16.msra.mxu0 %v954
      %1227 = vmatprep.subr.bf16.mxu0 0
      %1228 = vmatpush1.bf16.msra.mxu0 %v955
      %1229 = vmatprep.subr.bf16.mxu0 0
      %1230 = vmatpush1.bf16.msra.mxu0 %v956
      %1231 = vmatprep.subr.bf16.mxu0 0
      %1232 = vmatpush1.bf16.msra.mxu0 %v957
      %1233 = vmatprep.subr.bf16.mxu0 0
      %1234 = vmatpush1.bf16.msra.mxu0 %v958
      %1235 = vmatprep.subr.bf16.mxu0 0
      %1236 = vmatpush1.bf16.msra.mxu0 %v959
      %1237 = vmatprep.subr.bf16.mxu0 0
      %1238 = vmatpush1.bf16.msra.mxu0 %v960
      %1239 = vmatprep.subr.bf16.mxu0 0
      %1240 = vmatpush1.bf16.msra.mxu0 %v961
      %1241 = vmatprep.subr.bf16.mxu0 0
      %1242 = vmatpush1.bf16.msra.mxu0 %v962
      %1243 = vmatprep.subr.bf16.mxu0 0
      %1244 = vmatpush1.bf16.msra.mxu0 %v963
      %1245 = vmatprep.subr.bf16.mxu0 0
      %1246 = vmatpush1.bf16.msra.mxu0 %v964
      %1247 = vmatprep.mubr.bf16.mxu0 %v648
      %1248 = vmatmul.mubr.bf16.gmra.mrb[0].mxu0 %v647
      %v1249 = vpop.f32.mrb[0].mxu0
      %v1250 = vadd.f32 %v1089, %v1249
      %v1251 = vpop.f32.mrb[0].mxu0
      %v1252 = vpop.f32.mrb[0].mxu0
      %v1253 = vadd.f32 %v1092, %v1252
      %v1254 = vpop.f32.mrb[0].mxu0
      %1255 = vmatprep.mubr.bf16.mxu0 %v653
      %1256 = vmatmul.mubr.bf16.gmra.mrb[0].mxu0 %v652
      %v1257 = vpop.f32.mrb[0].mxu0
      %v1258 = vadd.f32 %v1097, %v1257
      %v1259 = vpop.f32.mrb[0].mxu0
      %v1260 = vpop.f32.mrb[0].mxu0
      %v1261 = vadd.f32 %v1100, %v1260
      %v1262 = vpop.f32.mrb[0].mxu0
      %1263 = vmatprep.mubr.bf16.mxu0 %v658
      %1264 = vmatmul.mubr.bf16.gmra.mrb[0].mxu0 %v657
      %v1265 = vpop.f32.mrb[0].mxu0
      %v1266 = vadd.f32 %v1105, %v1265
      %v1267 = vpop.f32.mrb[0].mxu0
      %v1268 = vpop.f32.mrb[0].mxu0
      %v1269 = vadd.f32 %v1108, %v1268
      %v1270 = vpop.f32.mrb[0].mxu0
      %1271 = vmatprep.mubr.bf16.mxu0 %v663
      %1272 = vmatmul.mubr.bf16.gmra.mrb[0].mxu0 %v662
      %v1273 = vpop.f32.mrb[0].mxu0
      %v1274 = vadd.f32 %v1113, %v1273
      %v1275 = vpop.f32.mrb[0].mxu0
      %v1276 = vpop.f32.mrb[0].mxu0
      %v1277 = vadd.f32 %v1116, %v1276
      %v1278 = vpop.f32.mrb[0].mxu0
      %1279 = vmatprep.mubr.bf16.mxu0 %v668
      %1280 = vmatmul.mubr.bf16.gmra.mrb[0].mxu0 %v667
      %v1281 = vpop.f32.mrb[0].mxu0
      %v1282 = vadd.f32 %v1121, %v1281
      %v1283 = vpop.f32.mrb[0].mxu0
      %v1284 = vpop.f32.mrb[0].mxu0
      %v1285 = vadd.f32 %v1124, %v1284
      %v1286 = vpop.f32.mrb[0].mxu0
      %1287 = vmatprep.mubr.bf16.mxu0 %v673
      %1288 = vmatmul.mubr.bf16.gmra.mrb[0].mxu0 %v672
      %v1289 = vpop.f32.mrb[0].mxu0
      %v1290 = vadd.f32 %v1129, %v1289
      %v1291 = vpop.f32.mrb[0].mxu0
      %v1292 = vpop.f32.mrb[0].mxu0
      %v1293 = vadd.f32 %v1132, %v1292
      %v1294 = vpop.f32.mrb[0].mxu0
      %1295 = vmatprep.mubr.bf16.mxu0 %v678
      %1296 = vmatmul.mubr.bf16.gmra.mrb[0].mxu0 %v677
      %v1297 = vpop.f32.mrb[0].mxu0
      %v1298 = vadd.f32 %v1137, %v1297
      %v1299 = vpop.f32.mrb[0].mxu0
      %v1300 = vpop.f32.mrb[0].mxu0
      %v1301 = vadd.f32 %v1140, %v1300
      %v1302 = vpop.f32.mrb[0].mxu0
      %1303 = vmatprep.mubr.bf16.mxu0 %v683
      %1304 = vmatmul.mubr.bf16.gmra.mrb[0].mxu0 %v682
      %v1305 = vpop.f32.mrb[0].mxu0
      %v1306 = vadd.f32 %v1145, %v1305
      %v1307 = vpop.f32.mrb[0].mxu0
      %v1308 = vpop.f32.mrb[0].mxu0
      %v1309 = vadd.f32 %v1148, %v1308
      %v1310 = vpop.f32.mrb[0].mxu0
      %1311 = vmatprep.mubr.bf16.mxu0 %v688
      %1312 = vmatmul.mubr.bf16.gmra.mrb[0].mxu0 %v687
      %v1313 = vpop.f32.mrb[0].mxu0
      %v1314 = vadd.f32 %v1153, %v1313
      %v1315 = vpop.f32.mrb[0].mxu0
      %v1316 = vpop.f32.mrb[0].mxu0
      %v1317 = vadd.f32 %v1156, %v1316
      %v1318 = vpop.f32.mrb[0].mxu0
      %1319 = vmatprep.mubr.bf16.mxu0 %v693
      %1320 = vmatmul.mubr.bf16.gmra.mrb[0].mxu0 %v692
      %v1321 = vpop.f32.mrb[0].mxu0
      %v1322 = vadd.f32 %v1161, %v1321
      %v1323 = vpop.f32.mrb[0].mxu0
      %v1324 = vpop.f32.mrb[0].mxu0
      %v1325 = vadd.f32 %v1164, %v1324
      %v1326 = vpop.f32.mrb[0].mxu0
      %1327 = vmatprep.mubr.bf16.mxu0 %v698
      %1328 = vmatmul.mubr.bf16.gmra.mrb[0].mxu0 %v697
      %v1329 = vpop.f32.mrb[0].mxu0
      %v1330 = vadd.f32 %v1169, %v1329
      %v1331 = vpop.f32.mrb[0].mxu0
      %v1332 = vpop.f32.mrb[0].mxu0
      %v1333 = vadd.f32 %v1172, %v1332
      %v1334 = vpop.f32.mrb[0].mxu0
      %1335 = vmatprep.mubr.bf16.mxu0 %v703
      %1336 = vmatmul.mubr.bf16.gmra.mrb[0].mxu0 %v702
      %v1337 = vpop.f32.mrb[0].mxu0
      %v1338 = vadd.f32 %v1177, %v1337
      %v1339 = vpop.f32.mrb[0].mxu0
      %v1340 = vpop.f32.mrb[0].mxu0
      %v1341 = vadd.f32 %v1180, %v1340
      %v1342 = vpop.f32.mrb[0].mxu0
      %1343 = vmatprep.mubr.bf16.mxu0 %v708
      %1344 = vmatmul.mubr.bf16.gmra.mrb[0].mxu0 %v707
      %v1345 = vpop.f32.mrb[0].mxu0
      %v1346 = vadd.f32 %v1185, %v1345
      %v1347 = vpop.f32.mrb[0].mxu0
      %v1348 = vpop.f32.mrb[0].mxu0
      %v1349 = vadd.f32 %v1188, %v1348
      %v1350 = vpop.f32.mrb[0].mxu0
      %1351 = vmatprep.mubr.bf16.mxu0 %v713
      %1352 = vmatmul.mubr.bf16.gmra.mrb[0].mxu0 %v712
      %v1353 = vpop.f32.mrb[0].mxu0
      %v1354 = vadd.f32 %v1193, %v1353
      %v1355 = vpop.f32.mrb[0].mxu0
      %v1356 = vpop.f32.mrb[0].mxu0
      %v1357 = vadd.f32 %v1196, %v1356
      %v1358 = vpop.f32.mrb[0].mxu0
      %1359 = vmatprep.mubr.bf16.mxu0 %v718
      %1360 = vmatmul.mubr.bf16.gmra.mrb[0].mxu0 %v717
      %v1361 = vpop.f32.mrb[0].mxu0
      %v1362 = vadd.f32 %v1201, %v1361
      %v1363 = vpop.f32.mrb[0].mxu0
      %v1364 = vpop.f32.mrb[0].mxu0
      %v1365 = vadd.f32 %v1204, %v1364
      %v1366 = vpop.f32.mrb[0].mxu0
      %1367 = vmatprep.mubr.bf16.mxu0 %v723
      %1368 = vmatmul.mubr.bf16.gmra.mrb[0].mxu0 %v722
      %v1369 = vpop.f32.mrb[0].mxu0
      %v1370 = vadd.f32 %v1209, %v1369
      %v1371 = vpop.f32.mrb[0].mxu0
      %v1372 = vpop.f32.mrb[0].mxu0
      %v1373 = vadd.f32 %v1212, %v1372
      %v1374 = vpop.f32.mrb[0].mxu0
      %1375 = vdwg.mxu0
      %1376 = vmatprep.subr.bf16.mxu0 0
      %1377 = vmatpush1.bf16.msra.mxu0 %v965
      %1378 = vmatprep.subr.bf16.mxu0 0
      %1379 = vmatpush1.bf16.msra.mxu0 %v966
      %1380 = vmatprep.subr.bf16.mxu0 0
      %1381 = vmatpush1.bf16.msra.mxu0 %v967
      %1382 = vmatprep.subr.bf16.mxu0 0
      %1383 = vmatpush1.bf16.msra.mxu0 %v968
      %1384 = vmatprep.subr.bf16.mxu0 0
      %1385 = vmatpush1.bf16.msra.mxu0 0
      %1386 = vmatprep.subr.bf16.mxu0 0
      %1387 = vmatpush1.bf16.msra.mxu0 0
      %1388 = vmatprep.subr.bf16.mxu0 0
      %1389 = vmatpush1.bf16.msra.mxu0 0
      %1390 = vmatprep.subr.bf16.mxu0 0
      %1391 = vmatpush1.bf16.msra.mxu0 0
      %1392 = vmatprep.subr.bf16.mxu0 0
      %1393 = vmatpush1.bf16.msra.mxu0 0
      %1394 = vmatprep.subr.bf16.mxu0 0
      %1395 = vmatpush1.bf16.msra.mxu0 0
      %1396 = vmatprep.subr.bf16.mxu0 0
      %1397 = vmatpush1.bf16.msra.mxu0 0
      %1398 = vmatprep.subr.bf16.mxu0 0
      %1399 = vmatpush1.bf16.msra.mxu0 0
      %1400 = vmatprep.subr.bf16.mxu0 0
      %1401 = vmatpush1.bf16.msra.mxu0 0
      %1402 = vmatprep.subr.bf16.mxu0 0
      %1403 = vmatpush1.bf16.msra.mxu0 0
      %1404 = vmatprep.subr.bf16.mxu0 0
      %1405 = vmatpush1.bf16.msra.mxu0 0
      %1406 = vmatprep.subr.bf16.mxu0 0
      %1407 = vmatpush1.bf16.msra.mxu0 0
      %1408 = vmatprep.mubr.bf16.mxu0 0
      %1409 = vmatmul.mubr.bf16.gmra.mrb[0].mxu0 %v1007
      %v1410 = vpop.f32.mrb[0].mxu0
      %v1411 = vadd.f32 %v1250, %v1410
      %v1412 = vpop.f32.mrb[0].mxu0
      %v1413 = vpop.f32.mrb[0].mxu0
      %v1414 = vadd.f32 %v1253, %v1413
      %v1415 = vpop.f32.mrb[0].mxu0
      %1416 = vmatprep.mubr.bf16.mxu0 0
      %1417 = vmatmul.mubr.bf16.gmra.mrb[0].mxu0 %v1010
      %v1418 = vpop.f32.mrb[0].mxu0
      %v1419 = vadd.f32 %v1258, %v1418
      %v1420 = vpop.f32.mrb[0].mxu0
      %v1421 = vpop.f32.mrb[0].mxu0
      %v1422 = vadd.f32 %v1261, %v1421
      %v1423 = vpop.f32.mrb[0].mxu0
      %1424 = vmatprep.mubr.bf16.mxu0 0
      %1425 = vmatmul.mubr.bf16.gmra.mrb[0].mxu0 %v1013
      %v1426 = vpop.f32.mrb[0].mxu0
      %v1427 = vadd.f32 %v1266, %v1426
      %v1428 = vpop.f32.mrb[0].mxu0
      %v1429 = vpop.f32.mrb[0].mxu0
      %v1430 = vadd.f32 %v1269, %v1429
      %v1431 = vpop.f32.mrb[0].mxu0
      %1432 = vmatprep.mubr.bf16.mxu0 0
      %1433 = vmatmul.mubr.bf16.gmra.mrb[0].mxu0 %v1016
      %v1434 = vpop.f32.mrb[0].mxu0
      %v1435 = vadd.f32 %v1274, %v1434
      %v1436 = vpop.f32.mrb[0].mxu0
      %v1437 = vpop.f32.mrb[0].mxu0
      %v1438 = vadd.f32 %v1277, %v1437
      %v1439 = vpop.f32.mrb[0].mxu0
      %1440 = vmatprep.mubr.bf16.mxu0 0
      %1441 = vmatmul.mubr.bf16.gmra.mrb[0].mxu0 %v1019
      %v1442 = vpop.f32.mrb[0].mxu0
      %v1443 = vadd.f32 %v1282, %v1442
      %v1444 = vpop.f32.mrb[0].mxu0
      %v1445 = vpop.f32.mrb[0].mxu0
      %v1446 = vadd.f32 %v1285, %v1445
      %v1447 = vpop.f32.mrb[0].mxu0
      %1448 = vmatprep.mubr.bf16.mxu0 0
      %1449 = vmatmul.mubr.bf16.gmra.mrb[0].mxu0 %v1022
      %v1450 = vpop.f32.mrb[0].mxu0
      %v1451 = vadd.f32 %v1290, %v1450
      %v1452 = vpop.f32.mrb[0].mxu0
      %v1453 = vpop.f32.mrb[0].mxu0
      %v1454 = vadd.f32 %v1293, %v1453
      %v1455 = vpop.f32.mrb[0].mxu0
      %1456 = vmatprep.mubr.bf16.mxu0 0
      %1457 = vmatmul.mubr.bf16.gmra.mrb[0].mxu0 %v1025
      %v1458 = vpop.f32.mrb[0].mxu0
      %v1459 = vadd.f32 %v1298, %v1458
      %v1460 = vpop.f32.mrb[0].mxu0
      %v1461 = vpop.f32.mrb[0].mxu0
      %v1462 = vadd.f32 %v1301, %v1461
      %v1463 = vpop.f32.mrb[0].mxu0
      %1464 = vmatprep.mubr.bf16.mxu0 0
      %1465 = vmatmul.mubr.bf16.gmra.mrb[0].mxu0 %v1028
      %v1466 = vpop.f32.mrb[0].mxu0
      %v1467 = vadd.f32 %v1306, %v1466
      %v1468 = vpop.f32.mrb[0].mxu0
      %v1469 = vpop.f32.mrb[0].mxu0
      %v1470 = vadd.f32 %v1309, %v1469
      %v1471 = vpop.f32.mrb[0].mxu0
      %1472 = vmatprep.mubr.bf16.mxu0 0
      %1473 = vmatmul.mubr.bf16.gmra.mrb[0].mxu0 %v1031
      %v1474 = vpop.f32.mrb[0].mxu0
      %v1475 = vadd.f32 %v1314, %v1474
      %v1476 = vpop.f32.mrb[0].mxu0
      %v1477 = vpop.f32.mrb[0].mxu0
      %v1478 = vadd.f32 %v1317, %v1477
      %v1479 = vpop.f32.mrb[0].mxu0
      %1480 = vmatprep.mubr.bf16.mxu0 0
      %1481 = vmatmul.mubr.bf16.gmra.mrb[0].mxu0 %v1034
      %v1482 = vpop.f32.mrb[0].mxu0
      %v1483 = vadd.f32 %v1322, %v1482
      %v1484 = vpop.f32.mrb[0].mxu0
      %v1485 = vpop.f32.mrb[0].mxu0
      %v1486 = vadd.f32 %v1325, %v1485
      %v1487 = vpop.f32.mrb[0].mxu0
      %1488 = vmatprep.mubr.bf16.mxu0 0
      %1489 = vmatmul.mubr.bf16.gmra.mrb[0].mxu0 %v1037
      %v1490 = vpop.f32.mrb[0].mxu0
      %v1491 = vadd.f32 %v1330, %v1490
      %v1492 = vpop.f32.mrb[0].mxu0
      %v1493 = vpop.f32.mrb[0].mxu0
      %v1494 = vadd.f32 %v1333, %v1493
      %v1495 = vpop.f32.mrb[0].mxu0
      %1496 = vmatprep.mubr.bf16.mxu0 0
      %1497 = vmatmul.mubr.bf16.gmra.mrb[0].mxu0 %v1040
      %v1498 = vpop.f32.mrb[0].mxu0
      %v1499 = vadd.f32 %v1338, %v1498
      %v1500 = vpop.f32.mrb[0].mxu0
      %v1501 = vpop.f32.mrb[0].mxu0
      %v1502 = vadd.f32 %v1341, %v1501
      %v1503 = vpop.f32.mrb[0].mxu0
      %1504 = vmatprep.mubr.bf16.mxu0 0
      %1505 = vmatmul.mubr.bf16.gmra.mrb[0].mxu0 %v1043
      %v1506 = vpop.f32.mrb[0].mxu0
      %v1507 = vadd.f32 %v1346, %v1506
      %v1508 = vpop.f32.mrb[0].mxu0
      %v1509 = vpop.f32.mrb[0].mxu0
      %v1510 = vadd.f32 %v1349, %v1509
      %v1511 = vpop.f32.mrb[0].mxu0
      %1512 = vmatprep.mubr.bf16.mxu0 0
      %1513 = vmatmul.mubr.bf16.gmra.mrb[0].mxu0 %v1046
      %v1514 = vpop.f32.mrb[0].mxu0
      %v1515 = vadd.f32 %v1354, %v1514
      %v1516 = vpop.f32.mrb[0].mxu0
      %v1517 = vpop.f32.mrb[0].mxu0
      %v1518 = vadd.f32 %v1357, %v1517
      %v1519 = vpop.f32.mrb[0].mxu0
      %1520 = vmatprep.mubr.bf16.mxu0 0
      %1521 = vmatmul.mubr.bf16.gmra.mrb[0].mxu0 %v1049
      %v1522 = vpop.f32.mrb[0].mxu0
      %v1523 = vadd.f32 %v1362, %v1522
      %v1524 = vpop.f32.mrb[0].mxu0
      %v1525 = vpop.f32.mrb[0].mxu0
      %v1526 = vadd.f32 %v1365, %v1525
      %v1527 = vpop.f32.mrb[0].mxu0
      %1528 = vmatprep.mubr.bf16.mxu0 0
      %1529 = vmatmul.mubr.bf16.gmra.mrb[0].mxu0 %v1052
      %v1530 = vpop.f32.mrb[0].mxu0
      %v1531 = vadd.f32 %v1370, %v1530
      %v1532 = vpop.f32.mrb[0].mxu0
      %v1533 = vpop.f32.mrb[0].mxu0
      %v1534 = vadd.f32 %v1373, %v1533
      %v1535 = vpop.f32.mrb[0].mxu0
      %1536 = vdwg.mxu0
      %v1537 = vmax.f32 %v1411, 0.0
      %v1538 = vmax.f32 %v1414, 0.0
      %v1539 = vmax.f32 %v1419, 0.0
      %v1540 = vmax.f32 %v1422, 0.0
      %v1541 = vmax.f32 %v1427, 0.0
      %v1542 = vmax.f32 %v1430, 0.0
      %v1543 = vmax.f32 %v1435, 0.0
      %v1544 = vmax.f32 %v1438, 0.0
      %v1545 = vmax.f32 %v1443, 0.0
      %v1546 = vmax.f32 %v1446, 0.0
      %v1547 = vmax.f32 %v1451, 0.0
      %v1548 = vmax.f32 %v1454, 0.0
      %v1549 = vmax.f32 %v1459, 0.0
      %v1550 = vmax.f32 %v1462, 0.0
      %v1551 = vmax.f32 %v1467, 0.0
      %v1552 = vmax.f32 %v1470, 0.0
      %v1553 = vmax.f32 %v1475, 0.0
      %v1554 = vmax.f32 %v1478, 0.0
      %v1555 = vmax.f32 %v1483, 0.0
      %v1556 = vmax.f32 %v1486, 0.0
      %v1557 = vmax.f32 %v1491, 0.0
      %v1558 = vmax.f32 %v1494, 0.0
      %v1559 = vmax.f32 %v1499, 0.0
      %v1560 = vmax.f32 %v1502, 0.0
      %v1561 = vmax.f32 %v1507, 0.0
      %v1562 = vmax.f32 %v1510, 0.0
      %v1563 = vmax.f32 %v1515, 0.0
      %v1564 = vmax.f32 %v1518, 0.0
      %v1565 = vmax.f32 %v1523, 0.0
      %v1566 = vmax.f32 %v1526, 0.0
      %v1567 = vmax.f32 %v1531, 0.0
      %v1568 = vmax.f32 %v1534, 0.0
      %v1569 = vpack.c.bf16 %v1538, %v1537
      %v1570 = vpack.c.bf16 %v1540, %v1539
      %v1571 = vpack.c.bf16 %v1542, %v1541
      %v1572 = vpack.c.bf16 %v1544, %v1543
      %v1573 = vpack.c.bf16 %v1546, %v1545
      %v1574 = vpack.c.bf16 %v1548, %v1547
      %v1575 = vpack.c.bf16 %v1550, %v1549
      %v1576 = vpack.c.bf16 %v1552, %v1551
      %v1577 = vpack.c.bf16 %v1554, %v1553
      %v1578 = vpack.c.bf16 %v1556, %v1555
      %v1579 = vpack.c.bf16 %v1558, %v1557
      %v1580 = vpack.c.bf16 %v1560, %v1559
      %v1581 = vpack.c.bf16 %v1562, %v1561
      %v1582 = vpack.c.bf16 %v1564, %v1563
      %v1583 = vpack.c.bf16 %v1566, %v1565
      %v1584 = vpack.c.bf16 %v1568, %v1567
      %v1601 = vunpack.c.l.b16 %v1569
      %v1602 = vunpack.c.h.b16 %v1569
      %v1603 = vunpack.c.l.b16 %v1570
      %v1604 = vunpack.c.h.b16 %v1570
      %v1605 = vunpack.c.l.b16 %v1571
      %v1606 = vunpack.c.h.b16 %v1571
      %v1607 = vunpack.c.l.b16 %v1572
      %v1608 = vunpack.c.h.b16 %v1572
      %v1609 = vunpack.c.l.b16 %v1573
      %v1610 = vunpack.c.h.b16 %v1573
      %v1611 = vunpack.c.l.b16 %v1574
      %v1612 = vunpack.c.h.b16 %v1574
      %v1613 = vunpack.c.l.b16 %v1575
      %v1614 = vunpack.c.h.b16 %v1575
      %v1615 = vunpack.c.l.b16 %v1576
      %v1616 = vunpack.c.h.b16 %v1576
      %v1617 = vunpack.c.l.b16 %v1577
      %v1618 = vunpack.c.h.b16 %v1577
      %v1619 = vunpack.c.l.b16 %v1578
      %v1620 = vunpack.c.h.b16 %v1578
      %v1621 = vunpack.c.l.b16 %v1579
      %v1622 = vunpack.c.h.b16 %v1579
      %v1623 = vunpack.c.l.b16 %v1580
      %v1624 = vunpack.c.h.b16 %v1580
      %v1625 = vunpack.c.l.b16 %v1581
      %v1626 = vunpack.c.h.b16 %v1581
      %v1627 = vunpack.c.l.b16 %v1582
      %v1628 = vunpack.c.h.b16 %v1582
      %v1629 = vunpack.c.l.b16 %v1583
      %v1630 = vunpack.c.h.b16 %v1583
      %v1631 = vunpack.c.l.b16 %v1584
      %v1632 = vunpack.c.h.b16 %v1584
      %v1633 = vpack.c.b16 %v1601, %v1601
      %v1634 = vpack.c.b16 %v1602, %v1602
      %v1635 = vpack.c.b16 %v1603, %v1603
      %v1636 = vpack.c.b16 %v1604, %v1604
      %v1637 = vpack.c.b16 %v1605, %v1605
      %v1638 = vpack.c.b16 %v1606, %v1606
      %v1639 = vpack.c.b16 %v1607, %v1607
      %v1640 = vpack.c.b16 %v1608, %v1608
      %v1641 = vpack.c.b16 %v1609, %v1609
      %v1642 = vpack.c.b16 %v1610, %v1610
      %v1643 = vpack.c.b16 %v1611, %v1611
      %v1644 = vpack.c.b16 %v1612, %v1612
      %v1645 = vpack.c.b16 %v1613, %v1613
      %v1646 = vpack.c.b16 %v1614, %v1614
      %v1647 = vpack.c.b16 %v1615, %v1615
      %v1648 = vpack.c.b16 %v1616, %v1616
      %v1649 = vpack.c.b16 %v1617, %v1617
      %v1650 = vpack.c.b16 %v1618, %v1618
      %v1651 = vpack.c.b16 %v1619, %v1619
      %v1652 = vpack.c.b16 %v1620, %v1620
      %v1653 = vpack.c.b16 %v1621, %v1621
      %v1654 = vpack.c.b16 %v1622, %v1622
      %v1655 = vpack.c.b16 %v1623, %v1623
      %v1656 = vpack.c.b16 %v1624, %v1624
      %v1657 = vpack.c.b16 %v1625, %v1625
      %v1658 = vpack.c.b16 %v1626, %v1626
      %v1659 = vpack.c.b16 %v1627, %v1627
      %v1660 = vpack.c.b16 %v1628, %v1628
      %v1661 = vpack.c.b16 %v1629, %v1629
      %v1662 = vpack.c.b16 %v1630, %v1630
      %v1663 = vpack.c.b16 %v1631, %v1631
      %v1664 = vpack.c.b16 %v1632, %v1632
      %vm1697 = vcmask 519168
      %1698 = vst.msk [vmem:[%s211] sm:$0xf] %vm1697, %v1633
      %1699 = vst.msk [vmem:[%s211 + $0x4] sm:$0xf] %vm1697, %v1634
      %1700 = vst.msk [vmem:[%s211 + $0x8] sm:$0xf] %vm1697, %v1635
      %1701 = vst.msk [vmem:[%s211 + $0xc] sm:$0xf] %vm1697, %v1636
      %1702 = vst.msk [vmem:[%s211 + $0x10] sm:$0xf] %vm1697, %v1637
      %1703 = vst.msk [vmem:[%s211 + $0x14] sm:$0xf] %vm1697, %v1638
      %1704 = vst.msk [vmem:[%s211 + $0x18] sm:$0xf] %vm1697, %v1639
      %1705 = vst.msk [vmem:[%s211 + $0x1c] sm:$0xf] %vm1697, %v1640
      %1706 = vst.msk [vmem:[%s211 + $0x20] sm:$0xf] %vm1697, %v1641
      %1707 = vst.msk [vmem:[%s211 + $0x24] sm:$0xf] %vm1697, %v1642
      %1708 = vst.msk [vmem:[%s211 + $0x28] sm:$0xf] %vm1697, %v1643
      %1709 = vst.msk [vmem:[%s211 + $0x2c] sm:$0xf] %vm1697, %v1644
      %1710 = vst.msk [vmem:[%s211 + $0x30] sm:$0xf] %vm1697, %v1645
      %1711 = vst.msk [vmem:[%s211 + $0x34] sm:$0xf] %vm1697, %v1646
      %1712 = vst.msk [vmem:[%s211 + $0x38] sm:$0xf] %vm1697, %v1647
      %1713 = vst.msk [vmem:[%s211 + $0x3c] sm:$0xf] %vm1697, %v1648
      %1714 = vst.msk [vmem:[%s211 + $0x40] sm:$0xf] %vm1697, %v1649
      %1715 = vst.msk [vmem:[%s211 + $0x44] sm:$0xf] %vm1697, %v1650
      %1716 = vst.msk [vmem:[%s211 + $0x48] sm:$0xf] %vm1697, %v1651
      %1717 = vst.msk [vmem:[%s211 + $0x4c] sm:$0xf] %vm1697, %v1652
      %1718 = vst.msk [vmem:[%s211 + $0x50] sm:$0xf] %vm1697, %v1653
      %1719 = vst.msk [vmem:[%s211 + $0x54] sm:$0xf] %vm1697, %v1654
      %1720 = vst.msk [vmem:[%s211 + $0x58] sm:$0xf] %vm1697, %v1655
      %1721 = vst.msk [vmem:[%s211 + $0x5c] sm:$0xf] %vm1697, %v1656
      %1722 = vst.msk [vmem:[%s211 + $0x60] sm:$0xf] %vm1697, %v1657
      %1723 = vst.msk [vmem:[%s211 + $0x64] sm:$0xf] %vm1697, %v1658
      %1724 = vst.msk [vmem:[%s211 + $0x68] sm:$0xf] %vm1697, %v1659
      %1725 = vst.msk [vmem:[%s211 + $0x6c] sm:$0xf] %vm1697, %v1660
      %1726 = vst.msk [vmem:[%s211 + $0x70] sm:$0xf] %vm1697, %v1661
      %1727 = vst.msk [vmem:[%s211 + $0x74] sm:$0xf] %vm1697, %v1662
      %1728 = vst.msk [vmem:[%s211 + $0x78] sm:$0xf] %vm1697, %v1663
      %1729 = vst.msk [vmem:[%s211 + $0x7c] sm:$0xf] %vm1697, %v1664
      %s1730 = smul.u32 32, %s19
      %p1731 = scmp.lt.s32.totalorder %s18, 3
      %s1732 = scalar_select %p1731, %s18, 3
      %p1733 = scmp.lt.s32.totalorder %s1730, 31
      %s1734 = scalar_select %p1733, %s1730, 31
      %s1735 = smul.addr %s1732, 32
      %s1736 = sadd.s32 %s1734, %s1735
      %s1737 = smul.addr %s1736, 4
      %s1738 = scalar_lea.vmem %s3, %s1737
      // Predicated region
      $region33: #{perceptual_loss.11} parent=31 // pred_check
        %p1739 = pneg %p116
      $region34: #{perceptual_loss.11} parent=31 // pred_check_branch
        %1741 = sbr.rel (%p1739) target = $region36
      $region35: #{perceptual_loss.11} parent=31 // pred_region
        %s1742 = smul.u32 32, %s19
      $region36: #{perceptual_loss.11} parent=31 // pred_fallthru
        _
    $region32: #{perceptual_loss.11} parent=5 // pred_fallthru
      _
    %p1743 = scmp.le.s32.totalorder 2, %s9
    // Predicated region
    $region37: #{perceptual_loss.11} parent=5 // pred_check
      %p1744 = pneg %p1743
    $region38: #{perceptual_loss.11} parent=5 // pred_check_branch
      %1746 = sbr.rel (%p1744) target = $region40
    $region39: #{perceptual_loss.11} parent=5 // pred_region
      %s1747 = ssub.s32 %s9, 2
      // Predicated region
      $region41: #{perceptual_loss.11} parent=39 // pred_check
        %p1748 = pneg %p122
      $region42: #{perceptual_loss.11} parent=39 // pred_check_branch
        %1750 = sbr.rel (%p1748) target = $region44
      $region43: #{perceptual_loss.11} parent=39 // pred_region
        %s1751 = smul.u32 32, %s21
        %p1752 = scmp.lt.s32.totalorder %s20, 3
        %s1753 = scalar_select %p1752, %s20, 3
        %p1754 = scmp.lt.s32.totalorder %s1751, 31
        %s1755 = scalar_select %p1754, %s1751, 31
        %s1756 = smul.addr %s1753, 32
        %s1757 = sadd.s32 %s1755, %s1756
        %s1758 = smul.addr %s1757, 4
        %s1759 = scalar_lea.vmem %s3, %s1758
      $region44: #{perceptual_loss.11} parent=39 // pred_fallthru
        _
    $region40: #{perceptual_loss.11} parent=5 // pred_fallthru
      _
  $region6: #{perceptual_loss.11} parent=0 // loop_footer
    %s13 = sadd.s32 1, %s9
  $region7: #{perceptual_loss.11} parent=0 // loop_footer_branch
    %8 = sbr.rel target = $region3
  $region8: #{perceptual_loss.11} parent=0 // loop_exit
    _

// kernel: perceptual_loss.12
$region0: #{perceptual_loss.12}
  #allocation0 [shape = 'u32[]', space=smem, size = 0x4, offset = 0x4, fixed_abs, tag = 'smem constant byte address 0x4 - core index']
  #allocation1 [shape = 'u32[144,128]{1,0:T(1,128)}', space=vmem, size = 0x12000, scoped, tag = 'internal scratch']
  %s0 = inlined_call_operand.vmem [shape: bf16[4,16,8,128], index: 0, kind: input, shape index: {}]
  %s1 = inlined_call_operand.vmem [shape: bf16[4,8,8,64], index: 1, kind: output, shape index: {}]
  %s2 = sld [smem:[#allocation0]]
  $region37: #{perceptual_loss.12} parent=0
    _
  %s4 = ssub.s32 1, %s2
  %s5 = scalar_select 0, %s4, %s2
  loop: start=0, step=1, limit=6
  $region2: #{perceptual_loss.12} parent=0 // loop_pre_header
    _
  $region3: #{perceptual_loss.12} parent=0 // loop_header
    %s7 = sphi 0, %s11
    %p8 = scmp.ge.s32.totalorder %s7, 6
    %s17 = sphi 0, %s19
    %s20 = sphi 0, %s17
    %s21 = sphi 0, %s20
    %s37 = sphi 0, %s21
    %s43 = sphi 0, %s45
    %s46 = sphi 0, %s43
    %s47 = sphi 0, %s46
    %s63 = sphi 0, %s47
  $region4: #{perceptual_loss.12} parent=0 // loop_header_branch
    %10 = sbr.rel (%p8) target = $region8
  $region5: #{perceptual_loss.12} parent=0 // loop_body
    %s12 = ssub.s32 %s7, 1
    %s13 = ssub.s32 %s7, 2
    %s14 = sadd.s32 %s7, 1
    %s15 = ssub.s32 %s7, %s14
    %p16 = scmp.eq.s32.totalorder %s15, 0
    %s18 = sadd.s32 %s17, 1
    %s19 = scalar_select %p16, %s17, %s18
    %p22 = pneg %p16
    %p23 = scmp.eq.s32.totalorder %s7, 3
    %p24 = por %p22, %p23
    %p25 = scmp.ne.s32.totalorder %s17, %s20
    %p26 = scmp.eq.s32.totalorder %s7, 0
    %p27 = por %p25, %p26
    %p28 = scmp.ne.s32.totalorder %s17, %s20
    %p29 = scmp.eq.s32.totalorder %s12, 3
    %p30 = por %p28, %p29
    %p31 = scmp.ne.s32.totalorder %s20, %s21
    %p32 = scmp.eq.s32.totalorder %s12, 0
    %p33 = por %p31, %p32
    %p34 = scmp.ne.s32.totalorder %s20, %s21
    %p35 = scmp.eq.s32.totalorder %s13, 3
    %p36 = por %p34, %p35
    %p38 = scmp.ne.s32.totalorder %s21, %s37
    %p39 = scmp.eq.s32.totalorder %s13, 0
    %p40 = por %p38, %p39
    %s41 = ssub.s32 %s7, %s14
    %p42 = scmp.eq.s32.totalorder %s41, 0
    %s44 = sadd.s32 %s43, 1
    %s45 = scalar_select %p42, %s43, %s44
    %p48 = pneg %p42
    %p49 = scmp.eq.s32.totalorder %s7, 3
    %p50 = por %p48, %p49
    %p51 = scmp.ne.s32.totalorder %s43, %s46
    %p52 = scmp.eq.s32.totalorder %s7, 0
    %p53 = por %p51, %p52
    %p54 = scmp.ne.s32.totalorder %s43, %s46
    %p55 = scmp.eq.s32.totalorder %s12, 3
    %p56 = por %p54, %p55
    %p57 = scmp.ne.s32.totalorder %s46, %s47
    %p58 = scmp.eq.s32.totalorder %s12, 0
    %p59 = por %p57, %p58
    %p60 = scmp.ne.s32.totalorder %s46, %s47
    %p61 = scmp.eq.s32.totalorder %s13, 3
    %p62 = por %p60, %p61
    %p64 = scmp.ne.s32.totalorder %s47, %s63
    %p65 = scmp.eq.s32.totalorder %s13, 0
    %p66 = por %p64, %p65
    %p67 = scmp.le.s32.totalorder 1, %s7
    %p68 = scmp.lt.s32.totalorder %s7, 5
    %p69 = pnand %p67, %p68
    %p70 = pneg %p69
    // Predicated region
    $region9: #{perceptual_loss.12} parent=5 // pred_check
      _
    $region10: #{perceptual_loss.12} parent=5 // pred_check_branch
      %72 = sbr.rel (%p69) target = $region12
    $region11: #{perceptual_loss.12} parent=5 // pred_region
      %s73 = ssub.s32 %s7, 1
    $region12: #{perceptual_loss.12} parent=5 // pred_fallthru
      _
    %p74 = scmp.lt.s32.totalorder %s7, 4
    // Predicated region
    $region13: #{perceptual_loss.12} parent=5 // pred_check
      %p75 = pneg %p74
    $region14: #{perceptual_loss.12} parent=5 // pred_check_branch
      %77 = sbr.rel (%p75) target = $region16
    $region15: #{perceptual_loss.12} parent=5 // pred_region
      // Predicated region
      $region17: #{perceptual_loss.12} parent=15 // pred_check
        %p78 = pneg %p27
      $region18: #{perceptual_loss.12} parent=15 // pred_check_branch
        %80 = sbr.rel (%p78) target = $region20
      $region19: #{perceptual_loss.12} parent=15 // pred_region
        %p81 = scmp.lt.s32.totalorder %s7, 3
        %s82 = scalar_select %p81, %s7, 3
        %s83 = smul.addr %s82, 16
        %s84 = smul.addr %s83, 4
        %s85 = scalar_lea.vmem %s0, %s84
      $region20: #{perceptual_loss.12} parent=15 // pred_fallthru
        _
    $region16: #{perceptual_loss.12} parent=5 // pred_fallthru
      _
    %p86 = scmp.le.s32.totalorder 1, %s7
    %p87 = scmp.lt.s32.totalorder %s7, 5
    %p88 = pnand %p86, %p87
    %p89 = pneg %p88
    // Predicated region
    $region21: #{perceptual_loss.12} parent=5 // pred_check
      _
    $region22: #{perceptual_loss.12} parent=5 // pred_check_branch
      %91 = sbr.rel (%p88) target = $region24
    $region23: #{perceptual_loss.12} parent=5 // pred_region
      %s92 = ssub.s32 %s7, 1
      %p93 = scmp.lt.s32.totalorder %s12, 3
      %s94 = scalar_select %p93, %s12, 3
      %s95 = smul.addr %s94, 16
      %s96 = smul.addr %s95, 4
      %s97 = scalar_lea.vmem %s0, %s96
      %p98 = pneg %p33
      %p99 = pneg %p30
      %p100 = pneg %p59
      %p101 = pneg %p56
      %p102 = scmp.lt.s32.totalorder %s12, 3
      %s103 = scalar_select %p102, %s12, 3
      %s104 = smul.addr %s103, 8
      %s105 = smul.addr %s104, 4
      %s106 = scalar_lea.vmem %s1, %s105
      %p107 = scmp.lt.s32.totalorder %s12, 3
      %s108 = scalar_select %p107, %s12, 3
      %s109 = smul.addr %s108, 16
      %s110 = smul.addr %s109, 4
      %s111 = scalar_lea.vmem %s0, %s110
      %p112 = scmp.lt.s32.totalorder %s12, 3
      %s113 = scalar_select %p112, %s12, 3
      %s114 = smul.addr %s113, 8
      %s115 = smul.addr %s114, 4
      %s116 = scalar_lea.vmem %s1, %s115
      %v117 = vld [vmem:[%s111] sm:$0xf]
      %v118 = vld [vmem:[%s111 + $0x4] sm:$0xf]
      %v119 = vld [vmem:[%s111 + $0x8] sm:$0xf]
      %v120 = vld [vmem:[%s111 + $0xc] sm:$0xf]
      %v121 = vld [vmem:[%s111 + $0x10] sm:$0xf]
      %v122 = vld [vmem:[%s111 + $0x14] sm:$0xf]
      %v123 = vld [vmem:[%s111 + $0x18] sm:$0xf]
      %v124 = vld [vmem:[%s111 + $0x1c] sm:$0xf]
      %v125 = vld [vmem:[%s111 + $0x20] sm:$0xf]
      %v126 = vld [vmem:[%s111 + $0x24] sm:$0xf]
      %v127 = vld [vmem:[%s111 + $0x28] sm:$0xf]
      %v128 = vld [vmem:[%s111 + $0x2c] sm:$0xf]
      %v129 = vld [vmem:[%s111 + $0x30] sm:$0xf]
      %v130 = vld [vmem:[%s111 + $0x34] sm:$0xf]
      %v131 = vld [vmem:[%s111 + $0x38] sm:$0xf]
      %v132 = vld [vmem:[%s111 + $0x3c] sm:$0xf]
      %149 = vrot.lane.b32.xlu0 %v117, 64
      %v150 = vpop.permute.xlu0 %149
      %151 = vrot.lane.b32.xlu0 %v118, 64
      %v152 = vpop.permute.xlu0 %151
      %153 = vrot.lane.b32.xlu0 %v119, 64
      %v154 = vpop.permute.xlu0 %153
      %155 = vrot.lane.b32.xlu0 %v120, 64
      %v156 = vpop.permute.xlu0 %155
      %157 = vrot.lane.b32.xlu0 %v121, 64
      %v158 = vpop.permute.xlu0 %157
      %159 = vrot.lane.b32.xlu0 %v122, 64
      %v160 = vpop.permute.xlu0 %159
      %161 = vrot.lane.b32.xlu0 %v123, 64
      %v162 = vpop.permute.xlu0 %161
      %163 = vrot.lane.b32.xlu0 %v124, 64
      %v164 = vpop.permute.xlu0 %163
      %165 = vrot.lane.b32.xlu0 %v125, 64
      %v166 = vpop.permute.xlu0 %165
      %167 = vrot.lane.b32.xlu0 %v126, 64
      %v168 = vpop.permute.xlu0 %167
      %169 = vrot.lane.b32.xlu0 %v127, 64
      %v170 = vpop.permute.xlu0 %169
      %171 = vrot.lane.b32.xlu0 %v128, 64
      %v172 = vpop.permute.xlu0 %171
      %173 = vrot.lane.b32.xlu0 %v129, 64
      %v174 = vpop.permute.xlu0 %173
      %175 = vrot.lane.b32.xlu0 %v130, 64
      %v176 = vpop.permute.xlu0 %175
      %177 = vrot.lane.b32.xlu0 %v131, 64
      %v178 = vpop.permute.xlu0 %177
      %179 = vrot.lane.b32.xlu0 %v132, 64
      %v180 = vpop.permute.xlu0 %179
      %v197 = vmax.bf16 %v117, %v150
      %v198 = vmax.bf16 %v118, %v152
      %v199 = vmax.bf16 %v119, %v154
      %v200 = vmax.bf16 %v120, %v156
      %v201 = vmax.bf16 %v121, %v158
      %v202 = vmax.bf16 %v122, %v160
      %v203 = vmax.bf16 %v123, %v162
      %v204 = vmax.bf16 %v124, %v164
      %v205 = vmax.bf16 %v125, %v166
      %v206 = vmax.bf16 %v126, %v168
      %v207 = vmax.bf16 %v127, %v170
      %v208 = vmax.bf16 %v128, %v172
      %v209 = vmax.bf16 %v129, %v174
      %v210 = vmax.bf16 %v130, %v176
      %v211 = vmax.bf16 %v131, %v178
      %v212 = vmax.bf16 %v132, %v180
      %v213 = vmax.bf16 %v197, %v198
      %v214 = vmax.bf16 %v199, %v200
      %v215 = vmax.bf16 %v201, %v202
      %v216 = vmax.bf16 %v203, %v204
      %v217 = vmax.bf16 %v205, %v206
      %v218 = vmax.bf16 %v207, %v208
      %v219 = vmax.bf16 %v209, %v210
      %v220 = vmax.bf16 %v211, %v212
      %vm221 = vcmask 519168
      %222 = vst.msk [vmem:[%s116] sm:$0xf] %vm221, %v213
      %223 = vst.msk [vmem:[%s116 + $0x4] sm:$0xf] %vm221, %v214
      %224 = vst.msk [vmem:[%s116 + $0x8] sm:$0xf] %vm221, %v215
      %225 = vst.msk [vmem:[%s116 + $0xc] sm:$0xf] %vm221, %v216
      %226 = vst.msk [vmem:[%s116 + $0x10] sm:$0xf] %vm221, %v217
      %227 = vst.msk [vmem:[%s116 + $0x14] sm:$0xf] %vm221, %v218
      %228 = vst.msk [vmem:[%s116 + $0x18] sm:$0xf] %vm221, %v219
      %229 = vst.msk [vmem:[%s116 + $0x1c] sm:$0xf] %vm221, %v220
      %p230 = scmp.lt.s32.totalorder %s12, 3
      %s231 = scalar_select %p230, %s12, 3
      %s232 = smul.addr %s231, 8
      %s233 = smul.addr %s232, 4
      %s234 = scalar_lea.vmem %s1, %s233
      // Predicated region
      $region25: #{perceptual_loss.12} parent=23 // pred_check
        %p235 = pneg %p56
      $region26: #{perceptual_loss.12} parent=23 // pred_check_branch
        %237 = sbr.rel (%p235) target = $region28
      $region27: #{perceptual_loss.12} parent=23 // pred_region
        _
      $region28: #{perceptual_loss.12} parent=23 // pred_fallthru
        _
    $region24: #{perceptual_loss.12} parent=5 // pred_fallthru
      _
    %p238 = scmp.le.s32.totalorder 2, %s7
    // Predicated region
    $region29: #{perceptual_loss.12} parent=5 // pred_check
      %p239 = pneg %p238
    $region30: #{perceptual_loss.12} parent=5 // pred_check_branch
      %241 = sbr.rel (%p239) target = $region32
    $region31: #{perceptual_loss.12} parent=5 // pred_region
      %s242 = ssub.s32 %s7, 2
      // Predicated region
      $region33: #{perceptual_loss.12} parent=31 // pred_check
        %p243 = pneg %p62
      $region34: #{perceptual_loss.12} parent=31 // pred_check_branch
        %245 = sbr.rel (%p243) target = $region36
      $region35: #{perceptual_loss.12} parent=31 // pred_region
        %p246 = scmp.lt.s32.totalorder %s13, 3
        %s247 = scalar_select %p246, %s13, 3
        %s248 = smul.addr %s247, 8
        %s249 = smul.addr %s248, 4
        %s250 = scalar_lea.vmem %s1, %s249
      $region36: #{perceptual_loss.12} parent=31 // pred_fallthru
        _
    $region32: #{perceptual_loss.12} parent=5 // pred_fallthru
      _
  $region6: #{perceptual_loss.12} parent=0 // loop_footer
    %s11 = sadd.s32 1, %s7
  $region7: #{perceptual_loss.12} parent=0 // loop_footer_branch
    %6 = sbr.rel target = $region3
  $region8: #{perceptual_loss.12} parent=0 // loop_exit
    _

// kernel: perceptual_loss.13
$region0: #{perceptual_loss.13}
  #allocation0 [shape = 'u32[]', space=smem, size = 0x4, offset = 0x4, fixed_abs, tag = 'smem constant byte address 0x4 - core index']
  #allocation1 [shape = 'u32[144,128]{1,0:T(1,128)}', space=vmem, size = 0x12000, scoped, tag = 'internal scratch']
  %s0 = inlined_call_operand.vmem [shape: bf16[4,64,576], index: 0, kind: input, shape index: {}]
  %s1 = inlined_call_operand.vmem [shape: bf16[576,128], index: 1, kind: input, shape index: {}]
  %s2 = inlined_call_operand.vmem [shape: f32[1,128], index: 2, kind: input, shape index: {}]
  %s3 = inlined_call_operand.vmem [shape: bf16[4,64,128], index: 3, kind: output, shape index: {}]
  %s4 = sld [smem:[#allocation0]]
  $region45: #{perceptual_loss.13} parent=0
    _
  %s6 = ssub.s32 1, %s4
  %s7 = scalar_select 0, %s6, %s4
  loop: start=0, step=1, limit=6
  $region2: #{perceptual_loss.13} parent=0 // loop_pre_header
    _
  $region3: #{perceptual_loss.13} parent=0 // loop_header
    %s9 = sphi 0, %s13
    %p10 = scmp.ge.s32.totalorder %s9, 6
    %s16 = sphi 0, %s28
    %s17 = sphi 0, %s24
    %s18 = sphi 0, %s16
    %s19 = sphi 0, %s17
    %s20 = sphi 0, %s18
    %s21 = sphi 0, %s19
    %s33 = sphi 0, %s35
    %s36 = sphi 0, %s33
    %s37 = sphi 0, %s36
    %s53 = sphi 0, %s37
    %s57 = sphi 0, %s57
    %s59 = sphi 0, %s57
    %s60 = sphi 0, %s59
    %s74 = sphi 0, %s60
    %s78 = sphi 0, %s78
    %s80 = sphi 0, %s78
    %s81 = sphi 0, %s80
    %s95 = sphi 0, %s81
    %s103 = sphi 0, %s105
    %s106 = sphi 0, %s103
    %s107 = sphi 0, %s106
    %s123 = sphi 0, %s107
  $region4: #{perceptual_loss.13} parent=0 // loop_header_branch
    %12 = sbr.rel (%p10) target = $region8
  $region5: #{perceptual_loss.13} parent=0 // loop_body
    %s14 = ssub.s32 %s9, 1
    %s15 = ssub.s32 %s9, 2
    %s22 = sadd.s32 1, %s17
    %p23 = scmp.ge.s32.totalorder %s22, 1
    %s24 = scalar_select %p23, 0, %s22
    %s25 = sadd.s32 1, %s16
    %s26 = scalar_select %p23, %s25, %s16
    %p27 = scmp.ge.s32.totalorder %s26, 4
    %s28 = scalar_select %p27, 0, %s26
    %s29 = ssub.s32 %s16, %s28
    %s30 = ssub.s32 %s17, %s24
    %s31 = sor.u32 %s29, %s30
    %p32 = scmp.eq.s32.totalorder %s31, 0
    %s34 = sadd.s32 %s33, 1
    %s35 = scalar_select %p32, %s33, %s34
    %p38 = pneg %p32
    %p39 = scmp.eq.s32.totalorder %s9, 3
    %p40 = por %p38, %p39
    %p41 = scmp.ne.s32.totalorder %s33, %s36
    %p42 = scmp.eq.s32.totalorder %s9, 0
    %p43 = por %p41, %p42
    %p44 = scmp.ne.s32.totalorder %s33, %s36
    %p45 = scmp.eq.s32.totalorder %s14, 3
    %p46 = por %p44, %p45
    %p47 = scmp.ne.s32.totalorder %s36, %s37
    %p48 = scmp.eq.s32.totalorder %s14, 0
    %p49 = por %p47, %p48
    %p50 = scmp.ne.s32.totalorder %s36, %s37
    %p51 = scmp.eq.s32.totalorder %s15, 3
    %p52 = por %p50, %p51
    %p54 = scmp.ne.s32.totalorder %s37, %s53
    %p55 = scmp.eq.s32.totalorder %s15, 0
    %p56 = por %p54, %p55
    %s58 = sadd.s32 %s57, 1
    %p61 = scmp.eq.s32.totalorder %s9, 3
    %p62 = scmp.ne.s32.totalorder %s57, %s59
    %p63 = scmp.eq.s32.totalorder %s9, 0
    %p64 = por %p62, %p63
    %p65 = scmp.ne.s32.totalorder %s57, %s59
    %p66 = scmp.eq.s32.totalorder %s14, 3
    %p67 = por %p65, %p66
    %p68 = scmp.ne.s32.totalorder %s59, %s60
    %p69 = scmp.eq.s32.totalorder %s14, 0
    %p70 = por %p68, %p69
    %p71 = scmp.ne.s32.totalorder %s59, %s60
    %p72 = scmp.eq.s32.totalorder %s15, 3
    %p73 = por %p71, %p72
    %p75 = scmp.ne.s32.totalorder %s60, %s74
    %p76 = scmp.eq.s32.totalorder %s15, 0
    %p77 = por %p75, %p76
    %s79 = sadd.s32 %s78, 1
    %p82 = scmp.eq.s32.totalorder %s9, 3
    %p83 = scmp.ne.s32.totalorder %s78, %s80
    %p84 = scmp.eq.s32.totalorder %s9, 0
    %p85 = por %p83, %p84
    %p86 = scmp.ne.s32.totalorder %s78, %s80
    %p87 = scmp.eq.s32.totalorder %s14, 3
    %p88 = por %p86, %p87
    %p89 = scmp.ne.s32.totalorder %s80, %s81
    %p90 = scmp.eq.s32.totalorder %s14, 0
    %p91 = por %p89, %p90
    %p92 = scmp.ne.s32.totalorder %s80, %s81
    %p93 = scmp.eq.s32.totalorder %s15, 3
    %p94 = por %p92, %p93
    %p96 = scmp.ne.s32.totalorder %s81, %s95
    %p97 = scmp.eq.s32.totalorder %s15, 0
    %p98 = por %p96, %p97
    %s99 = ssub.s32 %s16, %s28
    %s100 = ssub.s32 %s17, %s24
    %s101 = sor.u32 %s99, %s100
    %p102 = scmp.eq.s32.totalorder %s101, 0
    %s104 = sadd.s32 %s103, 1
    %s105 = scalar_select %p102, %s103, %s104
    %p108 = pneg %p102
    %p109 = scmp.eq.s32.totalorder %s9, 3
    %p110 = por %p108, %p109
    %p111 = scmp.ne.s32.totalorder %s103, %s106
    %p112 = scmp.eq.s32.totalorder %s9, 0
    %p113 = por %p111, %p112
    %p114 = scmp.ne.s32.totalorder %s103, %s106
    %p115 = scmp.eq.s32.totalorder %s14, 3
    %p116 = por %p114, %p115
    %p117 = scmp.ne.s32.totalorder %s106, %s107
    %p118 = scmp.eq.s32.totalorder %s14, 0
    %p119 = por %p117, %p118
    %p120 = scmp.ne.s32.totalorder %s106, %s107
    %p121 = scmp.eq.s32.totalorder %s15, 3
    %p122 = por %p120, %p121
    %p124 = scmp.ne.s32.totalorder %s107, %s123
    %p125 = scmp.eq.s32.totalorder %s15, 0
    %p126 = por %p124, %p125
    %p127 = scmp.le.s32.totalorder 1, %s9
    %p128 = scmp.lt.s32.totalorder %s9, 5
    %p129 = pnand %p127, %p128
    %p130 = pneg %p129
    // Predicated region
    $region9: #{perceptual_loss.13} parent=5 // pred_check
      _
    $region10: #{perceptual_loss.13} parent=5 // pred_check_branch
      %132 = sbr.rel (%p129) target = $region12
    $region11: #{perceptual_loss.13} parent=5 // pred_region
      %s133 = ssub.s32 %s9, 1
      // Predicated region
      $region13: #{perceptual_loss.13} parent=11 // pred_check
        %p134 = pneg %p70
      $region14: #{perceptual_loss.13} parent=11 // pred_check_branch
        %136 = sbr.rel (%p134) target = $region16
      $region15: #{perceptual_loss.13} parent=11 // pred_region
        _
      $region16: #{perceptual_loss.13} parent=11 // pred_fallthru
        _
      // Predicated region
      $region17: #{perceptual_loss.13} parent=11 // pred_check
        %p137 = pneg %p91
      $region18: #{perceptual_loss.13} parent=11 // pred_check_branch
        %139 = sbr.rel (%p137) target = $region20
      $region19: #{perceptual_loss.13} parent=11 // pred_region
        _
      $region20: #{perceptual_loss.13} parent=11 // pred_fallthru
        _
    $region12: #{perceptual_loss.13} parent=5 // pred_fallthru
      _
    %p140 = scmp.lt.s32.totalorder %s9, 4
    // Predicated region
    $region21: #{perceptual_loss.13} parent=5 // pred_check
      %p141 = pneg %p140
    $region22: #{perceptual_loss.13} parent=5 // pred_check_branch
      %143 = sbr.rel (%p141) target = $region24
    $region23: #{perceptual_loss.13} parent=5 // pred_region
      // Predicated region
      $region25: #{perceptual_loss.13} parent=23 // pred_check
        %p144 = pneg %p43
      $region26: #{perceptual_loss.13} parent=23 // pred_check_branch
        %146 = sbr.rel (%p144) target = $region28
      $region27: #{perceptual_loss.13} parent=23 // pred_region
        %s147 = smul.u32 8, %s17
        %p148 = scmp.lt.s32.totalorder %s16, 3
        %s149 = scalar_select %p148, %s16, 3
        %p150 = scmp.lt.s32.totalorder %s147, 7
        %s151 = scalar_select %p150, %s147, 7
        %s152 = smul.addr %s151, 5
        %s153 = smul.addr %s149, 40
        %s154 = sadd.s32 %s152, %s153
        %s155 = smul.addr %s154, 4
        %s156 = scalar_lea.vmem %s0, %s155
        %s157 = smul.u32 8, %s17
      $region28: #{perceptual_loss.13} parent=23 // pred_fallthru
        _
    $region24: #{perceptual_loss.13} parent=5 // pred_fallthru
      _
    %p158 = scmp.le.s32.totalorder 1, %s9
    %p159 = scmp.lt.s32.totalorder %s9, 5
    %p160 = pnand %p158, %p159
    %p161 = pneg %p160
    // Predicated region
    $region29: #{perceptual_loss.13} parent=5 // pred_check
      _
    $region30: #{perceptual_loss.13} parent=5 // pred_check_branch
      %163 = sbr.rel (%p160) target = $region32
    $region31: #{perceptual_loss.13} parent=5 // pred_region
      %s164 = ssub.s32 %s9, 1
      %s165 = smul.u32 8, %s19
      %p166 = scmp.lt.s32.totalorder %s18, 3
      %s167 = scalar_select %p166, %s18, 3
      %p168 = scmp.lt.s32.totalorder %s165, 7
      %s169 = scalar_select %p168, %s165, 7
      %s170 = smul.addr %s169, 5
      %s171 = smul.addr %s167, 40
      %s172 = sadd.s32 %s170, %s171
      %s173 = smul.addr %s172, 4
      %s174 = scalar_lea.vmem %s0, %s173
      %p175 = pneg %p49
      %p176 = pneg %p46
      %p177 = pneg %p70
      %p178 = pneg %p67
      %p179 = pneg %p91
      %p180 = pneg %p88
      %p181 = pneg %p119
      %p182 = pneg %p116
      %s183 = smul.u32 8, %s19
      %p184 = scmp.lt.s32.totalorder %s18, 3
      %s185 = scalar_select %p184, %s18, 3
      %p186 = scmp.lt.s32.totalorder %s183, 7
      %s187 = scalar_select %p186, %s183, 7
      %s188 = smul.addr %s185, 8
      %s189 = sadd.s32 %s187, %s188
      %s190 = smul.addr %s189, 4
      %s191 = scalar_lea.vmem %s3, %s190
      %s192 = smul.u32 8, %s19
      %p193 = scmp.lt.s32.totalorder %s18, 3
      %s194 = scalar_select %p193, %s18, 3
      %p195 = scmp.lt.s32.totalorder %s192, 7
      %s196 = scalar_select %p195, %s192, 7
      %s197 = smul.addr %s196, 5
      %s198 = smul.addr %s194, 40
      %s199 = sadd.s32 %s197, %s198
      %s200 = smul.addr %s199, 4
      %s201 = scalar_lea.vmem %s0, %s200
      %s202 = smul.u32 8, %s19
      %s203 = smul.u32 8, %s19
      %p204 = scmp.lt.s32.totalorder %s18, 3
      %s205 = scalar_select %p204, %s18, 3
      %p206 = scmp.lt.s32.totalorder %s203, 7
      %s207 = scalar_select %p206, %s203, 7
      %s208 = smul.addr %s205, 8
      %s209 = sadd.s32 %s207, %s208
      %s210 = smul.addr %s209, 4
      %s211 = scalar_lea.vmem %s3, %s210
      %s212 = smul.u32 8, %s19
      %v214 = vld [vmem:[%s201] sm:$0xff]
      %v215 = vld [vmem:[%s201 + $0x8] sm:$0xff]
      %v216 = vld [vmem:[%s201 + $0x10] sm:$0xf]
      %v217 = vld [vmem:[%s201 + $0x14] sm:$0xff]
      %v218 = vld [vmem:[%s201 + $0x1c] sm:$0xff]
      %v219 = vld [vmem:[%s201 + $0x24] sm:$0xf]
      %v220 = vld [vmem:[%s201 + $0x28] sm:$0xff]
      %v221 = vld [vmem:[%s201 + $0x30] sm:$0xff]
      %v222 = vld [vmem:[%s201 + $0x38] sm:$0xf]
      %v223 = vld [vmem:[%s201 + $0x3c] sm:$0xff]
      %v224 = vld [vmem:[%s201 + $0x44] sm:$0xff]
      %v225 = vld [vmem:[%s201 + $0x4c] sm:$0xf]
      %v226 = vld [vmem:[%s201 + $0x50] sm:$0xff]
      %v227 = vld [vmem:[%s201 + $0x58] sm:$0xff]
      %v228 = vld [vmem:[%s201 + $0x60] sm:$0xf]
      %v229 = vld [vmem:[%s201 + $0x64] sm:$0xff]
      %v230 = vld [vmem:[%s201 + $0x6c] sm:$0xff]
      %v231 = vld [vmem:[%s201 + $0x74] sm:$0xf]
      %v232 = vld [vmem:[%s201 + $0x78] sm:$0xff]
      %v233 = vld [vmem:[%s201 + $0x80] sm:$0xff]
      %v234 = vld [vmem:[%s201 + $0x88] sm:$0xf]
      %v235 = vld [vmem:[%s201 + $0x8c] sm:$0xff]
      %v236 = vld [vmem:[%s201 + $0x94] sm:$0xff]
      %v237 = vld [vmem:[%s201 + $0x9c] sm:$0xf]
      %v238 = vld [vmem:[%s1] sm:$0xf]
      %v239 = vld [vmem:[%s1 + $0x4] sm:$0xf]
      %v240 = vld [vmem:[%s1 + $0x8] sm:$0xf]
      %v241 = vld [vmem:[%s1 + $0xc] sm:$0xf]
      %v242 = vld [vmem:[%s1 + $0x10] sm:$0xf]
      %v243 = vld [vmem:[%s1 + $0x14] sm:$0xf]
      %v244 = vld [vmem:[%s1 + $0x18] sm:$0xf]
      %v245 = vld [vmem:[%s1 + $0x1c] sm:$0xf]
      %v246 = vld [vmem:[%s1 + $0x20] sm:$0xf]
      %v247 = vld [vmem:[%s1 + $0x24] sm:$0xf]
      %v248 = vld [vmem:[%s1 + $0x28] sm:$0xf]
      %v249 = vld [vmem:[%s1 + $0x2c] sm:$0xf]
      %v250 = vld [vmem:[%s1 + $0x30] sm:$0xf]
      %v251 = vld [vmem:[%s1 + $0x34] sm:$0xf]
      %v252 = vld [vmem:[%s1 + $0x38] sm:$0xf]
      %v253 = vld [vmem:[%s1 + $0x3c] sm:$0xf]
      %v254 = vld [vmem:[%s1 + $0x40] sm:$0xf]
      %v255 = vld [vmem:[%s1 + $0x44] sm:$0xf]
      %v256 = vld [vmem:[%s1 + $0x48] sm:$0xf]
      %v257 = vld [vmem:[%s1 + $0x4c] sm:$0xf]
      %v258 = vld [vmem:[%s1 + $0x50] sm:$0xf]
      %v259 = vld [vmem:[%s1 + $0x54] sm:$0xf]
      %v260 = vld [vmem:[%s1 + $0x58] sm:$0xf]
      %v261 = vld [vmem:[%s1 + $0x5c] sm:$0xf]
      %v262 = vld [vmem:[%s1 + $0x60] sm:$0xf]
      %v263 = vld [vmem:[%s1 + $0x64] sm:$0xf]
      %v264 = vld [vmem:[%s1 + $0x68] sm:$0xf]
      %v265 = vld [vmem:[%s1 + $0x6c] sm:$0xf]
      %v266 = vld [vmem:[%s1 + $0x70] sm:$0xf]
      %v267 = vld [vmem:[%s1 + $0x74] sm:$0xf]
      %v268 = vld [vmem:[%s1 + $0x78] sm:$0xf]
      %v269 = vld [vmem:[%s1 + $0x7c] sm:$0xf]
      %v270 = vld [vmem:[%s1 + $0x80] sm:$0xf]
      %v271 = vld [vmem:[%s1 + $0x84] sm:$0xf]
      %v272 = vld [vmem:[%s1 + $0x88] sm:$0xf]
      %v273 = vld [vmem:[%s1 + $0x8c] sm:$0xf]
      %v274 = vld [vmem:[%s1 + $0x90] sm:$0xf]
      %v275 = vld [vmem:[%s1 + $0x94] sm:$0xf]
      %v276 = vld [vmem:[%s1 + $0x98] sm:$0xf]
      %v277 = vld [vmem:[%s1 + $0x9c] sm:$0xf]
      %v278 = vld [vmem:[%s1 + $0xa0] sm:$0xf]
      %v279 = vld [vmem:[%s1 + $0xa4] sm:$0xf]
      %v280 = vld [vmem:[%s1 + $0xa8] sm:$0xf]
      %v281 = vld [vmem:[%s1 + $0xac] sm:$0xf]
      %v282 = vld [vmem:[%s1 + $0xb0] sm:$0xf]
      %v283 = vld [vmem:[%s1 + $0xb4] sm:$0xf]
      %v284 = vld [vmem:[%s1 + $0xb8] sm:$0xf]
      %v285 = vld [vmem:[%s1 + $0xbc] sm:$0xf]
      %v286 = vld [vmem:[%s1 + $0xc0] sm:$0xf]
      %v287 = vld [vmem:[%s1 + $0xc4] sm:$0xf]
      %v288 = vld [vmem:[%s1 + $0xc8] sm:$0xf]
      %v289 = vld [vmem:[%s1 + $0xcc] sm:$0xf]
      %v290 = vld [vmem:[%s1 + $0xd0] sm:$0xf]
      %v291 = vld [vmem:[%s1 + $0xd4] sm:$0xf]
      %v292 = vld [vmem:[%s1 + $0xd8] sm:$0xf]
      %v293 = vld [vmem:[%s1 + $0xdc] sm:$0xf]
      %v294 = vld [vmem:[%s1 + $0xe0] sm:$0xf]
      %v295 = vld [vmem:[%s1 + $0xe4] sm:$0xf]
      %v296 = vld [vmem:[%s1 + $0xe8] sm:$0xf]
      %v297 = vld [vmem:[%s1 + $0xec] sm:$0xf]
      %v298 = vld [vmem:[%s1 + $0xf0] sm:$0xf]
      %v299 = vld [vmem:[%s1 + $0xf4] sm:$0xf]
      %v300 = vld [vmem:[%s1 + $0xf8] sm:$0xf]
      %v301 = vld [vmem:[%s1 + $0xfc] sm:$0xf]
      %v302 = vld [vmem:[%s1 + $0x100] sm:$0xf]
      %v303 = vld [vmem:[%s1 + $0x104] sm:$0xf]
      %v304 = vld [vmem:[%s1 + $0x108] sm:$0xf]
      %v305 = vld [vmem:[%s1 + $0x10c] sm:$0xf]
      %v306 = vld [vmem:[%s1 + $0x110] sm:$0xf]
      %v307 = vld [vmem:[%s1 + $0x114] sm:$0xf]
      %v308 = vld [vmem:[%s1 + $0x118] sm:$0xf]
      %v309 = vld [vmem:[%s1 + $0x11c] sm:$0xf]
      %v310 = vld [vmem:[%s2] sm:$0x1]
      %v312 = vlaneseq
      %v313 = vshrl.u32 %v312, 7
      %v314 = vsub.s32 0, %v313
      %v315 = vrot.slane %v310, %v314
      %v341 = vunpack.c.l.b16 %v214
      %v342 = vunpack.c.h.b16 %v214
      %v343 = vunpack.c.l.b16 %v215
      %v344 = vunpack.c.h.b16 %v215
      %v345 = vunpack.c.l.b16 %v216
      %v346 = vunpack.c.l.b16 %v217
      %v347 = vunpack.c.h.b16 %v217
      %v348 = vunpack.c.l.b16 %v218
      %v349 = vunpack.c.h.b16 %v218
      %v350 = vunpack.c.l.b16 %v219
      %v351 = vunpack.c.l.b16 %v220
      %v352 = vunpack.c.h.b16 %v220
      %v353 = vunpack.c.l.b16 %v221
      %v354 = vunpack.c.h.b16 %v221
      %v355 = vunpack.c.l.b16 %v222
      %v356 = vunpack.c.l.b16 %v223
      %v357 = vunpack.c.h.b16 %v223
      %v358 = vunpack.c.l.b16 %v224
      %v359 = vunpack.c.h.b16 %v224
      %v360 = vunpack.c.l.b16 %v225
      %v361 = vunpack.c.l.b16 %v226
      %v362 = vunpack.c.h.b16 %v226
      %v363 = vunpack.c.l.b16 %v227
      %v364 = vunpack.c.h.b16 %v227
      %v365 = vunpack.c.l.b16 %v228
      %v366 = vunpack.c.l.b16 %v229
      %v367 = vunpack.c.h.b16 %v229
      %v368 = vunpack.c.l.b16 %v230
      %v369 = vunpack.c.h.b16 %v230
      %v370 = vunpack.c.l.b16 %v231
      %v371 = vunpack.c.l.b16 %v232
      %v372 = vunpack.c.h.b16 %v232
      %v373 = vunpack.c.l.b16 %v233
      %v374 = vunpack.c.h.b16 %v233
      %v375 = vunpack.c.l.b16 %v234
      %v376 = vunpack.c.l.b16 %v235
      %v377 = vunpack.c.h.b16 %v235
      %v378 = vunpack.c.l.b16 %v236
      %v379 = vunpack.c.h.b16 %v236
      %v380 = vunpack.c.l.b16 %v237
      %v381 = vpack.c.b16 %v346, %v341
      %v382 = vpack.c.b16 %v347, %v342
      %v383 = vpack.c.b16 %v348, %v343
      %v384 = vpack.c.b16 %v349, %v344
      %v385 = vpack.c.b16 %v350, %v345
      %v386 = vpack.c.b16 %v356, %v351
      %v387 = vpack.c.b16 %v357, %v352
      %v388 = vpack.c.b16 %v358, %v353
      %v389 = vpack.c.b16 %v359, %v354
      %v390 = vpack.c.b16 %v360, %v355
      %v391 = vpack.c.b16 %v366, %v361
      %v392 = vpack.c.b16 %v367, %v362
      %v393 = vpack.c.b16 %v368, %v363
      %v394 = vpack.c.b16 %v369, %v364
      %v395 = vpack.c.b16 %v370, %v365
      %v396 = vpack.c.b16 %v376, %v371
      %v397 = vpack.c.b16 %v377, %v372
      %v398 = vpack.c.b16 %v378, %v373
      %v399 = vpack.c.b16 %v379, %v374
      %v400 = vpack.c.b16 %v380, %v375
      %v489 = vunpack.c.l.b16 %v238
      %v490 = vunpack.c.l.b16 %v239
      %v491 = vunpack.c.l.b16 %v240
      %v492 = vunpack.c.l.b16 %v241
      %v493 = vunpack.c.l.b16 %v242
      %v494 = vunpack.c.l.b16 %v243
      %v495 = vunpack.c.l.b16 %v244
      %v496 = vunpack.c.l.b16 %v245
      %v497 = vunpack.c.l.b16 %v246
      %v498 = vunpack.c.l.b16 %v247
      %v499 = vunpack.c.l.b16 %v248
      %v500 = vunpack.c.l.b16 %v249
      %v501 = vunpack.c.l.b16 %v250
      %v502 = vunpack.c.l.b16 %v251
      %v503 = vunpack.c.l.b16 %v252
      %v504 = vunpack.c.l.b16 %v253
      %v505 = vunpack.c.l.b16 %v254
      %v506 = vunpack.c.l.b16 %v255
      %v507 = vunpack.c.l.b16 %v256
      %v508 = vunpack.c.l.b16 %v257
      %v509 = vunpack.c.l.b16 %v258
      %v510 = vunpack.c.l.b16 %v259
      %v511 = vunpack.c.l.b16 %v260
      %v512 = vunpack.c.l.b16 %v261
      %v513 = vunpack.c.l.b16 %v262
      %v514 = vunpack.c.l.b16 %v263
      %v515 = vunpack.c.l.b16 %v264
      %v516 = vunpack.c.l.b16 %v265
      %v517 = vunpack.c.l.b16 %v266
      %v518 = vunpack.c.l.b16 %v267
      %v519 = vunpack.c.l.b16 %v268
      %v520 = vunpack.c.l.b16 %v269
      %v521 = vunpack.c.l.b16 %v270
      %v522 = vunpack.c.l.b16 %v271
      %v523 = vunpack.c.l.b16 %v272
      %v524 = vunpack.c.l.b16 %v273
      %v525 = vunpack.c.l.b16 %v274
      %v526 = vunpack.c.l.b16 %v275
      %v527 = vunpack.c.l.b16 %v276
      %v528 = vunpack.c.l.b16 %v277
      %v529 = vunpack.c.l.b16 %v278
      %v530 = vunpack.c.l.b16 %v279
      %v531 = vunpack.c.l.b16 %v280
      %v532 = vunpack.c.l.b16 %v281
      %v533 = vunpack.c.l.b16 %v282
      %v534 = vunpack.c.l.b16 %v283
      %v535 = vunpack.c.l.b16 %v284
      %v536 = vunpack.c.l.b16 %v285
      %v537 = vunpack.c.l.b16 %v286
      %v538 = vunpack.c.l.b16 %v287
      %v539 = vunpack.c.l.b16 %v288
      %v540 = vunpack.c.l.b16 %v289
      %v541 = vunpack.c.l.b16 %v290
      %v542 = vunpack.c.l.b16 %v291
      %v543 = vunpack.c.l.b16 %v292
      %v544 = vunpack.c.l.b16 %v293
      %v545 = vunpack.c.l.b16 %v294
      %v546 = vunpack.c.l.b16 %v295
      %v547 = vunpack.c.l.b16 %v296
      %v548 = vunpack.c.l.b16 %v297
      %v549 = vunpack.c.l.b16 %v298
      %v550 = vunpack.c.l.b16 %v299
      %v551 = vunpack.c.l.b16 %v300
      %v552 = vunpack.c.l.b16 %v301
      %v553 = vunpack.c.l.b16 %v302
      %v554 = vunpack.c.l.b16 %v303
      %v555 = vunpack.c.l.b16 %v304
      %v556 = vunpack.c.l.b16 %v305
      %v557 = vunpack.c.l.b16 %v306
      %v558 = vunpack.c.l.b16 %v307
      %v559 = vunpack.c.l.b16 %v308
      %v560 = vunpack.c.l.b16 %v309
      %v561 = vpack.c.b16 %v490, %v489
      %v562 = vpack.c.b16 %v492, %v491
      %v563 = vpack.c.b16 %v494, %v493
      %v564 = vpack.c.b16 %v496, %v495
      %v565 = vpack.c.b16 %v498, %v497
      %v566 = vpack.c.b16 %v500, %v499
      %v567 = vpack.c.b16 %v502, %v501
      %v568 = vpack.c.b16 %v504, %v503
      %v569 = vpack.c.b16 %v506, %v505
      %v570 = vpack.c.b16 %v508, %v507
      %v571 = vpack.c.b16 %v510, %v509
      %v572 = vpack.c.b16 %v512, %v511
      %v573 = vpack.c.b16 %v514, %v513
      %v574 = vpack.c.b16 %v516, %v515
      %v575 = vpack.c.b16 %v518, %v517
      %v576 = vpack.c.b16 %v520, %v519
      %v577 = vpack.c.b16 %v522, %v521
      %v578 = vpack.c.b16 %v524, %v523
      %v579 = vpack.c.b16 %v526, %v525
      %v580 = vpack.c.b16 %v528, %v527
      %v581 = vpack.c.b16 %v530, %v529
      %v582 = vpack.c.b16 %v532, %v531
      %v583 = vpack.c.b16 %v534, %v533
      %v584 = vpack.c.b16 %v536, %v535
      %v585 = vpack.c.b16 %v538, %v537
      %v586 = vpack.c.b16 %v540, %v539
      %v587 = vpack.c.b16 %v542, %v541
      %v588 = vpack.c.b16 %v544, %v543
      %v589 = vpack.c.b16 %v546, %v545
      %v590 = vpack.c.b16 %v548, %v547
      %v591 = vpack.c.b16 %v550, %v549
      %v592 = vpack.c.b16 %v552, %v551
      %v593 = vpack.c.b16 %v554, %v553
      %v594 = vpack.c.b16 %v556, %v555
      %v595 = vpack.c.b16 %v558, %v557
      %v596 = vpack.c.b16 %v560, %v559
      %vm633 = vcmask 523264
      %v635 = vsel %vm633, %v385, 0
      %v638 = vsel %vm633, %v390, 0
      %v641 = vsel %vm633, %v395, 0
      %v644 = vsel %vm633, %v400, 0
      %646 = vmatprep.subr.bf16.mxu0 0
      %647 = vmatpush1.bf16.msra.mxu0 %v561
      %648 = vmatprep.subr.bf16.mxu0 0
      %649 = vmatpush1.bf16.msra.mxu0 %v562
      %650 = vmatprep.subr.bf16.mxu0 0
      %651 = vmatpush1.bf16.msra.mxu0 %v563
      %652 = vmatprep.subr.bf16.mxu0 0
      %653 = vmatpush1.bf16.msra.mxu0 %v564
      %654 = vmatprep.subr.bf16.mxu0 0
      %655 = vmatpush1.bf16.msra.mxu0 %v565
      %656 = vmatprep.subr.bf16.mxu0 0
      %657 = vmatpush1.bf16.msra.mxu0 %v566
      %658 = vmatprep.subr.bf16.mxu0 0
      %659 = vmatpush1.bf16.msra.mxu0 %v567
      %660 = vmatprep.subr.bf16.mxu0 0
      %661 = vmatpush1.bf16.msra.mxu0 %v568
      %662 = vmatprep.subr.bf16.mxu0 0
      %663 = vmatpush1.bf16.msra.mxu0 %v569
      %664 = vmatprep.subr.bf16.mxu0 0
      %665 = vmatpush1.bf16.msra.mxu0 %v570
      %666 = vmatprep.subr.bf16.mxu0 0
      %667 = vmatpush1.bf16.msra.mxu0 %v571
      %668 = vmatprep.subr.bf16.mxu0 0
      %669 = vmatpush1.bf16.msra.mxu0 %v572
      %670 = vmatprep.subr.bf16.mxu0 0
      %671 = vmatpush1.bf16.msra.mxu0 %v573
      %672 = vmatprep.subr.bf16.mxu0 0
      %673 = vmatpush1.bf16.msra.mxu0 %v574
      %674 = vmatprep.subr.bf16.mxu0 0
      %675 = vmatpush1.bf16.msra.mxu0 %v575
      %676 = vmatprep.subr.bf16.mxu0 0
      %677 = vmatpush1.bf16.msra.mxu0 %v576
      %678 = vmatprep.mubr.bf16.mxu0 %v382
      %679 = vmatmul.mubr.bf16.gmra.mrb[0].mxu0 %v381
      %v680 = vpop.f32.mrb[0].mxu0
      %v681 = vadd.f32 %v315, %v680
      %v682 = vpop.f32.mrb[0].mxu0
      %v683 = vpop.f32.mrb[0].mxu0
      %v684 = vadd.f32 %v315, %v683
      %v685 = vpop.f32.mrb[0].mxu0
      %686 = vmatprep.mubr.bf16.mxu0 %v387
      %687 = vmatmul.mubr.bf16.gmra.mrb[0].mxu0 %v386
      %v688 = vpop.f32.mrb[0].mxu0
      %v689 = vadd.f32 %v315, %v688
      %v690 = vpop.f32.mrb[0].mxu0
      %v691 = vpop.f32.mrb[0].mxu0
      %v692 = vadd.f32 %v315, %v691
      %v693 = vpop.f32.mrb[0].mxu0
      %694 = vmatprep.mubr.bf16.mxu0 %v392
      %695 = vmatmul.mubr.bf16.gmra.mrb[0].mxu0 %v391
      %v696 = vpop.f32.mrb[0].mxu0
      %v697 = vadd.f32 %v315, %v696
      %v698 = vpop.f32.mrb[0].mxu0
      %v699 = vpop.f32.mrb[0].mxu0
      %v700 = vadd.f32 %v315, %v699
      %v701 = vpop.f32.mrb[0].mxu0
      %702 = vmatprep.mubr.bf16.mxu0 %v397
      %703 = vmatmul.mubr.bf16.gmra.mrb[0].mxu0 %v396
      %v704 = vpop.f32.mrb[0].mxu0
      %v705 = vadd.f32 %v315, %v704
      %v706 = vpop.f32.mrb[0].mxu0
      %v707 = vpop.f32.mrb[0].mxu0
      %v708 = vadd.f32 %v315, %v707
      %v709 = vpop.f32.mrb[0].mxu0
      %710 = vdwg.mxu0
      %711 = vmatprep.subr.bf16.mxu0 0
      %712 = vmatpush1.bf16.msra.mxu0 %v577
      %713 = vmatprep.subr.bf16.mxu0 0
      %714 = vmatpush1.bf16.msra.mxu0 %v578
      %715 = vmatprep.subr.bf16.mxu0 0
      %716 = vmatpush1.bf16.msra.mxu0 %v579
      %717 = vmatprep.subr.bf16.mxu0 0
      %718 = vmatpush1.bf16.msra.mxu0 %v580
      %719 = vmatprep.subr.bf16.mxu0 0
      %720 = vmatpush1.bf16.msra.mxu0 %v581
      %721 = vmatprep.subr.bf16.mxu0 0
      %722 = vmatpush1.bf16.msra.mxu0 %v582
      %723 = vmatprep.subr.bf16.mxu0 0
      %724 = vmatpush1.bf16.msra.mxu0 %v583
      %725 = vmatprep.subr.bf16.mxu0 0
      %726 = vmatpush1.bf16.msra.mxu0 %v584
      %727 = vmatprep.subr.bf16.mxu0 0
      %728 = vmatpush1.bf16.msra.mxu0 %v585
      %729 = vmatprep.subr.bf16.mxu0 0
      %730 = vmatpush1.bf16.msra.mxu0 %v586
      %731 = vmatprep.subr.bf16.mxu0 0
      %732 = vmatpush1.bf16.msra.mxu0 %v587
      %733 = vmatprep.subr.bf16.mxu0 0
      %734 = vmatpush1.bf16.msra.mxu0 %v588
      %735 = vmatprep.subr.bf16.mxu0 0
      %736 = vmatpush1.bf16.msra.mxu0 %v589
      %737 = vmatprep.subr.bf16.mxu0 0
      %738 = vmatpush1.bf16.msra.mxu0 %v590
      %739 = vmatprep.subr.bf16.mxu0 0
      %740 = vmatpush1.bf16.msra.mxu0 %v591
      %741 = vmatprep.subr.bf16.mxu0 0
      %742 = vmatpush1.bf16.msra.mxu0 %v592
      %743 = vmatprep.mubr.bf16.mxu0 %v384
      %744 = vmatmul.mubr.bf16.gmra.mrb[0].mxu0 %v383
      %v745 = vpop.f32.mrb[0].mxu0
      %v746 = vadd.f32 %v681, %v745
      %v747 = vpop.f32.mrb[0].mxu0
      %v748 = vpop.f32.mrb[0].mxu0
      %v749 = vadd.f32 %v684, %v748
      %v750 = vpop.f32.mrb[0].mxu0
      %751 = vmatprep.mubr.bf16.mxu0 %v389
      %752 = vmatmul.mubr.bf16.gmra.mrb[0].mxu0 %v388
      %v753 = vpop.f32.mrb[0].mxu0
      %v754 = vadd.f32 %v689, %v753
      %v755 = vpop.f32.mrb[0].mxu0
      %v756 = vpop.f32.mrb[0].mxu0
      %v757 = vadd.f32 %v692, %v756
      %v758 = vpop.f32.mrb[0].mxu0
      %759 = vmatprep.mubr.bf16.mxu0 %v394
      %760 = vmatmul.mubr.bf16.gmra.mrb[0].mxu0 %v393
      %v761 = vpop.f32.mrb[0].mxu0
      %v762 = vadd.f32 %v697, %v761
      %v763 = vpop.f32.mrb[0].mxu0
      %v764 = vpop.f32.mrb[0].mxu0
      %v765 = vadd.f32 %v700, %v764
      %v766 = vpop.f32.mrb[0].mxu0
      %767 = vmatprep.mubr.bf16.mxu0 %v399
      %768 = vmatmul.mubr.bf16.gmra.mrb[0].mxu0 %v398
      %v769 = vpop.f32.mrb[0].mxu0
      %v770 = vadd.f32 %v705, %v769
      %v771 = vpop.f32.mrb[0].mxu0
      %v772 = vpop.f32.mrb[0].mxu0
      %v773 = vadd.f32 %v708, %v772
      %v774 = vpop.f32.mrb[0].mxu0
      %775 = vdwg.mxu0
      %776 = vmatprep.subr.bf16.mxu0 0
      %777 = vmatpush1.bf16.msra.mxu0 %v593
      %778 = vmatprep.subr.bf16.mxu0 0
      %779 = vmatpush1.bf16.msra.mxu0 %v594
      %780 = vmatprep.subr.bf16.mxu0 0
      %781 = vmatpush1.bf16.msra.mxu0 %v595
      %782 = vmatprep.subr.bf16.mxu0 0
      %783 = vmatpush1.bf16.msra.mxu0 %v596
      %784 = vmatprep.subr.bf16.mxu0 0
      %785 = vmatpush1.bf16.msra.mxu0 0
      %786 = vmatprep.subr.bf16.mxu0 0
      %787 = vmatpush1.bf16.msra.mxu0 0
      %788 = vmatprep.subr.bf16.mxu0 0
      %789 = vmatpush1.bf16.msra.mxu0 0
      %790 = vmatprep.subr.bf16.mxu0 0
      %791 = vmatpush1.bf16.msra.mxu0 0
      %792 = vmatprep.subr.bf16.mxu0 0
      %793 = vmatpush1.bf16.msra.mxu0 0
      %794 = vmatprep.subr.bf16.mxu0 0
      %795 = vmatpush1.bf16.msra.mxu0 0
      %796 = vmatprep.subr.bf16.mxu0 0
      %797 = vmatpush1.bf16.msra.mxu0 0
      %798 = vmatprep.subr.bf16.mxu0 0
      %799 = vmatpush1.bf16.msra.mxu0 0
      %800 = vmatprep.subr.bf16.mxu0 0
      %801 = vmatpush1.bf16.msra.mxu0 0
      %802 = vmatprep.subr.bf16.mxu0 0
      %803 = vmatpush1.bf16.msra.mxu0 0
      %804 = vmatprep.subr.bf16.mxu0 0
      %805 = vmatpush1.bf16.msra.mxu0 0
      %806 = vmatprep.subr.bf16.mxu0 0
      %807 = vmatpush1.bf16.msra.mxu0 0
      %808 = vmatprep.mubr.bf16.mxu0 0
      %809 = vmatmul.mubr.bf16.gmra.mrb[0].mxu0 %v635
      %v810 = vpop.f32.mrb[0].mxu0
      %v811 = vadd.f32 %v746, %v810
      %v812 = vpop.f32.mrb[0].mxu0
      %v813 = vpop.f32.mrb[0].mxu0
      %v814 = vadd.f32 %v749, %v813
      %v815 = vpop.f32.mrb[0].mxu0
      %816 = vmatprep.mubr.bf16.mxu0 0
      %817 = vmatmul.mubr.bf16.gmra.mrb[0].mxu0 %v638
      %v818 = vpop.f32.mrb[0].mxu0
      %v819 = vadd.f32 %v754, %v818
      %v820 = vpop.f32.mrb[0].mxu0
      %v821 = vpop.f32.mrb[0].mxu0
      %v822 = vadd.f32 %v757, %v821
      %v823 = vpop.f32.mrb[0].mxu0
      %824 = vmatprep.mubr.bf16.mxu0 0
      %825 = vmatmul.mubr.bf16.gmra.mrb[0].mxu0 %v641
      %v826 = vpop.f32.mrb[0].mxu0
      %v827 = vadd.f32 %v762, %v826
      %v828 = vpop.f32.mrb[0].mxu0
      %v829 = vpop.f32.mrb[0].mxu0
      %v830 = vadd.f32 %v765, %v829
      %v831 = vpop.f32.mrb[0].mxu0
      %832 = vmatprep.mubr.bf16.mxu0 0
      %833 = vmatmul.mubr.bf16.gmra.mrb[0].mxu0 %v644
      %v834 = vpop.f32.mrb[0].mxu0
      %v835 = vadd.f32 %v770, %v834
      %v836 = vpop.f32.mrb[0].mxu0
      %v837 = vpop.f32.mrb[0].mxu0
      %v838 = vadd.f32 %v773, %v837
      %v839 = vpop.f32.mrb[0].mxu0
      %840 = vdwg.mxu0
      %v841 = vmax.f32 %v811, 0.0
      %v842 = vmax.f32 %v814, 0.0
      %v843 = vmax.f32 %v819, 0.0
      %v844 = vmax.f32 %v822, 0.0
      %v845 = vmax.f32 %v827, 0.0
      %v846 = vmax.f32 %v830, 0.0
      %v847 = vmax.f32 %v835, 0.0
      %v848 = vmax.f32 %v838, 0.0
      %v849 = vpack.c.bf16 %v842, %v841
      %v850 = vpack.c.bf16 %v844, %v843
      %v851 = vpack.c.bf16 %v846, %v845
      %v852 = vpack.c.bf16 %v848, %v847
      %v857 = vunpack.c.l.b16 %v849
      %v858 = vunpack.c.h.b16 %v849
      %v859 = vunpack.c.l.b16 %v850
      %v860 = vunpack.c.h.b16 %v850
      %v861 = vunpack.c.l.b16 %v851
      %v862 = vunpack.c.h.b16 %v851
      %v863 = vunpack.c.l.b16 %v852
      %v864 = vunpack.c.h.b16 %v852
      %v865 = vpack.c.b16 %v857, %v857
      %v866 = vpack.c.b16 %v858, %v858
      %v867 = vpack.c.b16 %v859, %v859
      %v868 = vpack.c.b16 %v860, %v860
      %v869 = vpack.c.b16 %v861, %v861
      %v870 = vpack.c.b16 %v862, %v862
      %v871 = vpack.c.b16 %v863, %v863
      %v872 = vpack.c.b16 %v864, %v864
      %881 = vst [vmem:[%s211] sm:$0xf] %v865
      %882 = vst [vmem:[%s211 + $0x4] sm:$0xf] %v866
      %883 = vst [vmem:[%s211 + $0x8] sm:$0xf] %v867
      %884 = vst [vmem:[%s211 + $0xc] sm:$0xf] %v868
      %885 = vst [vmem:[%s211 + $0x10] sm:$0xf] %v869
      %886 = vst [vmem:[%s211 + $0x14] sm:$0xf] %v870
      %887 = vst [vmem:[%s211 + $0x18] sm:$0xf] %v871
      %888 = vst [vmem:[%s211 + $0x1c] sm:$0xf] %v872
      %s889 = smul.u32 8, %s19
      %p890 = scmp.lt.s32.totalorder %s18, 3
      %s891 = scalar_select %p890, %s18, 3
      %p892 = scmp.lt.s32.totalorder %s889, 7
      %s893 = scalar_select %p892, %s889, 7
      %s894 = smul.addr %s891, 8
      %s895 = sadd.s32 %s893, %s894
      %s896 = smul.addr %s895, 4
      %s897 = scalar_lea.vmem %s3, %s896
      // Predicated region
      $region33: #{perceptual_loss.13} parent=31 // pred_check
        %p898 = pneg %p116
      $region34: #{perceptual_loss.13} parent=31 // pred_check_branch
        %900 = sbr.rel (%p898) target = $region36
      $region35: #{perceptual_loss.13} parent=31 // pred_region
        %s901 = smul.u32 8, %s19
      $region36: #{perceptual_loss.13} parent=31 // pred_fallthru
        _
    $region32: #{perceptual_loss.13} parent=5 // pred_fallthru
      _
    %p902 = scmp.le.s32.totalorder 2, %s9
    // Predicated region
    $region37: #{perceptual_loss.13} parent=5 // pred_check
      %p903 = pneg %p902
    $region38: #{perceptual_loss.13} parent=5 // pred_check_branch
      %905 = sbr.rel (%p903) target = $region40
    $region39: #{perceptual_loss.13} parent=5 // pred_region
      %s906 = ssub.s32 %s9, 2
      // Predicated region
      $region41: #{perceptual_loss.13} parent=39 // pred_check
        %p907 = pneg %p122
      $region42: #{perceptual_loss.13} parent=39 // pred_check_branch
        %909 = sbr.rel (%p907) target = $region44
      $region43: #{perceptual_loss.13} parent=39 // pred_region
        %s910 = smul.u32 8, %s21
        %p911 = scmp.lt.s32.totalorder %s20, 3
        %s912 = scalar_select %p911, %s20, 3
        %p913 = scmp.lt.s32.totalorder %s910, 7
        %s914 = scalar_select %p913, %s910, 7
        %s915 = smul.addr %s912, 8
        %s916 = sadd.s32 %s914, %s915
        %s917 = smul.addr %s916, 4
        %s918 = scalar_lea.vmem %s3, %s917
      $region44: #{perceptual_loss.13} parent=39 // pred_fallthru
        _
    $region40: #{perceptual_loss.13} parent=5 // pred_fallthru
      _
  $region6: #{perceptual_loss.13} parent=0 // loop_footer
    %s13 = sadd.s32 1, %s9
  $region7: #{perceptual_loss.13} parent=0 // loop_footer_branch
    %8 = sbr.rel target = $region3
  $region8: #{perceptual_loss.13} parent=0 // loop_exit
    _

// kernel: perceptual_loss.15
$region0: #{perceptual_loss.15}
  #allocation0 [shape = 'u32[]', space=smem, size = 0x4, offset = 0x4, fixed_abs, tag = 'smem constant byte address 0x4 - core index']
  #allocation1 [shape = 'u32[144,128]{1,0:T(1,128)}', space=vmem, size = 0x12000, scoped, tag = 'internal scratch']
  %s0 = inlined_call_operand.vmem [shape: bf16[4,8,4,256], index: 0, kind: input, shape index: {}]
  %s1 = inlined_call_operand.vmem [shape: bf16[4,4,4,128], index: 1, kind: output, shape index: {}]
  %s2 = sld [smem:[#allocation0]]
  $region37: #{perceptual_loss.15} parent=0
    _
  %s4 = ssub.s32 1, %s2
  %s5 = scalar_select 0, %s4, %s2
  loop: start=0, step=1, limit=6
  $region2: #{perceptual_loss.15} parent=0 // loop_pre_header
    _
  $region3: #{perceptual_loss.15} parent=0 // loop_header
    %s7 = sphi 0, %s11
    %p8 = scmp.ge.s32.totalorder %s7, 6
    %s17 = sphi 0, %s19
    %s20 = sphi 0, %s17
    %s21 = sphi 0, %s20
    %s37 = sphi 0, %s21
    %s43 = sphi 0, %s45
    %s46 = sphi 0, %s43
    %s47 = sphi 0, %s46
    %s63 = sphi 0, %s47
  $region4: #{perceptual_loss.15} parent=0 // loop_header_branch
    %10 = sbr.rel (%p8) target = $region8
  $region5: #{perceptual_loss.15} parent=0 // loop_body
    %s12 = ssub.s32 %s7, 1
    %s13 = ssub.s32 %s7, 2
    %s14 = sadd.s32 %s7, 1
    %s15 = ssub.s32 %s7, %s14
    %p16 = scmp.eq.s32.totalorder %s15, 0
    %s18 = sadd.s32 %s17, 1
    %s19 = scalar_select %p16, %s17, %s18
    %p22 = pneg %p16
    %p23 = scmp.eq.s32.totalorder %s7, 3
    %p24 = por %p22, %p23
    %p25 = scmp.ne.s32.totalorder %s17, %s20
    %p26 = scmp.eq.s32.totalorder %s7, 0
    %p27 = por %p25, %p26
    %p28 = scmp.ne.s32.totalorder %s17, %s20
    %p29 = scmp.eq.s32.totalorder %s12, 3
    %p30 = por %p28, %p29
    %p31 = scmp.ne.s32.totalorder %s20, %s21
    %p32 = scmp.eq.s32.totalorder %s12, 0
    %p33 = por %p31, %p32
    %p34 = scmp.ne.s32.totalorder %s20, %s21
    %p35 = scmp.eq.s32.totalorder %s13, 3
    %p36 = por %p34, %p35
    %p38 = scmp.ne.s32.totalorder %s21, %s37
    %p39 = scmp.eq.s32.totalorder %s13, 0
    %p40 = por %p38, %p39
    %s41 = ssub.s32 %s7, %s14
    %p42 = scmp.eq.s32.totalorder %s41, 0
    %s44 = sadd.s32 %s43, 1
    %s45 = scalar_select %p42, %s43, %s44
    %p48 = pneg %p42
    %p49 = scmp.eq.s32.totalorder %s7, 3
    %p50 = por %p48, %p49
    %p51 = scmp.ne.s32.totalorder %s43, %s46
    %p52 = scmp.eq.s32.totalorder %s7, 0
    %p53 = por %p51, %p52
    %p54 = scmp.ne.s32.totalorder %s43, %s46
    %p55 = scmp.eq.s32.totalorder %s12, 3
    %p56 = por %p54, %p55
    %p57 = scmp.ne.s32.totalorder %s46, %s47
    %p58 = scmp.eq.s32.totalorder %s12, 0
    %p59 = por %p57, %p58
    %p60 = scmp.ne.s32.totalorder %s46, %s47
    %p61 = scmp.eq.s32.totalorder %s13, 3
    %p62 = por %p60, %p61
    %p64 = scmp.ne.s32.totalorder %s47, %s63
    %p65 = scmp.eq.s32.totalorder %s13, 0
    %p66 = por %p64, %p65
    %p67 = scmp.le.s32.totalorder 1, %s7
    %p68 = scmp.lt.s32.totalorder %s7, 5
    %p69 = pnand %p67, %p68
    %p70 = pneg %p69
    // Predicated region
    $region9: #{perceptual_loss.15} parent=5 // pred_check
      _
    $region10: #{perceptual_loss.15} parent=5 // pred_check_branch
      %72 = sbr.rel (%p69) target = $region12
    $region11: #{perceptual_loss.15} parent=5 // pred_region
      %s73 = ssub.s32 %s7, 1
    $region12: #{perceptual_loss.15} parent=5 // pred_fallthru
      _
    %p74 = scmp.lt.s32.totalorder %s7, 4
    // Predicated region
    $region13: #{perceptual_loss.15} parent=5 // pred_check
      %p75 = pneg %p74
    $region14: #{perceptual_loss.15} parent=5 // pred_check_branch
      %77 = sbr.rel (%p75) target = $region16
    $region15: #{perceptual_loss.15} parent=5 // pred_region
      // Predicated region
      $region17: #{perceptual_loss.15} parent=15 // pred_check
        %p78 = pneg %p27
      $region18: #{perceptual_loss.15} parent=15 // pred_check_branch
        %80 = sbr.rel (%p78) target = $region20
      $region19: #{perceptual_loss.15} parent=15 // pred_region
        %p81 = scmp.lt.s32.totalorder %s7, 3
        %s82 = scalar_select %p81, %s7, 3
        %s83 = smul.addr %s82, 16
        %s84 = smul.addr %s83, 2
        %s85 = scalar_lea.vmem %s0, %s84
      $region20: #{perceptual_loss.15} parent=15 // pred_fallthru
        _
    $region16: #{perceptual_loss.15} parent=5 // pred_fallthru
      _
    %p86 = scmp.le.s32.totalorder 1, %s7
    %p87 = scmp.lt.s32.totalorder %s7, 5
    %p88 = pnand %p86, %p87
    %p89 = pneg %p88
    // Predicated region
    $region21: #{perceptual_loss.15} parent=5 // pred_check
      _
    $region22: #{perceptual_loss.15} parent=5 // pred_check_branch
      %91 = sbr.rel (%p88) target = $region24
    $region23: #{perceptual_loss.15} parent=5 // pred_region
      %s92 = ssub.s32 %s7, 1
      %p93 = scmp.lt.s32.totalorder %s12, 3
      %s94 = scalar_select %p93, %s12, 3
      %s95 = smul.addr %s94, 16
      %s96 = smul.addr %s95, 2
      %s97 = scalar_lea.vmem %s0, %s96
      %p98 = pneg %p33
      %p99 = pneg %p30
      %p100 = pneg %p59
      %p101 = pneg %p56
      %p102 = scmp.lt.s32.totalorder %s12, 3
      %s103 = scalar_select %p102, %s12, 3
      %s104 = smul.addr %s103, 4
      %s105 = smul.addr %s104, 2
      %s106 = scalar_lea.vmem %s1, %s105
      %p107 = scmp.lt.s32.totalorder %s12, 3
      %s108 = scalar_select %p107, %s12, 3
      %s109 = smul.addr %s108, 16
      %s110 = smul.addr %s109, 2
      %s111 = scalar_lea.vmem %s0, %s110
      %p112 = scmp.lt.s32.totalorder %s12, 3
      %s113 = scalar_select %p112, %s12, 3
      %s114 = smul.addr %s113, 4
      %s115 = smul.addr %s114, 2
      %s116 = scalar_lea.vmem %s1, %s115
      %v117 = vld [vmem:[%s111] sm:$0xf]
      %v118 = vld [vmem:[%s111 + $0x4] sm:$0xf]
      %v119 = vld [vmem:[%s111 + $0x8] sm:$0xf]
      %v120 = vld [vmem:[%s111 + $0xc] sm:$0xf]
      %v121 = vld [vmem:[%s111 + $0x10] sm:$0xf]
      %v122 = vld [vmem:[%s111 + $0x14] sm:$0xf]
      %v123 = vld [vmem:[%s111 + $0x18] sm:$0xf]
      %v124 = vld [vmem:[%s111 + $0x1c] sm:$0xf]
      %v133 = vrot.slane %v117, 2
      %v134 = vrot.slane %v118, 2
      %v135 = vrot.slane %v119, 2
      %v136 = vrot.slane %v120, 2
      %v137 = vrot.slane %v121, 2
      %v138 = vrot.slane %v122, 2
      %v139 = vrot.slane %v123, 2
      %v140 = vrot.slane %v124, 2
      %v149 = vmax.bf16 %v117, %v133
      %v150 = vmax.bf16 %v118, %v134
      %v151 = vmax.bf16 %v119, %v135
      %v152 = vmax.bf16 %v120, %v136
      %v153 = vmax.bf16 %v121, %v137
      %v154 = vmax.bf16 %v122, %v138
      %v155 = vmax.bf16 %v123, %v139
      %v156 = vmax.bf16 %v124, %v140
      %v157 = vmax.bf16 %v149, %v150
      %v158 = vmax.bf16 %v151, %v152
      %v159 = vmax.bf16 %v153, %v154
      %v160 = vmax.bf16 %v155, %v156
      %161 = vst [vmem:[%s116] sm:$0x3] %v157
      %162 = vst [vmem:[%s116 + $0x2] sm:$0x3] %v158
      %163 = vst [vmem:[%s116 + $0x4] sm:$0x3] %v159
      %164 = vst [vmem:[%s116 + $0x6] sm:$0x3] %v160
      %p165 = scmp.lt.s32.totalorder %s12, 3
      %s166 = scalar_select %p165, %s12, 3
      %s167 = smul.addr %s166, 4
      %s168 = smul.addr %s167, 2
      %s169 = scalar_lea.vmem %s1, %s168
      // Predicated region
      $region25: #{perceptual_loss.15} parent=23 // pred_check
        %p170 = pneg %p56
      $region26: #{perceptual_loss.15} parent=23 // pred_check_branch
        %172 = sbr.rel (%p170) target = $region28
      $region27: #{perceptual_loss.15} parent=23 // pred_region
        _
      $region28: #{perceptual_loss.15} parent=23 // pred_fallthru
        _
    $region24: #{perceptual_loss.15} parent=5 // pred_fallthru
      _
    %p173 = scmp.le.s32.totalorder 2, %s7
    // Predicated region
    $region29: #{perceptual_loss.15} parent=5 // pred_check
      %p174 = pneg %p173
    $region30: #{perceptual_loss.15} parent=5 // pred_check_branch
      %176 = sbr.rel (%p174) target = $region32
    $region31: #{perceptual_loss.15} parent=5 // pred_region
      %s177 = ssub.s32 %s7, 2
      // Predicated region
      $region33: #{perceptual_loss.15} parent=31 // pred_check
        %p178 = pneg %p62
      $region34: #{perceptual_loss.15} parent=31 // pred_check_branch
        %180 = sbr.rel (%p178) target = $region36
      $region35: #{perceptual_loss.15} parent=31 // pred_region
        %p181 = scmp.lt.s32.totalorder %s13, 3
        %s182 = scalar_select %p181, %s13, 3
        %s183 = smul.addr %s182, 4
        %s184 = smul.addr %s183, 2
        %s185 = scalar_lea.vmem %s1, %s184
      $region36: #{perceptual_loss.15} parent=31 // pred_fallthru
        _
    $region32: #{perceptual_loss.15} parent=5 // pred_fallthru
      _
  $region6: #{perceptual_loss.15} parent=0 // loop_footer
    %s11 = sadd.s32 1, %s7
  $region7: #{perceptual_loss.15} parent=0 // loop_footer_branch
    %6 = sbr.rel target = $region3
  $region8: #{perceptual_loss.15} parent=0 // loop_exit
    _

// kernel: perceptual_loss.14
$region0: #{perceptual_loss.14}
  #allocation0 [shape = 'u32[]', space=smem, size = 0x4, offset = 0x4, fixed_abs, tag = 'smem constant byte address 0x4 - core index']
  #allocation1 [shape = 'u32[144,128]{1,0:T(1,128)}', space=vmem, size = 0x12000, scoped, tag = 'internal scratch']
  %s0 = inlined_call_operand.vmem [shape: bf16[4,64,1152], index: 0, kind: input, shape index: {}]
  %s1 = inlined_call_operand.vmem [shape: bf16[1152,128], index: 1, kind: input, shape index: {}]
  %s2 = inlined_call_operand.vmem [shape: f32[1,128], index: 2, kind: input, shape index: {}]
  %s3 = inlined_call_operand.vmem [shape: bf16[4,64,128], index: 3, kind: output, shape index: {}]
  %s4 = sld [smem:[#allocation0]]
  $region45: #{perceptual_loss.14} parent=0
    _
  %s6 = ssub.s32 1, %s4
  %s7 = scalar_select 0, %s6, %s4
  loop: start=0, step=1, limit=6
  $region2: #{perceptual_loss.14} parent=0 // loop_pre_header
    _
  $region3: #{perceptual_loss.14} parent=0 // loop_header
    %s9 = sphi 0, %s13
    %p10 = scmp.ge.s32.totalorder %s9, 6
    %s16 = sphi 0, %s28
    %s17 = sphi 0, %s24
    %s18 = sphi 0, %s16
    %s19 = sphi 0, %s17
    %s20 = sphi 0, %s18
    %s21 = sphi 0, %s19
    %s33 = sphi 0, %s35
    %s36 = sphi 0, %s33
    %s37 = sphi 0, %s36
    %s53 = sphi 0, %s37
    %s57 = sphi 0, %s57
    %s59 = sphi 0, %s57
    %s60 = sphi 0, %s59
    %s74 = sphi 0, %s60
    %s78 = sphi 0, %s78
    %s80 = sphi 0, %s78
    %s81 = sphi 0, %s80
    %s95 = sphi 0, %s81
    %s103 = sphi 0, %s105
    %s106 = sphi 0, %s103
    %s107 = sphi 0, %s106
    %s123 = sphi 0, %s107
  $region4: #{perceptual_loss.14} parent=0 // loop_header_branch
    %12 = sbr.rel (%p10) target = $region8
  $region5: #{perceptual_loss.14} parent=0 // loop_body
    %s14 = ssub.s32 %s9, 1
    %s15 = ssub.s32 %s9, 2
    %s22 = sadd.s32 1, %s17
    %p23 = scmp.ge.s32.totalorder %s22, 1
    %s24 = scalar_select %p23, 0, %s22
    %s25 = sadd.s32 1, %s16
    %s26 = scalar_select %p23, %s25, %s16
    %p27 = scmp.ge.s32.totalorder %s26, 4
    %s28 = scalar_select %p27, 0, %s26
    %s29 = ssub.s32 %s16, %s28
    %s30 = ssub.s32 %s17, %s24
    %s31 = sor.u32 %s29, %s30
    %p32 = scmp.eq.s32.totalorder %s31, 0
    %s34 = sadd.s32 %s33, 1
    %s35 = scalar_select %p32, %s33, %s34
    %p38 = pneg %p32
    %p39 = scmp.eq.s32.totalorder %s9, 3
    %p40 = por %p38, %p39
    %p41 = scmp.ne.s32.totalorder %s33, %s36
    %p42 = scmp.eq.s32.totalorder %s9, 0
    %p43 = por %p41, %p42
    %p44 = scmp.ne.s32.totalorder %s33, %s36
    %p45 = scmp.eq.s32.totalorder %s14, 3
    %p46 = por %p44, %p45
    %p47 = scmp.ne.s32.totalorder %s36, %s37
    %p48 = scmp.eq.s32.totalorder %s14, 0
    %p49 = por %p47, %p48
    %p50 = scmp.ne.s32.totalorder %s36, %s37
    %p51 = scmp.eq.s32.totalorder %s15, 3
    %p52 = por %p50, %p51
    %p54 = scmp.ne.s32.totalorder %s37, %s53
    %p55 = scmp.eq.s32.totalorder %s15, 0
    %p56 = por %p54, %p55
    %s58 = sadd.s32 %s57, 1
    %p61 = scmp.eq.s32.totalorder %s9, 3
    %p62 = scmp.ne.s32.totalorder %s57, %s59
    %p63 = scmp.eq.s32.totalorder %s9, 0
    %p64 = por %p62, %p63
    %p65 = scmp.ne.s32.totalorder %s57, %s59
    %p66 = scmp.eq.s32.totalorder %s14, 3
    %p67 = por %p65, %p66
    %p68 = scmp.ne.s32.totalorder %s59, %s60
    %p69 = scmp.eq.s32.totalorder %s14, 0
    %p70 = por %p68, %p69
    %p71 = scmp.ne.s32.totalorder %s59, %s60
    %p72 = scmp.eq.s32.totalorder %s15, 3
    %p73 = por %p71, %p72
    %p75 = scmp.ne.s32.totalorder %s60, %s74
    %p76 = scmp.eq.s32.totalorder %s15, 0
    %p77 = por %p75, %p76
    %s79 = sadd.s32 %s78, 1
    %p82 = scmp.eq.s32.totalorder %s9, 3
    %p83 = scmp.ne.s32.totalorder %s78, %s80
    %p84 = scmp.eq.s32.totalorder %s9, 0
    %p85 = por %p83, %p84
    %p86 = scmp.ne.s32.totalorder %s78, %s80
    %p87 = scmp.eq.s32.totalorder %s14, 3
    %p88 = por %p86, %p87
    %p89 = scmp.ne.s32.totalorder %s80, %s81
    %p90 = scmp.eq.s32.totalorder %s14, 0
    %p91 = por %p89, %p90
    %p92 = scmp.ne.s32.totalorder %s80, %s81
    %p93 = scmp.eq.s32.totalorder %s15, 3
    %p94 = por %p92, %p93
    %p96 = scmp.ne.s32.totalorder %s81, %s95
    %p97 = scmp.eq.s32.totalorder %s15, 0
    %p98 = por %p96, %p97
    %s99 = ssub.s32 %s16, %s28
    %s100 = ssub.s32 %s17, %s24
    %s101 = sor.u32 %s99, %s100
    %p102 = scmp.eq.s32.totalorder %s101, 0
    %s104 = sadd.s32 %s103, 1
    %s105 = scalar_select %p102, %s103, %s104
    %p108 = pneg %p102
    %p109 = scmp.eq.s32.totalorder %s9, 3
    %p110 = por %p108, %p109
    %p111 = scmp.ne.s32.totalorder %s103, %s106
    %p112 = scmp.eq.s32.totalorder %s9, 0
    %p113 = por %p111, %p112
    %p114 = scmp.ne.s32.totalorder %s103, %s106
    %p115 = scmp.eq.s32.totalorder %s14, 3
    %p116 = por %p114, %p115
    %p117 = scmp.ne.s32.totalorder %s106, %s107
    %p118 = scmp.eq.s32.totalorder %s14, 0
    %p119 = por %p117, %p118
    %p120 = scmp.ne.s32.totalorder %s106, %s107
    %p121 = scmp.eq.s32.totalorder %s15, 3
    %p122 = por %p120, %p121
    %p124 = scmp.ne.s32.totalorder %s107, %s123
    %p125 = scmp.eq.s32.totalorder %s15, 0
    %p126 = por %p124, %p125
    %p127 = scmp.le.s32.totalorder 1, %s9
    %p128 = scmp.lt.s32.totalorder %s9, 5
    %p129 = pnand %p127, %p128
    %p130 = pneg %p129
    // Predicated region
    $region9: #{perceptual_loss.14} parent=5 // pred_check
      _
    $region10: #{perceptual_loss.14} parent=5 // pred_check_branch
      %132 = sbr.rel (%p129) target = $region12
    $region11: #{perceptual_loss.14} parent=5 // pred_region
      %s133 = ssub.s32 %s9, 1
      // Predicated region
      $region13: #{perceptual_loss.14} parent=11 // pred_check
        %p134 = pneg %p70
      $region14: #{perceptual_loss.14} parent=11 // pred_check_branch
        %136 = sbr.rel (%p134) target = $region16
      $region15: #{perceptual_loss.14} parent=11 // pred_region
        _
      $region16: #{perceptual_loss.14} parent=11 // pred_fallthru
        _
      // Predicated region
      $region17: #{perceptual_loss.14} parent=11 // pred_check
        %p137 = pneg %p91
      $region18: #{perceptual_loss.14} parent=11 // pred_check_branch
        %139 = sbr.rel (%p137) target = $region20
      $region19: #{perceptual_loss.14} parent=11 // pred_region
        _
      $region20: #{perceptual_loss.14} parent=11 // pred_fallthru
        _
    $region12: #{perceptual_loss.14} parent=5 // pred_fallthru
      _
    %p140 = scmp.lt.s32.totalorder %s9, 4
    // Predicated region
    $region21: #{perceptual_loss.14} parent=5 // pred_check
      %p141 = pneg %p140
    $region22: #{perceptual_loss.14} parent=5 // pred_check_branch
      %143 = sbr.rel (%p141) target = $region24
    $region23: #{perceptual_loss.14} parent=5 // pred_region
      // Predicated region
      $region25: #{perceptual_loss.14} parent=23 // pred_check
        %p144 = pneg %p43
      $region26: #{perceptual_loss.14} parent=23 // pred_check_branch
        %146 = sbr.rel (%p144) target = $region28
      $region27: #{perceptual_loss.14} parent=23 // pred_region
        %s147 = smul.u32 8, %s17
        %p148 = scmp.lt.s32.totalorder %s16, 3
        %s149 = scalar_select %p148, %s16, 3
        %p150 = scmp.lt.s32.totalorder %s147, 7
        %s151 = scalar_select %p150, %s147, 7
        %s152 = smul.addr %s151, 9
        %s153 = smul.addr %s149, 72
        %s154 = sadd.s32 %s152, %s153
        %s155 = smul.addr %s154, 4
        %s156 = scalar_lea.vmem %s0, %s155
        %s157 = smul.u32 8, %s17
      $region28: #{perceptual_loss.14} parent=23 // pred_fallthru
        _
    $region24: #{perceptual_loss.14} parent=5 // pred_fallthru
      _
    %p158 = scmp.le.s32.totalorder 1, %s9
    %p159 = scmp.lt.s32.totalorder %s9, 5
    %p160 = pnand %p158, %p159
    %p161 = pneg %p160
    // Predicated region
    $region29: #{perceptual_loss.14} parent=5 // pred_check
      _
    $region30: #{perceptual_loss.14} parent=5 // pred_check_branch
      %163 = sbr.rel (%p160) target = $region32
    $region31: #{perceptual_loss.14} parent=5 // pred_region
      %s164 = ssub.s32 %s9, 1
      %s165 = smul.u32 8, %s19
      %p166 = scmp.lt.s32.totalorder %s18, 3
      %s167 = scalar_select %p166, %s18, 3
      %p168 = scmp.lt.s32.totalorder %s165, 7
      %s169 = scalar_select %p168, %s165, 7
      %s170 = smul.addr %s169, 9
      %s171 = smul.addr %s167, 72
      %s172 = sadd.s32 %s170, %s171
      %s173 = smul.addr %s172, 4
      %s174 = scalar_lea.vmem %s0, %s173
      %p175 = pneg %p49
      %p176 = pneg %p46
      %p177 = pneg %p70
      %p178 = pneg %p67
      %p179 = pneg %p91
      %p180 = pneg %p88
      %p181 = pneg %p119
      %p182 = pneg %p116
      %s183 = smul.u32 8, %s19
      %p184 = scmp.lt.s32.totalorder %s18, 3
      %s185 = scalar_select %p184, %s18, 3
      %p186 = scmp.lt.s32.totalorder %s183, 7
      %s187 = scalar_select %p186, %s183, 7
      %s188 = smul.addr %s185, 8
      %s189 = sadd.s32 %s187, %s188
      %s190 = smul.addr %s189, 4
      %s191 = scalar_lea.vmem %s3, %s190
      %s192 = smul.u32 8, %s19
      %p193 = scmp.lt.s32.totalorder %s18, 3
      %s194 = scalar_select %p193, %s18, 3
      %p195 = scmp.lt.s32.totalorder %s192, 7
      %s196 = scalar_select %p195, %s192, 7
      %s197 = smul.addr %s196, 9
      %s198 = smul.addr %s194, 72
      %s199 = sadd.s32 %s197, %s198
      %s200 = smul.addr %s199, 4
      %s201 = scalar_lea.vmem %s0, %s200
      %s202 = smul.u32 8, %s19
      %s203 = smul.u32 8, %s19
      %p204 = scmp.lt.s32.totalorder %s18, 3
      %s205 = scalar_select %p204, %s18, 3
      %p206 = scmp.lt.s32.totalorder %s203, 7
      %s207 = scalar_select %p206, %s203, 7
      %s208 = smul.addr %s205, 8
      %s209 = sadd.s32 %s207, %s208
      %s210 = smul.addr %s209, 4
      %s211 = scalar_lea.vmem %s3, %s210
      %s212 = smul.u32 8, %s19
      %v214 = vld [vmem:[%s201] sm:$0xff]
      %v215 = vld [vmem:[%s201 + $0x8] sm:$0xff]
      %v216 = vld [vmem:[%s201 + $0x10] sm:$0xff]
      %v217 = vld [vmem:[%s201 + $0x18] sm:$0xff]
      %v218 = vld [vmem:[%s201 + $0x20] sm:$0xf]
      %v219 = vld [vmem:[%s201 + $0x24] sm:$0xff]
      %v220 = vld [vmem:[%s201 + $0x2c] sm:$0xff]
      %v221 = vld [vmem:[%s201 + $0x34] sm:$0xff]
      %v222 = vld [vmem:[%s201 + $0x3c] sm:$0xff]
      %v223 = vld [vmem:[%s201 + $0x44] sm:$0xf]
      %v224 = vld [vmem:[%s201 + $0x48] sm:$0xff]
      %v225 = vld [vmem:[%s201 + $0x50] sm:$0xff]
      %v226 = vld [vmem:[%s201 + $0x58] sm:$0xff]
      %v227 = vld [vmem:[%s201 + $0x60] sm:$0xff]
      %v228 = vld [vmem:[%s201 + $0x68] sm:$0xf]
      %v229 = vld [vmem:[%s201 + $0x6c] sm:$0xff]
      %v230 = vld [vmem:[%s201 + $0x74] sm:$0xff]
      %v231 = vld [vmem:[%s201 + $0x7c] sm:$0xff]
      %v232 = vld [vmem:[%s201 + $0x84] sm:$0xff]
      %v233 = vld [vmem:[%s201 + $0x8c] sm:$0xf]
      %v234 = vld [vmem:[%s201 + $0x90] sm:$0xff]
      %v235 = vld [vmem:[%s201 + $0x98] sm:$0xff]
      %v236 = vld [vmem:[%s201 + $0xa0] sm:$0xff]
      %v237 = vld [vmem:[%s201 + $0xa8] sm:$0xff]
      %v238 = vld [vmem:[%s201 + $0xb0] sm:$0xf]
      %v239 = vld [vmem:[%s201 + $0xb4] sm:$0xff]
      %v240 = vld [vmem:[%s201 + $0xbc] sm:$0xff]
      %v241 = vld [vmem:[%s201 + $0xc4] sm:$0xff]
      %v242 = vld [vmem:[%s201 + $0xcc] sm:$0xff]
      %v243 = vld [vmem:[%s201 + $0xd4] sm:$0xf]
      %v244 = vld [vmem:[%s201 + $0xd8] sm:$0xff]
      %v245 = vld [vmem:[%s201 + $0xe0] sm:$0xff]
      %v246 = vld [vmem:[%s201 + $0xe8] sm:$0xff]
      %v247 = vld [vmem:[%s201 + $0xf0] sm:$0xff]
      %v248 = vld [vmem:[%s201 + $0xf8] sm:$0xf]
      %v249 = vld [vmem:[%s201 + $0xfc] sm:$0xff]
      %v250 = vld [vmem:[%s201 + $0x104] sm:$0xff]
      %v251 = vld [vmem:[%s201 + $0x10c] sm:$0xff]
      %v252 = vld [vmem:[%s201 + $0x114] sm:$0xff]
      %v253 = vld [vmem:[%s201 + $0x11c] sm:$0xf]
      %v254 = vld [vmem:[%s1] sm:$0xf]
      %v255 = vld [vmem:[%s1 + $0x4] sm:$0xf]
      %v256 = vld [vmem:[%s1 + $0x8] sm:$0xf]
      %v257 = vld [vmem:[%s1 + $0xc] sm:$0xf]
      %v258 = vld [vmem:[%s1 + $0x10] sm:$0xf]
      %v259 = vld [vmem:[%s1 + $0x14] sm:$0xf]
      %v260 = vld [vmem:[%s1 + $0x18] sm:$0xf]
      %v261 = vld [vmem:[%s1 + $0x1c] sm:$0xf]
      %v262 = vld [vmem:[%s1 + $0x20] sm:$0xf]
      %v263 = vld [vmem:[%s1 + $0x24] sm:$0xf]
      %v264 = vld [vmem:[%s1 + $0x28] sm:$0xf]
      %v265 = vld [vmem:[%s1 + $0x2c] sm:$0xf]
      %v266 = vld [vmem:[%s1 + $0x30] sm:$0xf]
      %v267 = vld [vmem:[%s1 + $0x34] sm:$0xf]
      %v268 = vld [vmem:[%s1 + $0x38] sm:$0xf]
      %v269 = vld [vmem:[%s1 + $0x3c] sm:$0xf]
      %v270 = vld [vmem:[%s1 + $0x40] sm:$0xf]
      %v271 = vld [vmem:[%s1 + $0x44] sm:$0xf]
      %v272 = vld [vmem:[%s1 + $0x48] sm:$0xf]
      %v273 = vld [vmem:[%s1 + $0x4c] sm:$0xf]
      %v274 = vld [vmem:[%s1 + $0x50] sm:$0xf]
      %v275 = vld [vmem:[%s1 + $0x54] sm:$0xf]
      %v276 = vld [vmem:[%s1 + $0x58] sm:$0xf]
      %v277 = vld [vmem:[%s1 + $0x5c] sm:$0xf]
      %v278 = vld [vmem:[%s1 + $0x60] sm:$0xf]
      %v279 = vld [vmem:[%s1 + $0x64] sm:$0xf]
      %v280 = vld [vmem:[%s1 + $0x68] sm:$0xf]
      %v281 = vld [vmem:[%s1 + $0x6c] sm:$0xf]
      %v282 = vld [vmem:[%s1 + $0x70] sm:$0xf]
      %v283 = vld [vmem:[%s1 + $0x74] sm:$0xf]
      %v284 = vld [vmem:[%s1 + $0x78] sm:$0xf]
      %v285 = vld [vmem:[%s1 + $0x7c] sm:$0xf]
      %v286 = vld [vmem:[%s1 + $0x80] sm:$0xf]
      %v287 = vld [vmem:[%s1 + $0x84] sm:$0xf]
      %v288 = vld [vmem:[%s1 + $0x88] sm:$0xf]
      %v289 = vld [vmem:[%s1 + $0x8c] sm:$0xf]
      %v290 = vld [vmem:[%s1 + $0x90] sm:$0xf]
      %v291 = vld [vmem:[%s1 + $0x94] sm:$0xf]
      %v292 = vld [vmem:[%s1 + $0x98] sm:$0xf]
      %v293 = vld [vmem:[%s1 + $0x9c] sm:$0xf]
      %v294 = vld [vmem:[%s1 + $0xa0] sm:$0xf]
      %v295 = vld [vmem:[%s1 + $0xa4] sm:$0xf]
      %v296 = vld [vmem:[%s1 + $0xa8] sm:$0xf]
      %v297 = vld [vmem:[%s1 + $0xac] sm:$0xf]
      %v298 = vld [vmem:[%s1 + $0xb0] sm:$0xf]
      %v299 = vld [vmem:[%s1 + $0xb4] sm:$0xf]
      %v300 = vld [vmem:[%s1 + $0xb8] sm:$0xf]
      %v301 = vld [vmem:[%s1 + $0xbc] sm:$0xf]
      %v302 = vld [vmem:[%s1 + $0xc0] sm:$0xf]
      %v303 = vld [vmem:[%s1 + $0xc4] sm:$0xf]
      %v304 = vld [vmem:[%s1 + $0xc8] sm:$0xf]
      %v305 = vld [vmem:[%s1 + $0xcc] sm:$0xf]
      %v306 = vld [vmem:[%s1 + $0xd0] sm:$0xf]
      %v307 = vld [vmem:[%s1 + $0xd4] sm:$0xf]
      %v308 = vld [vmem:[%s1 + $0xd8] sm:$0xf]
      %v309 = vld [vmem:[%s1 + $0xdc] sm:$0xf]
      %v310 = vld [vmem:[%s1 + $0xe0] sm:$0xf]
      %v311 = vld [vmem:[%s1 + $0xe4] sm:$0xf]
      %v312 = vld [vmem:[%s1 + $0xe8] sm:$0xf]
      %v313 = vld [vmem:[%s1 + $0xec] sm:$0xf]
      %v314 = vld [vmem:[%s1 + $0xf0] sm:$0xf]
      %v315 = vld [vmem:[%s1 + $0xf4] sm:$0xf]
      %v316 = vld [vmem:[%s1 + $0xf8] sm:$0xf]
      %v317 = vld [vmem:[%s1 + $0xfc] sm:$0xf]
      %v318 = vld [vmem:[%s1 + $0x100] sm:$0xf]
      %v319 = vld [vmem:[%s1 + $0x104] sm:$0xf]
      %v320 = vld [vmem:[%s1 + $0x108] sm:$0xf]
      %v321 = vld [vmem:[%s1 + $0x10c] sm:$0xf]
      %v322 = vld [vmem:[%s1 + $0x110] sm:$0xf]
      %v323 = vld [vmem:[%s1 + $0x114] sm:$0xf]
      %v324 = vld [vmem:[%s1 + $0x118] sm:$0xf]
      %v325 = vld [vmem:[%s1 + $0x11c] sm:$0xf]
      %v326 = vld [vmem:[%s1 + $0x120] sm:$0xf]
      %v327 = vld [vmem:[%s1 + $0x124] sm:$0xf]
      %v328 = vld [vmem:[%s1 + $0x128] sm:$0xf]
      %v329 = vld [vmem:[%s1 + $0x12c] sm:$0xf]
      %v330 = vld [vmem:[%s1 + $0x130] sm:$0xf]
      %v331 = vld [vmem:[%s1 + $0x134] sm:$0xf]
      %v332 = vld [vmem:[%s1 + $0x138] sm:$0xf]
      %v333 = vld [vmem:[%s1 + $0x13c] sm:$0xf]
      %v334 = vld [vmem:[%s1 + $0x140] sm:$0xf]
      %v335 = vld [vmem:[%s1 + $0x144] sm:$0xf]
      %v336 = vld [vmem:[%s1 + $0x148] sm:$0xf]
      %v337 = vld [vmem:[%s1 + $0x14c] sm:$0xf]
      %v338 = vld [vmem:[%s1 + $0x150] sm:$0xf]
      %v339 = vld [vmem:[%s1 + $0x154] sm:$0xf]
      %v340 = vld [vmem:[%s1 + $0x158] sm:$0xf]
      %v341 = vld [vmem:[%s1 + $0x15c] sm:$0xf]
      %v342 = vld [vmem:[%s1 + $0x160] sm:$0xf]
      %v343 = vld [vmem:[%s1 + $0x164] sm:$0xf]
      %v344 = vld [vmem:[%s1 + $0x168] sm:$0xf]
      %v345 = vld [vmem:[%s1 + $0x16c] sm:$0xf]
      %v346 = vld [vmem:[%s1 + $0x170] sm:$0xf]
      %v347 = vld [vmem:[%s1 + $0x174] sm:$0xf]
      %v348 = vld [vmem:[%s1 + $0x178] sm:$0xf]
      %v349 = vld [vmem:[%s1 + $0x17c] sm:$0xf]
      %v350 = vld [vmem:[%s1 + $0x180] sm:$0xf]
      %v351 = vld [vmem:[%s1 + $0x184] sm:$0xf]
      %v352 = vld [vmem:[%s1 + $0x188] sm:$0xf]
      %v353 = vld [vmem:[%s1 + $0x18c] sm:$0xf]
      %v354 = vld [vmem:[%s1 + $0x190] sm:$0xf]
      %v355 = vld [vmem:[%s1 + $0x194] sm:$0xf]
      %v356 = vld [vmem:[%s1 + $0x198] sm:$0xf]
      %v357 = vld [vmem:[%s1 + $0x19c] sm:$0xf]
      %v358 = vld [vmem:[%s1 + $0x1a0] sm:$0xf]
      %v359 = vld [vmem:[%s1 + $0x1a4] sm:$0xf]
      %v360 = vld [vmem:[%s1 + $0x1a8] sm:$0xf]
      %v361 = vld [vmem:[%s1 + $0x1ac] sm:$0xf]
      %v362 = vld [vmem:[%s1 + $0x1b0] sm:$0xf]
      %v363 = vld [vmem:[%s1 + $0x1b4] sm:$0xf]
      %v364 = vld [vmem:[%s1 + $0x1b8] sm:$0xf]
      %v365 = vld [vmem:[%s1 + $0x1bc] sm:$0xf]
      %v366 = vld [vmem:[%s1 + $0x1c0] sm:$0xf]
      %v367 = vld [vmem:[%s1 + $0x1c4] sm:$0xf]
      %v368 = vld [vmem:[%s1 + $0x1c8] sm:$0xf]
      %v369 = vld [vmem:[%s1 + $0x1cc] sm:$0xf]
      %v370 = vld [vmem:[%s1 + $0x1d0] sm:$0xf]
      %v371 = vld [vmem:[%s1 + $0x1d4] sm:$0xf]
      %v372 = vld [vmem:[%s1 + $0x1d8] sm:$0xf]
      %v373 = vld [vmem:[%s1 + $0x1dc] sm:$0xf]
      %v374 = vld [vmem:[%s1 + $0x1e0] sm:$0xf]
      %v375 = vld [vmem:[%s1 + $0x1e4] sm:$0xf]
      %v376 = vld [vmem:[%s1 + $0x1e8] sm:$0xf]
      %v377 = vld [vmem:[%s1 + $0x1ec] sm:$0xf]
      %v378 = vld [vmem:[%s1 + $0x1f0] sm:$0xf]
      %v379 = vld [vmem:[%s1 + $0x1f4] sm:$0xf]
      %v380 = vld [vmem:[%s1 + $0x1f8] sm:$0xf]
      %v381 = vld [vmem:[%s1 + $0x1fc] sm:$0xf]
      %v382 = vld [vmem:[%s1 + $0x200] sm:$0xf]
      %v383 = vld [vmem:[%s1 + $0x204] sm:$0xf]
      %v384 = vld [vmem:[%s1 + $0x208] sm:$0xf]
      %v385 = vld [vmem:[%s1 + $0x20c] sm:$0xf]
      %v386 = vld [vmem:[%s1 + $0x210] sm:$0xf]
      %v387 = vld [vmem:[%s1 + $0x214] sm:$0xf]
      %v388 = vld [vmem:[%s1 + $0x218] sm:$0xf]
      %v389 = vld [vmem:[%s1 + $0x21c] sm:$0xf]
      %v390 = vld [vmem:[%s1 + $0x220] sm:$0xf]
      %v391 = vld [vmem:[%s1 + $0x224] sm:$0xf]
      %v392 = vld [vmem:[%s1 + $0x228] sm:$0xf]
      %v393 = vld [vmem:[%s1 + $0x22c] sm:$0xf]
      %v394 = vld [vmem:[%s1 + $0x230] sm:$0xf]
      %v395 = vld [vmem:[%s1 + $0x234] sm:$0xf]
      %v396 = vld [vmem:[%s1 + $0x238] sm:$0xf]
      %v397 = vld [vmem:[%s1 + $0x23c] sm:$0xf]
      %v398 = vld [vmem:[%s2] sm:$0x1]
      %v400 = vlaneseq
      %v401 = vshrl.u32 %v400, 7
      %v402 = vsub.s32 0, %v401
      %v403 = vrot.slane %v398, %v402
      %v445 = vunpack.c.l.b16 %v214
      %v446 = vunpack.c.h.b16 %v214
      %v447 = vunpack.c.l.b16 %v215
      %v448 = vunpack.c.h.b16 %v215
      %v449 = vunpack.c.l.b16 %v216
      %v450 = vunpack.c.h.b16 %v216
      %v451 = vunpack.c.l.b16 %v217
      %v452 = vunpack.c.h.b16 %v217
      %v453 = vunpack.c.l.b16 %v218
      %v454 = vunpack.c.l.b16 %v219
      %v455 = vunpack.c.h.b16 %v219
      %v456 = vunpack.c.l.b16 %v220
      %v457 = vunpack.c.h.b16 %v220
      %v458 = vunpack.c.l.b16 %v221
      %v459 = vunpack.c.h.b16 %v221
      %v460 = vunpack.c.l.b16 %v222
      %v461 = vunpack.c.h.b16 %v222
      %v462 = vunpack.c.l.b16 %v223
      %v463 = vunpack.c.l.b16 %v224
      %v464 = vunpack.c.h.b16 %v224
      %v465 = vunpack.c.l.b16 %v225
      %v466 = vunpack.c.h.b16 %v225
      %v467 = vunpack.c.l.b16 %v226
      %v468 = vunpack.c.h.b16 %v226
      %v469 = vunpack.c.l.b16 %v227
      %v470 = vunpack.c.h.b16 %v227
      %v471 = vunpack.c.l.b16 %v228
      %v472 = vunpack.c.l.b16 %v229
      %v473 = vunpack.c.h.b16 %v229
      %v474 = vunpack.c.l.b16 %v230
      %v475 = vunpack.c.h.b16 %v230
      %v476 = vunpack.c.l.b16 %v231
      %v477 = vunpack.c.h.b16 %v231
      %v478 = vunpack.c.l.b16 %v232
      %v479 = vunpack.c.h.b16 %v232
      %v480 = vunpack.c.l.b16 %v233
      %v481 = vunpack.c.l.b16 %v234
      %v482 = vunpack.c.h.b16 %v234
      %v483 = vunpack.c.l.b16 %v235
      %v484 = vunpack.c.h.b16 %v235
      %v485 = vunpack.c.l.b16 %v236
      %v486 = vunpack.c.h.b16 %v236
      %v487 = vunpack.c.l.b16 %v237
      %v488 = vunpack.c.h.b16 %v237
      %v489 = vunpack.c.l.b16 %v238
      %v490 = vunpack.c.l.b16 %v239
      %v491 = vunpack.c.h.b16 %v239
      %v492 = vunpack.c.l.b16 %v240
      %v493 = vunpack.c.h.b16 %v240
      %v494 = vunpack.c.l.b16 %v241
      %v495 = vunpack.c.h.b16 %v241
      %v496 = vunpack.c.l.b16 %v242
      %v497 = vunpack.c.h.b16 %v242
      %v498 = vunpack.c.l.b16 %v243
      %v499 = vunpack.c.l.b16 %v244
      %v500 = vunpack.c.h.b16 %v244
      %v501 = vunpack.c.l.b16 %v245
      %v502 = vunpack.c.h.b16 %v245
      %v503 = vunpack.c.l.b16 %v246
      %v504 = vunpack.c.h.b16 %v246
      %v505 = vunpack.c.l.b16 %v247
      %v506 = vunpack.c.h.b16 %v247
      %v507 = vunpack.c.l.b16 %v248
      %v508 = vunpack.c.l.b16 %v249
      %v509 = vunpack.c.h.b16 %v249
      %v510 = vunpack.c.l.b16 %v250
      %v511 = vunpack.c.h.b16 %v250
      %v512 = vunpack.c.l.b16 %v251
      %v513 = vunpack.c.h.b16 %v251
      %v514 = vunpack.c.l.b16 %v252
      %v515 = vunpack.c.h.b16 %v252
      %v516 = vunpack.c.l.b16 %v253
      %v517 = vpack.c.b16 %v454, %v445
      %v518 = vpack.c.b16 %v455, %v446
      %v519 = vpack.c.b16 %v456, %v447
      %v520 = vpack.c.b16 %v457, %v448
      %v521 = vpack.c.b16 %v458, %v449
      %v522 = vpack.c.b16 %v459, %v450
      %v523 = vpack.c.b16 %v460, %v451
      %v524 = vpack.c.b16 %v461, %v452
      %v525 = vpack.c.b16 %v462, %v453
      %v526 = vpack.c.b16 %v472, %v463
      %v527 = vpack.c.b16 %v473, %v464
      %v528 = vpack.c.b16 %v474, %v465
      %v529 = vpack.c.b16 %v475, %v466
      %v530 = vpack.c.b16 %v476, %v467
      %v531 = vpack.c.b16 %v477, %v468
      %v532 = vpack.c.b16 %v478, %v469
      %v533 = vpack.c.b16 %v479, %v470
      %v534 = vpack.c.b16 %v480, %v471
      %v535 = vpack.c.b16 %v490, %v481
      %v536 = vpack.c.b16 %v491, %v482
      %v537 = vpack.c.b16 %v492, %v483
      %v538 = vpack.c.b16 %v493, %v484
      %v539 = vpack.c.b16 %v494, %v485
      %v540 = vpack.c.b16 %v495, %v486
      %v541 = vpack.c.b16 %v496, %v487
      %v542 = vpack.c.b16 %v497, %v488
      %v543 = vpack.c.b16 %v498, %v489
      %v544 = vpack.c.b16 %v508, %v499
      %v545 = vpack.c.b16 %v509, %v500
      %v546 = vpack.c.b16 %v510, %v501
      %v547 = vpack.c.b16 %v511, %v502
      %v548 = vpack.c.b16 %v512, %v503
      %v549 = vpack.c.b16 %v513, %v504
      %v550 = vpack.c.b16 %v514, %v505
      %v551 = vpack.c.b16 %v515, %v506
      %v552 = vpack.c.b16 %v516, %v507
      %v733 = vunpack.c.l.b16 %v254
      %v734 = vunpack.c.l.b16 %v255
      %v735 = vunpack.c.l.b16 %v256
      %v736 = vunpack.c.l.b16 %v257
      %v737 = vunpack.c.l.b16 %v258
      %v738 = vunpack.c.l.b16 %v259
      %v739 = vunpack.c.l.b16 %v260
      %v740 = vunpack.c.l.b16 %v261
      %v741 = vunpack.c.l.b16 %v262
      %v742 = vunpack.c.l.b16 %v263
      %v743 = vunpack.c.l.b16 %v264
      %v744 = vunpack.c.l.b16 %v265
      %v745 = vunpack.c.l.b16 %v266
      %v746 = vunpack.c.l.b16 %v267
      %v747 = vunpack.c.l.b16 %v268
      %v748 = vunpack.c.l.b16 %v269
      %v749 = vunpack.c.l.b16 %v270
      %v750 = vunpack.c.l.b16 %v271
      %v751 = vunpack.c.l.b16 %v272
      %v752 = vunpack.c.l.b16 %v273
      %v753 = vunpack.c.l.b16 %v274
      %v754 = vunpack.c.l.b16 %v275
      %v755 = vunpack.c.l.b16 %v276
      %v756 = vunpack.c.l.b16 %v277
      %v757 = vunpack.c.l.b16 %v278
      %v758 = vunpack.c.l.b16 %v279
      %v759 = vunpack.c.l.b16 %v280
      %v760 = vunpack.c.l.b16 %v281
      %v761 = vunpack.c.l.b16 %v282
      %v762 = vunpack.c.l.b16 %v283
      %v763 = vunpack.c.l.b16 %v284
      %v764 = vunpack.c.l.b16 %v285
      %v765 = vunpack.c.l.b16 %v286
      %v766 = vunpack.c.l.b16 %v287
      %v767 = vunpack.c.l.b16 %v288
      %v768 = vunpack.c.l.b16 %v289
      %v769 = vunpack.c.l.b16 %v290
      %v770 = vunpack.c.l.b16 %v291
      %v771 = vunpack.c.l.b16 %v292
      %v772 = vunpack.c.l.b16 %v293
      %v773 = vunpack.c.l.b16 %v294
      %v774 = vunpack.c.l.b16 %v295
      %v775 = vunpack.c.l.b16 %v296
      %v776 = vunpack.c.l.b16 %v297
      %v777 = vunpack.c.l.b16 %v298
      %v778 = vunpack.c.l.b16 %v299
      %v779 = vunpack.c.l.b16 %v300
      %v780 = vunpack.c.l.b16 %v301
      %v781 = vunpack.c.l.b16 %v302
      %v782 = vunpack.c.l.b16 %v303
      %v783 = vunpack.c.l.b16 %v304
      %v784 = vunpack.c.l.b16 %v305
      %v785 = vunpack.c.l.b16 %v306
      %v786 = vunpack.c.l.b16 %v307
      %v787 = vunpack.c.l.b16 %v308
      %v788 = vunpack.c.l.b16 %v309
      %v789 = vunpack.c.l.b16 %v310
      %v790 = vunpack.c.l.b16 %v311
      %v791 = vunpack.c.l.b16 %v312
      %v792 = vunpack.c.l.b16 %v313
      %v793 = vunpack.c.l.b16 %v314
      %v794 = vunpack.c.l.b16 %v315
      %v795 = vunpack.c.l.b16 %v316
      %v796 = vunpack.c.l.b16 %v317
      %v797 = vunpack.c.l.b16 %v318
      %v798 = vunpack.c.l.b16 %v319
      %v799 = vunpack.c.l.b16 %v320
      %v800 = vunpack.c.l.b16 %v321
      %v801 = vunpack.c.l.b16 %v322
      %v802 = vunpack.c.l.b16 %v323
      %v803 = vunpack.c.l.b16 %v324
      %v804 = vunpack.c.l.b16 %v325
      %v805 = vunpack.c.l.b16 %v326
      %v806 = vunpack.c.l.b16 %v327
      %v807 = vunpack.c.l.b16 %v328
      %v808 = vunpack.c.l.b16 %v329
      %v809 = vunpack.c.l.b16 %v330
      %v810 = vunpack.c.l.b16 %v331
      %v811 = vunpack.c.l.b16 %v332
      %v812 = vunpack.c.l.b16 %v333
      %v813 = vunpack.c.l.b16 %v334
      %v814 = vunpack.c.l.b16 %v335
      %v815 = vunpack.c.l.b16 %v336
      %v816 = vunpack.c.l.b16 %v337
      %v817 = vunpack.c.l.b16 %v338
      %v818 = vunpack.c.l.b16 %v339
      %v819 = vunpack.c.l.b16 %v340
      %v820 = vunpack.c.l.b16 %v341
      %v821 = vunpack.c.l.b16 %v342
      %v822 = vunpack.c.l.b16 %v343
      %v823 = vunpack.c.l.b16 %v344
      %v824 = vunpack.c.l.b16 %v345
      %v825 = vunpack.c.l.b16 %v346
      %v826 = vunpack.c.l.b16 %v347
      %v827 = vunpack.c.l.b16 %v348
      %v828 = vunpack.c.l.b16 %v349
      %v829 = vunpack.c.l.b16 %v350
      %v830 = vunpack.c.l.b16 %v351
      %v831 = vunpack.c.l.b16 %v352
      %v832 = vunpack.c.l.b16 %v353
      %v833 = vunpack.c.l.b16 %v354
      %v834 = vunpack.c.l.b16 %v355
      %v835 = vunpack.c.l.b16 %v356
      %v836 = vunpack.c.l.b16 %v357
      %v837 = vunpack.c.l.b16 %v358
      %v838 = vunpack.c.l.b16 %v359
      %v839 = vunpack.c.l.b16 %v360
      %v840 = vunpack.c.l.b16 %v361
      %v841 = vunpack.c.l.b16 %v362
      %v842 = vunpack.c.l.b16 %v363
      %v843 = vunpack.c.l.b16 %v364
      %v844 = vunpack.c.l.b16 %v365
      %v845 = vunpack.c.l.b16 %v366
      %v846 = vunpack.c.l.b16 %v367
      %v847 = vunpack.c.l.b16 %v368
      %v848 = vunpack.c.l.b16 %v369
      %v849 = vunpack.c.l.b16 %v370
      %v850 = vunpack.c.l.b16 %v371
      %v851 = vunpack.c.l.b16 %v372
      %v852 = vunpack.c.l.b16 %v373
      %v853 = vunpack.c.l.b16 %v374
      %v854 = vunpack.c.l.b16 %v375
      %v855 = vunpack.c.l.b16 %v376
      %v856 = vunpack.c.l.b16 %v377
      %v857 = vunpack.c.l.b16 %v378
      %v858 = vunpack.c.l.b16 %v379
      %v859 = vunpack.c.l.b16 %v380
      %v860 = vunpack.c.l.b16 %v381
      %v861 = vunpack.c.l.b16 %v382
      %v862 = vunpack.c.l.b16 %v383
      %v863 = vunpack.c.l.b16 %v384
      %v864 = vunpack.c.l.b16 %v385
      %v865 = vunpack.c.l.b16 %v386
      %v866 = vunpack.c.l.b16 %v387
      %v867 = vunpack.c.l.b16 %v388
      %v868 = vunpack.c.l.b16 %v389
      %v869 = vunpack.c.l.b16 %v390
      %v870 = vunpack.c.l.b16 %v391
      %v871 = vunpack.c.l.b16 %v392
      %v872 = vunpack.c.l.b16 %v393
      %v873 = vunpack.c.l.b16 %v394
      %v874 = vunpack.c.l.b16 %v395
      %v875 = vunpack.c.l.b16 %v396
      %v876 = vunpack.c.l.b16 %v397
      %v877 = vpack.c.b16 %v734, %v733
      %v878 = vpack.c.b16 %v736, %v735
      %v879 = vpack.c.b16 %v738, %v737
      %v880 = vpack.c.b16 %v740, %v739
      %v881 = vpack.c.b16 %v742, %v741
      %v882 = vpack.c.b16 %v744, %v743
      %v883 = vpack.c.b16 %v746, %v745
      %v884 = vpack.c.b16 %v748, %v747
      %v885 = vpack.c.b16 %v750, %v749
      %v886 = vpack.c.b16 %v752, %v751
      %v887 = vpack.c.b16 %v754, %v753
      %v888 = vpack.c.b16 %v756, %v755
      %v889 = vpack.c.b16 %v758, %v757
      %v890 = vpack.c.b16 %v760, %v759
      %v891 = vpack.c.b16 %v762, %v761
      %v892 = vpack.c.b16 %v764, %v763
      %v893 = vpack.c.b16 %v766, %v765
      %v894 = vpack.c.b16 %v768, %v767
      %v895 = vpack.c.b16 %v770, %v769
      %v896 = vpack.c.b16 %v772, %v771
      %v897 = vpack.c.b16 %v774, %v773
      %v898 = vpack.c.b16 %v776, %v775
      %v899 = vpack.c.b16 %v778, %v777
      %v900 = vpack.c.b16 %v780, %v779
      %v901 = vpack.c.b16 %v782, %v781
      %v902 = vpack.c.b16 %v784, %v783
      %v903 = vpack.c.b16 %v786, %v785
      %v904 = vpack.c.b16 %v788, %v787
      %v905 = vpack.c.b16 %v790, %v789
      %v906 = vpack.c.b16 %v792, %v791
      %v907 = vpack.c.b16 %v794, %v793
      %v908 = vpack.c.b16 %v796, %v795
      %v909 = vpack.c.b16 %v798, %v797
      %v910 = vpack.c.b16 %v800, %v799
      %v911 = vpack.c.b16 %v802, %v801
      %v912 = vpack.c.b16 %v804, %v803
      %v913 = vpack.c.b16 %v806, %v805
      %v914 = vpack.c.b16 %v808, %v807
      %v915 = vpack.c.b16 %v810, %v809
      %v916 = vpack.c.b16 %v812, %v811
      %v917 = vpack.c.b16 %v814, %v813
      %v918 = vpack.c.b16 %v816, %v815
      %v919 = vpack.c.b16 %v818, %v817
      %v920 = vpack.c.b16 %v820, %v819
      %v921 = vpack.c.b16 %v822, %v821
      %v922 = vpack.c.b16 %v824, %v823
      %v923 = vpack.c.b16 %v826, %v825
      %v924 = vpack.c.b16 %v828, %v827
      %v925 = vpack.c.b16 %v830, %v829
      %v926 = vpack.c.b16 %v832, %v831
      %v927 = vpack.c.b16 %v834, %v833
      %v928 = vpack.c.b16 %v836, %v835
      %v929 = vpack.c.b16 %v838, %v837
      %v930 = vpack.c.b16 %v840, %v839
      %v931 = vpack.c.b16 %v842, %v841
      %v932 = vpack.c.b16 %v844, %v843
      %v933 = vpack.c.b16 %v846, %v845
      %v934 = vpack.c.b16 %v848, %v847
      %v935 = vpack.c.b16 %v850, %v849
      %v936 = vpack.c.b16 %v852, %v851
      %v937 = vpack.c.b16 %v854, %v853
      %v938 = vpack.c.b16 %v856, %v855
      %v939 = vpack.c.b16 %v858, %v857
      %v940 = vpack.c.b16 %v860, %v859
      %v941 = vpack.c.b16 %v862, %v861
      %v942 = vpack.c.b16 %v864, %v863
      %v943 = vpack.c.b16 %v866, %v865
      %v944 = vpack.c.b16 %v868, %v867
      %v945 = vpack.c.b16 %v870, %v869
      %v946 = vpack.c.b16 %v872, %v871
      %v947 = vpack.c.b16 %v874, %v873
      %v948 = vpack.c.b16 %v876, %v875
      %1021 = vmatprep.subr.bf16.mxu0 0
      %1022 = vmatpush1.bf16.msra.mxu0 %v877
      %1023 = vmatprep.subr.bf16.mxu0 0
      %1024 = vmatpush1.bf16.msra.mxu0 %v878
      %1025 = vmatprep.subr.bf16.mxu0 0
      %1026 = vmatpush1.bf16.msra.mxu0 %v879
      %1027 = vmatprep.subr.bf16.mxu0 0
      %1028 = vmatpush1.bf16.msra.mxu0 %v880
      %1029 = vmatprep.subr.bf16.mxu0 0
      %1030 = vmatpush1.bf16.msra.mxu0 %v881
      %1031 = vmatprep.subr.bf16.mxu0 0
      %1032 = vmatpush1.bf16.msra.mxu0 %v882
      %1033 = vmatprep.subr.bf16.mxu0 0
      %1034 = vmatpush1.bf16.msra.mxu0 %v883
      %1035 = vmatprep.subr.bf16.mxu0 0
      %1036 = vmatpush1.bf16.msra.mxu0 %v884
      %1037 = vmatprep.subr.bf16.mxu0 0
      %1038 = vmatpush1.bf16.msra.mxu0 %v885
      %1039 = vmatprep.subr.bf16.mxu0 0
      %1040 = vmatpush1.bf16.msra.mxu0 %v886
      %1041 = vmatprep.subr.bf16.mxu0 0
      %1042 = vmatpush1.bf16.msra.mxu0 %v887
      %1043 = vmatprep.subr.bf16.mxu0 0
      %1044 = vmatpush1.bf16.msra.mxu0 %v888
      %1045 = vmatprep.subr.bf16.mxu0 0
      %1046 = vmatpush1.bf16.msra.mxu0 %v889
      %1047 = vmatprep.subr.bf16.mxu0 0
      %1048 = vmatpush1.bf16.msra.mxu0 %v890
      %1049 = vmatprep.subr.bf16.mxu0 0
      %1050 = vmatpush1.bf16.msra.mxu0 %v891
      %1051 = vmatprep.subr.bf16.mxu0 0
      %1052 = vmatpush1.bf16.msra.mxu0 %v892
      %1053 = vmatprep.mubr.bf16.mxu0 %v518
      %1054 = vmatmul.mubr.bf16.gmra.mrb[0].mxu0 %v517
      %v1055 = vpop.f32.mrb[0].mxu0
      %v1056 = vadd.f32 %v403, %v1055
      %v1057 = vpop.f32.mrb[0].mxu0
      %v1058 = vpop.f32.mrb[0].mxu0
      %v1059 = vadd.f32 %v403, %v1058
      %v1060 = vpop.f32.mrb[0].mxu0
      %1061 = vmatprep.mubr.bf16.mxu0 %v527
      %1062 = vmatmul.mubr.bf16.gmra.mrb[0].mxu0 %v526
      %v1063 = vpop.f32.mrb[0].mxu0
      %v1064 = vadd.f32 %v403, %v1063
      %v1065 = vpop.f32.mrb[0].mxu0
      %v1066 = vpop.f32.mrb[0].mxu0
      %v1067 = vadd.f32 %v403, %v1066
      %v1068 = vpop.f32.mrb[0].mxu0
      %1069 = vmatprep.mubr.bf16.mxu0 %v536
      %1070 = vmatmul.mubr.bf16.gmra.mrb[0].mxu0 %v535
      %v1071 = vpop.f32.mrb[0].mxu0
      %v1072 = vadd.f32 %v403, %v1071
      %v1073 = vpop.f32.mrb[0].mxu0
      %v1074 = vpop.f32.mrb[0].mxu0
      %v1075 = vadd.f32 %v403, %v1074
      %v1076 = vpop.f32.mrb[0].mxu0
      %1077 = vmatprep.mubr.bf16.mxu0 %v545
      %1078 = vmatmul.mubr.bf16.gmra.mrb[0].mxu0 %v544
      %v1079 = vpop.f32.mrb[0].mxu0
      %v1080 = vadd.f32 %v403, %v1079
      %v1081 = vpop.f32.mrb[0].mxu0
      %v1082 = vpop.f32.mrb[0].mxu0
      %v1083 = vadd.f32 %v403, %v1082
      %v1084 = vpop.f32.mrb[0].mxu0
      %1085 = vdwg.mxu0
      %1086 = vmatprep.subr.bf16.mxu0 0
      %1087 = vmatpush1.bf16.msra.mxu0 %v893
      %1088 = vmatprep.subr.bf16.mxu0 0
      %1089 = vmatpush1.bf16.msra.mxu0 %v894
      %1090 = vmatprep.subr.bf16.mxu0 0
      %1091 = vmatpush1.bf16.msra.mxu0 %v895
      %1092 = vmatprep.subr.bf16.mxu0 0
      %1093 = vmatpush1.bf16.msra.mxu0 %v896
      %1094 = vmatprep.subr.bf16.mxu0 0
      %1095 = vmatpush1.bf16.msra.mxu0 %v897
      %1096 = vmatprep.subr.bf16.mxu0 0
      %1097 = vmatpush1.bf16.msra.mxu0 %v898
      %1098 = vmatprep.subr.bf16.mxu0 0
      %1099 = vmatpush1.bf16.msra.mxu0 %v899
      %1100 = vmatprep.subr.bf16.mxu0 0
      %1101 = vmatpush1.bf16.msra.mxu0 %v900
      %1102 = vmatprep.subr.bf16.mxu0 0
      %1103 = vmatpush1.bf16.msra.mxu0 %v901
      %1104 = vmatprep.subr.bf16.mxu0 0
      %1105 = vmatpush1.bf16.msra.mxu0 %v902
      %1106 = vmatprep.subr.bf16.mxu0 0
      %1107 = vmatpush1.bf16.msra.mxu0 %v903
      %1108 = vmatprep.subr.bf16.mxu0 0
      %1109 = vmatpush1.bf16.msra.mxu0 %v904
      %1110 = vmatprep.subr.bf16.mxu0 0
      %1111 = vmatpush1.bf16.msra.mxu0 %v905
      %1112 = vmatprep.subr.bf16.mxu0 0
      %1113 = vmatpush1.bf16.msra.mxu0 %v906
      %1114 = vmatprep.subr.bf16.mxu0 0
      %1115 = vmatpush1.bf16.msra.mxu0 %v907
      %1116 = vmatprep.subr.bf16.mxu0 0
      %1117 = vmatpush1.bf16.msra.mxu0 %v908
      %1118 = vmatprep.mubr.bf16.mxu0 %v520
      %1119 = vmatmul.mubr.bf16.gmra.mrb[0].mxu0 %v519
      %v1120 = vpop.f32.mrb[0].mxu0
      %v1121 = vadd.f32 %v1056, %v1120
      %v1122 = vpop.f32.mrb[0].mxu0
      %v1123 = vpop.f32.mrb[0].mxu0
      %v1124 = vadd.f32 %v1059, %v1123
      %v1125 = vpop.f32.mrb[0].mxu0
      %1126 = vmatprep.mubr.bf16.mxu0 %v529
      %1127 = vmatmul.mubr.bf16.gmra.mrb[0].mxu0 %v528
      %v1128 = vpop.f32.mrb[0].mxu0
      %v1129 = vadd.f32 %v1064, %v1128
      %v1130 = vpop.f32.mrb[0].mxu0
      %v1131 = vpop.f32.mrb[0].mxu0
      %v1132 = vadd.f32 %v1067, %v1131
      %v1133 = vpop.f32.mrb[0].mxu0
      %1134 = vmatprep.mubr.bf16.mxu0 %v538
      %1135 = vmatmul.mubr.bf16.gmra.mrb[0].mxu0 %v537
      %v1136 = vpop.f32.mrb[0].mxu0
      %v1137 = vadd.f32 %v1072, %v1136
      %v1138 = vpop.f32.mrb[0].mxu0
      %v1139 = vpop.f32.mrb[0].mxu0
      %v1140 = vadd.f32 %v1075, %v1139
      %v1141 = vpop.f32.mrb[0].mxu0
      %1142 = vmatprep.mubr.bf16.mxu0 %v547
      %1143 = vmatmul.mubr.bf16.gmra.mrb[0].mxu0 %v546
      %v1144 = vpop.f32.mrb[0].mxu0
      %v1145 = vadd.f32 %v1080, %v1144
      %v1146 = vpop.f32.mrb[0].mxu0
      %v1147 = vpop.f32.mrb[0].mxu0
      %v1148 = vadd.f32 %v1083, %v1147
      %v1149 = vpop.f32.mrb[0].mxu0
      %1150 = vdwg.mxu0
      %1151 = vmatprep.subr.bf16.mxu0 0
      %1152 = vmatpush1.bf16.msra.mxu0 %v909
      %1153 = vmatprep.subr.bf16.mxu0 0
      %1154 = vmatpush1.bf16.msra.mxu0 %v910
      %1155 = vmatprep.subr.bf16.mxu0 0
      %1156 = vmatpush1.bf16.msra.mxu0 %v911
      %1157 = vmatprep.subr.bf16.mxu0 0
      %1158 = vmatpush1.bf16.msra.mxu0 %v912
      %1159 = vmatprep.subr.bf16.mxu0 0
      %1160 = vmatpush1.bf16.msra.mxu0 %v913
      %1161 = vmatprep.subr.bf16.mxu0 0
      %1162 = vmatpush1.bf16.msra.mxu0 %v914
      %1163 = vmatprep.subr.bf16.mxu0 0
      %1164 = vmatpush1.bf16.msra.mxu0 %v915
      %1165 = vmatprep.subr.bf16.mxu0 0
      %1166 = vmatpush1.bf16.msra.mxu0 %v916
      %1167 = vmatprep.subr.bf16.mxu0 0
      %1168 = vmatpush1.bf16.msra.mxu0 %v917
      %1169 = vmatprep.subr.bf16.mxu0 0
      %1170 = vmatpush1.bf16.msra.mxu0 %v918
      %1171 = vmatprep.subr.bf16.mxu0 0
      %1172 = vmatpush1.bf16.msra.mxu0 %v919
      %1173 = vmatprep.subr.bf16.mxu0 0
      %1174 = vmatpush1.bf16.msra.mxu0 %v920
      %1175 = vmatprep.subr.bf16.mxu0 0
      %1176 = vmatpush1.bf16.msra.mxu0 %v921
      %1177 = vmatprep.subr.bf16.mxu0 0
      %1178 = vmatpush1.bf16.msra.mxu0 %v922
      %1179 = vmatprep.subr.bf16.mxu0 0
      %1180 = vmatpush1.bf16.msra.mxu0 %v923
      %1181 = vmatprep.subr.bf16.mxu0 0
      %1182 = vmatpush1.bf16.msra.mxu0 %v924
      %1183 = vmatprep.mubr.bf16.mxu0 %v522
      %1184 = vmatmul.mubr.bf16.gmra.mrb[0].mxu0 %v521
      %v1185 = vpop.f32.mrb[0].mxu0
      %v1186 = vadd.f32 %v1121, %v1185
      %v1187 = vpop.f32.mrb[0].mxu0
      %v1188 = vpop.f32.mrb[0].mxu0
      %v1189 = vadd.f32 %v1124, %v1188
      %v1190 = vpop.f32.mrb[0].mxu0
      %1191 = vmatprep.mubr.bf16.mxu0 %v531
      %1192 = vmatmul.mubr.bf16.gmra.mrb[0].mxu0 %v530
      %v1193 = vpop.f32.mrb[0].mxu0
      %v1194 = vadd.f32 %v1129, %v1193
      %v1195 = vpop.f32.mrb[0].mxu0
      %v1196 = vpop.f32.mrb[0].mxu0
      %v1197 = vadd.f32 %v1132, %v1196
      %v1198 = vpop.f32.mrb[0].mxu0
      %1199 = vmatprep.mubr.bf16.mxu0 %v540
      %1200 = vmatmul.mubr.bf16.gmra.mrb[0].mxu0 %v539
      %v1201 = vpop.f32.mrb[0].mxu0
      %v1202 = vadd.f32 %v1137, %v1201
      %v1203 = vpop.f32.mrb[0].mxu0
      %v1204 = vpop.f32.mrb[0].mxu0
      %v1205 = vadd.f32 %v1140, %v1204
      %v1206 = vpop.f32.mrb[0].mxu0
      %1207 = vmatprep.mubr.bf16.mxu0 %v549
      %1208 = vmatmul.mubr.bf16.gmra.mrb[0].mxu0 %v548
      %v1209 = vpop.f32.mrb[0].mxu0
      %v1210 = vadd.f32 %v1145, %v1209
      %v1211 = vpop.f32.mrb[0].mxu0
      %v1212 = vpop.f32.mrb[0].mxu0
      %v1213 = vadd.f32 %v1148, %v1212
      %v1214 = vpop.f32.mrb[0].mxu0
      %1215 = vdwg.mxu0
      %1216 = vmatprep.subr.bf16.mxu0 0
      %1217 = vmatpush1.bf16.msra.mxu0 %v925
      %1218 = vmatprep.subr.bf16.mxu0 0
      %1219 = vmatpush1.bf16.msra.mxu0 %v926
      %1220 = vmatprep.subr.bf16.mxu0 0
      %1221 = vmatpush1.bf16.msra.mxu0 %v927
      %1222 = vmatprep.subr.bf16.mxu0 0
      %1223 = vmatpush1.bf16.msra.mxu0 %v928
      %1224 = vmatprep.subr.bf16.mxu0 0
      %1225 = vmatpush1.bf16.msra.mxu0 %v929
      %1226 = vmatprep.subr.bf16.mxu0 0
      %1227 = vmatpush1.bf16.msra.mxu0 %v930
      %1228 = vmatprep.subr.bf16.mxu0 0
      %1229 = vmatpush1.bf16.msra.mxu0 %v931
      %1230 = vmatprep.subr.bf16.mxu0 0
      %1231 = vmatpush1.bf16.msra.mxu0 %v932
      %1232 = vmatprep.subr.bf16.mxu0 0
      %1233 = vmatpush1.bf16.msra.mxu0 %v933
      %1234 = vmatprep.subr.bf16.mxu0 0
      %1235 = vmatpush1.bf16.msra.mxu0 %v934
      %1236 = vmatprep.subr.bf16.mxu0 0
      %1237 = vmatpush1.bf16.msra.mxu0 %v935
      %1238 = vmatprep.subr.bf16.mxu0 0
      %1239 = vmatpush1.bf16.msra.mxu0 %v936
      %1240 = vmatprep.subr.bf16.mxu0 0
      %1241 = vmatpush1.bf16.msra.mxu0 %v937
      %1242 = vmatprep.subr.bf16.mxu0 0
      %1243 = vmatpush1.bf16.msra.mxu0 %v938
      %1244 = vmatprep.subr.bf16.mxu0 0
      %1245 = vmatpush1.bf16.msra.mxu0 %v939
      %1246 = vmatprep.subr.bf16.mxu0 0
      %1247 = vmatpush1.bf16.msra.mxu0 %v940
      %1248 = vmatprep.mubr.bf16.mxu0 %v524
      %1249 = vmatmul.mubr.bf16.gmra.mrb[0].mxu0 %v523
      %v1250 = vpop.f32.mrb[0].mxu0
      %v1251 = vadd.f32 %v1186, %v1250
      %v1252 = vpop.f32.mrb[0].mxu0
      %v1253 = vpop.f32.mrb[0].mxu0
      %v1254 = vadd.f32 %v1189, %v1253
      %v1255 = vpop.f32.mrb[0].mxu0
      %1256 = vmatprep.mubr.bf16.mxu0 %v533
      %1257 = vmatmul.mubr.bf16.gmra.mrb[0].mxu0 %v532
      %v1258 = vpop.f32.mrb[0].mxu0
      %v1259 = vadd.f32 %v1194, %v1258
      %v1260 = vpop.f32.mrb[0].mxu0
      %v1261 = vpop.f32.mrb[0].mxu0
      %v1262 = vadd.f32 %v1197, %v1261
      %v1263 = vpop.f32.mrb[0].mxu0
      %1264 = vmatprep.mubr.bf16.mxu0 %v542
      %1265 = vmatmul.mubr.bf16.gmra.mrb[0].mxu0 %v541
      %v1266 = vpop.f32.mrb[0].mxu0
      %v1267 = vadd.f32 %v1202, %v1266
      %v1268 = vpop.f32.mrb[0].mxu0
      %v1269 = vpop.f32.mrb[0].mxu0
      %v1270 = vadd.f32 %v1205, %v1269
      %v1271 = vpop.f32.mrb[0].mxu0
      %1272 = vmatprep.mubr.bf16.mxu0 %v551
      %1273 = vmatmul.mubr.bf16.gmra.mrb[0].mxu0 %v550
      %v1274 = vpop.f32.mrb[0].mxu0
      %v1275 = vadd.f32 %v1210, %v1274
      %v1276 = vpop.f32.mrb[0].mxu0
      %v1277 = vpop.f32.mrb[0].mxu0
      %v1278 = vadd.f32 %v1213, %v1277
      %v1279 = vpop.f32.mrb[0].mxu0
      %1280 = vdwg.mxu0
      %1281 = vmatprep.subr.bf16.mxu0 0
      %1282 = vmatpush1.bf16.msra.mxu0 %v941
      %1283 = vmatprep.subr.bf16.mxu0 0
      %1284 = vmatpush1.bf16.msra.mxu0 %v942
      %1285 = vmatprep.subr.bf16.mxu0 0
      %1286 = vmatpush1.bf16.msra.mxu0 %v943
      %1287 = vmatprep.subr.bf16.mxu0 0
      %1288 = vmatpush1.bf16.msra.mxu0 %v944
      %1289 = vmatprep.subr.bf16.mxu0 0
      %1290 = vmatpush1.bf16.msra.mxu0 %v945
      %1291 = vmatprep.subr.bf16.mxu0 0
      %1292 = vmatpush1.bf16.msra.mxu0 %v946
      %1293 = vmatprep.subr.bf16.mxu0 0
      %1294 = vmatpush1.bf16.msra.mxu0 %v947
      %1295 = vmatprep.subr.bf16.mxu0 0
      %1296 = vmatpush1.bf16.msra.mxu0 %v948
      %1297 = vmatprep.subr.bf16.mxu0 0
      %1298 = vmatpush1.bf16.msra.mxu0 0
      %1299 = vmatprep.subr.bf16.mxu0 0
      %1300 = vmatpush1.bf16.msra.mxu0 0
      %1301 = vmatprep.subr.bf16.mxu0 0
      %1302 = vmatpush1.bf16.msra.mxu0 0
      %1303 = vmatprep.subr.bf16.mxu0 0
      %1304 = vmatpush1.bf16.msra.mxu0 0
      %1305 = vmatprep.subr.bf16.mxu0 0
      %1306 = vmatpush1.bf16.msra.mxu0 0
      %1307 = vmatprep.subr.bf16.mxu0 0
      %1308 = vmatpush1.bf16.msra.mxu0 0
      %1309 = vmatprep.subr.bf16.mxu0 0
      %1310 = vmatpush1.bf16.msra.mxu0 0
      %1311 = vmatprep.subr.bf16.mxu0 0
      %1312 = vmatpush1.bf16.msra.mxu0 0
      %1313 = vmatprep.mubr.bf16.mxu0 0
      %1314 = vmatmul.mubr.bf16.gmra.mrb[0].mxu0 %v525
      %v1315 = vpop.f32.mrb[0].mxu0
      %v1316 = vadd.f32 %v1251, %v1315
      %v1317 = vpop.f32.mrb[0].mxu0
      %v1318 = vpop.f32.mrb[0].mxu0
      %v1319 = vadd.f32 %v1254, %v1318
      %v1320 = vpop.f32.mrb[0].mxu0
      %1321 = vmatprep.mubr.bf16.mxu0 0
      %1322 = vmatmul.mubr.bf16.gmra.mrb[0].mxu0 %v534
      %v1323 = vpop.f32.mrb[0].mxu0
      %v1324 = vadd.f32 %v1259, %v1323
      %v1325 = vpop.f32.mrb[0].mxu0
      %v1326 = vpop.f32.mrb[0].mxu0
      %v1327 = vadd.f32 %v1262, %v1326
      %v1328 = vpop.f32.mrb[0].mxu0
      %1329 = vmatprep.mubr.bf16.mxu0 0
      %1330 = vmatmul.mubr.bf16.gmra.mrb[0].mxu0 %v543
      %v1331 = vpop.f32.mrb[0].mxu0
      %v1332 = vadd.f32 %v1267, %v1331
      %v1333 = vpop.f32.mrb[0].mxu0
      %v1334 = vpop.f32.mrb[0].mxu0
      %v1335 = vadd.f32 %v1270, %v1334
      %v1336 = vpop.f32.mrb[0].mxu0
      %1337 = vmatprep.mubr.bf16.mxu0 0
      %1338 = vmatmul.mubr.bf16.gmra.mrb[0].mxu0 %v552
      %v1339 = vpop.f32.mrb[0].mxu0
      %v1340 = vadd.f32 %v1275, %v1339
      %v1341 = vpop.f32.mrb[0].mxu0
      %v1342 = vpop.f32.mrb[0].mxu0
      %v1343 = vadd.f32 %v1278, %v1342
      %v1344 = vpop.f32.mrb[0].mxu0
      %1345 = vdwg.mxu0
      %v1346 = vmax.f32 %v1316, 0.0
      %v1347 = vmax.f32 %v1319, 0.0
      %v1348 = vmax.f32 %v1324, 0.0
      %v1349 = vmax.f32 %v1327, 0.0
      %v1350 = vmax.f32 %v1332, 0.0
      %v1351 = vmax.f32 %v1335, 0.0
      %v1352 = vmax.f32 %v1340, 0.0
      %v1353 = vmax.f32 %v1343, 0.0
      %v1354 = vpack.c.bf16 %v1347, %v1346
      %v1355 = vpack.c.bf16 %v1349, %v1348
      %v1356 = vpack.c.bf16 %v1351, %v1350
      %v1357 = vpack.c.bf16 %v1353, %v1352
      %v1362 = vunpack.c.l.b16 %v1354
      %v1363 = vunpack.c.h.b16 %v1354
      %v1364 = vunpack.c.l.b16 %v1355
      %v1365 = vunpack.c.h.b16 %v1355
      %v1366 = vunpack.c.l.b16 %v1356
      %v1367 = vunpack.c.h.b16 %v1356
      %v1368 = vunpack.c.l.b16 %v1357
      %v1369 = vunpack.c.h.b16 %v1357
      %v1370 = vpack.c.b16 %v1362, %v1362
      %v1371 = vpack.c.b16 %v1363, %v1363
      %v1372 = vpack.c.b16 %v1364, %v1364
      %v1373 = vpack.c.b16 %v1365, %v1365
      %v1374 = vpack.c.b16 %v1366, %v1366
      %v1375 = vpack.c.b16 %v1367, %v1367
      %v1376 = vpack.c.b16 %v1368, %v1368
      %v1377 = vpack.c.b16 %v1369, %v1369
      %1386 = vst [vmem:[%s211] sm:$0xf] %v1370
      %1387 = vst [vmem:[%s211 + $0x4] sm:$0xf] %v1371
      %1388 = vst [vmem:[%s211 + $0x8] sm:$0xf] %v1372
      %1389 = vst [vmem:[%s211 + $0xc] sm:$0xf] %v1373
      %1390 = vst [vmem:[%s211 + $0x10] sm:$0xf] %v1374
      %1391 = vst [vmem:[%s211 + $0x14] sm:$0xf] %v1375
      %1392 = vst [vmem:[%s211 + $0x18] sm:$0xf] %v1376
      %1393 = vst [vmem:[%s211 + $0x1c] sm:$0xf] %v1377
      %s1394 = smul.u32 8, %s19
      %p1395 = scmp.lt.s32.totalorder %s18, 3
      %s1396 = scalar_select %p1395, %s18, 3
      %p1397 = scmp.lt.s32.totalorder %s1394, 7
      %s1398 = scalar_select %p1397, %s1394, 7
      %s1399 = smul.addr %s1396, 8
      %s1400 = sadd.s32 %s1398, %s1399
      %s1401 = smul.addr %s1400, 4
      %s1402 = scalar_lea.vmem %s3, %s1401
      // Predicated region
      $region33: #{perceptual_loss.14} parent=31 // pred_check
        %p1403 = pneg %p116
      $region34: #{perceptual_loss.14} parent=31 // pred_check_branch
        %1405 = sbr.rel (%p1403) target = $region36
      $region35: #{perceptual_loss.14} parent=31 // pred_region
        %s1406 = smul.u32 8, %s19
      $region36: #{perceptual_loss.14} parent=31 // pred_fallthru
        _
    $region32: #{perceptual_loss.14} parent=5 // pred_fallthru
      _
    %p1407 = scmp.le.s32.totalorder 2, %s9
    // Predicated region
    $region37: #{perceptual_loss.14} parent=5 // pred_check
      %p1408 = pneg %p1407
    $region38: #{perceptual_loss.14} parent=5 // pred_check_branch
      %1410 = sbr.rel (%p1408) target = $region40
    $region39: #{perceptual_loss.14} parent=5 // pred_region
      %s1411 = ssub.s32 %s9, 2
      // Predicated region
      $region41: #{perceptual_loss.14} parent=39 // pred_check
        %p1412 = pneg %p122
      $region42: #{perceptual_loss.14} parent=39 // pred_check_branch
        %1414 = sbr.rel (%p1412) target = $region44
      $region43: #{perceptual_loss.14} parent=39 // pred_region
        %s1415 = smul.u32 8, %s21
        %p1416 = scmp.lt.s32.totalorder %s20, 3
        %s1417 = scalar_select %p1416, %s20, 3
        %p1418 = scmp.lt.s32.totalorder %s1415, 7
        %s1419 = scalar_select %p1418, %s1415, 7
        %s1420 = smul.addr %s1417, 8
        %s1421 = sadd.s32 %s1419, %s1420
        %s1422 = smul.addr %s1421, 4
        %s1423 = scalar_lea.vmem %s3, %s1422
      $region44: #{perceptual_loss.14} parent=39 // pred_fallthru
        _
    $region40: #{perceptual_loss.14} parent=5 // pred_fallthru
      _
  $region6: #{perceptual_loss.14} parent=0 // loop_footer
    %s13 = sadd.s32 1, %s9
  $region7: #{perceptual_loss.14} parent=0 // loop_footer_branch
    %8 = sbr.rel target = $region3
  $region8: #{perceptual_loss.14} parent=0 // loop_exit
    _

// kernel: perceptual_loss.16
$region0: #{perceptual_loss.16}
  #allocation0 [shape = 'u32[]', space=smem, size = 0x4, offset = 0x4, fixed_abs, tag = 'smem constant byte address 0x4 - core index']
  #allocation1 [shape = 'u32[144,128]{1,0:T(1,128)}', space=vmem, size = 0x12000, scoped, tag = 'internal scratch']
  %s0 = inlined_call_operand.vmem [shape: bf16[4,16,1152], index: 0, kind: input, shape index: {}]
  %s1 = inlined_call_operand.vmem [shape: bf16[1152,256], index: 1, kind: input, shape index: {}]
  %s2 = inlined_call_operand.vmem [shape: f32[1,256], index: 2, kind: input, shape index: {}]
  %s3 = inlined_call_operand.vmem [shape: bf16[4,16,256], index: 3, kind: output, shape index: {}]
  %s4 = sld [smem:[#allocation0]]
  $region45: #{perceptual_loss.16} parent=0
    _
  %s6 = ssub.s32 1, %s4
  %s7 = scalar_select 0, %s6, %s4
  loop: start=0, step=1, limit=6
  $region2: #{perceptual_loss.16} parent=0 // loop_pre_header
    _
  $region3: #{perceptual_loss.16} parent=0 // loop_header
    %s9 = sphi 0, %s13
    %p10 = scmp.ge.s32.totalorder %s9, 6
    %s16 = sphi 0, %s28
    %s17 = sphi 0, %s24
    %s18 = sphi 0, %s16
    %s19 = sphi 0, %s17
    %s20 = sphi 0, %s18
    %s21 = sphi 0, %s19
    %s33 = sphi 0, %s35
    %s36 = sphi 0, %s33
    %s37 = sphi 0, %s36
    %s53 = sphi 0, %s37
    %s57 = sphi 0, %s57
    %s59 = sphi 0, %s57
    %s60 = sphi 0, %s59
    %s74 = sphi 0, %s60
    %s78 = sphi 0, %s78
    %s80 = sphi 0, %s78
    %s81 = sphi 0, %s80
    %s95 = sphi 0, %s81
    %s103 = sphi 0, %s105
    %s106 = sphi 0, %s103
    %s107 = sphi 0, %s106
    %s123 = sphi 0, %s107
  $region4: #{perceptual_loss.16} parent=0 // loop_header_branch
    %12 = sbr.rel (%p10) target = $region8
  $region5: #{perceptual_loss.16} parent=0 // loop_body
    %s14 = ssub.s32 %s9, 1
    %s15 = ssub.s32 %s9, 2
    %s22 = sadd.s32 1, %s17
    %p23 = scmp.ge.s32.totalorder %s22, 1
    %s24 = scalar_select %p23, 0, %s22
    %s25 = sadd.s32 1, %s16
    %s26 = scalar_select %p23, %s25, %s16
    %p27 = scmp.ge.s32.totalorder %s26, 4
    %s28 = scalar_select %p27, 0, %s26
    %s29 = ssub.s32 %s16, %s28
    %s30 = ssub.s32 %s17, %s24
    %s31 = sor.u32 %s29, %s30
    %p32 = scmp.eq.s32.totalorder %s31, 0
    %s34 = sadd.s32 %s33, 1
    %s35 = scalar_select %p32, %s33, %s34
    %p38 = pneg %p32
    %p39 = scmp.eq.s32.totalorder %s9, 3
    %p40 = por %p38, %p39
    %p41 = scmp.ne.s32.totalorder %s33, %s36
    %p42 = scmp.eq.s32.totalorder %s9, 0
    %p43 = por %p41, %p42
    %p44 = scmp.ne.s32.totalorder %s33, %s36
    %p45 = scmp.eq.s32.totalorder %s14, 3
    %p46 = por %p44, %p45
    %p47 = scmp.ne.s32.totalorder %s36, %s37
    %p48 = scmp.eq.s32.totalorder %s14, 0
    %p49 = por %p47, %p48
    %p50 = scmp.ne.s32.totalorder %s36, %s37
    %p51 = scmp.eq.s32.totalorder %s15, 3
    %p52 = por %p50, %p51
    %p54 = scmp.ne.s32.totalorder %s37, %s53
    %p55 = scmp.eq.s32.totalorder %s15, 0
    %p56 = por %p54, %p55
    %s58 = sadd.s32 %s57, 1
    %p61 = scmp.eq.s32.totalorder %s9, 3
    %p62 = scmp.ne.s32.totalorder %s57, %s59
    %p63 = scmp.eq.s32.totalorder %s9, 0
    %p64 = por %p62, %p63
    %p65 = scmp.ne.s32.totalorder %s57, %s59
    %p66 = scmp.eq.s32.totalorder %s14, 3
    %p67 = por %p65, %p66
    %p68 = scmp.ne.s32.totalorder %s59, %s60
    %p69 = scmp.eq.s32.totalorder %s14, 0
    %p70 = por %p68, %p69
    %p71 = scmp.ne.s32.totalorder %s59, %s60
    %p72 = scmp.eq.s32.totalorder %s15, 3
    %p73 = por %p71, %p72
    %p75 = scmp.ne.s32.totalorder %s60, %s74
    %p76 = scmp.eq.s32.totalorder %s15, 0
    %p77 = por %p75, %p76
    %s79 = sadd.s32 %s78, 1
    %p82 = scmp.eq.s32.totalorder %s9, 3
    %p83 = scmp.ne.s32.totalorder %s78, %s80
    %p84 = scmp.eq.s32.totalorder %s9, 0
    %p85 = por %p83, %p84
    %p86 = scmp.ne.s32.totalorder %s78, %s80
    %p87 = scmp.eq.s32.totalorder %s14, 3
    %p88 = por %p86, %p87
    %p89 = scmp.ne.s32.totalorder %s80, %s81
    %p90 = scmp.eq.s32.totalorder %s14, 0
    %p91 = por %p89, %p90
    %p92 = scmp.ne.s32.totalorder %s80, %s81
    %p93 = scmp.eq.s32.totalorder %s15, 3
    %p94 = por %p92, %p93
    %p96 = scmp.ne.s32.totalorder %s81, %s95
    %p97 = scmp.eq.s32.totalorder %s15, 0
    %p98 = por %p96, %p97
    %s99 = ssub.s32 %s16, %s28
    %s100 = ssub.s32 %s17, %s24
    %s101 = sor.u32 %s99, %s100
    %p102 = scmp.eq.s32.totalorder %s101, 0
    %s104 = sadd.s32 %s103, 1
    %s105 = scalar_select %p102, %s103, %s104
    %p108 = pneg %p102
    %p109 = scmp.eq.s32.totalorder %s9, 3
    %p110 = por %p108, %p109
    %p111 = scmp.ne.s32.totalorder %s103, %s106
    %p112 = scmp.eq.s32.totalorder %s9, 0
    %p113 = por %p111, %p112
    %p114 = scmp.ne.s32.totalorder %s103, %s106
    %p115 = scmp.eq.s32.totalorder %s14, 3
    %p116 = por %p114, %p115
    %p117 = scmp.ne.s32.totalorder %s106, %s107
    %p118 = scmp.eq.s32.totalorder %s14, 0
    %p119 = por %p117, %p118
    %p120 = scmp.ne.s32.totalorder %s106, %s107
    %p121 = scmp.eq.s32.totalorder %s15, 3
    %p122 = por %p120, %p121
    %p124 = scmp.ne.s32.totalorder %s107, %s123
    %p125 = scmp.eq.s32.totalorder %s15, 0
    %p126 = por %p124, %p125
    %p127 = scmp.le.s32.totalorder 1, %s9
    %p128 = scmp.lt.s32.totalorder %s9, 5
    %p129 = pnand %p127, %p128
    %p130 = pneg %p129
    // Predicated region
    $region9: #{perceptual_loss.16} parent=5 // pred_check
      _
    $region10: #{perceptual_loss.16} parent=5 // pred_check_branch
      %132 = sbr.rel (%p129) target = $region12
    $region11: #{perceptual_loss.16} parent=5 // pred_region
      %s133 = ssub.s32 %s9, 1
      // Predicated region
      $region13: #{perceptual_loss.16} parent=11 // pred_check
        %p134 = pneg %p70
      $region14: #{perceptual_loss.16} parent=11 // pred_check_branch
        %136 = sbr.rel (%p134) target = $region16
      $region15: #{perceptual_loss.16} parent=11 // pred_region
        _
      $region16: #{perceptual_loss.16} parent=11 // pred_fallthru
        _
      // Predicated region
      $region17: #{perceptual_loss.16} parent=11 // pred_check
        %p137 = pneg %p91
      $region18: #{perceptual_loss.16} parent=11 // pred_check_branch
        %139 = sbr.rel (%p137) target = $region20
      $region19: #{perceptual_loss.16} parent=11 // pred_region
        _
      $region20: #{perceptual_loss.16} parent=11 // pred_fallthru
        _
    $region12: #{perceptual_loss.16} parent=5 // pred_fallthru
      _
    %p140 = scmp.lt.s32.totalorder %s9, 4
    // Predicated region
    $region21: #{perceptual_loss.16} parent=5 // pred_check
      %p141 = pneg %p140
    $region22: #{perceptual_loss.16} parent=5 // pred_check_branch
      %143 = sbr.rel (%p141) target = $region24
    $region23: #{perceptual_loss.16} parent=5 // pred_region
      // Predicated region
      $region25: #{perceptual_loss.16} parent=23 // pred_check
        %p144 = pneg %p43
      $region26: #{perceptual_loss.16} parent=23 // pred_check_branch
        %146 = sbr.rel (%p144) target = $region28
      $region27: #{perceptual_loss.16} parent=23 // pred_region
        %s147 = smul.u32 2, %s17
        %p148 = scmp.lt.s32.totalorder %s16, 3
        %s149 = scalar_select %p148, %s16, 3
        %p150 = scmp.lt.s32.totalorder %s147, 1
        %s151 = scalar_select %p150, %s147, 1
        %s152 = smul.addr %s151, 9
        %s153 = smul.addr %s149, 18
        %s154 = sadd.s32 %s152, %s153
        %s155 = smul.addr %s154, 4
        %s156 = scalar_lea.vmem %s0, %s155
        %s157 = smul.u32 2, %s17
      $region28: #{perceptual_loss.16} parent=23 // pred_fallthru
        _
    $region24: #{perceptual_loss.16} parent=5 // pred_fallthru
      _
    %p158 = scmp.le.s32.totalorder 1, %s9
    %p159 = scmp.lt.s32.totalorder %s9, 5
    %p160 = pnand %p158, %p159
    %p161 = pneg %p160
    // Predicated region
    $region29: #{perceptual_loss.16} parent=5 // pred_check
      _
    $region30: #{perceptual_loss.16} parent=5 // pred_check_branch
      %163 = sbr.rel (%p160) target = $region32
    $region31: #{perceptual_loss.16} parent=5 // pred_region
      %s164 = ssub.s32 %s9, 1
      %s165 = smul.u32 2, %s19
      %p166 = scmp.lt.s32.totalorder %s18, 3
      %s167 = scalar_select %p166, %s18, 3
      %p168 = scmp.lt.s32.totalorder %s165, 1
      %s169 = scalar_select %p168, %s165, 1
      %s170 = smul.addr %s169, 9
      %s171 = smul.addr %s167, 18
      %s172 = sadd.s32 %s170, %s171
      %s173 = smul.addr %s172, 4
      %s174 = scalar_lea.vmem %s0, %s173
      %p175 = pneg %p49
      %p176 = pneg %p46
      %p177 = pneg %p70
      %p178 = pneg %p67
      %p179 = pneg %p91
      %p180 = pneg %p88
      %p181 = pneg %p119
      %p182 = pneg %p116
      %s183 = smul.u32 2, %s19
      %p184 = scmp.lt.s32.totalorder %s18, 3
      %s185 = scalar_select %p184, %s18, 3
      %p186 = scmp.lt.s32.totalorder %s183, 1
      %s187 = scalar_select %p186, %s183, 1
      %s188 = smul.addr %s187, 2
      %s189 = smul.addr %s185, 4
      %s190 = sadd.s32 %s188, %s189
      %s191 = smul.addr %s190, 4
      %s192 = scalar_lea.vmem %s3, %s191
      %s193 = smul.u32 2, %s19
      %p194 = scmp.lt.s32.totalorder %s18, 3
      %s195 = scalar_select %p194, %s18, 3
      %p196 = scmp.lt.s32.totalorder %s193, 1
      %s197 = scalar_select %p196, %s193, 1
      %s198 = smul.addr %s197, 9
      %s199 = smul.addr %s195, 18
      %s200 = sadd.s32 %s198, %s199
      %s201 = smul.addr %s200, 4
      %s202 = scalar_lea.vmem %s0, %s201
      %s203 = smul.u32 2, %s19
      %s204 = smul.u32 2, %s19
      %p205 = scmp.lt.s32.totalorder %s18, 3
      %s206 = scalar_select %p205, %s18, 3
      %p207 = scmp.lt.s32.totalorder %s204, 1
      %s208 = scalar_select %p207, %s204, 1
      %s209 = smul.addr %s208, 2
      %s210 = smul.addr %s206, 4
      %s211 = sadd.s32 %s209, %s210
      %s212 = smul.addr %s211, 4
      %s213 = scalar_lea.vmem %s3, %s212
      %s214 = smul.u32 2, %s19
      %v216 = vld [vmem:[%s202] sm:$0xff]
      %v217 = vld [vmem:[%s202 + $0x8] sm:$0xff]
      %v218 = vld [vmem:[%s202 + $0x10] sm:$0xff]
      %v219 = vld [vmem:[%s202 + $0x18] sm:$0xff]
      %v220 = vld [vmem:[%s202 + $0x20] sm:$0xf]
      %v221 = vld [vmem:[%s202 + $0x24] sm:$0xff]
      %v222 = vld [vmem:[%s202 + $0x2c] sm:$0xff]
      %v223 = vld [vmem:[%s202 + $0x34] sm:$0xff]
      %v224 = vld [vmem:[%s202 + $0x3c] sm:$0xff]
      %v225 = vld [vmem:[%s202 + $0x44] sm:$0xf]
      %v226 = vld [vmem:[%s1] sm:$0xff]
      %v227 = vld [vmem:[%s1 + $0x8] sm:$0xff]
      %v228 = vld [vmem:[%s1 + $0x10] sm:$0xff]
      %v229 = vld [vmem:[%s1 + $0x18] sm:$0xff]
      %v230 = vld [vmem:[%s1 + $0x20] sm:$0xff]
      %v231 = vld [vmem:[%s1 + $0x28] sm:$0xff]
      %v232 = vld [vmem:[%s1 + $0x30] sm:$0xff]
      %v233 = vld [vmem:[%s1 + $0x38] sm:$0xff]
      %v234 = vld [vmem:[%s1 + $0x40] sm:$0xff]
      %v235 = vld [vmem:[%s1 + $0x48] sm:$0xff]
      %v236 = vld [vmem:[%s1 + $0x50] sm:$0xff]
      %v237 = vld [vmem:[%s1 + $0x58] sm:$0xff]
      %v238 = vld [vmem:[%s1 + $0x60] sm:$0xff]
      %v239 = vld [vmem:[%s1 + $0x68] sm:$0xff]
      %v240 = vld [vmem:[%s1 + $0x70] sm:$0xff]
      %v241 = vld [vmem:[%s1 + $0x78] sm:$0xff]
      %v242 = vld [vmem:[%s1 + $0x80] sm:$0xff]
      %v243 = vld [vmem:[%s1 + $0x88] sm:$0xff]
      %v244 = vld [vmem:[%s1 + $0x90] sm:$0xff]
      %v245 = vld [vmem:[%s1 + $0x98] sm:$0xff]
      %v246 = vld [vmem:[%s1 + $0xa0] sm:$0xff]
      %v247 = vld [vmem:[%s1 + $0xa8] sm:$0xff]
      %v248 = vld [vmem:[%s1 + $0xb0] sm:$0xff]
      %v249 = vld [vmem:[%s1 + $0xb8] sm:$0xff]
      %v250 = vld [vmem:[%s1 + $0xc0] sm:$0xff]
      %v251 = vld [vmem:[%s1 + $0xc8] sm:$0xff]
      %v252 = vld [vmem:[%s1 + $0xd0] sm:$0xff]
      %v253 = vld [vmem:[%s1 + $0xd8] sm:$0xff]
      %v254 = vld [vmem:[%s1 + $0xe0] sm:$0xff]
      %v255 = vld [vmem:[%s1 + $0xe8] sm:$0xff]
      %v256 = vld [vmem:[%s1 + $0xf0] sm:$0xff]
      %v257 = vld [vmem:[%s1 + $0xf8] sm:$0xff]
      %v258 = vld [vmem:[%s1 + $0x100] sm:$0xff]
      %v259 = vld [vmem:[%s1 + $0x108] sm:$0xff]
      %v260 = vld [vmem:[%s1 + $0x110] sm:$0xff]
      %v261 = vld [vmem:[%s1 + $0x118] sm:$0xff]
      %v262 = vld [vmem:[%s1 + $0x120] sm:$0xff]
      %v263 = vld [vmem:[%s1 + $0x128] sm:$0xff]
      %v264 = vld [vmem:[%s1 + $0x130] sm:$0xff]
      %v265 = vld [vmem:[%s1 + $0x138] sm:$0xff]
      %v266 = vld [vmem:[%s1 + $0x140] sm:$0xff]
      %v267 = vld [vmem:[%s1 + $0x148] sm:$0xff]
      %v268 = vld [vmem:[%s1 + $0x150] sm:$0xff]
      %v269 = vld [vmem:[%s1 + $0x158] sm:$0xff]
      %v270 = vld [vmem:[%s1 + $0x160] sm:$0xff]
      %v271 = vld [vmem:[%s1 + $0x168] sm:$0xff]
      %v272 = vld [vmem:[%s1 + $0x170] sm:$0xff]
      %v273 = vld [vmem:[%s1 + $0x178] sm:$0xff]
      %v274 = vld [vmem:[%s1 + $0x180] sm:$0xff]
      %v275 = vld [vmem:[%s1 + $0x188] sm:$0xff]
      %v276 = vld [vmem:[%s1 + $0x190] sm:$0xff]
      %v277 = vld [vmem:[%s1 + $0x198] sm:$0xff]
      %v278 = vld [vmem:[%s1 + $0x1a0] sm:$0xff]
      %v279 = vld [vmem:[%s1 + $0x1a8] sm:$0xff]
      %v280 = vld [vmem:[%s1 + $0x1b0] sm:$0xff]
      %v281 = vld [vmem:[%s1 + $0x1b8] sm:$0xff]
      %v282 = vld [vmem:[%s1 + $0x1c0] sm:$0xff]
      %v283 = vld [vmem:[%s1 + $0x1c8] sm:$0xff]
      %v284 = vld [vmem:[%s1 + $0x1d0] sm:$0xff]
      %v285 = vld [vmem:[%s1 + $0x1d8] sm:$0xff]
      %v286 = vld [vmem:[%s1 + $0x1e0] sm:$0xff]
      %v287 = vld [vmem:[%s1 + $0x1e8] sm:$0xff]
      %v288 = vld [vmem:[%s1 + $0x1f0] sm:$0xff]
      %v289 = vld [vmem:[%s1 + $0x1f8] sm:$0xff]
      %v290 = vld [vmem:[%s1 + $0x200] sm:$0xff]
      %v291 = vld [vmem:[%s1 + $0x208] sm:$0xff]
      %v292 = vld [vmem:[%s1 + $0x210] sm:$0xff]
      %v293 = vld [vmem:[%s1 + $0x218] sm:$0xff]
      %v294 = vld [vmem:[%s1 + $0x220] sm:$0xff]
      %v295 = vld [vmem:[%s1 + $0x228] sm:$0xff]
      %v296 = vld [vmem:[%s1 + $0x230] sm:$0xff]
      %v297 = vld [vmem:[%s1 + $0x238] sm:$0xff]
      %v298 = vld [vmem:[%s1 + $0x240] sm:$0xff]
      %v299 = vld [vmem:[%s1 + $0x248] sm:$0xff]
      %v300 = vld [vmem:[%s1 + $0x250] sm:$0xff]
      %v301 = vld [vmem:[%s1 + $0x258] sm:$0xff]
      %v302 = vld [vmem:[%s1 + $0x260] sm:$0xff]
      %v303 = vld [vmem:[%s1 + $0x268] sm:$0xff]
      %v304 = vld [vmem:[%s1 + $0x270] sm:$0xff]
      %v305 = vld [vmem:[%s1 + $0x278] sm:$0xff]
      %v306 = vld [vmem:[%s1 + $0x280] sm:$0xff]
      %v307 = vld [vmem:[%s1 + $0x288] sm:$0xff]
      %v308 = vld [vmem:[%s1 + $0x290] sm:$0xff]
      %v309 = vld [vmem:[%s1 + $0x298] sm:$0xff]
      %v310 = vld [vmem:[%s1 + $0x2a0] sm:$0xff]
      %v311 = vld [vmem:[%s1 + $0x2a8] sm:$0xff]
      %v312 = vld [vmem:[%s1 + $0x2b0] sm:$0xff]
      %v313 = vld [vmem:[%s1 + $0x2b8] sm:$0xff]
      %v314 = vld [vmem:[%s1 + $0x2c0] sm:$0xff]
      %v315 = vld [vmem:[%s1 + $0x2c8] sm:$0xff]
      %v316 = vld [vmem:[%s1 + $0x2d0] sm:$0xff]
      %v317 = vld [vmem:[%s1 + $0x2d8] sm:$0xff]
      %v318 = vld [vmem:[%s1 + $0x2e0] sm:$0xff]
      %v319 = vld [vmem:[%s1 + $0x2e8] sm:$0xff]
      %v320 = vld [vmem:[%s1 + $0x2f0] sm:$0xff]
      %v321 = vld [vmem:[%s1 + $0x2f8] sm:$0xff]
      %v322 = vld [vmem:[%s1 + $0x300] sm:$0xff]
      %v323 = vld [vmem:[%s1 + $0x308] sm:$0xff]
      %v324 = vld [vmem:[%s1 + $0x310] sm:$0xff]
      %v325 = vld [vmem:[%s1 + $0x318] sm:$0xff]
      %v326 = vld [vmem:[%s1 + $0x320] sm:$0xff]
      %v327 = vld [vmem:[%s1 + $0x328] sm:$0xff]
      %v328 = vld [vmem:[%s1 + $0x330] sm:$0xff]
      %v329 = vld [vmem:[%s1 + $0x338] sm:$0xff]
      %v330 = vld [vmem:[%s1 + $0x340] sm:$0xff]
      %v331 = vld [vmem:[%s1 + $0x348] sm:$0xff]
      %v332 = vld [vmem:[%s1 + $0x350] sm:$0xff]
      %v333 = vld [vmem:[%s1 + $0x358] sm:$0xff]
      %v334 = vld [vmem:[%s1 + $0x360] sm:$0xff]
      %v335 = vld [vmem:[%s1 + $0x368] sm:$0xff]
      %v336 = vld [vmem:[%s1 + $0x370] sm:$0xff]
      %v337 = vld [vmem:[%s1 + $0x378] sm:$0xff]
      %v338 = vld [vmem:[%s1 + $0x380] sm:$0xff]
      %v339 = vld [vmem:[%s1 + $0x388] sm:$0xff]
      %v340 = vld [vmem:[%s1 + $0x390] sm:$0xff]
      %v341 = vld [vmem:[%s1 + $0x398] sm:$0xff]
      %v342 = vld [vmem:[%s1 + $0x3a0] sm:$0xff]
      %v343 = vld [vmem:[%s1 + $0x3a8] sm:$0xff]
      %v344 = vld [vmem:[%s1 + $0x3b0] sm:$0xff]
      %v345 = vld [vmem:[%s1 + $0x3b8] sm:$0xff]
      %v346 = vld [vmem:[%s1 + $0x3c0] sm:$0xff]
      %v347 = vld [vmem:[%s1 + $0x3c8] sm:$0xff]
      %v348 = vld [vmem:[%s1 + $0x3d0] sm:$0xff]
      %v349 = vld [vmem:[%s1 + $0x3d8] sm:$0xff]
      %v350 = vld [vmem:[%s1 + $0x3e0] sm:$0xff]
      %v351 = vld [vmem:[%s1 + $0x3e8] sm:$0xff]
      %v352 = vld [vmem:[%s1 + $0x3f0] sm:$0xff]
      %v353 = vld [vmem:[%s1 + $0x3f8] sm:$0xff]
      %v354 = vld [vmem:[%s1 + $0x400] sm:$0xff]
      %v355 = vld [vmem:[%s1 + $0x408] sm:$0xff]
      %v356 = vld [vmem:[%s1 + $0x410] sm:$0xff]
      %v357 = vld [vmem:[%s1 + $0x418] sm:$0xff]
      %v358 = vld [vmem:[%s1 + $0x420] sm:$0xff]
      %v359 = vld [vmem:[%s1 + $0x428] sm:$0xff]
      %v360 = vld [vmem:[%s1 + $0x430] sm:$0xff]
      %v361 = vld [vmem:[%s1 + $0x438] sm:$0xff]
      %v362 = vld [vmem:[%s1 + $0x440] sm:$0xff]
      %v363 = vld [vmem:[%s1 + $0x448] sm:$0xff]
      %v364 = vld [vmem:[%s1 + $0x450] sm:$0xff]
      %v365 = vld [vmem:[%s1 + $0x458] sm:$0xff]
      %v366 = vld [vmem:[%s1 + $0x460] sm:$0xff]
      %v367 = vld [vmem:[%s1 + $0x468] sm:$0xff]
      %v368 = vld [vmem:[%s1 + $0x470] sm:$0xff]
      %v369 = vld [vmem:[%s1 + $0x478] sm:$0xff]
      %v370 = vld [vmem:[%s2] sm:$0x3]
      %v372 = vlaneseq
      %v373 = vshrl.u32 %v372, 7
      %v374 = vsub.s32 0, %v373
      %v375 = vrot.slane %v370, %v374
      %v376 = vlaneseq
      %v377 = vshrl.u32 %v376, 7
      %v378 = vsub.s32 1, %v377
      %v379 = vrot.slane %v370, %v378
      %v392 = vunpack.c.l.b16 %v216
      %v393 = vunpack.c.h.b16 %v216
      %v394 = vunpack.c.l.b16 %v217
      %v395 = vunpack.c.h.b16 %v217
      %v396 = vunpack.c.l.b16 %v218
      %v397 = vunpack.c.h.b16 %v218
      %v398 = vunpack.c.l.b16 %v219
      %v399 = vunpack.c.h.b16 %v219
      %v400 = vunpack.c.l.b16 %v220
      %v401 = vunpack.c.l.b16 %v221
      %v402 = vunpack.c.h.b16 %v221
      %v403 = vunpack.c.l.b16 %v222
      %v404 = vunpack.c.h.b16 %v222
      %v405 = vunpack.c.l.b16 %v223
      %v406 = vunpack.c.h.b16 %v223
      %v407 = vunpack.c.l.b16 %v224
      %v408 = vunpack.c.h.b16 %v224
      %v409 = vunpack.c.l.b16 %v225
      %v410 = vpack.c.b16 %v401, %v392
      %v411 = vpack.c.b16 %v402, %v393
      %v412 = vpack.c.b16 %v403, %v394
      %v413 = vpack.c.b16 %v404, %v395
      %v414 = vpack.c.b16 %v405, %v396
      %v415 = vpack.c.b16 %v406, %v397
      %v416 = vpack.c.b16 %v407, %v398
      %v417 = vpack.c.b16 %v408, %v399
      %v418 = vpack.c.b16 %v409, %v400
      %v572 = vunpack.c.l.b16 %v226
      %v573 = vunpack.c.h.b16 %v226
      %v574 = vunpack.c.l.b16 %v227
      %v575 = vunpack.c.h.b16 %v227
      %v576 = vunpack.c.l.b16 %v228
      %v577 = vunpack.c.h.b16 %v228
      %v578 = vunpack.c.l.b16 %v229
      %v579 = vunpack.c.h.b16 %v229
      %v580 = vunpack.c.l.b16 %v230
      %v581 = vunpack.c.h.b16 %v230
      %v582 = vunpack.c.l.b16 %v231
      %v583 = vunpack.c.h.b16 %v231
      %v584 = vunpack.c.l.b16 %v232
      %v585 = vunpack.c.h.b16 %v232
      %v586 = vunpack.c.l.b16 %v233
      %v587 = vunpack.c.h.b16 %v233
      %v588 = vunpack.c.l.b16 %v234
      %v589 = vunpack.c.h.b16 %v234
      %v590 = vunpack.c.l.b16 %v235
      %v591 = vunpack.c.h.b16 %v235
      %v592 = vunpack.c.l.b16 %v236
      %v593 = vunpack.c.h.b16 %v236
      %v594 = vunpack.c.l.b16 %v237
      %v595 = vunpack.c.h.b16 %v237
      %v596 = vunpack.c.l.b16 %v238
      %v597 = vunpack.c.h.b16 %v238
      %v598 = vunpack.c.l.b16 %v239
      %v599 = vunpack.c.h.b16 %v239
      %v600 = vunpack.c.l.b16 %v240
      %v601 = vunpack.c.h.b16 %v240
      %v602 = vunpack.c.l.b16 %v241
      %v603 = vunpack.c.h.b16 %v241
      %v604 = vunpack.c.l.b16 %v242
      %v605 = vunpack.c.h.b16 %v242
      %v606 = vunpack.c.l.b16 %v243
      %v607 = vunpack.c.h.b16 %v243
      %v608 = vunpack.c.l.b16 %v244
      %v609 = vunpack.c.h.b16 %v244
      %v610 = vunpack.c.l.b16 %v245
      %v611 = vunpack.c.h.b16 %v245
      %v612 = vunpack.c.l.b16 %v246
      %v613 = vunpack.c.h.b16 %v246
      %v614 = vunpack.c.l.b16 %v247
      %v615 = vunpack.c.h.b16 %v247
      %v616 = vunpack.c.l.b16 %v248
      %v617 = vunpack.c.h.b16 %v248
      %v618 = vunpack.c.l.b16 %v249
      %v619 = vunpack.c.h.b16 %v249
      %v620 = vunpack.c.l.b16 %v250
      %v621 = vunpack.c.h.b16 %v250
      %v622 = vunpack.c.l.b16 %v251
      %v623 = vunpack.c.h.b16 %v251
      %v624 = vunpack.c.l.b16 %v252
      %v625 = vunpack.c.h.b16 %v252
      %v626 = vunpack.c.l.b16 %v253
      %v627 = vunpack.c.h.b16 %v253
      %v628 = vunpack.c.l.b16 %v254
      %v629 = vunpack.c.h.b16 %v254
      %v630 = vunpack.c.l.b16 %v255
      %v631 = vunpack.c.h.b16 %v255
      %v632 = vunpack.c.l.b16 %v256
      %v633 = vunpack.c.h.b16 %v256
      %v634 = vunpack.c.l.b16 %v257
      %v635 = vunpack.c.h.b16 %v257
      %v636 = vunpack.c.l.b16 %v258
      %v637 = vunpack.c.h.b16 %v258
      %v638 = vunpack.c.l.b16 %v259
      %v639 = vunpack.c.h.b16 %v259
      %v640 = vunpack.c.l.b16 %v260
      %v641 = vunpack.c.h.b16 %v260
      %v642 = vunpack.c.l.b16 %v261
      %v643 = vunpack.c.h.b16 %v261
      %v644 = vunpack.c.l.b16 %v262
      %v645 = vunpack.c.h.b16 %v262
      %v646 = vunpack.c.l.b16 %v263
      %v647 = vunpack.c.h.b16 %v263
      %v648 = vunpack.c.l.b16 %v264
      %v649 = vunpack.c.h.b16 %v264
      %v650 = vunpack.c.l.b16 %v265
      %v651 = vunpack.c.h.b16 %v265
      %v652 = vunpack.c.l.b16 %v266
      %v653 = vunpack.c.h.b16 %v266
      %v654 = vunpack.c.l.b16 %v267
      %v655 = vunpack.c.h.b16 %v267
      %v656 = vunpack.c.l.b16 %v268
      %v657 = vunpack.c.h.b16 %v268
      %v658 = vunpack.c.l.b16 %v269
      %v659 = vunpack.c.h.b16 %v269
      %v660 = vunpack.c.l.b16 %v270
      %v661 = vunpack.c.h.b16 %v270
      %v662 = vunpack.c.l.b16 %v271
      %v663 = vunpack.c.h.b16 %v271
      %v664 = vunpack.c.l.b16 %v272
      %v665 = vunpack.c.h.b16 %v272
      %v666 = vunpack.c.l.b16 %v273
      %v667 = vunpack.c.h.b16 %v273
      %v668 = vunpack.c.l.b16 %v274
      %v669 = vunpack.c.h.b16 %v274
      %v670 = vunpack.c.l.b16 %v275
      %v671 = vunpack.c.h.b16 %v275
      %v672 = vunpack.c.l.b16 %v276
      %v673 = vunpack.c.h.b16 %v276
      %v674 = vunpack.c.l.b16 %v277
      %v675 = vunpack.c.h.b16 %v277
      %v676 = vunpack.c.l.b16 %v278
      %v677 = vunpack.c.h.b16 %v278
      %v678 = vunpack.c.l.b16 %v279
      %v679 = vunpack.c.h.b16 %v279
      %v680 = vunpack.c.l.b16 %v280
      %v681 = vunpack.c.h.b16 %v280
      %v682 = vunpack.c.l.b16 %v281
      %v683 = vunpack.c.h.b16 %v281
      %v684 = vunpack.c.l.b16 %v282
      %v685 = vunpack.c.h.b16 %v282
      %v686 = vunpack.c.l.b16 %v283
      %v687 = vunpack.c.h.b16 %v283
      %v688 = vunpack.c.l.b16 %v284
      %v689 = vunpack.c.h.b16 %v284
      %v690 = vunpack.c.l.b16 %v285
      %v691 = vunpack.c.h.b16 %v285
      %v692 = vunpack.c.l.b16 %v286
      %v693 = vunpack.c.h.b16 %v286
      %v694 = vunpack.c.l.b16 %v287
      %v695 = vunpack.c.h.b16 %v287
      %v696 = vunpack.c.l.b16 %v288
      %v697 = vunpack.c.h.b16 %v288
      %v698 = vunpack.c.l.b16 %v289
      %v699 = vunpack.c.h.b16 %v289
      %v700 = vunpack.c.l.b16 %v290
      %v701 = vunpack.c.h.b16 %v290
      %v702 = vunpack.c.l.b16 %v291
      %v703 = vunpack.c.h.b16 %v291
      %v704 = vunpack.c.l.b16 %v292
      %v705 = vunpack.c.h.b16 %v292
      %v706 = vunpack.c.l.b16 %v293
      %v707 = vunpack.c.h.b16 %v293
      %v708 = vunpack.c.l.b16 %v294
      %v709 = vunpack.c.h.b16 %v294
      %v710 = vunpack.c.l.b16 %v295
      %v711 = vunpack.c.h.b16 %v295
      %v712 = vunpack.c.l.b16 %v296
      %v713 = vunpack.c.h.b16 %v296
      %v714 = vunpack.c.l.b16 %v297
      %v715 = vunpack.c.h.b16 %v297
      %v716 = vunpack.c.l.b16 %v298
      %v717 = vunpack.c.h.b16 %v298
      %v718 = vunpack.c.l.b16 %v299
      %v719 = vunpack.c.h.b16 %v299
      %v720 = vunpack.c.l.b16 %v300
      %v721 = vunpack.c.h.b16 %v300
      %v722 = vunpack.c.l.b16 %v301
      %v723 = vunpack.c.h.b16 %v301
      %v724 = vunpack.c.l.b16 %v302
      %v725 = vunpack.c.h.b16 %v302
      %v726 = vunpack.c.l.b16 %v303
      %v727 = vunpack.c.h.b16 %v303
      %v728 = vunpack.c.l.b16 %v304
      %v729 = vunpack.c.h.b16 %v304
      %v730 = vunpack.c.l.b16 %v305
      %v731 = vunpack.c.h.b16 %v305
      %v732 = vunpack.c.l.b16 %v306
      %v733 = vunpack.c.h.b16 %v306
      %v734 = vunpack.c.l.b16 %v307
      %v735 = vunpack.c.h.b16 %v307
      %v736 = vunpack.c.l.b16 %v308
      %v737 = vunpack.c.h.b16 %v308
      %v738 = vunpack.c.l.b16 %v309
      %v739 = vunpack.c.h.b16 %v309
      %v740 = vunpack.c.l.b16 %v310
      %v741 = vunpack.c.h.b16 %v310
      %v742 = vunpack.c.l.b16 %v311
      %v743 = vunpack.c.h.b16 %v311
      %v744 = vunpack.c.l.b16 %v312
      %v745 = vunpack.c.h.b16 %v312
      %v746 = vunpack.c.l.b16 %v313
      %v747 = vunpack.c.h.b16 %v313
      %v748 = vunpack.c.l.b16 %v314
      %v749 = vunpack.c.h.b16 %v314
      %v750 = vunpack.c.l.b16 %v315
      %v751 = vunpack.c.h.b16 %v315
      %v752 = vunpack.c.l.b16 %v316
      %v753 = vunpack.c.h.b16 %v316
      %v754 = vunpack.c.l.b16 %v317
      %v755 = vunpack.c.h.b16 %v317
      %v756 = vunpack.c.l.b16 %v318
      %v757 = vunpack.c.h.b16 %v318
      %v758 = vunpack.c.l.b16 %v319
      %v759 = vunpack.c.h.b16 %v319
      %v760 = vunpack.c.l.b16 %v320
      %v761 = vunpack.c.h.b16 %v320
      %v762 = vunpack.c.l.b16 %v321
      %v763 = vunpack.c.h.b16 %v321
      %v764 = vunpack.c.l.b16 %v322
      %v765 = vunpack.c.h.b16 %v322
      %v766 = vunpack.c.l.b16 %v323
      %v767 = vunpack.c.h.b16 %v323
      %v768 = vunpack.c.l.b16 %v324
      %v769 = vunpack.c.h.b16 %v324
      %v770 = vunpack.c.l.b16 %v325
      %v771 = vunpack.c.h.b16 %v325
      %v772 = vunpack.c.l.b16 %v326
      %v773 = vunpack.c.h.b16 %v326
      %v774 = vunpack.c.l.b16 %v327
      %v775 = vunpack.c.h.b16 %v327
      %v776 = vunpack.c.l.b16 %v328
      %v777 = vunpack.c.h.b16 %v328
      %v778 = vunpack.c.l.b16 %v329
      %v779 = vunpack.c.h.b16 %v329
      %v780 = vunpack.c.l.b16 %v330
      %v781 = vunpack.c.h.b16 %v330
      %v782 = vunpack.c.l.b16 %v331
      %v783 = vunpack.c.h.b16 %v331
      %v784 = vunpack.c.l.b16 %v332
      %v785 = vunpack.c.h.b16 %v332
      %v786 = vunpack.c.l.b16 %v333
      %v787 = vunpack.c.h.b16 %v333
      %v788 = vunpack.c.l.b16 %v334
      %v789 = vunpack.c.h.b16 %v334
      %v790 = vunpack.c.l.b16 %v335
      %v791 = vunpack.c.h.b16 %v335
      %v792 = vunpack.c.l.b16 %v336
      %v793 = vunpack.c.h.b16 %v336
      %v794 = vunpack.c.l.b16 %v337
      %v795 = vunpack.c.h.b16 %v337
      %v796 = vunpack.c.l.b16 %v338
      %v797 = vunpack.c.h.b16 %v338
      %v798 = vunpack.c.l.b16 %v339
      %v799 = vunpack.c.h.b16 %v339
      %v800 = vunpack.c.l.b16 %v340
      %v801 = vunpack.c.h.b16 %v340
      %v802 = vunpack.c.l.b16 %v341
      %v803 = vunpack.c.h.b16 %v341
      %v804 = vunpack.c.l.b16 %v342
      %v805 = vunpack.c.h.b16 %v342
      %v806 = vunpack.c.l.b16 %v343
      %v807 = vunpack.c.h.b16 %v343
      %v808 = vunpack.c.l.b16 %v344
      %v809 = vunpack.c.h.b16 %v344
      %v810 = vunpack.c.l.b16 %v345
      %v811 = vunpack.c.h.b16 %v345
      %v812 = vunpack.c.l.b16 %v346
      %v813 = vunpack.c.h.b16 %v346
      %v814 = vunpack.c.l.b16 %v347
      %v815 = vunpack.c.h.b16 %v347
      %v816 = vunpack.c.l.b16 %v348
      %v817 = vunpack.c.h.b16 %v348
      %v818 = vunpack.c.l.b16 %v349
      %v819 = vunpack.c.h.b16 %v349
      %v820 = vunpack.c.l.b16 %v350
      %v821 = vunpack.c.h.b16 %v350
      %v822 = vunpack.c.l.b16 %v351
      %v823 = vunpack.c.h.b16 %v351
      %v824 = vunpack.c.l.b16 %v352
      %v825 = vunpack.c.h.b16 %v352
      %v826 = vunpack.c.l.b16 %v353
      %v827 = vunpack.c.h.b16 %v353
      %v828 = vunpack.c.l.b16 %v354
      %v829 = vunpack.c.h.b16 %v354
      %v830 = vunpack.c.l.b16 %v355
      %v831 = vunpack.c.h.b16 %v355
      %v832 = vunpack.c.l.b16 %v356
      %v833 = vunpack.c.h.b16 %v356
      %v834 = vunpack.c.l.b16 %v357
      %v835 = vunpack.c.h.b16 %v357
      %v836 = vunpack.c.l.b16 %v358
      %v837 = vunpack.c.h.b16 %v358
      %v838 = vunpack.c.l.b16 %v359
      %v839 = vunpack.c.h.b16 %v359
      %v840 = vunpack.c.l.b16 %v360
      %v841 = vunpack.c.h.b16 %v360
      %v842 = vunpack.c.l.b16 %v361
      %v843 = vunpack.c.h.b16 %v361
      %v844 = vunpack.c.l.b16 %v362
      %v845 = vunpack.c.h.b16 %v362
      %v846 = vunpack.c.l.b16 %v363
      %v847 = vunpack.c.h.b16 %v363
      %v848 = vunpack.c.l.b16 %v364
      %v849 = vunpack.c.h.b16 %v364
      %v850 = vunpack.c.l.b16 %v365
      %v851 = vunpack.c.h.b16 %v365
      %v852 = vunpack.c.l.b16 %v366
      %v853 = vunpack.c.h.b16 %v366
      %v854 = vunpack.c.l.b16 %v367
      %v855 = vunpack.c.h.b16 %v367
      %v856 = vunpack.c.l.b16 %v368
      %v857 = vunpack.c.h.b16 %v368
      %v858 = vunpack.c.l.b16 %v369
      %v859 = vunpack.c.h.b16 %v369
      %v860 = vpack.c.b16 %v574, %v572
      %v861 = vpack.c.b16 %v575, %v573
      %v862 = vpack.c.b16 %v578, %v576
      %v863 = vpack.c.b16 %v579, %v577
      %v864 = vpack.c.b16 %v582, %v580
      %v865 = vpack.c.b16 %v583, %v581
      %v866 = vpack.c.b16 %v586, %v584
      %v867 = vpack.c.b16 %v587, %v585
      %v868 = vpack.c.b16 %v590, %v588
      %v869 = vpack.c.b16 %v591, %v589
      %v870 = vpack.c.b16 %v594, %v592
      %v871 = vpack.c.b16 %v595, %v593
      %v872 = vpack.c.b16 %v598, %v596
      %v873 = vpack.c.b16 %v599, %v597
      %v874 = vpack.c.b16 %v602, %v600
      %v875 = vpack.c.b16 %v603, %v601
      %v876 = vpack.c.b16 %v606, %v604
      %v877 = vpack.c.b16 %v607, %v605
      %v878 = vpack.c.b16 %v610, %v608
      %v879 = vpack.c.b16 %v611, %v609
      %v880 = vpack.c.b16 %v614, %v612
      %v881 = vpack.c.b16 %v615, %v613
      %v882 = vpack.c.b16 %v618, %v616
      %v883 = vpack.c.b16 %v619, %v617
      %v884 = vpack.c.b16 %v622, %v620
      %v885 = vpack.c.b16 %v623, %v621
      %v886 = vpack.c.b16 %v626, %v624
      %v887 = vpack.c.b16 %v627, %v625
      %v888 = vpack.c.b16 %v630, %v628
      %v889 = vpack.c.b16 %v631, %v629
      %v890 = vpack.c.b16 %v634, %v632
      %v891 = vpack.c.b16 %v635, %v633
      %v892 = vpack.c.b16 %v638, %v636
      %v893 = vpack.c.b16 %v639, %v637
      %v894 = vpack.c.b16 %v642, %v640
      %v895 = vpack.c.b16 %v643, %v641
      %v896 = vpack.c.b16 %v646, %v644
      %v897 = vpack.c.b16 %v647, %v645
      %v898 = vpack.c.b16 %v650, %v648
      %v899 = vpack.c.b16 %v651, %v649
      %v900 = vpack.c.b16 %v654, %v652
      %v901 = vpack.c.b16 %v655, %v653
      %v902 = vpack.c.b16 %v658, %v656
      %v903 = vpack.c.b16 %v659, %v657
      %v904 = vpack.c.b16 %v662, %v660
      %v905 = vpack.c.b16 %v663, %v661
      %v906 = vpack.c.b16 %v666, %v664
      %v907 = vpack.c.b16 %v667, %v665
      %v908 = vpack.c.b16 %v670, %v668
      %v909 = vpack.c.b16 %v671, %v669
      %v910 = vpack.c.b16 %v674, %v672
      %v911 = vpack.c.b16 %v675, %v673
      %v912 = vpack.c.b16 %v678, %v676
      %v913 = vpack.c.b16 %v679, %v677
      %v914 = vpack.c.b16 %v682, %v680
      %v915 = vpack.c.b16 %v683, %v681
      %v916 = vpack.c.b16 %v686, %v684
      %v917 = vpack.c.b16 %v687, %v685
      %v918 = vpack.c.b16 %v690, %v688
      %v919 = vpack.c.b16 %v691, %v689
      %v920 = vpack.c.b16 %v694, %v692
      %v921 = vpack.c.b16 %v695, %v693
      %v922 = vpack.c.b16 %v698, %v696
      %v923 = vpack.c.b16 %v699, %v697
      %v924 = vpack.c.b16 %v702, %v700
      %v925 = vpack.c.b16 %v703, %v701
      %v926 = vpack.c.b16 %v706, %v704
      %v927 = vpack.c.b16 %v707, %v705
      %v928 = vpack.c.b16 %v710, %v708
      %v929 = vpack.c.b16 %v711, %v709
      %v930 = vpack.c.b16 %v714, %v712
      %v931 = vpack.c.b16 %v715, %v713
      %v932 = vpack.c.b16 %v718, %v716
      %v933 = vpack.c.b16 %v719, %v717
      %v934 = vpack.c.b16 %v722, %v720
      %v935 = vpack.c.b16 %v723, %v721
      %v936 = vpack.c.b16 %v726, %v724
      %v937 = vpack.c.b16 %v727, %v725
      %v938 = vpack.c.b16 %v730, %v728
      %v939 = vpack.c.b16 %v731, %v729
      %v940 = vpack.c.b16 %v734, %v732
      %v941 = vpack.c.b16 %v735, %v733
      %v942 = vpack.c.b16 %v738, %v736
      %v943 = vpack.c.b16 %v739, %v737
      %v944 = vpack.c.b16 %v742, %v740
      %v945 = vpack.c.b16 %v743, %v741
      %v946 = vpack.c.b16 %v746, %v744
      %v947 = vpack.c.b16 %v747, %v745
      %v948 = vpack.c.b16 %v750, %v748
      %v949 = vpack.c.b16 %v751, %v749
      %v950 = vpack.c.b16 %v754, %v752
      %v951 = vpack.c.b16 %v755, %v753
      %v952 = vpack.c.b16 %v758, %v756
      %v953 = vpack.c.b16 %v759, %v757
      %v954 = vpack.c.b16 %v762, %v760
      %v955 = vpack.c.b16 %v763, %v761
      %v956 = vpack.c.b16 %v766, %v764
      %v957 = vpack.c.b16 %v767, %v765
      %v958 = vpack.c.b16 %v770, %v768
      %v959 = vpack.c.b16 %v771, %v769
      %v960 = vpack.c.b16 %v774, %v772
      %v961 = vpack.c.b16 %v775, %v773
      %v962 = vpack.c.b16 %v778, %v776
      %v963 = vpack.c.b16 %v779, %v777
      %v964 = vpack.c.b16 %v782, %v780
      %v965 = vpack.c.b16 %v783, %v781
      %v966 = vpack.c.b16 %v786, %v784
      %v967 = vpack.c.b16 %v787, %v785
      %v968 = vpack.c.b16 %v790, %v788
      %v969 = vpack.c.b16 %v791, %v789
      %v970 = vpack.c.b16 %v794, %v792
      %v971 = vpack.c.b16 %v795, %v793
      %v972 = vpack.c.b16 %v798, %v796
      %v973 = vpack.c.b16 %v799, %v797
      %v974 = vpack.c.b16 %v802, %v800
      %v975 = vpack.c.b16 %v803, %v801
      %v976 = vpack.c.b16 %v806, %v804
      %v977 = vpack.c.b16 %v807, %v805
      %v978 = vpack.c.b16 %v810, %v808
      %v979 = vpack.c.b16 %v811, %v809
      %v980 = vpack.c.b16 %v814, %v812
      %v981 = vpack.c.b16 %v815, %v813
      %v982 = vpack.c.b16 %v818, %v816
      %v983 = vpack.c.b16 %v819, %v817
      %v984 = vpack.c.b16 %v822, %v820
      %v985 = vpack.c.b16 %v823, %v821
      %v986 = vpack.c.b16 %v826, %v824
      %v987 = vpack.c.b16 %v827, %v825
      %v988 = vpack.c.b16 %v830, %v828
      %v989 = vpack.c.b16 %v831, %v829
      %v990 = vpack.c.b16 %v834, %v832
      %v991 = vpack.c.b16 %v835, %v833
      %v992 = vpack.c.b16 %v838, %v836
      %v993 = vpack.c.b16 %v839, %v837
      %v994 = vpack.c.b16 %v842, %v840
      %v995 = vpack.c.b16 %v843, %v841
      %v996 = vpack.c.b16 %v846, %v844
      %v997 = vpack.c.b16 %v847, %v845
      %v998 = vpack.c.b16 %v850, %v848
      %v999 = vpack.c.b16 %v851, %v849
      %v1000 = vpack.c.b16 %v854, %v852
      %v1001 = vpack.c.b16 %v855, %v853
      %v1002 = vpack.c.b16 %v858, %v856
      %v1003 = vpack.c.b16 %v859, %v857
      %1148 = vmatprep.subr.bf16.mxu0 %v861
      %1149 = vmatpush1.bf16.msra.mxu0 %v860
      %1150 = vmatprep.subr.bf16.mxu0 %v863
      %1151 = vmatpush1.bf16.msra.mxu0 %v862
      %1152 = vmatprep.subr.bf16.mxu0 %v865
      %1153 = vmatpush1.bf16.msra.mxu0 %v864
      %1154 = vmatprep.subr.bf16.mxu0 %v867
      %1155 = vmatpush1.bf16.msra.mxu0 %v866
      %1156 = vmatprep.subr.bf16.mxu0 %v869
      %1157 = vmatpush1.bf16.msra.mxu0 %v868
      %1158 = vmatprep.subr.bf16.mxu0 %v871
      %1159 = vmatpush1.bf16.msra.mxu0 %v870
      %1160 = vmatprep.subr.bf16.mxu0 %v873
      %1161 = vmatpush1.bf16.msra.mxu0 %v872
      %1162 = vmatprep.subr.bf16.mxu0 %v875
      %1163 = vmatpush1.bf16.msra.mxu0 %v874
      %1164 = vmatprep.subr.bf16.mxu0 %v877
      %1165 = vmatpush1.bf16.msra.mxu0 %v876
      %1166 = vmatprep.subr.bf16.mxu0 %v879
      %1167 = vmatpush1.bf16.msra.mxu0 %v878
      %1168 = vmatprep.subr.bf16.mxu0 %v881
      %1169 = vmatpush1.bf16.msra.mxu0 %v880
      %1170 = vmatprep.subr.bf16.mxu0 %v883
      %1171 = vmatpush1.bf16.msra.mxu0 %v882
      %1172 = vmatprep.subr.bf16.mxu0 %v885
      %1173 = vmatpush1.bf16.msra.mxu0 %v884
      %1174 = vmatprep.subr.bf16.mxu0 %v887
      %1175 = vmatpush1.bf16.msra.mxu0 %v886
      %1176 = vmatprep.subr.bf16.mxu0 %v889
      %1177 = vmatpush1.bf16.msra.mxu0 %v888
      %1178 = vmatprep.subr.bf16.mxu0 %v891
      %1179 = vmatpush1.bf16.msra.mxu0 %v890
      %1180 = vmatprep.mubr.bf16.mxu0 %v411
      %1181 = vmatmul.mubr.bf16.gmra.mrb[0].mxu0 %v410
      %v1182 = vpop.f32.mrb[0].mxu0
      %v1183 = vadd.f32 %v375, %v1182
      %v1184 = vpop.f32.mrb[0].mxu0
      %v1185 = vadd.f32 %v379, %v1184
      %v1186 = vpop.f32.mrb[0].mxu0
      %v1187 = vadd.f32 %v375, %v1186
      %v1188 = vpop.f32.mrb[0].mxu0
      %v1189 = vadd.f32 %v379, %v1188
      %1190 = vdwg.mxu0
      %1191 = vmatprep.subr.bf16.mxu0 %v893
      %1192 = vmatpush1.bf16.msra.mxu0 %v892
      %1193 = vmatprep.subr.bf16.mxu0 %v895
      %1194 = vmatpush1.bf16.msra.mxu0 %v894
      %1195 = vmatprep.subr.bf16.mxu0 %v897
      %1196 = vmatpush1.bf16.msra.mxu0 %v896
      %1197 = vmatprep.subr.bf16.mxu0 %v899
      %1198 = vmatpush1.bf16.msra.mxu0 %v898
      %1199 = vmatprep.subr.bf16.mxu0 %v901
      %1200 = vmatpush1.bf16.msra.mxu0 %v900
      %1201 = vmatprep.subr.bf16.mxu0 %v903
      %1202 = vmatpush1.bf16.msra.mxu0 %v902
      %1203 = vmatprep.subr.bf16.mxu0 %v905
      %1204 = vmatpush1.bf16.msra.mxu0 %v904
      %1205 = vmatprep.subr.bf16.mxu0 %v907
      %1206 = vmatpush1.bf16.msra.mxu0 %v906
      %1207 = vmatprep.subr.bf16.mxu0 %v909
      %1208 = vmatpush1.bf16.msra.mxu0 %v908
      %1209 = vmatprep.subr.bf16.mxu0 %v911
      %1210 = vmatpush1.bf16.msra.mxu0 %v910
      %1211 = vmatprep.subr.bf16.mxu0 %v913
      %1212 = vmatpush1.bf16.msra.mxu0 %v912
      %1213 = vmatprep.subr.bf16.mxu0 %v915
      %1214 = vmatpush1.bf16.msra.mxu0 %v914
      %1215 = vmatprep.subr.bf16.mxu0 %v917
      %1216 = vmatpush1.bf16.msra.mxu0 %v916
      %1217 = vmatprep.subr.bf16.mxu0 %v919
      %1218 = vmatpush1.bf16.msra.mxu0 %v918
      %1219 = vmatprep.subr.bf16.mxu0 %v921
      %1220 = vmatpush1.bf16.msra.mxu0 %v920
      %1221 = vmatprep.subr.bf16.mxu0 %v923
      %1222 = vmatpush1.bf16.msra.mxu0 %v922
      %1223 = vmatprep.mubr.bf16.mxu0 %v413
      %1224 = vmatmul.mubr.bf16.gmra.mrb[0].mxu0 %v412
      %v1225 = vpop.f32.mrb[0].mxu0
      %v1226 = vadd.f32 %v1183, %v1225
      %v1227 = vpop.f32.mrb[0].mxu0
      %v1228 = vadd.f32 %v1185, %v1227
      %v1229 = vpop.f32.mrb[0].mxu0
      %v1230 = vadd.f32 %v1187, %v1229
      %v1231 = vpop.f32.mrb[0].mxu0
      %v1232 = vadd.f32 %v1189, %v1231
      %1233 = vdwg.mxu0
      %1234 = vmatprep.subr.bf16.mxu0 %v925
      %1235 = vmatpush1.bf16.msra.mxu0 %v924
      %1236 = vmatprep.subr.bf16.mxu0 %v927
      %1237 = vmatpush1.bf16.msra.mxu0 %v926
      %1238 = vmatprep.subr.bf16.mxu0 %v929
      %1239 = vmatpush1.bf16.msra.mxu0 %v928
      %1240 = vmatprep.subr.bf16.mxu0 %v931
      %1241 = vmatpush1.bf16.msra.mxu0 %v930
      %1242 = vmatprep.subr.bf16.mxu0 %v933
      %1243 = vmatpush1.bf16.msra.mxu0 %v932
      %1244 = vmatprep.subr.bf16.mxu0 %v935
      %1245 = vmatpush1.bf16.msra.mxu0 %v934
      %1246 = vmatprep.subr.bf16.mxu0 %v937
      %1247 = vmatpush1.bf16.msra.mxu0 %v936
      %1248 = vmatprep.subr.bf16.mxu0 %v939
      %1249 = vmatpush1.bf16.msra.mxu0 %v938
      %1250 = vmatprep.subr.bf16.mxu0 %v941
      %1251 = vmatpush1.bf16.msra.mxu0 %v940
      %1252 = vmatprep.subr.bf16.mxu0 %v943
      %1253 = vmatpush1.bf16.msra.mxu0 %v942
      %1254 = vmatprep.subr.bf16.mxu0 %v945
      %1255 = vmatpush1.bf16.msra.mxu0 %v944
      %1256 = vmatprep.subr.bf16.mxu0 %v947
      %1257 = vmatpush1.bf16.msra.mxu0 %v946
      %1258 = vmatprep.subr.bf16.mxu0 %v949
      %1259 = vmatpush1.bf16.msra.mxu0 %v948
      %1260 = vmatprep.subr.bf16.mxu0 %v951
      %1261 = vmatpush1.bf16.msra.mxu0 %v950
      %1262 = vmatprep.subr.bf16.mxu0 %v953
      %1263 = vmatpush1.bf16.msra.mxu0 %v952
      %1264 = vmatprep.subr.bf16.mxu0 %v955
      %1265 = vmatpush1.bf16.msra.mxu0 %v954
      %1266 = vmatprep.mubr.bf16.mxu0 %v415
      %1267 = vmatmul.mubr.bf16.gmra.mrb[0].mxu0 %v414
      %v1268 = vpop.f32.mrb[0].mxu0
      %v1269 = vadd.f32 %v1226, %v1268
      %v1270 = vpop.f32.mrb[0].mxu0
      %v1271 = vadd.f32 %v1228, %v1270
      %v1272 = vpop.f32.mrb[0].mxu0
      %v1273 = vadd.f32 %v1230, %v1272
      %v1274 = vpop.f32.mrb[0].mxu0
      %v1275 = vadd.f32 %v1232, %v1274
      %1276 = vdwg.mxu0
      %1277 = vmatprep.subr.bf16.mxu0 %v957
      %1278 = vmatpush1.bf16.msra.mxu0 %v956
      %1279 = vmatprep.subr.bf16.mxu0 %v959
      %1280 = vmatpush1.bf16.msra.mxu0 %v958
      %1281 = vmatprep.subr.bf16.mxu0 %v961
      %1282 = vmatpush1.bf16.msra.mxu0 %v960
      %1283 = vmatprep.subr.bf16.mxu0 %v963
      %1284 = vmatpush1.bf16.msra.mxu0 %v962
      %1285 = vmatprep.subr.bf16.mxu0 %v965
      %1286 = vmatpush1.bf16.msra.mxu0 %v964
      %1287 = vmatprep.subr.bf16.mxu0 %v967
      %1288 = vmatpush1.bf16.msra.mxu0 %v966
      %1289 = vmatprep.subr.bf16.mxu0 %v969
      %1290 = vmatpush1.bf16.msra.mxu0 %v968
      %1291 = vmatprep.subr.bf16.mxu0 %v971
      %1292 = vmatpush1.bf16.msra.mxu0 %v970
      %1293 = vmatprep.subr.bf16.mxu0 %v973
      %1294 = vmatpush1.bf16.msra.mxu0 %v972
      %1295 = vmatprep.subr.bf16.mxu0 %v975
      %1296 = vmatpush1.bf16.msra.mxu0 %v974
      %1297 = vmatprep.subr.bf16.mxu0 %v977
      %1298 = vmatpush1.bf16.msra.mxu0 %v976
      %1299 = vmatprep.subr.bf16.mxu0 %v979
      %1300 = vmatpush1.bf16.msra.mxu0 %v978
      %1301 = vmatprep.subr.bf16.mxu0 %v981
      %1302 = vmatpush1.bf16.msra.mxu0 %v980
      %1303 = vmatprep.subr.bf16.mxu0 %v983
      %1304 = vmatpush1.bf16.msra.mxu0 %v982
      %1305 = vmatprep.subr.bf16.mxu0 %v985
      %1306 = vmatpush1.bf16.msra.mxu0 %v984
      %1307 = vmatprep.subr.bf16.mxu0 %v987
      %1308 = vmatpush1.bf16.msra.mxu0 %v986
      %1309 = vmatprep.mubr.bf16.mxu0 %v417
      %1310 = vmatmul.mubr.bf16.gmra.mrb[0].mxu0 %v416
      %v1311 = vpop.f32.mrb[0].mxu0
      %v1312 = vadd.f32 %v1269, %v1311
      %v1313 = vpop.f32.mrb[0].mxu0
      %v1314 = vadd.f32 %v1271, %v1313
      %v1315 = vpop.f32.mrb[0].mxu0
      %v1316 = vadd.f32 %v1273, %v1315
      %v1317 = vpop.f32.mrb[0].mxu0
      %v1318 = vadd.f32 %v1275, %v1317
      %1319 = vdwg.mxu0
      %1320 = vmatprep.subr.bf16.mxu0 %v989
      %1321 = vmatpush1.bf16.msra.mxu0 %v988
      %1322 = vmatprep.subr.bf16.mxu0 %v991
      %1323 = vmatpush1.bf16.msra.mxu0 %v990
      %1324 = vmatprep.subr.bf16.mxu0 %v993
      %1325 = vmatpush1.bf16.msra.mxu0 %v992
      %1326 = vmatprep.subr.bf16.mxu0 %v995
      %1327 = vmatpush1.bf16.msra.mxu0 %v994
      %1328 = vmatprep.subr.bf16.mxu0 %v997
      %1329 = vmatpush1.bf16.msra.mxu0 %v996
      %1330 = vmatprep.subr.bf16.mxu0 %v999
      %1331 = vmatpush1.bf16.msra.mxu0 %v998
      %1332 = vmatprep.subr.bf16.mxu0 %v1001
      %1333 = vmatpush1.bf16.msra.mxu0 %v1000
      %1334 = vmatprep.subr.bf16.mxu0 %v1003
      %1335 = vmatpush1.bf16.msra.mxu0 %v1002
      %1336 = vmatprep.subr.bf16.mxu0 0
      %1337 = vmatpush1.bf16.msra.mxu0 0
      %1338 = vmatprep.subr.bf16.mxu0 0
      %1339 = vmatpush1.bf16.msra.mxu0 0
      %1340 = vmatprep.subr.bf16.mxu0 0
      %1341 = vmatpush1.bf16.msra.mxu0 0
      %1342 = vmatprep.subr.bf16.mxu0 0
      %1343 = vmatpush1.bf16.msra.mxu0 0
      %1344 = vmatprep.subr.bf16.mxu0 0
      %1345 = vmatpush1.bf16.msra.mxu0 0
      %1346 = vmatprep.subr.bf16.mxu0 0
      %1347 = vmatpush1.bf16.msra.mxu0 0
      %1348 = vmatprep.subr.bf16.mxu0 0
      %1349 = vmatpush1.bf16.msra.mxu0 0
      %1350 = vmatprep.subr.bf16.mxu0 0
      %1351 = vmatpush1.bf16.msra.mxu0 0
      %1352 = vmatprep.mubr.bf16.mxu0 0
      %1353 = vmatmul.mubr.bf16.gmra.mrb[0].mxu0 %v418
      %v1354 = vpop.f32.mrb[0].mxu0
      %v1355 = vadd.f32 %v1312, %v1354
      %v1356 = vpop.f32.mrb[0].mxu0
      %v1357 = vadd.f32 %v1314, %v1356
      %v1358 = vpop.f32.mrb[0].mxu0
      %v1359 = vadd.f32 %v1316, %v1358
      %v1360 = vpop.f32.mrb[0].mxu0
      %v1361 = vadd.f32 %v1318, %v1360
      %1362 = vdwg.mxu0
      %v1363 = vmax.f32 %v1355, 0.0
      %v1364 = vmax.f32 %v1357, 0.0
      %v1365 = vmax.f32 %v1359, 0.0
      %v1366 = vmax.f32 %v1361, 0.0
      %v1367 = vpack.c.bf16 %v1365, %v1363
      %v1368 = vpack.c.bf16 %v1366, %v1364
      %v1371 = vunpack.c.l.b16 %v1367
      %v1372 = vunpack.c.l.b16 %v1368
      %v1373 = vunpack.c.h.b16 %v1367
      %v1374 = vunpack.c.h.b16 %v1368
      %v1375 = vpack.c.b16 %v1372, %v1371
      %v1376 = vpack.c.b16 %v1374, %v1373
      %1379 = vst [vmem:[%s213] sm:$0xff] %v1375
      %1380 = vst [vmem:[%s213 + $0x8] sm:$0xff] %v1376
      %s1381 = smul.u32 2, %s19
      %p1382 = scmp.lt.s32.totalorder %s18, 3
      %s1383 = scalar_select %p1382, %s18, 3
      %p1384 = scmp.lt.s32.totalorder %s1381, 1
      %s1385 = scalar_select %p1384, %s1381, 1
      %s1386 = smul.addr %s1385, 2
      %s1387 = smul.addr %s1383, 4
      %s1388 = sadd.s32 %s1386, %s1387
      %s1389 = smul.addr %s1388, 4
      %s1390 = scalar_lea.vmem %s3, %s1389
      // Predicated region
      $region33: #{perceptual_loss.16} parent=31 // pred_check
        %p1391 = pneg %p116
      $region34: #{perceptual_loss.16} parent=31 // pred_check_branch
        %1393 = sbr.rel (%p1391) target = $region36
      $region35: #{perceptual_loss.16} parent=31 // pred_region
        %s1394 = smul.u32 2, %s19
      $region36: #{perceptual_loss.16} parent=31 // pred_fallthru
        _
    $region32: #{perceptual_loss.16} parent=5 // pred_fallthru
      _
    %p1395 = scmp.le.s32.totalorder 2, %s9
    // Predicated region
    $region37: #{perceptual_loss.16} parent=5 // pred_check
      %p1396 = pneg %p1395
    $region38: #{perceptual_loss.16} parent=5 // pred_check_branch
      %1398 = sbr.rel (%p1396) target = $region40
    $region39: #{perceptual_loss.16} parent=5 // pred_region
      %s1399 = ssub.s32 %s9, 2
      // Predicated region
      $region41: #{perceptual_loss.16} parent=39 // pred_check
        %p1400 = pneg %p122
      $region42: #{perceptual_loss.16} parent=39 // pred_check_branch
        %1402 = sbr.rel (%p1400) target = $region44
      $region43: #{perceptual_loss.16} parent=39 // pred_region
        %s1403 = smul.u32 2, %s21
        %p1404 = scmp.lt.s32.totalorder %s20, 3
        %s1405 = scalar_select %p1404, %s20, 3
        %p1406 = scmp.lt.s32.totalorder %s1403, 1
        %s1407 = scalar_select %p1406, %s1403, 1
        %s1408 = smul.addr %s1407, 2
        %s1409 = smul.addr %s1405, 4
        %s1410 = sadd.s32 %s1408, %s1409
        %s1411 = smul.addr %s1410, 4
        %s1412 = scalar_lea.vmem %s3, %s1411
      $region44: #{perceptual_loss.16} parent=39 // pred_fallthru
        _
    $region40: #{perceptual_loss.16} parent=5 // pred_fallthru
      _
  $region6: #{perceptual_loss.16} parent=0 // loop_footer
    %s13 = sadd.s32 1, %s9
  $region7: #{perceptual_loss.16} parent=0 // loop_footer_branch
    %8 = sbr.rel target = $region3
  $region8: #{perceptual_loss.16} parent=0 // loop_exit
    _

// kernel: perceptual_loss.19
$region0: #{perceptual_loss.19}
  #allocation0 [shape = 'u32[]', space=smem, size = 0x4, offset = 0x4, fixed_abs, tag = 'smem constant byte address 0x4 - core index']
  #allocation1 [shape = 'u32[144,128]{1,0:T(1,128)}', space=vmem, size = 0x12000, scoped, tag = 'internal scratch']
  #allocation2 [shape = 'f32[1,256]{1,0:T(1,128)}', space=vmem, size = 0x400, scoped, tag = 'scratch operand']
  %s0 = inlined_call_operand.vmem [shape: bf16[2,16,256], index: 0, kind: input, shape index: {}]
  %s1 = inlined_call_operand.vmem [shape: bf16[2,16,256], index: 1, kind: input, shape index: {}]
  %s2 = inlined_call_operand.hbm [shape: f32[1,1], index: 2, kind: output, shape index: {}]
  %s3 = sld [smem:[#allocation0]]
  $region49: #{perceptual_loss.19} parent=0
    _
  %s5 = ssub.s32 1, %s3
  %s6 = scalar_select 0, %s5, %s3
  $region1: #{perceptual_loss.19} parent=0
    #allocation3 [shape = 'u8[512]{0}', space=vmem, size = 0x400, scoped, tag = 'output window, operand 0, single buffered']
    #allocation4 [shape = 's32[2]{0}', space=sflag, size = 0x8, scoped, tag = 'scoped memory for perceptual_loss.19']
    %7 = vsyncpa [#allocation4], 0
    loop: start=0, step=1, limit=4
    $region2: #{perceptual_loss.19} parent=1 // loop_pre_header
      _
    $region3: #{perceptual_loss.19} parent=1 // loop_header
      %s9 = sphi 0, %s13
      %p10 = scmp.ge.s32.totalorder %s9, 4
      %s19 = sphi 0, %s21
      %s22 = sphi 0, %s19
      %s23 = sphi 0, %s22
      %s39 = sphi 0, %s23
      %s45 = sphi 0, %s47
      %s48 = sphi 0, %s45
      %s49 = sphi 0, %s48
      %s65 = sphi 0, %s49
      %s69 = sphi 0, %s69
      %s71 = sphi 0, %s69
      %s72 = sphi 0, %s71
      %s86 = sphi 0, %s72
    $region4: #{perceptual_loss.19} parent=1 // loop_header_branch
      %12 = sbr.rel (%p10) target = $region8
    $region5: #{perceptual_loss.19} parent=1 // loop_body
      %s14 = ssub.s32 %s9, 1
      %s15 = ssub.s32 %s9, 2
      %s16 = sadd.s32 %s9, 1
      %s17 = ssub.s32 %s9, %s16
      %p18 = scmp.eq.s32.totalorder %s17, 0
      %s20 = sadd.s32 %s19, 1
      %s21 = scalar_select %p18, %s19, %s20
      %p24 = pneg %p18
      %p25 = scmp.eq.s32.totalorder %s9, 1
      %p26 = por %p24, %p25
      %p27 = scmp.ne.s32.totalorder %s19, %s22
      %p28 = scmp.eq.s32.totalorder %s9, 0
      %p29 = por %p27, %p28
      %p30 = scmp.ne.s32.totalorder %s19, %s22
      %p31 = scmp.eq.s32.totalorder %s14, 1
      %p32 = por %p30, %p31
      %p33 = scmp.ne.s32.totalorder %s22, %s23
      %p34 = scmp.eq.s32.totalorder %s14, 0
      %p35 = por %p33, %p34
      %p36 = scmp.ne.s32.totalorder %s22, %s23
      %p37 = scmp.eq.s32.totalorder %s15, 1
      %p38 = por %p36, %p37
      %p40 = scmp.ne.s32.totalorder %s23, %s39
      %p41 = scmp.eq.s32.totalorder %s15, 0
      %p42 = por %p40, %p41
      %s43 = ssub.s32 %s9, %s16
      %p44 = scmp.eq.s32.totalorder %s43, 0
      %s46 = sadd.s32 %s45, 1
      %s47 = scalar_select %p44, %s45, %s46
      %p50 = pneg %p44
      %p51 = scmp.eq.s32.totalorder %s9, 1
      %p52 = por %p50, %p51
      %p53 = scmp.ne.s32.totalorder %s45, %s48
      %p54 = scmp.eq.s32.totalorder %s9, 0
      %p55 = por %p53, %p54
      %p56 = scmp.ne.s32.totalorder %s45, %s48
      %p57 = scmp.eq.s32.totalorder %s14, 1
      %p58 = por %p56, %p57
      %p59 = scmp.ne.s32.totalorder %s48, %s49
      %p60 = scmp.eq.s32.totalorder %s14, 0
      %p61 = por %p59, %p60
      %p62 = scmp.ne.s32.totalorder %s48, %s49
      %p63 = scmp.eq.s32.totalorder %s15, 1
      %p64 = por %p62, %p63
      %p66 = scmp.ne.s32.totalorder %s49, %s65
      %p67 = scmp.eq.s32.totalorder %s15, 0
      %p68 = por %p66, %p67
      %s70 = sadd.s32 %s69, 1
      %p73 = scmp.eq.s32.totalorder %s9, 1
      %p74 = scmp.ne.s32.totalorder %s69, %s71
      %p75 = scmp.eq.s32.totalorder %s9, 0
      %p76 = por %p74, %p75
      %p77 = scmp.ne.s32.totalorder %s69, %s71
      %p78 = scmp.eq.s32.totalorder %s14, 1
      %p79 = por %p77, %p78
      %p80 = scmp.ne.s32.totalorder %s71, %s72
      %p81 = scmp.eq.s32.totalorder %s14, 0
      %p82 = por %p80, %p81
      %p83 = scmp.ne.s32.totalorder %s71, %s72
      %p84 = scmp.eq.s32.totalorder %s15, 1
      %p85 = por %p83, %p84
      %p87 = scmp.ne.s32.totalorder %s72, %s86
      %p88 = scmp.eq.s32.totalorder %s15, 0
      %p89 = por %p87, %p88
      %p90 = scmp.le.s32.totalorder 1, %s9
      %p91 = scmp.lt.s32.totalorder %s9, 3
      %p92 = pnand %p90, %p91
      %p93 = pneg %p92
      // Predicated region
      $region9: #{perceptual_loss.19} parent=5 // pred_check
        _
      $region10: #{perceptual_loss.19} parent=5 // pred_check_branch
        %95 = sbr.rel (%p92) target = $region12
      $region11: #{perceptual_loss.19} parent=5 // pred_region
        %s96 = ssub.s32 %s9, 1
      $region12: #{perceptual_loss.19} parent=5 // pred_fallthru
        _
      %p97 = scmp.lt.s32.totalorder %s9, 2
      // Predicated region
      $region13: #{perceptual_loss.19} parent=5 // pred_check
        %p98 = pneg %p97
      $region14: #{perceptual_loss.19} parent=5 // pred_check_branch
        %100 = sbr.rel (%p98) target = $region16
      $region15: #{perceptual_loss.19} parent=5 // pred_region
        // Predicated region
        $region17: #{perceptual_loss.19} parent=15 // pred_check
          %p101 = pneg %p29
        $region18: #{perceptual_loss.19} parent=15 // pred_check_branch
          %103 = sbr.rel (%p101) target = $region20
        $region19: #{perceptual_loss.19} parent=15 // pred_region
          %p104 = scmp.lt.s32.totalorder %s9, 1
          %s105 = scalar_select %p104, %s9, 1
          %s106 = smul.addr %s105, 4
          %s107 = smul.addr %s106, 4
          %s108 = scalar_lea.vmem %s0, %s107
        $region20: #{perceptual_loss.19} parent=15 // pred_fallthru
          _
        // Predicated region
        $region21: #{perceptual_loss.19} parent=15 // pred_check
          %p109 = pneg %p55
        $region22: #{perceptual_loss.19} parent=15 // pred_check_branch
          %111 = sbr.rel (%p109) target = $region24
        $region23: #{perceptual_loss.19} parent=15 // pred_region
          %p112 = scmp.lt.s32.totalorder %s9, 1
          %s113 = scalar_select %p112, %s9, 1
          %s114 = smul.addr %s113, 4
          %s115 = smul.addr %s114, 4
          %s116 = scalar_lea.vmem %s1, %s115
        $region24: #{perceptual_loss.19} parent=15 // pred_fallthru
          _
      $region16: #{perceptual_loss.19} parent=5 // pred_fallthru
        _
      %p117 = scmp.le.s32.totalorder 1, %s9
      %p118 = scmp.lt.s32.totalorder %s9, 3
      %p119 = pnand %p117, %p118
      %p120 = pneg %p119
      // Predicated region
      $region25: #{perceptual_loss.19} parent=5 // pred_check
        _
      $region26: #{perceptual_loss.19} parent=5 // pred_check_branch
        %122 = sbr.rel (%p119) target = $region28
      $region27: #{perceptual_loss.19} parent=5 // pred_region
        %s123 = ssub.s32 %s9, 1
        %p124 = scmp.lt.s32.totalorder %s14, 1
        %s125 = scalar_select %p124, %s14, 1
        %s126 = smul.addr %s125, 4
        %s127 = smul.addr %s126, 4
        %s128 = scalar_lea.vmem %s0, %s127
        %p129 = pneg %p35
        %p130 = pneg %p32
        %p131 = scmp.lt.s32.totalorder %s14, 1
        %s132 = scalar_select %p131, %s14, 1
        %s133 = smul.addr %s132, 4
        %s134 = smul.addr %s133, 4
        %s135 = scalar_lea.vmem %s1, %s134
        %p136 = pneg %p61
        %p137 = pneg %p58
        %p138 = pneg %p82
        %p139 = pneg %p79
        %p140 = scmp.lt.s32.totalorder %s14, 1
        %s141 = scalar_select %p140, %s14, 1
        %s142 = smul.addr %s141, 4
        %s143 = smul.addr %s142, 4
        %s144 = scalar_lea.vmem %s0, %s143
        %p145 = scmp.lt.s32.totalorder %s14, 1
        %s146 = scalar_select %p145, %s14, 1
        %s147 = smul.addr %s146, 4
        %s148 = smul.addr %s147, 4
        %s149 = scalar_lea.vmem %s1, %s148
        %p150 = scmp.eq.s32.totalorder %s14, 0
        // Predicated region
        $region29: #{perceptual_loss.19} parent=27 // pred_check
          %p151 = pneg %p150
        $region30: #{perceptual_loss.19} parent=27 // pred_check_branch
          %153 = sbr.rel (%p151) target = $region32
        $region31: #{perceptual_loss.19} parent=27 // pred_region
          %v154 = vlaneseq
          %vm155 = vcmp.ge.s32.totalorder %v154, 0
          %vm156 = vcmp.lt.s32.totalorder %v154, 256
          %vm157 = vmand %vm155, %vm156
          %158 = vst.msk [vmem:[#allocation2] sm:$0x3] %vm157, 0.0
        $region32: #{perceptual_loss.19} parent=27 // pred_fallthru
          _
        %v159 = vld [vmem:[%s144] sm:$0xff]
        %v160 = vld [vmem:[%s144 + $0x8] sm:$0xff]
        %v161 = vunpack.c.l.bf16 %v159
        %v162 = vunpack.c.h.bf16 %v159
        %v163 = vunpack.c.l.bf16 %v160
        %v164 = vunpack.c.h.bf16 %v160
        %v165 = vld [vmem:[%s149] sm:$0xff]
        %v166 = vld [vmem:[%s149 + $0x8] sm:$0xff]
        %v167 = vunpack.c.l.bf16 %v165
        %v168 = vunpack.c.h.bf16 %v165
        %v169 = vunpack.c.l.bf16 %v166
        %v170 = vunpack.c.h.bf16 %v166
        %v171 = vsub.f32 %v161, %v167
        %v172 = vsub.f32 %v162, %v168
        %v173 = vsub.f32 %v163, %v169
        %v174 = vsub.f32 %v164, %v170
        %v175 = vld [vmem:[#allocation2] sm:$0x3]
        %v176 = vmul.f32 %v171, %v171
        %v177 = vmul.f32 %v172, %v172
        %v178 = vmul.f32 %v173, %v173
        %v179 = vmul.f32 %v174, %v174
        %v180 = vadd.f32 %v176, %v178
        %v181 = vrot.slane %v180, 4
        %v182 = vadd.f32 %v180, %v181
        %v183 = vrot.slane %v182, 2
        %v184 = vadd.f32 %v182, %v183
        %v185 = vrot.slane %v184, 1
        %v186 = vadd.f32 %v184, %v185
        %v187 = vadd.f32 %v177, %v179
        %v188 = vrot.slane %v187, 4
        %v189 = vadd.f32 %v187, %v188
        %v190 = vrot.slane %v189, 2
        %v191 = vadd.f32 %v189, %v190
        %v192 = vrot.slane %v191, 1
        %v193 = vadd.f32 %v191, %v192
        %v196 = vcombine.low %v186, %v193
        %v198 = vunpack.c.l.s4 1966171168
        %v199 = vunpack.c.0.s8 %v198
        %v200 = vlaneseq
        %v201 = vshrl.u32 %v200, 7
        %v202 = vsub.s32 %v199, %v201
        %v203 = vrot.slane %v196, %v202
        %v205 = vunpack.c.l.s4 1966171168
        %v206 = vunpack.c.0.s8 %v205
        %v207 = vlaneseq
        %v208 = vshrl.u32 %v207, 7
        %v209 = vsub.s32 %v206, %v208
        %v210 = vrot.slane %v203, %v209
        %v212 = vadd.f32 %v175, %v210
        %v213 = vlaneseq
        %vm214 = vcmp.ge.s32.totalorder %v213, 0
        %vm215 = vcmp.lt.s32.totalorder %v213, 256
        %vm216 = vmand %vm214, %vm215
        %217 = vst.msk [vmem:[#allocation2] sm:$0x3] %vm216, %v212
        %p218 = scmp.eq.s32.totalorder %s14, 1
        // Predicated region
        $region33: #{perceptual_loss.19} parent=27 // pred_check
          %p219 = pneg %p218
        $region34: #{perceptual_loss.19} parent=27 // pred_check_branch
          %221 = sbr.rel (%p219) target = $region36
        $region35: #{perceptual_loss.19} parent=27 // pred_region
          %v222 = vld [vmem:[#allocation2] sm:$0x3]
          %v224 = vlaneseq
          %v225 = vshrl.u32 %v224, 7
          %v226 = vsub.s32 0, %v225
          %v227 = vrot.slane %v222, %v226
          %v228 = vlaneseq
          %v229 = vshrl.u32 %v228, 7
          %v230 = vsub.s32 1, %v229
          %v231 = vrot.slane %v222, %v230
          %vm234 = vcmask 1040384
          %v235 = vsel %vm234, %v227, 0.0
          %v236 = vsel %vm234, %v231, 0.0
          %v237 = vadd.f32 %v235, %v236
          %238 = vadd.xlane.f32.xlu0 %v237
          %v239 = vpop.xlane.xlu0 %238
          %v240 = vmul.f32 %v239, 0.00012207031
          %vm241 = vcmask 0
          %242 = vst.msk [vmem:[#allocation3] sm:$0x1] %vm241, %v240
        $region36: #{perceptual_loss.19} parent=27 // pred_fallthru
          _
        // Predicated region
        $region37: #{perceptual_loss.19} parent=27 // pred_check
          %p243 = pneg %p79
        $region38: #{perceptual_loss.19} parent=27 // pred_check_branch
          %245 = sbr.rel (%p243) target = $region40
        $region39: #{perceptual_loss.19} parent=27 // pred_region
          %s247 = ssub.s32 16, 16
          %248 = vsyncadd [#allocation4], %s247
          %s250 = sshll.u32 [#allocation3], 4
          %s251 = int_to_ptr.vmem [resolvable:$true] %s250
          %253 = dma.vmem_to_hbm [thread:$0]  %s251, 16, %s2, [#allocation4]
        $region40: #{perceptual_loss.19} parent=27 // pred_fallthru
          _
        // Predicated region
        $region41: #{perceptual_loss.19} parent=27 // pred_check
          %p254 = pneg %p79
        $region42: #{perceptual_loss.19} parent=27 // pred_check_branch
          %256 = sbr.rel (%p254) target = $region44
        $region43: #{perceptual_loss.19} parent=27 // pred_region
          %257 = dma.done [#allocation4], 16
        $region44: #{perceptual_loss.19} parent=27 // pred_fallthru
          _
      $region28: #{perceptual_loss.19} parent=5 // pred_fallthru
        _
      %p258 = scmp.le.s32.totalorder 2, %s9
      // Predicated region
      $region45: #{perceptual_loss.19} parent=5 // pred_check
        %p259 = pneg %p258
      $region46: #{perceptual_loss.19} parent=5 // pred_check_branch
        %261 = sbr.rel (%p259) target = $region48
      $region47: #{perceptual_loss.19} parent=5 // pred_region
        %s262 = ssub.s32 %s9, 2
      $region48: #{perceptual_loss.19} parent=5 // pred_fallthru
        _
    $region6: #{perceptual_loss.19} parent=1 // loop_footer
      %s13 = sadd.s32 1, %s9
    $region7: #{perceptual_loss.19} parent=1 // loop_footer_branch
      %8 = sbr.rel target = $region3
    $region8: #{perceptual_loss.19} parent=1 // loop_exit
      _
    %263 = vsyncpa [#allocation4], 1
    %s264 = scalar_lea.sflag [#allocation4], 1
    %265 = vsyncpa %s264, 1

// kernel: perceptual_loss.17
$region0: #{perceptual_loss.17}
  #allocation0 [shape = 'u32[]', space=smem, size = 0x4, offset = 0x4, fixed_abs, tag = 'smem constant byte address 0x4 - core index']
  #allocation1 [shape = 'u32[144,128]{1,0:T(1,128)}', space=vmem, size = 0x12000, scoped, tag = 'internal scratch']
  %s0 = inlined_call_operand.vmem [shape: bf16[4,16,2304], index: 0, kind: input, shape index: {}]
  %s1 = inlined_call_operand.vmem [shape: bf16[2304,256], index: 1, kind: input, shape index: {}]
  %s2 = inlined_call_operand.vmem [shape: f32[1,256], index: 2, kind: input, shape index: {}]
  %s3 = inlined_call_operand.vmem [shape: bf16[4,16,256], index: 3, kind: output, shape index: {}]
  %s4 = sld [smem:[#allocation0]]
  $region45: #{perceptual_loss.17} parent=0
    _
  %s6 = ssub.s32 1, %s4
  %s7 = scalar_select 0, %s6, %s4
  loop: start=0, step=1, limit=6
  $region2: #{perceptual_loss.17} parent=0 // loop_pre_header
    _
  $region3: #{perceptual_loss.17} parent=0 // loop_header
    %s9 = sphi 0, %s13
    %p10 = scmp.ge.s32.totalorder %s9, 6
    %s16 = sphi 0, %s28
    %s17 = sphi 0, %s24
    %s18 = sphi 0, %s16
    %s19 = sphi 0, %s17
    %s20 = sphi 0, %s18
    %s21 = sphi 0, %s19
    %s33 = sphi 0, %s35
    %s36 = sphi 0, %s33
    %s37 = sphi 0, %s36
    %s53 = sphi 0, %s37
    %s57 = sphi 0, %s57
    %s59 = sphi 0, %s57
    %s60 = sphi 0, %s59
    %s74 = sphi 0, %s60
    %s78 = sphi 0, %s78
    %s80 = sphi 0, %s78
    %s81 = sphi 0, %s80
    %s95 = sphi 0, %s81
    %s103 = sphi 0, %s105
    %s106 = sphi 0, %s103
    %s107 = sphi 0, %s106
    %s123 = sphi 0, %s107
  $region4: #{perceptual_loss.17} parent=0 // loop_header_branch
    %12 = sbr.rel (%p10) target = $region8
  $region5: #{perceptual_loss.17} parent=0 // loop_body
    %s14 = ssub.s32 %s9, 1
    %s15 = ssub.s32 %s9, 2
    %s22 = sadd.s32 1, %s17
    %p23 = scmp.ge.s32.totalorder %s22, 1
    %s24 = scalar_select %p23, 0, %s22
    %s25 = sadd.s32 1, %s16
    %s26 = scalar_select %p23, %s25, %s16
    %p27 = scmp.ge.s32.totalorder %s26, 4
    %s28 = scalar_select %p27, 0, %s26
    %s29 = ssub.s32 %s16, %s28
    %s30 = ssub.s32 %s17, %s24
    %s31 = sor.u32 %s29, %s30
    %p32 = scmp.eq.s32.totalorder %s31, 0
    %s34 = sadd.s32 %s33, 1
    %s35 = scalar_select %p32, %s33, %s34
    %p38 = pneg %p32
    %p39 = scmp.eq.s32.totalorder %s9, 3
    %p40 = por %p38, %p39
    %p41 = scmp.ne.s32.totalorder %s33, %s36
    %p42 = scmp.eq.s32.totalorder %s9, 0
    %p43 = por %p41, %p42
    %p44 = scmp.ne.s32.totalorder %s33, %s36
    %p45 = scmp.eq.s32.totalorder %s14, 3
    %p46 = por %p44, %p45
    %p47 = scmp.ne.s32.totalorder %s36, %s37
    %p48 = scmp.eq.s32.totalorder %s14, 0
    %p49 = por %p47, %p48
    %p50 = scmp.ne.s32.totalorder %s36, %s37
    %p51 = scmp.eq.s32.totalorder %s15, 3
    %p52 = por %p50, %p51
    %p54 = scmp.ne.s32.totalorder %s37, %s53
    %p55 = scmp.eq.s32.totalorder %s15, 0
    %p56 = por %p54, %p55
    %s58 = sadd.s32 %s57, 1
    %p61 = scmp.eq.s32.totalorder %s9, 3
    %p62 = scmp.ne.s32.totalorder %s57, %s59
    %p63 = scmp.eq.s32.totalorder %s9, 0
    %p64 = por %p62, %p63
    %p65 = scmp.ne.s32.totalorder %s57, %s59
    %p66 = scmp.eq.s32.totalorder %s14, 3
    %p67 = por %p65, %p66
    %p68 = scmp.ne.s32.totalorder %s59, %s60
    %p69 = scmp.eq.s32.totalorder %s14, 0
    %p70 = por %p68, %p69
    %p71 = scmp.ne.s32.totalorder %s59, %s60
    %p72 = scmp.eq.s32.totalorder %s15, 3
    %p73 = por %p71, %p72
    %p75 = scmp.ne.s32.totalorder %s60, %s74
    %p76 = scmp.eq.s32.totalorder %s15, 0
    %p77 = por %p75, %p76
    %s79 = sadd.s32 %s78, 1
    %p82 = scmp.eq.s32.totalorder %s9, 3
    %p83 = scmp.ne.s32.totalorder %s78, %s80
    %p84 = scmp.eq.s32.totalorder %s9, 0
    %p85 = por %p83, %p84
    %p86 = scmp.ne.s32.totalorder %s78, %s80
    %p87 = scmp.eq.s32.totalorder %s14, 3
    %p88 = por %p86, %p87
    %p89 = scmp.ne.s32.totalorder %s80, %s81
    %p90 = scmp.eq.s32.totalorder %s14, 0
    %p91 = por %p89, %p90
    %p92 = scmp.ne.s32.totalorder %s80, %s81
    %p93 = scmp.eq.s32.totalorder %s15, 3
    %p94 = por %p92, %p93
    %p96 = scmp.ne.s32.totalorder %s81, %s95
    %p97 = scmp.eq.s32.totalorder %s15, 0
    %p98 = por %p96, %p97
    %s99 = ssub.s32 %s16, %s28
    %s100 = ssub.s32 %s17, %s24
    %s101 = sor.u32 %s99, %s100
    %p102 = scmp.eq.s32.totalorder %s101, 0
    %s104 = sadd.s32 %s103, 1
    %s105 = scalar_select %p102, %s103, %s104
    %p108 = pneg %p102
    %p109 = scmp.eq.s32.totalorder %s9, 3
    %p110 = por %p108, %p109
    %p111 = scmp.ne.s32.totalorder %s103, %s106
    %p112 = scmp.eq.s32.totalorder %s9, 0
    %p113 = por %p111, %p112
    %p114 = scmp.ne.s32.totalorder %s103, %s106
    %p115 = scmp.eq.s32.totalorder %s14, 3
    %p116 = por %p114, %p115
    %p117 = scmp.ne.s32.totalorder %s106, %s107
    %p118 = scmp.eq.s32.totalorder %s14, 0
    %p119 = por %p117, %p118
    %p120 = scmp.ne.s32.totalorder %s106, %s107
    %p121 = scmp.eq.s32.totalorder %s15, 3
    %p122 = por %p120, %p121
    %p124 = scmp.ne.s32.totalorder %s107, %s123
    %p125 = scmp.eq.s32.totalorder %s15, 0
    %p126 = por %p124, %p125
    %p127 = scmp.le.s32.totalorder 1, %s9
    %p128 = scmp.lt.s32.totalorder %s9, 5
    %p129 = pnand %p127, %p128
    %p130 = pneg %p129
    // Predicated region
    $region9: #{perceptual_loss.17} parent=5 // pred_check
      _
    $region10: #{perceptual_loss.17} parent=5 // pred_check_branch
      %132 = sbr.rel (%p129) target = $region12
    $region11: #{perceptual_loss.17} parent=5 // pred_region
      %s133 = ssub.s32 %s9, 1
      // Predicated region
      $region13: #{perceptual_loss.17} parent=11 // pred_check
        %p134 = pneg %p70
      $region14: #{perceptual_loss.17} parent=11 // pred_check_branch
        %136 = sbr.rel (%p134) target = $region16
      $region15: #{perceptual_loss.17} parent=11 // pred_region
        _
      $region16: #{perceptual_loss.17} parent=11 // pred_fallthru
        _
      // Predicated region
      $region17: #{perceptual_loss.17} parent=11 // pred_check
        %p137 = pneg %p91
      $region18: #{perceptual_loss.17} parent=11 // pred_check_branch
        %139 = sbr.rel (%p137) target = $region20
      $region19: #{perceptual_loss.17} parent=11 // pred_region
        _
      $region20: #{perceptual_loss.17} parent=11 // pred_fallthru
        _
    $region12: #{perceptual_loss.17} parent=5 // pred_fallthru
      _
    %p140 = scmp.lt.s32.totalorder %s9, 4
    // Predicated region
    $region21: #{perceptual_loss.17} parent=5 // pred_check
      %p141 = pneg %p140
    $region22: #{perceptual_loss.17} parent=5 // pred_check_branch
      %143 = sbr.rel (%p141) target = $region24
    $region23: #{perceptual_loss.17} parent=5 // pred_region
      // Predicated region
      $region25: #{perceptual_loss.17} parent=23 // pred_check
        %p144 = pneg %p43
      $region26: #{perceptual_loss.17} parent=23 // pred_check_branch
        %146 = sbr.rel (%p144) target = $region28
      $region27: #{perceptual_loss.17} parent=23 // pred_region
        %s147 = smul.u32 2, %s17
        %p148 = scmp.lt.s32.totalorder %s16, 3
        %s149 = scalar_select %p148, %s16, 3
        %p150 = scmp.lt.s32.totalorder %s147, 1
        %s151 = scalar_select %p150, %s147, 1
        %s152 = smul.addr %s151, 18
        %s153 = smul.addr %s149, 36
        %s154 = sadd.s32 %s152, %s153
        %s155 = smul.addr %s154, 4
        %s156 = scalar_lea.vmem %s0, %s155
        %s157 = smul.u32 2, %s17
      $region28: #{perceptual_loss.17} parent=23 // pred_fallthru
        _
    $region24: #{perceptual_loss.17} parent=5 // pred_fallthru
      _
    %p158 = scmp.le.s32.totalorder 1, %s9
    %p159 = scmp.lt.s32.totalorder %s9, 5
    %p160 = pnand %p158, %p159
    %p161 = pneg %p160
    // Predicated region
    $region29: #{perceptual_loss.17} parent=5 // pred_check
      _
    $region30: #{perceptual_loss.17} parent=5 // pred_check_branch
      %163 = sbr.rel (%p160) target = $region32
    $region31: #{perceptual_loss.17} parent=5 // pred_region
      %s164 = ssub.s32 %s9, 1
      %s165 = smul.u32 2, %s19
      %p166 = scmp.lt.s32.totalorder %s18, 3
      %s167 = scalar_select %p166, %s18, 3
      %p168 = scmp.lt.s32.totalorder %s165, 1
      %s169 = scalar_select %p168, %s165, 1
      %s170 = smul.addr %s169, 18
      %s171 = smul.addr %s167, 36
      %s172 = sadd.s32 %s170, %s171
      %s173 = smul.addr %s172, 4
      %s174 = scalar_lea.vmem %s0, %s173
      %p175 = pneg %p49
      %p176 = pneg %p46
      %p177 = pneg %p70
      %p178 = pneg %p67
      %p179 = pneg %p91
      %p180 = pneg %p88
      %p181 = pneg %p119
      %p182 = pneg %p116
      %s183 = smul.u32 2, %s19
      %p184 = scmp.lt.s32.totalorder %s18, 3
      %s185 = scalar_select %p184, %s18, 3
      %p186 = scmp.lt.s32.totalorder %s183, 1
      %s187 = scalar_select %p186, %s183, 1
      %s188 = smul.addr %s187, 2
      %s189 = smul.addr %s185, 4
      %s190 = sadd.s32 %s188, %s189
      %s191 = smul.addr %s190, 4
      %s192 = scalar_lea.vmem %s3, %s191
      %s193 = smul.u32 2, %s19
      %p194 = scmp.lt.s32.totalorder %s18, 3
      %s195 = scalar_select %p194, %s18, 3
      %p196 = scmp.lt.s32.totalorder %s193, 1
      %s197 = scalar_select %p196, %s193, 1
      %s198 = smul.addr %s197, 18
      %s199 = smul.addr %s195, 36
      %s200 = sadd.s32 %s198, %s199
      %s201 = smul.addr %s200, 4
      %s202 = scalar_lea.vmem %s0, %s201
      %s203 = smul.u32 2, %s19
      %s204 = smul.u32 2, %s19
      %p205 = scmp.lt.s32.totalorder %s18, 3
      %s206 = scalar_select %p205, %s18, 3
      %p207 = scmp.lt.s32.totalorder %s204, 1
      %s208 = scalar_select %p207, %s204, 1
      %s209 = smul.addr %s208, 2
      %s210 = smul.addr %s206, 4
      %s211 = sadd.s32 %s209, %s210
      %s212 = smul.addr %s211, 4
      %s213 = scalar_lea.vmem %s3, %s212
      %s214 = smul.u32 2, %s19
      %v215 = vld [vmem:[%s202] sm:$0xff]
      %v216 = vld [vmem:[%s202 + $0x8] sm:$0xff]
      %v217 = vld [vmem:[%s202 + $0x10] sm:$0xff]
      %v218 = vld [vmem:[%s202 + $0x18] sm:$0xff]
      %v219 = vld [vmem:[%s202 + $0x20] sm:$0xff]
      %v220 = vld [vmem:[%s202 + $0x28] sm:$0xff]
      %v221 = vld [vmem:[%s202 + $0x30] sm:$0xff]
      %v222 = vld [vmem:[%s202 + $0x38] sm:$0xff]
      %v223 = vld [vmem:[%s202 + $0x40] sm:$0xff]
      %v224 = vld [vmem:[%s202 + $0x48] sm:$0xff]
      %v225 = vld [vmem:[%s202 + $0x50] sm:$0xff]
      %v226 = vld [vmem:[%s202 + $0x58] sm:$0xff]
      %v227 = vld [vmem:[%s202 + $0x60] sm:$0xff]
      %v228 = vld [vmem:[%s202 + $0x68] sm:$0xff]
      %v229 = vld [vmem:[%s202 + $0x70] sm:$0xff]
      %v230 = vld [vmem:[%s202 + $0x78] sm:$0xff]
      %v231 = vld [vmem:[%s202 + $0x80] sm:$0xff]
      %v232 = vld [vmem:[%s202 + $0x88] sm:$0xff]
      %v233 = vld [vmem:[%s1] sm:$0xff]
      %v234 = vld [vmem:[%s1 + $0x8] sm:$0xff]
      %v235 = vld [vmem:[%s1 + $0x10] sm:$0xff]
      %v236 = vld [vmem:[%s1 + $0x18] sm:$0xff]
      %v237 = vld [vmem:[%s1 + $0x20] sm:$0xff]
      %v238 = vld [vmem:[%s1 + $0x28] sm:$0xff]
      %v239 = vld [vmem:[%s1 + $0x30] sm:$0xff]
      %v240 = vld [vmem:[%s1 + $0x38] sm:$0xff]
      %v241 = vld [vmem:[%s1 + $0x40] sm:$0xff]
      %v242 = vld [vmem:[%s1 + $0x48] sm:$0xff]
      %v243 = vld [vmem:[%s1 + $0x50] sm:$0xff]
      %v244 = vld [vmem:[%s1 + $0x58] sm:$0xff]
      %v245 = vld [vmem:[%s1 + $0x60] sm:$0xff]
      %v246 = vld [vmem:[%s1 + $0x68] sm:$0xff]
      %v247 = vld [vmem:[%s1 + $0x70] sm:$0xff]
      %v248 = vld [vmem:[%s1 + $0x78] sm:$0xff]
      %v249 = vld [vmem:[%s1 + $0x80] sm:$0xff]
      %v250 = vld [vmem:[%s1 + $0x88] sm:$0xff]
      %v251 = vld [vmem:[%s1 + $0x90] sm:$0xff]
      %v252 = vld [vmem:[%s1 + $0x98] sm:$0xff]
      %v253 = vld [vmem:[%s1 + $0xa0] sm:$0xff]
      %v254 = vld [vmem:[%s1 + $0xa8] sm:$0xff]
      %v255 = vld [vmem:[%s1 + $0xb0] sm:$0xff]
      %v256 = vld [vmem:[%s1 + $0xb8] sm:$0xff]
      %v257 = vld [vmem:[%s1 + $0xc0] sm:$0xff]
      %v258 = vld [vmem:[%s1 + $0xc8] sm:$0xff]
      %v259 = vld [vmem:[%s1 + $0xd0] sm:$0xff]
      %v260 = vld [vmem:[%s1 + $0xd8] sm:$0xff]
      %v261 = vld [vmem:[%s1 + $0xe0] sm:$0xff]
      %v262 = vld [vmem:[%s1 + $0xe8] sm:$0xff]
      %v263 = vld [vmem:[%s1 + $0xf0] sm:$0xff]
      %v264 = vld [vmem:[%s1 + $0xf8] sm:$0xff]
      %v265 = vld [vmem:[%s1 + $0x100] sm:$0xff]
      %v266 = vld [vmem:[%s1 + $0x108] sm:$0xff]
      %v267 = vld [vmem:[%s1 + $0x110] sm:$0xff]
      %v268 = vld [vmem:[%s1 + $0x118] sm:$0xff]
      %v269 = vld [vmem:[%s1 + $0x120] sm:$0xff]
      %v270 = vld [vmem:[%s1 + $0x128] sm:$0xff]
      %v271 = vld [vmem:[%s1 + $0x130] sm:$0xff]
      %v272 = vld [vmem:[%s1 + $0x138] sm:$0xff]
      %v273 = vld [vmem:[%s1 + $0x140] sm:$0xff]
      %v274 = vld [vmem:[%s1 + $0x148] sm:$0xff]
      %v275 = vld [vmem:[%s1 + $0x150] sm:$0xff]
      %v276 = vld [vmem:[%s1 + $0x158] sm:$0xff]
      %v277 = vld [vmem:[%s1 + $0x160] sm:$0xff]
      %v278 = vld [vmem:[%s1 + $0x168] sm:$0xff]
      %v279 = vld [vmem:[%s1 + $0x170] sm:$0xff]
      %v280 = vld [vmem:[%s1 + $0x178] sm:$0xff]
      %v281 = vld [vmem:[%s1 + $0x180] sm:$0xff]
      %v282 = vld [vmem:[%s1 + $0x188] sm:$0xff]
      %v283 = vld [vmem:[%s1 + $0x190] sm:$0xff]
      %v284 = vld [vmem:[%s1 + $0x198] sm:$0xff]
      %v285 = vld [vmem:[%s1 + $0x1a0] sm:$0xff]
      %v286 = vld [vmem:[%s1 + $0x1a8] sm:$0xff]
      %v287 = vld [vmem:[%s1 + $0x1b0] sm:$0xff]
      %v288 = vld [vmem:[%s1 + $0x1b8] sm:$0xff]
      %v289 = vld [vmem:[%s1 + $0x1c0] sm:$0xff]
      %v290 = vld [vmem:[%s1 + $0x1c8] sm:$0xff]
      %v291 = vld [vmem:[%s1 + $0x1d0] sm:$0xff]
      %v292 = vld [vmem:[%s1 + $0x1d8] sm:$0xff]
      %v293 = vld [vmem:[%s1 + $0x1e0] sm:$0xff]
      %v294 = vld [vmem:[%s1 + $0x1e8] sm:$0xff]
      %v295 = vld [vmem:[%s1 + $0x1f0] sm:$0xff]
      %v296 = vld [vmem:[%s1 + $0x1f8] sm:$0xff]
      %v297 = vld [vmem:[%s1 + $0x200] sm:$0xff]
      %v298 = vld [vmem:[%s1 + $0x208] sm:$0xff]
      %v299 = vld [vmem:[%s1 + $0x210] sm:$0xff]
      %v300 = vld [vmem:[%s1 + $0x218] sm:$0xff]
      %v301 = vld [vmem:[%s1 + $0x220] sm:$0xff]
      %v302 = vld [vmem:[%s1 + $0x228] sm:$0xff]
      %v303 = vld [vmem:[%s1 + $0x230] sm:$0xff]
      %v304 = vld [vmem:[%s1 + $0x238] sm:$0xff]
      %v305 = vld [vmem:[%s1 + $0x240] sm:$0xff]
      %v306 = vld [vmem:[%s1 + $0x248] sm:$0xff]
      %v307 = vld [vmem:[%s1 + $0x250] sm:$0xff]
      %v308 = vld [vmem:[%s1 + $0x258] sm:$0xff]
      %v309 = vld [vmem:[%s1 + $0x260] sm:$0xff]
      %v310 = vld [vmem:[%s1 + $0x268] sm:$0xff]
      %v311 = vld [vmem:[%s1 + $0x270] sm:$0xff]
      %v312 = vld [vmem:[%s1 + $0x278] sm:$0xff]
      %v313 = vld [vmem:[%s1 + $0x280] sm:$0xff]
      %v314 = vld [vmem:[%s1 + $0x288] sm:$0xff]
      %v315 = vld [vmem:[%s1 + $0x290] sm:$0xff]
      %v316 = vld [vmem:[%s1 + $0x298] sm:$0xff]
      %v317 = vld [vmem:[%s1 + $0x2a0] sm:$0xff]
      %v318 = vld [vmem:[%s1 + $0x2a8] sm:$0xff]
      %v319 = vld [vmem:[%s1 + $0x2b0] sm:$0xff]
      %v320 = vld [vmem:[%s1 + $0x2b8] sm:$0xff]
      %v321 = vld [vmem:[%s1 + $0x2c0] sm:$0xff]
      %v322 = vld [vmem:[%s1 + $0x2c8] sm:$0xff]
      %v323 = vld [vmem:[%s1 + $0x2d0] sm:$0xff]
      %v324 = vld [vmem:[%s1 + $0x2d8] sm:$0xff]
      %v325 = vld [vmem:[%s1 + $0x2e0] sm:$0xff]
      %v326 = vld [vmem:[%s1 + $0x2e8] sm:$0xff]
      %v327 = vld [vmem:[%s1 + $0x2f0] sm:$0xff]
      %v328 = vld [vmem:[%s1 + $0x2f8] sm:$0xff]
      %v329 = vld [vmem:[%s1 + $0x300] sm:$0xff]
      %v330 = vld [vmem:[%s1 + $0x308] sm:$0xff]
      %v331 = vld [vmem:[%s1 + $0x310] sm:$0xff]
      %v332 = vld [vmem:[%s1 + $0x318] sm:$0xff]
      %v333 = vld [vmem:[%s1 + $0x320] sm:$0xff]
      %v334 = vld [vmem:[%s1 + $0x328] sm:$0xff]
      %v335 = vld [vmem:[%s1 + $0x330] sm:$0xff]
      %v336 = vld [vmem:[%s1 + $0x338] sm:$0xff]
      %v337 = vld [vmem:[%s1 + $0x340] sm:$0xff]
      %v338 = vld [vmem:[%s1 + $0x348] sm:$0xff]
      %v339 = vld [vmem:[%s1 + $0x350] sm:$0xff]
      %v340 = vld [vmem:[%s1 + $0x358] sm:$0xff]
      %v341 = vld [vmem:[%s1 + $0x360] sm:$0xff]
      %v342 = vld [vmem:[%s1 + $0x368] sm:$0xff]
      %v343 = vld [vmem:[%s1 + $0x370] sm:$0xff]
      %v344 = vld [vmem:[%s1 + $0x378] sm:$0xff]
      %v345 = vld [vmem:[%s1 + $0x380] sm:$0xff]
      %v346 = vld [vmem:[%s1 + $0x388] sm:$0xff]
      %v347 = vld [vmem:[%s1 + $0x390] sm:$0xff]
      %v348 = vld [vmem:[%s1 + $0x398] sm:$0xff]
      %v349 = vld [vmem:[%s1 + $0x3a0] sm:$0xff]
      %v350 = vld [vmem:[%s1 + $0x3a8] sm:$0xff]
      %v351 = vld [vmem:[%s1 + $0x3b0] sm:$0xff]
      %v352 = vld [vmem:[%s1 + $0x3b8] sm:$0xff]
      %v353 = vld [vmem:[%s1 + $0x3c0] sm:$0xff]
      %v354 = vld [vmem:[%s1 + $0x3c8] sm:$0xff]
      %v355 = vld [vmem:[%s1 + $0x3d0] sm:$0xff]
      %v356 = vld [vmem:[%s1 + $0x3d8] sm:$0xff]
      %v357 = vld [vmem:[%s1 + $0x3e0] sm:$0xff]
      %v358 = vld [vmem:[%s1 + $0x3e8] sm:$0xff]
      %v359 = vld [vmem:[%s1 + $0x3f0] sm:$0xff]
      %v360 = vld [vmem:[%s1 + $0x3f8] sm:$0xff]
      %v361 = vld [vmem:[%s1 + $0x400] sm:$0xff]
      %v362 = vld [vmem:[%s1 + $0x408] sm:$0xff]
      %v363 = vld [vmem:[%s1 + $0x410] sm:$0xff]
      %v364 = vld [vmem:[%s1 + $0x418] sm:$0xff]
      %v365 = vld [vmem:[%s1 + $0x420] sm:$0xff]
      %v366 = vld [vmem:[%s1 + $0x428] sm:$0xff]
      %v367 = vld [vmem:[%s1 + $0x430] sm:$0xff]
      %v368 = vld [vmem:[%s1 + $0x438] sm:$0xff]
      %v369 = vld [vmem:[%s1 + $0x440] sm:$0xff]
      %v370 = vld [vmem:[%s1 + $0x448] sm:$0xff]
      %v371 = vld [vmem:[%s1 + $0x450] sm:$0xff]
      %v372 = vld [vmem:[%s1 + $0x458] sm:$0xff]
      %v373 = vld [vmem:[%s1 + $0x460] sm:$0xff]
      %v374 = vld [vmem:[%s1 + $0x468] sm:$0xff]
      %v375 = vld [vmem:[%s1 + $0x470] sm:$0xff]
      %v376 = vld [vmem:[%s1 + $0x478] sm:$0xff]
      %v377 = vld [vmem:[%s1 + $0x480] sm:$0xff]
      %v378 = vld [vmem:[%s1 + $0x488] sm:$0xff]
      %v379 = vld [vmem:[%s1 + $0x490] sm:$0xff]
      %v380 = vld [vmem:[%s1 + $0x498] sm:$0xff]
      %v381 = vld [vmem:[%s1 + $0x4a0] sm:$0xff]
      %v382 = vld [vmem:[%s1 + $0x4a8] sm:$0xff]
      %v383 = vld [vmem:[%s1 + $0x4b0] sm:$0xff]
      %v384 = vld [vmem:[%s1 + $0x4b8] sm:$0xff]
      %v385 = vld [vmem:[%s1 + $0x4c0] sm:$0xff]
      %v386 = vld [vmem:[%s1 + $0x4c8] sm:$0xff]
      %v387 = vld [vmem:[%s1 + $0x4d0] sm:$0xff]
      %v388 = vld [vmem:[%s1 + $0x4d8] sm:$0xff]
      %v389 = vld [vmem:[%s1 + $0x4e0] sm:$0xff]
      %v390 = vld [vmem:[%s1 + $0x4e8] sm:$0xff]
      %v391 = vld [vmem:[%s1 + $0x4f0] sm:$0xff]
      %v392 = vld [vmem:[%s1 + $0x4f8] sm:$0xff]
      %v393 = vld [vmem:[%s1 + $0x500] sm:$0xff]
      %v394 = vld [vmem:[%s1 + $0x508] sm:$0xff]
      %v395 = vld [vmem:[%s1 + $0x510] sm:$0xff]
      %v396 = vld [vmem:[%s1 + $0x518] sm:$0xff]
      %v397 = vld [vmem:[%s1 + $0x520] sm:$0xff]
      %v398 = vld [vmem:[%s1 + $0x528] sm:$0xff]
      %v399 = vld [vmem:[%s1 + $0x530] sm:$0xff]
      %v400 = vld [vmem:[%s1 + $0x538] sm:$0xff]
      %v401 = vld [vmem:[%s1 + $0x540] sm:$0xff]
      %v402 = vld [vmem:[%s1 + $0x548] sm:$0xff]
      %v403 = vld [vmem:[%s1 + $0x550] sm:$0xff]
      %v404 = vld [vmem:[%s1 + $0x558] sm:$0xff]
      %v405 = vld [vmem:[%s1 + $0x560] sm:$0xff]
      %v406 = vld [vmem:[%s1 + $0x568] sm:$0xff]
      %v407 = vld [vmem:[%s1 + $0x570] sm:$0xff]
      %v408 = vld [vmem:[%s1 + $0x578] sm:$0xff]
      %v409 = vld [vmem:[%s1 + $0x580] sm:$0xff]
      %v410 = vld [vmem:[%s1 + $0x588] sm:$0xff]
      %v411 = vld [vmem:[%s1 + $0x590] sm:$0xff]
      %v412 = vld [vmem:[%s1 + $0x598] sm:$0xff]
      %v413 = vld [vmem:[%s1 + $0x5a0] sm:$0xff]
      %v414 = vld [vmem:[%s1 + $0x5a8] sm:$0xff]
      %v415 = vld [vmem:[%s1 + $0x5b0] sm:$0xff]
      %v416 = vld [vmem:[%s1 + $0x5b8] sm:$0xff]
      %v417 = vld [vmem:[%s1 + $0x5c0] sm:$0xff]
      %v418 = vld [vmem:[%s1 + $0x5c8] sm:$0xff]
      %v419 = vld [vmem:[%s1 + $0x5d0] sm:$0xff]
      %v420 = vld [vmem:[%s1 + $0x5d8] sm:$0xff]
      %v421 = vld [vmem:[%s1 + $0x5e0] sm:$0xff]
      %v422 = vld [vmem:[%s1 + $0x5e8] sm:$0xff]
      %v423 = vld [vmem:[%s1 + $0x5f0] sm:$0xff]
      %v424 = vld [vmem:[%s1 + $0x5f8] sm:$0xff]
      %v425 = vld [vmem:[%s1 + $0x600] sm:$0xff]
      %v426 = vld [vmem:[%s1 + $0x608] sm:$0xff]
      %v427 = vld [vmem:[%s1 + $0x610] sm:$0xff]
      %v428 = vld [vmem:[%s1 + $0x618] sm:$0xff]
      %v429 = vld [vmem:[%s1 + $0x620] sm:$0xff]
      %v430 = vld [vmem:[%s1 + $0x628] sm:$0xff]
      %v431 = vld [vmem:[%s1 + $0x630] sm:$0xff]
      %v432 = vld [vmem:[%s1 + $0x638] sm:$0xff]
      %v433 = vld [vmem:[%s1 + $0x640] sm:$0xff]
      %v434 = vld [vmem:[%s1 + $0x648] sm:$0xff]
      %v435 = vld [vmem:[%s1 + $0x650] sm:$0xff]
      %v436 = vld [vmem:[%s1 + $0x658] sm:$0xff]
      %v437 = vld [vmem:[%s1 + $0x660] sm:$0xff]
      %v438 = vld [vmem:[%s1 + $0x668] sm:$0xff]
      %v439 = vld [vmem:[%s1 + $0x670] sm:$0xff]
      %v440 = vld [vmem:[%s1 + $0x678] sm:$0xff]
      %v441 = vld [vmem:[%s1 + $0x680] sm:$0xff]
      %v442 = vld [vmem:[%s1 + $0x688] sm:$0xff]
      %v443 = vld [vmem:[%s1 + $0x690] sm:$0xff]
      %v444 = vld [vmem:[%s1 + $0x698] sm:$0xff]
      %v445 = vld [vmem:[%s1 + $0x6a0] sm:$0xff]
      %v446 = vld [vmem:[%s1 + $0x6a8] sm:$0xff]
      %v447 = vld [vmem:[%s1 + $0x6b0] sm:$0xff]
      %v448 = vld [vmem:[%s1 + $0x6b8] sm:$0xff]
      %v449 = vld [vmem:[%s1 + $0x6c0] sm:$0xff]
      %v450 = vld [vmem:[%s1 + $0x6c8] sm:$0xff]
      %v451 = vld [vmem:[%s1 + $0x6d0] sm:$0xff]
      %v452 = vld [vmem:[%s1 + $0x6d8] sm:$0xff]
      %v453 = vld [vmem:[%s1 + $0x6e0] sm:$0xff]
      %v454 = vld [vmem:[%s1 + $0x6e8] sm:$0xff]
      %v455 = vld [vmem:[%s1 + $0x6f0] sm:$0xff]
      %v456 = vld [vmem:[%s1 + $0x6f8] sm:$0xff]
      %v457 = vld [vmem:[%s1 + $0x700] sm:$0xff]
      %v458 = vld [vmem:[%s1 + $0x708] sm:$0xff]
      %v459 = vld [vmem:[%s1 + $0x710] sm:$0xff]
      %v460 = vld [vmem:[%s1 + $0x718] sm:$0xff]
      %v461 = vld [vmem:[%s1 + $0x720] sm:$0xff]
      %v462 = vld [vmem:[%s1 + $0x728] sm:$0xff]
      %v463 = vld [vmem:[%s1 + $0x730] sm:$0xff]
      %v464 = vld [vmem:[%s1 + $0x738] sm:$0xff]
      %v465 = vld [vmem:[%s1 + $0x740] sm:$0xff]
      %v466 = vld [vmem:[%s1 + $0x748] sm:$0xff]
      %v467 = vld [vmem:[%s1 + $0x750] sm:$0xff]
      %v468 = vld [vmem:[%s1 + $0x758] sm:$0xff]
      %v469 = vld [vmem:[%s1 + $0x760] sm:$0xff]
      %v470 = vld [vmem:[%s1 + $0x768] sm:$0xff]
      %v471 = vld [vmem:[%s1 + $0x770] sm:$0xff]
      %v472 = vld [vmem:[%s1 + $0x778] sm:$0xff]
      %v473 = vld [vmem:[%s1 + $0x780] sm:$0xff]
      %v474 = vld [vmem:[%s1 + $0x788] sm:$0xff]
      %v475 = vld [vmem:[%s1 + $0x790] sm:$0xff]
      %v476 = vld [vmem:[%s1 + $0x798] sm:$0xff]
      %v477 = vld [vmem:[%s1 + $0x7a0] sm:$0xff]
      %v478 = vld [vmem:[%s1 + $0x7a8] sm:$0xff]
      %v479 = vld [vmem:[%s1 + $0x7b0] sm:$0xff]
      %v480 = vld [vmem:[%s1 + $0x7b8] sm:$0xff]
      %v481 = vld [vmem:[%s1 + $0x7c0] sm:$0xff]
      %v482 = vld [vmem:[%s1 + $0x7c8] sm:$0xff]
      %v483 = vld [vmem:[%s1 + $0x7d0] sm:$0xff]
      %v484 = vld [vmem:[%s1 + $0x7d8] sm:$0xff]
      %v485 = vld [vmem:[%s1 + $0x7e0] sm:$0xff]
      %v486 = vld [vmem:[%s1 + $0x7e8] sm:$0xff]
      %v487 = vld [vmem:[%s1 + $0x7f0] sm:$0xff]
      %v488 = vld [vmem:[%s1 + $0x7f8] sm:$0xff]
      %v489 = vld [vmem:[%s1 + $0x800] sm:$0xff]
      %v490 = vld [vmem:[%s1 + $0x808] sm:$0xff]
      %v491 = vld [vmem:[%s1 + $0x810] sm:$0xff]
      %v492 = vld [vmem:[%s1 + $0x818] sm:$0xff]
      %v493 = vld [vmem:[%s1 + $0x820] sm:$0xff]
      %v494 = vld [vmem:[%s1 + $0x828] sm:$0xff]
      %v495 = vld [vmem:[%s1 + $0x830] sm:$0xff]
      %v496 = vld [vmem:[%s1 + $0x838] sm:$0xff]
      %v497 = vld [vmem:[%s1 + $0x840] sm:$0xff]
      %v498 = vld [vmem:[%s1 + $0x848] sm:$0xff]
      %v499 = vld [vmem:[%s1 + $0x850] sm:$0xff]
      %v500 = vld [vmem:[%s1 + $0x858] sm:$0xff]
      %v501 = vld [vmem:[%s1 + $0x860] sm:$0xff]
      %v502 = vld [vmem:[%s1 + $0x868] sm:$0xff]
      %v503 = vld [vmem:[%s1 + $0x870] sm:$0xff]
      %v504 = vld [vmem:[%s1 + $0x878] sm:$0xff]
      %v505 = vld [vmem:[%s1 + $0x880] sm:$0xff]
      %v506 = vld [vmem:[%s1 + $0x888] sm:$0xff]
      %v507 = vld [vmem:[%s1 + $0x890] sm:$0xff]
      %v508 = vld [vmem:[%s1 + $0x898] sm:$0xff]
      %v509 = vld [vmem:[%s1 + $0x8a0] sm:$0xff]
      %v510 = vld [vmem:[%s1 + $0x8a8] sm:$0xff]
      %v511 = vld [vmem:[%s1 + $0x8b0] sm:$0xff]
      %v512 = vld [vmem:[%s1 + $0x8b8] sm:$0xff]
      %v513 = vld [vmem:[%s1 + $0x8c0] sm:$0xff]
      %v514 = vld [vmem:[%s1 + $0x8c8] sm:$0xff]
      %v515 = vld [vmem:[%s1 + $0x8d0] sm:$0xff]
      %v516 = vld [vmem:[%s1 + $0x8d8] sm:$0xff]
      %v517 = vld [vmem:[%s1 + $0x8e0] sm:$0xff]
      %v518 = vld [vmem:[%s1 + $0x8e8] sm:$0xff]
      %v519 = vld [vmem:[%s1 + $0x8f0] sm:$0xff]
      %v520 = vld [vmem:[%s1 + $0x8f8] sm:$0xff]
      %v521 = vld [vmem:[%s2] sm:$0x3]
      %v523 = vlaneseq
      %v524 = vshrl.u32 %v523, 7
      %v525 = vsub.s32 0, %v524
      %v526 = vrot.slane %v521, %v525
      %v527 = vlaneseq
      %v528 = vshrl.u32 %v527, 7
      %v529 = vsub.s32 1, %v528
      %v530 = vrot.slane %v521, %v529
      %v551 = vunpack.c.l.b16 %v215
      %v552 = vunpack.c.h.b16 %v215
      %v553 = vunpack.c.l.b16 %v216
      %v554 = vunpack.c.h.b16 %v216
      %v555 = vunpack.c.l.b16 %v217
      %v556 = vunpack.c.h.b16 %v217
      %v557 = vunpack.c.l.b16 %v218
      %v558 = vunpack.c.h.b16 %v218
      %v559 = vunpack.c.l.b16 %v219
      %v560 = vunpack.c.h.b16 %v219
      %v561 = vunpack.c.l.b16 %v220
      %v562 = vunpack.c.h.b16 %v220
      %v563 = vunpack.c.l.b16 %v221
      %v564 = vunpack.c.h.b16 %v221
      %v565 = vunpack.c.l.b16 %v222
      %v566 = vunpack.c.h.b16 %v222
      %v567 = vunpack.c.l.b16 %v223
      %v568 = vunpack.c.h.b16 %v223
      %v569 = vunpack.c.l.b16 %v224
      %v570 = vunpack.c.h.b16 %v224
      %v571 = vunpack.c.l.b16 %v225
      %v572 = vunpack.c.h.b16 %v225
      %v573 = vunpack.c.l.b16 %v226
      %v574 = vunpack.c.h.b16 %v226
      %v575 = vunpack.c.l.b16 %v227
      %v576 = vunpack.c.h.b16 %v227
      %v577 = vunpack.c.l.b16 %v228
      %v578 = vunpack.c.h.b16 %v228
      %v579 = vunpack.c.l.b16 %v229
      %v580 = vunpack.c.h.b16 %v229
      %v581 = vunpack.c.l.b16 %v230
      %v582 = vunpack.c.h.b16 %v230
      %v583 = vunpack.c.l.b16 %v231
      %v584 = vunpack.c.h.b16 %v231
      %v585 = vunpack.c.l.b16 %v232
      %v586 = vunpack.c.h.b16 %v232
      %v587 = vpack.c.b16 %v569, %v551
      %v588 = vpack.c.b16 %v570, %v552
      %v589 = vpack.c.b16 %v571, %v553
      %v590 = vpack.c.b16 %v572, %v554
      %v591 = vpack.c.b16 %v573, %v555
      %v592 = vpack.c.b16 %v574, %v556
      %v593 = vpack.c.b16 %v575, %v557
      %v594 = vpack.c.b16 %v576, %v558
      %v595 = vpack.c.b16 %v577, %v559
      %v596 = vpack.c.b16 %v578, %v560
      %v597 = vpack.c.b16 %v579, %v561
      %v598 = vpack.c.b16 %v580, %v562
      %v599 = vpack.c.b16 %v581, %v563
      %v600 = vpack.c.b16 %v582, %v564
      %v601 = vpack.c.b16 %v583, %v565
      %v602 = vpack.c.b16 %v584, %v566
      %v603 = vpack.c.b16 %v585, %v567
      %v604 = vpack.c.b16 %v586, %v568
      %v911 = vunpack.c.l.b16 %v233
      %v912 = vunpack.c.h.b16 %v233
      %v913 = vunpack.c.l.b16 %v234
      %v914 = vunpack.c.h.b16 %v234
      %v915 = vunpack.c.l.b16 %v235
      %v916 = vunpack.c.h.b16 %v235
      %v917 = vunpack.c.l.b16 %v236
      %v918 = vunpack.c.h.b16 %v236
      %v919 = vunpack.c.l.b16 %v237
      %v920 = vunpack.c.h.b16 %v237
      %v921 = vunpack.c.l.b16 %v238
      %v922 = vunpack.c.h.b16 %v238
      %v923 = vunpack.c.l.b16 %v239
      %v924 = vunpack.c.h.b16 %v239
      %v925 = vunpack.c.l.b16 %v240
      %v926 = vunpack.c.h.b16 %v240
      %v927 = vunpack.c.l.b16 %v241
      %v928 = vunpack.c.h.b16 %v241
      %v929 = vunpack.c.l.b16 %v242
      %v930 = vunpack.c.h.b16 %v242
      %v931 = vunpack.c.l.b16 %v243
      %v932 = vunpack.c.h.b16 %v243
      %v933 = vunpack.c.l.b16 %v244
      %v934 = vunpack.c.h.b16 %v244
      %v935 = vunpack.c.l.b16 %v245
      %v936 = vunpack.c.h.b16 %v245
      %v937 = vunpack.c.l.b16 %v246
      %v938 = vunpack.c.h.b16 %v246
      %v939 = vunpack.c.l.b16 %v247
      %v940 = vunpack.c.h.b16 %v247
      %v941 = vunpack.c.l.b16 %v248
      %v942 = vunpack.c.h.b16 %v248
      %v943 = vunpack.c.l.b16 %v249
      %v944 = vunpack.c.h.b16 %v249
      %v945 = vunpack.c.l.b16 %v250
      %v946 = vunpack.c.h.b16 %v250
      %v947 = vunpack.c.l.b16 %v251
      %v948 = vunpack.c.h.b16 %v251
      %v949 = vunpack.c.l.b16 %v252
      %v950 = vunpack.c.h.b16 %v252
      %v951 = vunpack.c.l.b16 %v253
      %v952 = vunpack.c.h.b16 %v253
      %v953 = vunpack.c.l.b16 %v254
      %v954 = vunpack.c.h.b16 %v254
      %v955 = vunpack.c.l.b16 %v255
      %v956 = vunpack.c.h.b16 %v255
      %v957 = vunpack.c.l.b16 %v256
      %v958 = vunpack.c.h.b16 %v256
      %v959 = vunpack.c.l.b16 %v257
      %v960 = vunpack.c.h.b16 %v257
      %v961 = vunpack.c.l.b16 %v258
      %v962 = vunpack.c.h.b16 %v258
      %v963 = vunpack.c.l.b16 %v259
      %v964 = vunpack.c.h.b16 %v259
      %v965 = vunpack.c.l.b16 %v260
      %v966 = vunpack.c.h.b16 %v260
      %v967 = vunpack.c.l.b16 %v261
      %v968 = vunpack.c.h.b16 %v261
      %v969 = vunpack.c.l.b16 %v262
      %v970 = vunpack.c.h.b16 %v262
      %v971 = vunpack.c.l.b16 %v263
      %v972 = vunpack.c.h.b16 %v263
      %v973 = vunpack.c.l.b16 %v264
      %v974 = vunpack.c.h.b16 %v264
      %v975 = vunpack.c.l.b16 %v265
      %v976 = vunpack.c.h.b16 %v265
      %v977 = vunpack.c.l.b16 %v266
      %v978 = vunpack.c.h.b16 %v266
      %v979 = vunpack.c.l.b16 %v267
      %v980 = vunpack.c.h.b16 %v267
      %v981 = vunpack.c.l.b16 %v268
      %v982 = vunpack.c.h.b16 %v268
      %v983 = vunpack.c.l.b16 %v269
      %v984 = vunpack.c.h.b16 %v269
      %v985 = vunpack.c.l.b16 %v270
      %v986 = vunpack.c.h.b16 %v270
      %v987 = vunpack.c.l.b16 %v271
      %v988 = vunpack.c.h.b16 %v271
      %v989 = vunpack.c.l.b16 %v272
      %v990 = vunpack.c.h.b16 %v272
      %v991 = vunpack.c.l.b16 %v273
      %v992 = vunpack.c.h.b16 %v273
      %v993 = vunpack.c.l.b16 %v274
      %v994 = vunpack.c.h.b16 %v274
      %v995 = vunpack.c.l.b16 %v275
      %v996 = vunpack.c.h.b16 %v275
      %v997 = vunpack.c.l.b16 %v276
      %v998 = vunpack.c.h.b16 %v276
      %v999 = vunpack.c.l.b16 %v277
      %v1000 = vunpack.c.h.b16 %v277
      %v1001 = vunpack.c.l.b16 %v278
      %v1002 = vunpack.c.h.b16 %v278
      %v1003 = vunpack.c.l.b16 %v279
      %v1004 = vunpack.c.h.b16 %v279
      %v1005 = vunpack.c.l.b16 %v280
      %v1006 = vunpack.c.h.b16 %v280
      %v1007 = vunpack.c.l.b16 %v281
      %v1008 = vunpack.c.h.b16 %v281
      %v1009 = vunpack.c.l.b16 %v282
      %v1010 = vunpack.c.h.b16 %v282
      %v1011 = vunpack.c.l.b16 %v283
      %v1012 = vunpack.c.h.b16 %v283
      %v1013 = vunpack.c.l.b16 %v284
      %v1014 = vunpack.c.h.b16 %v284
      %v1015 = vunpack.c.l.b16 %v285
      %v1016 = vunpack.c.h.b16 %v285
      %v1017 = vunpack.c.l.b16 %v286
      %v1018 = vunpack.c.h.b16 %v286
      %v1019 = vunpack.c.l.b16 %v287
      %v1020 = vunpack.c.h.b16 %v287
      %v1021 = vunpack.c.l.b16 %v288
      %v1022 = vunpack.c.h.b16 %v288
      %v1023 = vunpack.c.l.b16 %v289
      %v1024 = vunpack.c.h.b16 %v289
      %v1025 = vunpack.c.l.b16 %v290
      %v1026 = vunpack.c.h.b16 %v290
      %v1027 = vunpack.c.l.b16 %v291
      %v1028 = vunpack.c.h.b16 %v291
      %v1029 = vunpack.c.l.b16 %v292
      %v1030 = vunpack.c.h.b16 %v292
      %v1031 = vunpack.c.l.b16 %v293
      %v1032 = vunpack.c.h.b16 %v293
      %v1033 = vunpack.c.l.b16 %v294
      %v1034 = vunpack.c.h.b16 %v294
      %v1035 = vunpack.c.l.b16 %v295
      %v1036 = vunpack.c.h.b16 %v295
      %v1037 = vunpack.c.l.b16 %v296
      %v1038 = vunpack.c.h.b16 %v296
      %v1039 = vunpack.c.l.b16 %v297
      %v1040 = vunpack.c.h.b16 %v297
      %v1041 = vunpack.c.l.b16 %v298
      %v1042 = vunpack.c.h.b16 %v298
      %v1043 = vunpack.c.l.b16 %v299
      %v1044 = vunpack.c.h.b16 %v299
      %v1045 = vunpack.c.l.b16 %v300
      %v1046 = vunpack.c.h.b16 %v300
      %v1047 = vunpack.c.l.b16 %v301
      %v1048 = vunpack.c.h.b16 %v301
      %v1049 = vunpack.c.l.b16 %v302
      %v1050 = vunpack.c.h.b16 %v302
      %v1051 = vunpack.c.l.b16 %v303
      %v1052 = vunpack.c.h.b16 %v303
      %v1053 = vunpack.c.l.b16 %v304
      %v1054 = vunpack.c.h.b16 %v304
      %v1055 = vunpack.c.l.b16 %v305
      %v1056 = vunpack.c.h.b16 %v305
      %v1057 = vunpack.c.l.b16 %v306
      %v1058 = vunpack.c.h.b16 %v306
      %v1059 = vunpack.c.l.b16 %v307
      %v1060 = vunpack.c.h.b16 %v307
      %v1061 = vunpack.c.l.b16 %v308
      %v1062 = vunpack.c.h.b16 %v308
      %v1063 = vunpack.c.l.b16 %v309
      %v1064 = vunpack.c.h.b16 %v309
      %v1065 = vunpack.c.l.b16 %v310
      %v1066 = vunpack.c.h.b16 %v310
      %v1067 = vunpack.c.l.b16 %v311
      %v1068 = vunpack.c.h.b16 %v311
      %v1069 = vunpack.c.l.b16 %v312
      %v1070 = vunpack.c.h.b16 %v312
      %v1071 = vunpack.c.l.b16 %v313
      %v1072 = vunpack.c.h.b16 %v313
      %v1073 = vunpack.c.l.b16 %v314
      %v1074 = vunpack.c.h.b16 %v314
      %v1075 = vunpack.c.l.b16 %v315
      %v1076 = vunpack.c.h.b16 %v315
      %v1077 = vunpack.c.l.b16 %v316
      %v1078 = vunpack.c.h.b16 %v316
      %v1079 = vunpack.c.l.b16 %v317
      %v1080 = vunpack.c.h.b16 %v317
      %v1081 = vunpack.c.l.b16 %v318
      %v1082 = vunpack.c.h.b16 %v318
      %v1083 = vunpack.c.l.b16 %v319
      %v1084 = vunpack.c.h.b16 %v319
      %v1085 = vunpack.c.l.b16 %v320
      %v1086 = vunpack.c.h.b16 %v320
      %v1087 = vunpack.c.l.b16 %v321
      %v1088 = vunpack.c.h.b16 %v321
      %v1089 = vunpack.c.l.b16 %v322
      %v1090 = vunpack.c.h.b16 %v322
      %v1091 = vunpack.c.l.b16 %v323
      %v1092 = vunpack.c.h.b16 %v323
      %v1093 = vunpack.c.l.b16 %v324
      %v1094 = vunpack.c.h.b16 %v324
      %v1095 = vunpack.c.l.b16 %v325
      %v1096 = vunpack.c.h.b16 %v325
      %v1097 = vunpack.c.l.b16 %v326
      %v1098 = vunpack.c.h.b16 %v326
      %v1099 = vunpack.c.l.b16 %v327
      %v1100 = vunpack.c.h.b16 %v327
      %v1101 = vunpack.c.l.b16 %v328
      %v1102 = vunpack.c.h.b16 %v328
      %v1103 = vunpack.c.l.b16 %v329
      %v1104 = vunpack.c.h.b16 %v329
      %v1105 = vunpack.c.l.b16 %v330
      %v1106 = vunpack.c.h.b16 %v330
      %v1107 = vunpack.c.l.b16 %v331
      %v1108 = vunpack.c.h.b16 %v331
      %v1109 = vunpack.c.l.b16 %v332
      %v1110 = vunpack.c.h.b16 %v332
      %v1111 = vunpack.c.l.b16 %v333
      %v1112 = vunpack.c.h.b16 %v333
      %v1113 = vunpack.c.l.b16 %v334
      %v1114 = vunpack.c.h.b16 %v334
      %v1115 = vunpack.c.l.b16 %v335
      %v1116 = vunpack.c.h.b16 %v335
      %v1117 = vunpack.c.l.b16 %v336
      %v1118 = vunpack.c.h.b16 %v336
      %v1119 = vunpack.c.l.b16 %v337
      %v1120 = vunpack.c.h.b16 %v337
      %v1121 = vunpack.c.l.b16 %v338
      %v1122 = vunpack.c.h.b16 %v338
      %v1123 = vunpack.c.l.b16 %v339
      %v1124 = vunpack.c.h.b16 %v339
      %v1125 = vunpack.c.l.b16 %v340
      %v1126 = vunpack.c.h.b16 %v340
      %v1127 = vunpack.c.l.b16 %v341
      %v1128 = vunpack.c.h.b16 %v341
      %v1129 = vunpack.c.l.b16 %v342
      %v1130 = vunpack.c.h.b16 %v342
      %v1131 = vunpack.c.l.b16 %v343
      %v1132 = vunpack.c.h.b16 %v343
      %v1133 = vunpack.c.l.b16 %v344
      %v1134 = vunpack.c.h.b16 %v344
      %v1135 = vunpack.c.l.b16 %v345
      %v1136 = vunpack.c.h.b16 %v345
      %v1137 = vunpack.c.l.b16 %v346
      %v1138 = vunpack.c.h.b16 %v346
      %v1139 = vunpack.c.l.b16 %v347
      %v1140 = vunpack.c.h.b16 %v347
      %v1141 = vunpack.c.l.b16 %v348
      %v1142 = vunpack.c.h.b16 %v348
      %v1143 = vunpack.c.l.b16 %v349
      %v1144 = vunpack.c.h.b16 %v349
      %v1145 = vunpack.c.l.b16 %v350
      %v1146 = vunpack.c.h.b16 %v350
      %v1147 = vunpack.c.l.b16 %v351
      %v1148 = vunpack.c.h.b16 %v351
      %v1149 = vunpack.c.l.b16 %v352
      %v1150 = vunpack.c.h.b16 %v352
      %v1151 = vunpack.c.l.b16 %v353
      %v1152 = vunpack.c.h.b16 %v353
      %v1153 = vunpack.c.l.b16 %v354
      %v1154 = vunpack.c.h.b16 %v354
      %v1155 = vunpack.c.l.b16 %v355
      %v1156 = vunpack.c.h.b16 %v355
      %v1157 = vunpack.c.l.b16 %v356
      %v1158 = vunpack.c.h.b16 %v356
      %v1159 = vunpack.c.l.b16 %v357
      %v1160 = vunpack.c.h.b16 %v357
      %v1161 = vunpack.c.l.b16 %v358
      %v1162 = vunpack.c.h.b16 %v358
      %v1163 = vunpack.c.l.b16 %v359
      %v1164 = vunpack.c.h.b16 %v359
      %v1165 = vunpack.c.l.b16 %v360
      %v1166 = vunpack.c.h.b16 %v360
      %v1167 = vunpack.c.l.b16 %v361
      %v1168 = vunpack.c.h.b16 %v361
      %v1169 = vunpack.c.l.b16 %v362
      %v1170 = vunpack.c.h.b16 %v362
      %v1171 = vunpack.c.l.b16 %v363
      %v1172 = vunpack.c.h.b16 %v363
      %v1173 = vunpack.c.l.b16 %v364
      %v1174 = vunpack.c.h.b16 %v364
      %v1175 = vunpack.c.l.b16 %v365
      %v1176 = vunpack.c.h.b16 %v365
      %v1177 = vunpack.c.l.b16 %v366
      %v1178 = vunpack.c.h.b16 %v366
      %v1179 = vunpack.c.l.b16 %v367
      %v1180 = vunpack.c.h.b16 %v367
      %v1181 = vunpack.c.l.b16 %v368
      %v1182 = vunpack.c.h.b16 %v368
      %v1183 = vunpack.c.l.b16 %v369
      %v1184 = vunpack.c.h.b16 %v369
      %v1185 = vunpack.c.l.b16 %v370
      %v1186 = vunpack.c.h.b16 %v370
      %v1187 = vunpack.c.l.b16 %v371
      %v1188 = vunpack.c.h.b16 %v371
      %v1189 = vunpack.c.l.b16 %v372
      %v1190 = vunpack.c.h.b16 %v372
      %v1191 = vunpack.c.l.b16 %v373
      %v1192 = vunpack.c.h.b16 %v373
      %v1193 = vunpack.c.l.b16 %v374
      %v1194 = vunpack.c.h.b16 %v374
      %v1195 = vunpack.c.l.b16 %v375
      %v1196 = vunpack.c.h.b16 %v375
      %v1197 = vunpack.c.l.b16 %v376
      %v1198 = vunpack.c.h.b16 %v376
      %v1199 = vunpack.c.l.b16 %v377
      %v1200 = vunpack.c.h.b16 %v377
      %v1201 = vunpack.c.l.b16 %v378
      %v1202 = vunpack.c.h.b16 %v378
      %v1203 = vunpack.c.l.b16 %v379
      %v1204 = vunpack.c.h.b16 %v379
      %v1205 = vunpack.c.l.b16 %v380
      %v1206 = vunpack.c.h.b16 %v380
      %v1207 = vunpack.c.l.b16 %v381
      %v1208 = vunpack.c.h.b16 %v381
      %v1209 = vunpack.c.l.b16 %v382
      %v1210 = vunpack.c.h.b16 %v382
      %v1211 = vunpack.c.l.b16 %v383
      %v1212 = vunpack.c.h.b16 %v383
      %v1213 = vunpack.c.l.b16 %v384
      %v1214 = vunpack.c.h.b16 %v384
      %v1215 = vunpack.c.l.b16 %v385
      %v1216 = vunpack.c.h.b16 %v385
      %v1217 = vunpack.c.l.b16 %v386
      %v1218 = vunpack.c.h.b16 %v386
      %v1219 = vunpack.c.l.b16 %v387
      %v1220 = vunpack.c.h.b16 %v387
      %v1221 = vunpack.c.l.b16 %v388
      %v1222 = vunpack.c.h.b16 %v388
      %v1223 = vunpack.c.l.b16 %v389
      %v1224 = vunpack.c.h.b16 %v389
      %v1225 = vunpack.c.l.b16 %v390
      %v1226 = vunpack.c.h.b16 %v390
      %v1227 = vunpack.c.l.b16 %v391
      %v1228 = vunpack.c.h.b16 %v391
      %v1229 = vunpack.c.l.b16 %v392
      %v1230 = vunpack.c.h.b16 %v392
      %v1231 = vunpack.c.l.b16 %v393
      %v1232 = vunpack.c.h.b16 %v393
      %v1233 = vunpack.c.l.b16 %v394
      %v1234 = vunpack.c.h.b16 %v394
      %v1235 = vunpack.c.l.b16 %v395
      %v1236 = vunpack.c.h.b16 %v395
      %v1237 = vunpack.c.l.b16 %v396
      %v1238 = vunpack.c.h.b16 %v396
      %v1239 = vunpack.c.l.b16 %v397
      %v1240 = vunpack.c.h.b16 %v397
      %v1241 = vunpack.c.l.b16 %v398
      %v1242 = vunpack.c.h.b16 %v398
      %v1243 = vunpack.c.l.b16 %v399
      %v1244 = vunpack.c.h.b16 %v399
      %v1245 = vunpack.c.l.b16 %v400
      %v1246 = vunpack.c.h.b16 %v400
      %v1247 = vunpack.c.l.b16 %v401
      %v1248 = vunpack.c.h.b16 %v401
      %v1249 = vunpack.c.l.b16 %v402
      %v1250 = vunpack.c.h.b16 %v402
      %v1251 = vunpack.c.l.b16 %v403
      %v1252 = vunpack.c.h.b16 %v403
      %v1253 = vunpack.c.l.b16 %v404
      %v1254 = vunpack.c.h.b16 %v404
      %v1255 = vunpack.c.l.b16 %v405
      %v1256 = vunpack.c.h.b16 %v405
      %v1257 = vunpack.c.l.b16 %v406
      %v1258 = vunpack.c.h.b16 %v406
      %v1259 = vunpack.c.l.b16 %v407
      %v1260 = vunpack.c.h.b16 %v407
      %v1261 = vunpack.c.l.b16 %v408
      %v1262 = vunpack.c.h.b16 %v408
      %v1263 = vunpack.c.l.b16 %v409
      %v1264 = vunpack.c.h.b16 %v409
      %v1265 = vunpack.c.l.b16 %v410
      %v1266 = vunpack.c.h.b16 %v410
      %v1267 = vunpack.c.l.b16 %v411
      %v1268 = vunpack.c.h.b16 %v411
      %v1269 = vunpack.c.l.b16 %v412
      %v1270 = vunpack.c.h.b16 %v412
      %v1271 = vunpack.c.l.b16 %v413
      %v1272 = vunpack.c.h.b16 %v413
      %v1273 = vunpack.c.l.b16 %v414
      %v1274 = vunpack.c.h.b16 %v414
      %v1275 = vunpack.c.l.b16 %v415
      %v1276 = vunpack.c.h.b16 %v415
      %v1277 = vunpack.c.l.b16 %v416
      %v1278 = vunpack.c.h.b16 %v416
      %v1279 = vunpack.c.l.b16 %v417
      %v1280 = vunpack.c.h.b16 %v417
      %v1281 = vunpack.c.l.b16 %v418
      %v1282 = vunpack.c.h.b16 %v418
      %v1283 = vunpack.c.l.b16 %v419
      %v1284 = vunpack.c.h.b16 %v419
      %v1285 = vunpack.c.l.b16 %v420
      %v1286 = vunpack.c.h.b16 %v420
      %v1287 = vunpack.c.l.b16 %v421
      %v1288 = vunpack.c.h.b16 %v421
      %v1289 = vunpack.c.l.b16 %v422
      %v1290 = vunpack.c.h.b16 %v422
      %v1291 = vunpack.c.l.b16 %v423
      %v1292 = vunpack.c.h.b16 %v423
      %v1293 = vunpack.c.l.b16 %v424
      %v1294 = vunpack.c.h.b16 %v424
      %v1295 = vunpack.c.l.b16 %v425
      %v1296 = vunpack.c.h.b16 %v425
      %v1297 = vunpack.c.l.b16 %v426
      %v1298 = vunpack.c.h.b16 %v426
      %v1299 = vunpack.c.l.b16 %v427
      %v1300 = vunpack.c.h.b16 %v427
      %v1301 = vunpack.c.l.b16 %v428
      %v1302 = vunpack.c.h.b16 %v428
      %v1303 = vunpack.c.l.b16 %v429
      %v1304 = vunpack.c.h.b16 %v429
      %v1305 = vunpack.c.l.b16 %v430
      %v1306 = vunpack.c.h.b16 %v430
      %v1307 = vunpack.c.l.b16 %v431
      %v1308 = vunpack.c.h.b16 %v431
      %v1309 = vunpack.c.l.b16 %v432
      %v1310 = vunpack.c.h.b16 %v432
      %v1311 = vunpack.c.l.b16 %v433
      %v1312 = vunpack.c.h.b16 %v433
      %v1313 = vunpack.c.l.b16 %v434
      %v1314 = vunpack.c.h.b16 %v434
      %v1315 = vunpack.c.l.b16 %v435
      %v1316 = vunpack.c.h.b16 %v435
      %v1317 = vunpack.c.l.b16 %v436
      %v1318 = vunpack.c.h.b16 %v436
      %v1319 = vunpack.c.l.b16 %v437
      %v1320 = vunpack.c.h.b16 %v437
      %v1321 = vunpack.c.l.b16 %v438
      %v1322 = vunpack.c.h.b16 %v438
      %v1323 = vunpack.c.l.b16 %v439
      %v1324 = vunpack.c.h.b16 %v439
      %v1325 = vunpack.c.l.b16 %v440
      %v1326 = vunpack.c.h.b16 %v440
      %v1327 = vunpack.c.l.b16 %v441
      %v1328 = vunpack.c.h.b16 %v441
      %v1329 = vunpack.c.l.b16 %v442
      %v1330 = vunpack.c.h.b16 %v442
      %v1331 = vunpack.c.l.b16 %v443
      %v1332 = vunpack.c.h.b16 %v443
      %v1333 = vunpack.c.l.b16 %v444
      %v1334 = vunpack.c.h.b16 %v444
      %v1335 = vunpack.c.l.b16 %v445
      %v1336 = vunpack.c.h.b16 %v445
      %v1337 = vunpack.c.l.b16 %v446
      %v1338 = vunpack.c.h.b16 %v446
      %v1339 = vunpack.c.l.b16 %v447
      %v1340 = vunpack.c.h.b16 %v447
      %v1341 = vunpack.c.l.b16 %v448
      %v1342 = vunpack.c.h.b16 %v448
      %v1343 = vunpack.c.l.b16 %v449
      %v1344 = vunpack.c.h.b16 %v449
      %v1345 = vunpack.c.l.b16 %v450
      %v1346 = vunpack.c.h.b16 %v450
      %v1347 = vunpack.c.l.b16 %v451
      %v1348 = vunpack.c.h.b16 %v451
      %v1349 = vunpack.c.l.b16 %v452
      %v1350 = vunpack.c.h.b16 %v452
      %v1351 = vunpack.c.l.b16 %v453
      %v1352 = vunpack.c.h.b16 %v453
      %v1353 = vunpack.c.l.b16 %v454
      %v1354 = vunpack.c.h.b16 %v454
      %v1355 = vunpack.c.l.b16 %v455
      %v1356 = vunpack.c.h.b16 %v455
      %v1357 = vunpack.c.l.b16 %v456
      %v1358 = vunpack.c.h.b16 %v456
      %v1359 = vunpack.c.l.b16 %v457
      %v1360 = vunpack.c.h.b16 %v457
      %v1361 = vunpack.c.l.b16 %v458
      %v1362 = vunpack.c.h.b16 %v458
      %v1363 = vunpack.c.l.b16 %v459
      %v1364 = vunpack.c.h.b16 %v459
      %v1365 = vunpack.c.l.b16 %v460
      %v1366 = vunpack.c.h.b16 %v460
      %v1367 = vunpack.c.l.b16 %v461
      %v1368 = vunpack.c.h.b16 %v461
      %v1369 = vunpack.c.l.b16 %v462
      %v1370 = vunpack.c.h.b16 %v462
      %v1371 = vunpack.c.l.b16 %v463
      %v1372 = vunpack.c.h.b16 %v463
      %v1373 = vunpack.c.l.b16 %v464
      %v1374 = vunpack.c.h.b16 %v464
      %v1375 = vunpack.c.l.b16 %v465
      %v1376 = vunpack.c.h.b16 %v465
      %v1377 = vunpack.c.l.b16 %v466
      %v1378 = vunpack.c.h.b16 %v466
      %v1379 = vunpack.c.l.b16 %v467
      %v1380 = vunpack.c.h.b16 %v467
      %v1381 = vunpack.c.l.b16 %v468
      %v1382 = vunpack.c.h.b16 %v468
      %v1383 = vunpack.c.l.b16 %v469
      %v1384 = vunpack.c.h.b16 %v469
      %v1385 = vunpack.c.l.b16 %v470
      %v1386 = vunpack.c.h.b16 %v470
      %v1387 = vunpack.c.l.b16 %v471
      %v1388 = vunpack.c.h.b16 %v471
      %v1389 = vunpack.c.l.b16 %v472
      %v1390 = vunpack.c.h.b16 %v472
      %v1391 = vunpack.c.l.b16 %v473
      %v1392 = vunpack.c.h.b16 %v473
      %v1393 = vunpack.c.l.b16 %v474
      %v1394 = vunpack.c.h.b16 %v474
      %v1395 = vunpack.c.l.b16 %v475
      %v1396 = vunpack.c.h.b16 %v475
      %v1397 = vunpack.c.l.b16 %v476
      %v1398 = vunpack.c.h.b16 %v476
      %v1399 = vunpack.c.l.b16 %v477
      %v1400 = vunpack.c.h.b16 %v477
      %v1401 = vunpack.c.l.b16 %v478
      %v1402 = vunpack.c.h.b16 %v478
      %v1403 = vunpack.c.l.b16 %v479
      %v1404 = vunpack.c.h.b16 %v479
      %v1405 = vunpack.c.l.b16 %v480
      %v1406 = vunpack.c.h.b16 %v480
      %v1407 = vunpack.c.l.b16 %v481
      %v1408 = vunpack.c.h.b16 %v481
      %v1409 = vunpack.c.l.b16 %v482
      %v1410 = vunpack.c.h.b16 %v482
      %v1411 = vunpack.c.l.b16 %v483
      %v1412 = vunpack.c.h.b16 %v483
      %v1413 = vunpack.c.l.b16 %v484
      %v1414 = vunpack.c.h.b16 %v484
      %v1415 = vunpack.c.l.b16 %v485
      %v1416 = vunpack.c.h.b16 %v485
      %v1417 = vunpack.c.l.b16 %v486
      %v1418 = vunpack.c.h.b16 %v486
      %v1419 = vunpack.c.l.b16 %v487
      %v1420 = vunpack.c.h.b16 %v487
      %v1421 = vunpack.c.l.b16 %v488
      %v1422 = vunpack.c.h.b16 %v488
      %v1423 = vunpack.c.l.b16 %v489
      %v1424 = vunpack.c.h.b16 %v489
      %v1425 = vunpack.c.l.b16 %v490
      %v1426 = vunpack.c.h.b16 %v490
      %v1427 = vunpack.c.l.b16 %v491
      %v1428 = vunpack.c.h.b16 %v491
      %v1429 = vunpack.c.l.b16 %v492
      %v1430 = vunpack.c.h.b16 %v492
      %v1431 = vunpack.c.l.b16 %v493
      %v1432 = vunpack.c.h.b16 %v493
      %v1433 = vunpack.c.l.b16 %v494
      %v1434 = vunpack.c.h.b16 %v494
      %v1435 = vunpack.c.l.b16 %v495
      %v1436 = vunpack.c.h.b16 %v495
      %v1437 = vunpack.c.l.b16 %v496
      %v1438 = vunpack.c.h.b16 %v496
      %v1439 = vunpack.c.l.b16 %v497
      %v1440 = vunpack.c.h.b16 %v497
      %v1441 = vunpack.c.l.b16 %v498
      %v1442 = vunpack.c.h.b16 %v498
      %v1443 = vunpack.c.l.b16 %v499
      %v1444 = vunpack.c.h.b16 %v499
      %v1445 = vunpack.c.l.b16 %v500
      %v1446 = vunpack.c.h.b16 %v500
      %v1447 = vunpack.c.l.b16 %v501
      %v1448 = vunpack.c.h.b16 %v501
      %v1449 = vunpack.c.l.b16 %v502
      %v1450 = vunpack.c.h.b16 %v502
      %v1451 = vunpack.c.l.b16 %v503
      %v1452 = vunpack.c.h.b16 %v503
      %v1453 = vunpack.c.l.b16 %v504
      %v1454 = vunpack.c.h.b16 %v504
      %v1455 = vunpack.c.l.b16 %v505
      %v1456 = vunpack.c.h.b16 %v505
      %v1457 = vunpack.c.l.b16 %v506
      %v1458 = vunpack.c.h.b16 %v506
      %v1459 = vunpack.c.l.b16 %v507
      %v1460 = vunpack.c.h.b16 %v507
      %v1461 = vunpack.c.l.b16 %v508
      %v1462 = vunpack.c.h.b16 %v508
      %v1463 = vunpack.c.l.b16 %v509
      %v1464 = vunpack.c.h.b16 %v509
      %v1465 = vunpack.c.l.b16 %v510
      %v1466 = vunpack.c.h.b16 %v510
      %v1467 = vunpack.c.l.b16 %v511
      %v1468 = vunpack.c.h.b16 %v511
      %v1469 = vunpack.c.l.b16 %v512
      %v1470 = vunpack.c.h.b16 %v512
      %v1471 = vunpack.c.l.b16 %v513
      %v1472 = vunpack.c.h.b16 %v513
      %v1473 = vunpack.c.l.b16 %v514
      %v1474 = vunpack.c.h.b16 %v514
      %v1475 = vunpack.c.l.b16 %v515
      %v1476 = vunpack.c.h.b16 %v515
      %v1477 = vunpack.c.l.b16 %v516
      %v1478 = vunpack.c.h.b16 %v516
      %v1479 = vunpack.c.l.b16 %v517
      %v1480 = vunpack.c.h.b16 %v517
      %v1481 = vunpack.c.l.b16 %v518
      %v1482 = vunpack.c.h.b16 %v518
      %v1483 = vunpack.c.l.b16 %v519
      %v1484 = vunpack.c.h.b16 %v519
      %v1485 = vunpack.c.l.b16 %v520
      %v1486 = vunpack.c.h.b16 %v520
      %v1487 = vpack.c.b16 %v913, %v911
      %v1488 = vpack.c.b16 %v914, %v912
      %v1489 = vpack.c.b16 %v917, %v915
      %v1490 = vpack.c.b16 %v918, %v916
      %v1491 = vpack.c.b16 %v921, %v919
      %v1492 = vpack.c.b16 %v922, %v920
      %v1493 = vpack.c.b16 %v925, %v923
      %v1494 = vpack.c.b16 %v926, %v924
      %v1495 = vpack.c.b16 %v929, %v927
      %v1496 = vpack.c.b16 %v930, %v928
      %v1497 = vpack.c.b16 %v933, %v931
      %v1498 = vpack.c.b16 %v934, %v932
      %v1499 = vpack.c.b16 %v937, %v935
      %v1500 = vpack.c.b16 %v938, %v936
      %v1501 = vpack.c.b16 %v941, %v939
      %v1502 = vpack.c.b16 %v942, %v940
      %v1503 = vpack.c.b16 %v945, %v943
      %v1504 = vpack.c.b16 %v946, %v944
      %v1505 = vpack.c.b16 %v949, %v947
      %v1506 = vpack.c.b16 %v950, %v948
      %v1507 = vpack.c.b16 %v953, %v951
      %v1508 = vpack.c.b16 %v954, %v952
      %v1509 = vpack.c.b16 %v957, %v955
      %v1510 = vpack.c.b16 %v958, %v956
      %v1511 = vpack.c.b16 %v961, %v959
      %v1512 = vpack.c.b16 %v962, %v960
      %v1513 = vpack.c.b16 %v965, %v963
      %v1514 = vpack.c.b16 %v966, %v964
      %v1515 = vpack.c.b16 %v969, %v967
      %v1516 = vpack.c.b16 %v970, %v968
      %v1517 = vpack.c.b16 %v973, %v971
      %v1518 = vpack.c.b16 %v974, %v972
      %v1519 = vpack.c.b16 %v977, %v975
      %v1520 = vpack.c.b16 %v978, %v976
      %v1521 = vpack.c.b16 %v981, %v979
      %v1522 = vpack.c.b16 %v982, %v980
      %v1523 = vpack.c.b16 %v985, %v983
      %v1524 = vpack.c.b16 %v986, %v984
      %v1525 = vpack.c.b16 %v989, %v987
      %v1526 = vpack.c.b16 %v990, %v988
      %v1527 = vpack.c.b16 %v993, %v991
      %v1528 = vpack.c.b16 %v994, %v992
      %v1529 = vpack.c.b16 %v997, %v995
      %v1530 = vpack.c.b16 %v998, %v996
      %v1531 = vpack.c.b16 %v1001, %v999
      %v1532 = vpack.c.b16 %v1002, %v1000
      %v1533 = vpack.c.b16 %v1005, %v1003
      %v1534 = vpack.c.b16 %v1006, %v1004
      %v1535 = vpack.c.b16 %v1009, %v1007
      %v1536 = vpack.c.b16 %v1010, %v1008
      %v1537 = vpack.c.b16 %v1013, %v1011
      %v1538 = vpack.c.b16 %v1014, %v1012
      %v1539 = vpack.c.b16 %v1017, %v1015
      %v1540 = vpack.c.b16 %v1018, %v1016
      %v1541 = vpack.c.b16 %v1021, %v1019
      %v1542 = vpack.c.b16 %v1022, %v1020
      %v1543 = vpack.c.b16 %v1025, %v1023
      %v1544 = vpack.c.b16 %v1026, %v1024
      %v1545 = vpack.c.b16 %v1029, %v1027
      %v1546 = vpack.c.b16 %v1030, %v1028
      %v1547 = vpack.c.b16 %v1033, %v1031
      %v1548 = vpack.c.b16 %v1034, %v1032
      %v1549 = vpack.c.b16 %v1037, %v1035
      %v1550 = vpack.c.b16 %v1038, %v1036
      %v1551 = vpack.c.b16 %v1041, %v1039
      %v1552 = vpack.c.b16 %v1042, %v1040
      %v1553 = vpack.c.b16 %v1045, %v1043
      %v1554 = vpack.c.b16 %v1046, %v1044
      %v1555 = vpack.c.b16 %v1049, %v1047
      %v1556 = vpack.c.b16 %v1050, %v1048
      %v1557 = vpack.c.b16 %v1053, %v1051
      %v1558 = vpack.c.b16 %v1054, %v1052
      %v1559 = vpack.c.b16 %v1057, %v1055
      %v1560 = vpack.c.b16 %v1058, %v1056
      %v1561 = vpack.c.b16 %v1061, %v1059
      %v1562 = vpack.c.b16 %v1062, %v1060
      %v1563 = vpack.c.b16 %v1065, %v1063
      %v1564 = vpack.c.b16 %v1066, %v1064
      %v1565 = vpack.c.b16 %v1069, %v1067
      %v1566 = vpack.c.b16 %v1070, %v1068
      %v1567 = vpack.c.b16 %v1073, %v1071
      %v1568 = vpack.c.b16 %v1074, %v1072
      %v1569 = vpack.c.b16 %v1077, %v1075
      %v1570 = vpack.c.b16 %v1078, %v1076
      %v1571 = vpack.c.b16 %v1081, %v1079
      %v1572 = vpack.c.b16 %v1082, %v1080
      %v1573 = vpack.c.b16 %v1085, %v1083
      %v1574 = vpack.c.b16 %v1086, %v1084
      %v1575 = vpack.c.b16 %v1089, %v1087
      %v1576 = vpack.c.b16 %v1090, %v1088
      %v1577 = vpack.c.b16 %v1093, %v1091
      %v1578 = vpack.c.b16 %v1094, %v1092
      %v1579 = vpack.c.b16 %v1097, %v1095
      %v1580 = vpack.c.b16 %v1098, %v1096
      %v1581 = vpack.c.b16 %v1101, %v1099
      %v1582 = vpack.c.b16 %v1102, %v1100
      %v1583 = vpack.c.b16 %v1105, %v1103
      %v1584 = vpack.c.b16 %v1106, %v1104
      %v1585 = vpack.c.b16 %v1109, %v1107
      %v1586 = vpack.c.b16 %v1110, %v1108
      %v1587 = vpack.c.b16 %v1113, %v1111
      %v1588 = vpack.c.b16 %v1114, %v1112
      %v1589 = vpack.c.b16 %v1117, %v1115
      %v1590 = vpack.c.b16 %v1118, %v1116
      %v1591 = vpack.c.b16 %v1121, %v1119
      %v1592 = vpack.c.b16 %v1122, %v1120
      %v1593 = vpack.c.b16 %v1125, %v1123
      %v1594 = vpack.c.b16 %v1126, %v1124
      %v1595 = vpack.c.b16 %v1129, %v1127
      %v1596 = vpack.c.b16 %v1130, %v1128
      %v1597 = vpack.c.b16 %v1133, %v1131
      %v1598 = vpack.c.b16 %v1134, %v1132
      %v1599 = vpack.c.b16 %v1137, %v1135
      %v1600 = vpack.c.b16 %v1138, %v1136
      %v1601 = vpack.c.b16 %v1141, %v1139
      %v1602 = vpack.c.b16 %v1142, %v1140
      %v1603 = vpack.c.b16 %v1145, %v1143
      %v1604 = vpack.c.b16 %v1146, %v1144
      %v1605 = vpack.c.b16 %v1149, %v1147
      %v1606 = vpack.c.b16 %v1150, %v1148
      %v1607 = vpack.c.b16 %v1153, %v1151
      %v1608 = vpack.c.b16 %v1154, %v1152
      %v1609 = vpack.c.b16 %v1157, %v1155
      %v1610 = vpack.c.b16 %v1158, %v1156
      %v1611 = vpack.c.b16 %v1161, %v1159
      %v1612 = vpack.c.b16 %v1162, %v1160
      %v1613 = vpack.c.b16 %v1165, %v1163
      %v1614 = vpack.c.b16 %v1166, %v1164
      %v1615 = vpack.c.b16 %v1169, %v1167
      %v1616 = vpack.c.b16 %v1170, %v1168
      %v1617 = vpack.c.b16 %v1173, %v1171
      %v1618 = vpack.c.b16 %v1174, %v1172
      %v1619 = vpack.c.b16 %v1177, %v1175
      %v1620 = vpack.c.b16 %v1178, %v1176
      %v1621 = vpack.c.b16 %v1181, %v1179
      %v1622 = vpack.c.b16 %v1182, %v1180
      %v1623 = vpack.c.b16 %v1185, %v1183
      %v1624 = vpack.c.b16 %v1186, %v1184
      %v1625 = vpack.c.b16 %v1189, %v1187
      %v1626 = vpack.c.b16 %v1190, %v1188
      %v1627 = vpack.c.b16 %v1193, %v1191
      %v1628 = vpack.c.b16 %v1194, %v1192
      %v1629 = vpack.c.b16 %v1197, %v1195
      %v1630 = vpack.c.b16 %v1198, %v1196
      %v1631 = vpack.c.b16 %v1201, %v1199
      %v1632 = vpack.c.b16 %v1202, %v1200
      %v1633 = vpack.c.b16 %v1205, %v1203
      %v1634 = vpack.c.b16 %v1206, %v1204
      %v1635 = vpack.c.b16 %v1209, %v1207
      %v1636 = vpack.c.b16 %v1210, %v1208
      %v1637 = vpack.c.b16 %v1213, %v1211
      %v1638 = vpack.c.b16 %v1214, %v1212
      %v1639 = vpack.c.b16 %v1217, %v1215
      %v1640 = vpack.c.b16 %v1218, %v1216
      %v1641 = vpack.c.b16 %v1221, %v1219
      %v1642 = vpack.c.b16 %v1222, %v1220
      %v1643 = vpack.c.b16 %v1225, %v1223
      %v1644 = vpack.c.b16 %v1226, %v1224
      %v1645 = vpack.c.b16 %v1229, %v1227
      %v1646 = vpack.c.b16 %v1230, %v1228
      %v1647 = vpack.c.b16 %v1233, %v1231
      %v1648 = vpack.c.b16 %v1234, %v1232
      %v1649 = vpack.c.b16 %v1237, %v1235
      %v1650 = vpack.c.b16 %v1238, %v1236
      %v1651 = vpack.c.b16 %v1241, %v1239
      %v1652 = vpack.c.b16 %v1242, %v1240
      %v1653 = vpack.c.b16 %v1245, %v1243
      %v1654 = vpack.c.b16 %v1246, %v1244
      %v1655 = vpack.c.b16 %v1249, %v1247
      %v1656 = vpack.c.b16 %v1250, %v1248
      %v1657 = vpack.c.b16 %v1253, %v1251
      %v1658 = vpack.c.b16 %v1254, %v1252
      %v1659 = vpack.c.b16 %v1257, %v1255
      %v1660 = vpack.c.b16 %v1258, %v1256
      %v1661 = vpack.c.b16 %v1261, %v1259
      %v1662 = vpack.c.b16 %v1262, %v1260
      %v1663 = vpack.c.b16 %v1265, %v1263
      %v1664 = vpack.c.b16 %v1266, %v1264
      %v1665 = vpack.c.b16 %v1269, %v1267
      %v1666 = vpack.c.b16 %v1270, %v1268
      %v1667 = vpack.c.b16 %v1273, %v1271
      %v1668 = vpack.c.b16 %v1274, %v1272
      %v1669 = vpack.c.b16 %v1277, %v1275
      %v1670 = vpack.c.b16 %v1278, %v1276
      %v1671 = vpack.c.b16 %v1281, %v1279
      %v1672 = vpack.c.b16 %v1282, %v1280
      %v1673 = vpack.c.b16 %v1285, %v1283
      %v1674 = vpack.c.b16 %v1286, %v1284
      %v1675 = vpack.c.b16 %v1289, %v1287
      %v1676 = vpack.c.b16 %v1290, %v1288
      %v1677 = vpack.c.b16 %v1293, %v1291
      %v1678 = vpack.c.b16 %v1294, %v1292
      %v1679 = vpack.c.b16 %v1297, %v1295
      %v1680 = vpack.c.b16 %v1298, %v1296
      %v1681 = vpack.c.b16 %v1301, %v1299
      %v1682 = vpack.c.b16 %v1302, %v1300
      %v1683 = vpack.c.b16 %v1305, %v1303
      %v1684 = vpack.c.b16 %v1306, %v1304
      %v1685 = vpack.c.b16 %v1309, %v1307
      %v1686 = vpack.c.b16 %v1310, %v1308
      %v1687 = vpack.c.b16 %v1313, %v1311
      %v1688 = vpack.c.b16 %v1314, %v1312
      %v1689 = vpack.c.b16 %v1317, %v1315
      %v1690 = vpack.c.b16 %v1318, %v1316
      %v1691 = vpack.c.b16 %v1321, %v1319
      %v1692 = vpack.c.b16 %v1322, %v1320
      %v1693 = vpack.c.b16 %v1325, %v1323
      %v1694 = vpack.c.b16 %v1326, %v1324
      %v1695 = vpack.c.b16 %v1329, %v1327
      %v1696 = vpack.c.b16 %v1330, %v1328
      %v1697 = vpack.c.b16 %v1333, %v1331
      %v1698 = vpack.c.b16 %v1334, %v1332
      %v1699 = vpack.c.b16 %v1337, %v1335
      %v1700 = vpack.c.b16 %v1338, %v1336
      %v1701 = vpack.c.b16 %v1341, %v1339
      %v1702 = vpack.c.b16 %v1342, %v1340
      %v1703 = vpack.c.b16 %v1345, %v1343
      %v1704 = vpack.c.b16 %v1346, %v1344
      %v1705 = vpack.c.b16 %v1349, %v1347
      %v1706 = vpack.c.b16 %v1350, %v1348
      %v1707 = vpack.c.b16 %v1353, %v1351
      %v1708 = vpack.c.b16 %v1354, %v1352
      %v1709 = vpack.c.b16 %v1357, %v1355
      %v1710 = vpack.c.b16 %v1358, %v1356
      %v1711 = vpack.c.b16 %v1361, %v1359
      %v1712 = vpack.c.b16 %v1362, %v1360
      %v1713 = vpack.c.b16 %v1365, %v1363
      %v1714 = vpack.c.b16 %v1366, %v1364
      %v1715 = vpack.c.b16 %v1369, %v1367
      %v1716 = vpack.c.b16 %v1370, %v1368
      %v1717 = vpack.c.b16 %v1373, %v1371
      %v1718 = vpack.c.b16 %v1374, %v1372
      %v1719 = vpack.c.b16 %v1377, %v1375
      %v1720 = vpack.c.b16 %v1378, %v1376
      %v1721 = vpack.c.b16 %v1381, %v1379
      %v1722 = vpack.c.b16 %v1382, %v1380
      %v1723 = vpack.c.b16 %v1385, %v1383
      %v1724 = vpack.c.b16 %v1386, %v1384
      %v1725 = vpack.c.b16 %v1389, %v1387
      %v1726 = vpack.c.b16 %v1390, %v1388
      %v1727 = vpack.c.b16 %v1393, %v1391
      %v1728 = vpack.c.b16 %v1394, %v1392
      %v1729 = vpack.c.b16 %v1397, %v1395
      %v1730 = vpack.c.b16 %v1398, %v1396
      %v1731 = vpack.c.b16 %v1401, %v1399
      %v1732 = vpack.c.b16 %v1402, %v1400
      %v1733 = vpack.c.b16 %v1405, %v1403
      %v1734 = vpack.c.b16 %v1406, %v1404
      %v1735 = vpack.c.b16 %v1409, %v1407
      %v1736 = vpack.c.b16 %v1410, %v1408
      %v1737 = vpack.c.b16 %v1413, %v1411
      %v1738 = vpack.c.b16 %v1414, %v1412
      %v1739 = vpack.c.b16 %v1417, %v1415
      %v1740 = vpack.c.b16 %v1418, %v1416
      %v1741 = vpack.c.b16 %v1421, %v1419
      %v1742 = vpack.c.b16 %v1422, %v1420
      %v1743 = vpack.c.b16 %v1425, %v1423
      %v1744 = vpack.c.b16 %v1426, %v1424
      %v1745 = vpack.c.b16 %v1429, %v1427
      %v1746 = vpack.c.b16 %v1430, %v1428
      %v1747 = vpack.c.b16 %v1433, %v1431
      %v1748 = vpack.c.b16 %v1434, %v1432
      %v1749 = vpack.c.b16 %v1437, %v1435
      %v1750 = vpack.c.b16 %v1438, %v1436
      %v1751 = vpack.c.b16 %v1441, %v1439
      %v1752 = vpack.c.b16 %v1442, %v1440
      %v1753 = vpack.c.b16 %v1445, %v1443
      %v1754 = vpack.c.b16 %v1446, %v1444
      %v1755 = vpack.c.b16 %v1449, %v1447
      %v1756 = vpack.c.b16 %v1450, %v1448
      %v1757 = vpack.c.b16 %v1453, %v1451
      %v1758 = vpack.c.b16 %v1454, %v1452
      %v1759 = vpack.c.b16 %v1457, %v1455
      %v1760 = vpack.c.b16 %v1458, %v1456
      %v1761 = vpack.c.b16 %v1461, %v1459
      %v1762 = vpack.c.b16 %v1462, %v1460
      %v1763 = vpack.c.b16 %v1465, %v1463
      %v1764 = vpack.c.b16 %v1466, %v1464
      %v1765 = vpack.c.b16 %v1469, %v1467
      %v1766 = vpack.c.b16 %v1470, %v1468
      %v1767 = vpack.c.b16 %v1473, %v1471
      %v1768 = vpack.c.b16 %v1474, %v1472
      %v1769 = vpack.c.b16 %v1477, %v1475
      %v1770 = vpack.c.b16 %v1478, %v1476
      %v1771 = vpack.c.b16 %v1481, %v1479
      %v1772 = vpack.c.b16 %v1482, %v1480
      %v1773 = vpack.c.b16 %v1485, %v1483
      %v1774 = vpack.c.b16 %v1486, %v1484
      %2063 = vmatprep.subr.bf16.mxu0 %v1488
      %2064 = vmatpush1.bf16.msra.mxu0 %v1487
      %2065 = vmatprep.subr.bf16.mxu0 %v1490
      %2066 = vmatpush1.bf16.msra.mxu0 %v1489
      %2067 = vmatprep.subr.bf16.mxu0 %v1492
      %2068 = vmatpush1.bf16.msra.mxu0 %v1491
      %2069 = vmatprep.subr.bf16.mxu0 %v1494
      %2070 = vmatpush1.bf16.msra.mxu0 %v1493
      %2071 = vmatprep.subr.bf16.mxu0 %v1496
      %2072 = vmatpush1.bf16.msra.mxu0 %v1495
      %2073 = vmatprep.subr.bf16.mxu0 %v1498
      %2074 = vmatpush1.bf16.msra.mxu0 %v1497
      %2075 = vmatprep.subr.bf16.mxu0 %v1500
      %2076 = vmatpush1.bf16.msra.mxu0 %v1499
      %2077 = vmatprep.subr.bf16.mxu0 %v1502
      %2078 = vmatpush1.bf16.msra.mxu0 %v1501
      %2079 = vmatprep.subr.bf16.mxu0 %v1504
      %2080 = vmatpush1.bf16.msra.mxu0 %v1503
      %2081 = vmatprep.subr.bf16.mxu0 %v1506
      %2082 = vmatpush1.bf16.msra.mxu0 %v1505
      %2083 = vmatprep.subr.bf16.mxu0 %v1508
      %2084 = vmatpush1.bf16.msra.mxu0 %v1507
      %2085 = vmatprep.subr.bf16.mxu0 %v1510
      %2086 = vmatpush1.bf16.msra.mxu0 %v1509
      %2087 = vmatprep.subr.bf16.mxu0 %v1512
      %2088 = vmatpush1.bf16.msra.mxu0 %v1511
      %2089 = vmatprep.subr.bf16.mxu0 %v1514
      %2090 = vmatpush1.bf16.msra.mxu0 %v1513
      %2091 = vmatprep.subr.bf16.mxu0 %v1516
      %2092 = vmatpush1.bf16.msra.mxu0 %v1515
      %2093 = vmatprep.subr.bf16.mxu0 %v1518
      %2094 = vmatpush1.bf16.msra.mxu0 %v1517
      %2095 = vmatprep.mubr.bf16.mxu0 %v588
      %2096 = vmatmul.mubr.bf16.gmra.mrb[0].mxu0 %v587
      %v2097 = vpop.f32.mrb[0].mxu0
      %v2098 = vadd.f32 %v526, %v2097
      %v2099 = vpop.f32.mrb[0].mxu0
      %v2100 = vadd.f32 %v530, %v2099
      %v2101 = vpop.f32.mrb[0].mxu0
      %v2102 = vadd.f32 %v526, %v2101
      %v2103 = vpop.f32.mrb[0].mxu0
      %v2104 = vadd.f32 %v530, %v2103
      %2105 = vdwg.mxu0
      %2106 = vmatprep.subr.bf16.mxu0 %v1520
      %2107 = vmatpush1.bf16.msra.mxu0 %v1519
      %2108 = vmatprep.subr.bf16.mxu0 %v1522
      %2109 = vmatpush1.bf16.msra.mxu0 %v1521
      %2110 = vmatprep.subr.bf16.mxu0 %v1524
      %2111 = vmatpush1.bf16.msra.mxu0 %v1523
      %2112 = vmatprep.subr.bf16.mxu0 %v1526
      %2113 = vmatpush1.bf16.msra.mxu0 %v1525
      %2114 = vmatprep.subr.bf16.mxu0 %v1528
      %2115 = vmatpush1.bf16.msra.mxu0 %v1527
      %2116 = vmatprep.subr.bf16.mxu0 %v1530
      %2117 = vmatpush1.bf16.msra.mxu0 %v1529
      %2118 = vmatprep.subr.bf16.mxu0 %v1532
      %2119 = vmatpush1.bf16.msra.mxu0 %v1531
      %2120 = vmatprep.subr.bf16.mxu0 %v1534
      %2121 = vmatpush1.bf16.msra.mxu0 %v1533
      %2122 = vmatprep.subr.bf16.mxu0 %v1536
      %2123 = vmatpush1.bf16.msra.mxu0 %v1535
      %2124 = vmatprep.subr.bf16.mxu0 %v1538
      %2125 = vmatpush1.bf16.msra.mxu0 %v1537
      %2126 = vmatprep.subr.bf16.mxu0 %v1540
      %2127 = vmatpush1.bf16.msra.mxu0 %v1539
      %2128 = vmatprep.subr.bf16.mxu0 %v1542
      %2129 = vmatpush1.bf16.msra.mxu0 %v1541
      %2130 = vmatprep.subr.bf16.mxu0 %v1544
      %2131 = vmatpush1.bf16.msra.mxu0 %v1543
      %2132 = vmatprep.subr.bf16.mxu0 %v1546
      %2133 = vmatpush1.bf16.msra.mxu0 %v1545
      %2134 = vmatprep.subr.bf16.mxu0 %v1548
      %2135 = vmatpush1.bf16.msra.mxu0 %v1547
      %2136 = vmatprep.subr.bf16.mxu0 %v1550
      %2137 = vmatpush1.bf16.msra.mxu0 %v1549
      %2138 = vmatprep.mubr.bf16.mxu0 %v590
      %2139 = vmatmul.mubr.bf16.gmra.mrb[0].mxu0 %v589
      %v2140 = vpop.f32.mrb[0].mxu0
      %v2141 = vadd.f32 %v2098, %v2140
      %v2142 = vpop.f32.mrb[0].mxu0
      %v2143 = vadd.f32 %v2100, %v2142
      %v2144 = vpop.f32.mrb[0].mxu0
      %v2145 = vadd.f32 %v2102, %v2144
      %v2146 = vpop.f32.mrb[0].mxu0
      %v2147 = vadd.f32 %v2104, %v2146
      %2148 = vdwg.mxu0
      %2149 = vmatprep.subr.bf16.mxu0 %v1552
      %2150 = vmatpush1.bf16.msra.mxu0 %v1551
      %2151 = vmatprep.subr.bf16.mxu0 %v1554
      %2152 = vmatpush1.bf16.msra.mxu0 %v1553
      %2153 = vmatprep.subr.bf16.mxu0 %v1556
      %2154 = vmatpush1.bf16.msra.mxu0 %v1555
      %2155 = vmatprep.subr.bf16.mxu0 %v1558
      %2156 = vmatpush1.bf16.msra.mxu0 %v1557
      %2157 = vmatprep.subr.bf16.mxu0 %v1560
      %2158 = vmatpush1.bf16.msra.mxu0 %v1559
      %2159 = vmatprep.subr.bf16.mxu0 %v1562
      %2160 = vmatpush1.bf16.msra.mxu0 %v1561
      %2161 = vmatprep.subr.bf16.mxu0 %v1564
      %2162 = vmatpush1.bf16.msra.mxu0 %v1563
      %2163 = vmatprep.subr.bf16.mxu0 %v1566
      %2164 = vmatpush1.bf16.msra.mxu0 %v1565
      %2165 = vmatprep.subr.bf16.mxu0 %v1568
      %2166 = vmatpush1.bf16.msra.mxu0 %v1567
      %2167 = vmatprep.subr.bf16.mxu0 %v1570
      %2168 = vmatpush1.bf16.msra.mxu0 %v1569
      %2169 = vmatprep.subr.bf16.mxu0 %v1572
      %2170 = vmatpush1.bf16.msra.mxu0 %v1571
      %2171 = vmatprep.subr.bf16.mxu0 %v1574
      %2172 = vmatpush1.bf16.msra.mxu0 %v1573
      %2173 = vmatprep.subr.bf16.mxu0 %v1576
      %2174 = vmatpush1.bf16.msra.mxu0 %v1575
      %2175 = vmatprep.subr.bf16.mxu0 %v1578
      %2176 = vmatpush1.bf16.msra.mxu0 %v1577
      %2177 = vmatprep.subr.bf16.mxu0 %v1580
      %2178 = vmatpush1.bf16.msra.mxu0 %v1579
      %2179 = vmatprep.subr.bf16.mxu0 %v1582
      %2180 = vmatpush1.bf16.msra.mxu0 %v1581
      %2181 = vmatprep.mubr.bf16.mxu0 %v592
      %2182 = vmatmul.mubr.bf16.gmra.mrb[0].mxu0 %v591
      %v2183 = vpop.f32.mrb[0].mxu0
      %v2184 = vadd.f32 %v2141, %v2183
      %v2185 = vpop.f32.mrb[0].mxu0
      %v2186 = vadd.f32 %v2143, %v2185
      %v2187 = vpop.f32.mrb[0].mxu0
      %v2188 = vadd.f32 %v2145, %v2187
      %v2189 = vpop.f32.mrb[0].mxu0
      %v2190 = vadd.f32 %v2147, %v2189
      %2191 = vdwg.mxu0
      %2192 = vmatprep.subr.bf16.mxu0 %v1584
      %2193 = vmatpush1.bf16.msra.mxu0 %v1583
      %2194 = vmatprep.subr.bf16.mxu0 %v1586
      %2195 = vmatpush1.bf16.msra.mxu0 %v1585
      %2196 = vmatprep.subr.bf16.mxu0 %v1588
      %2197 = vmatpush1.bf16.msra.mxu0 %v1587
      %2198 = vmatprep.subr.bf16.mxu0 %v1590
      %2199 = vmatpush1.bf16.msra.mxu0 %v1589
      %2200 = vmatprep.subr.bf16.mxu0 %v1592
      %2201 = vmatpush1.bf16.msra.mxu0 %v1591
      %2202 = vmatprep.subr.bf16.mxu0 %v1594
      %2203 = vmatpush1.bf16.msra.mxu0 %v1593
      %2204 = vmatprep.subr.bf16.mxu0 %v1596
      %2205 = vmatpush1.bf16.msra.mxu0 %v1595
      %2206 = vmatprep.subr.bf16.mxu0 %v1598
      %2207 = vmatpush1.bf16.msra.mxu0 %v1597
      %2208 = vmatprep.subr.bf16.mxu0 %v1600
      %2209 = vmatpush1.bf16.msra.mxu0 %v1599
      %2210 = vmatprep.subr.bf16.mxu0 %v1602
      %2211 = vmatpush1.bf16.msra.mxu0 %v1601
      %2212 = vmatprep.subr.bf16.mxu0 %v1604
      %2213 = vmatpush1.bf16.msra.mxu0 %v1603
      %2214 = vmatprep.subr.bf16.mxu0 %v1606
      %2215 = vmatpush1.bf16.msra.mxu0 %v1605
      %2216 = vmatprep.subr.bf16.mxu0 %v1608
      %2217 = vmatpush1.bf16.msra.mxu0 %v1607
      %2218 = vmatprep.subr.bf16.mxu0 %v1610
      %2219 = vmatpush1.bf16.msra.mxu0 %v1609
      %2220 = vmatprep.subr.bf16.mxu0 %v1612
      %2221 = vmatpush1.bf16.msra.mxu0 %v1611
      %2222 = vmatprep.subr.bf16.mxu0 %v1614
      %2223 = vmatpush1.bf16.msra.mxu0 %v1613
      %2224 = vmatprep.mubr.bf16.mxu0 %v594
      %2225 = vmatmul.mubr.bf16.gmra.mrb[0].mxu0 %v593
      %v2226 = vpop.f32.mrb[0].mxu0
      %v2227 = vadd.f32 %v2184, %v2226
      %v2228 = vpop.f32.mrb[0].mxu0
      %v2229 = vadd.f32 %v2186, %v2228
      %v2230 = vpop.f32.mrb[0].mxu0
      %v2231 = vadd.f32 %v2188, %v2230
      %v2232 = vpop.f32.mrb[0].mxu0
      %v2233 = vadd.f32 %v2190, %v2232
      %2234 = vdwg.mxu0
      %2235 = vmatprep.subr.bf16.mxu0 %v1616
      %2236 = vmatpush1.bf16.msra.mxu0 %v1615
      %2237 = vmatprep.subr.bf16.mxu0 %v1618
      %2238 = vmatpush1.bf16.msra.mxu0 %v1617
      %2239 = vmatprep.subr.bf16.mxu0 %v1620
      %2240 = vmatpush1.bf16.msra.mxu0 %v1619
      %2241 = vmatprep.subr.bf16.mxu0 %v1622
      %2242 = vmatpush1.bf16.msra.mxu0 %v1621
      %2243 = vmatprep.subr.bf16.mxu0 %v1624
      %2244 = vmatpush1.bf16.msra.mxu0 %v1623
      %2245 = vmatprep.subr.bf16.mxu0 %v1626
      %2246 = vmatpush1.bf16.msra.mxu0 %v1625
      %2247 = vmatprep.subr.bf16.mxu0 %v1628
      %2248 = vmatpush1.bf16.msra.mxu0 %v1627
      %2249 = vmatprep.subr.bf16.mxu0 %v1630
      %2250 = vmatpush1.bf16.msra.mxu0 %v1629
      %2251 = vmatprep.subr.bf16.mxu0 %v1632
      %2252 = vmatpush1.bf16.msra.mxu0 %v1631
      %2253 = vmatprep.subr.bf16.mxu0 %v1634
      %2254 = vmatpush1.bf16.msra.mxu0 %v1633
      %2255 = vmatprep.subr.bf16.mxu0 %v1636
      %2256 = vmatpush1.bf16.msra.mxu0 %v1635
      %2257 = vmatprep.subr.bf16.mxu0 %v1638
      %2258 = vmatpush1.bf16.msra.mxu0 %v1637
      %2259 = vmatprep.subr.bf16.mxu0 %v1640
      %2260 = vmatpush1.bf16.msra.mxu0 %v1639
      %2261 = vmatprep.subr.bf16.mxu0 %v1642
      %2262 = vmatpush1.bf16.msra.mxu0 %v1641
      %2263 = vmatprep.subr.bf16.mxu0 %v1644
      %2264 = vmatpush1.bf16.msra.mxu0 %v1643
      %2265 = vmatprep.subr.bf16.mxu0 %v1646
      %2266 = vmatpush1.bf16.msra.mxu0 %v1645
      %2267 = vmatprep.mubr.bf16.mxu0 %v596
      %2268 = vmatmul.mubr.bf16.gmra.mrb[0].mxu0 %v595
      %v2269 = vpop.f32.mrb[0].mxu0
      %v2270 = vadd.f32 %v2227, %v2269
      %v2271 = vpop.f32.mrb[0].mxu0
      %v2272 = vadd.f32 %v2229, %v2271
      %v2273 = vpop.f32.mrb[0].mxu0
      %v2274 = vadd.f32 %v2231, %v2273
      %v2275 = vpop.f32.mrb[0].mxu0
      %v2276 = vadd.f32 %v2233, %v2275
      %2277 = vdwg.mxu0
      %2278 = vmatprep.subr.bf16.mxu0 %v1648
      %2279 = vmatpush1.bf16.msra.mxu0 %v1647
      %2280 = vmatprep.subr.bf16.mxu0 %v1650
      %2281 = vmatpush1.bf16.msra.mxu0 %v1649
      %2282 = vmatprep.subr.bf16.mxu0 %v1652
      %2283 = vmatpush1.bf16.msra.mxu0 %v1651
      %2284 = vmatprep.subr.bf16.mxu0 %v1654
      %2285 = vmatpush1.bf16.msra.mxu0 %v1653
      %2286 = vmatprep.subr.bf16.mxu0 %v1656
      %2287 = vmatpush1.bf16.msra.mxu0 %v1655
      %2288 = vmatprep.subr.bf16.mxu0 %v1658
      %2289 = vmatpush1.bf16.msra.mxu0 %v1657
      %2290 = vmatprep.subr.bf16.mxu0 %v1660
      %2291 = vmatpush1.bf16.msra.mxu0 %v1659
      %2292 = vmatprep.subr.bf16.mxu0 %v1662
      %2293 = vmatpush1.bf16.msra.mxu0 %v1661
      %2294 = vmatprep.subr.bf16.mxu0 %v1664
      %2295 = vmatpush1.bf16.msra.mxu0 %v1663
      %2296 = vmatprep.subr.bf16.mxu0 %v1666
      %2297 = vmatpush1.bf16.msra.mxu0 %v1665
      %2298 = vmatprep.subr.bf16.mxu0 %v1668
      %2299 = vmatpush1.bf16.msra.mxu0 %v1667
      %2300 = vmatprep.subr.bf16.mxu0 %v1670
      %2301 = vmatpush1.bf16.msra.mxu0 %v1669
      %2302 = vmatprep.subr.bf16.mxu0 %v1672
      %2303 = vmatpush1.bf16.msra.mxu0 %v1671
      %2304 = vmatprep.subr.bf16.mxu0 %v1674
      %2305 = vmatpush1.bf16.msra.mxu0 %v1673
      %2306 = vmatprep.subr.bf16.mxu0 %v1676
      %2307 = vmatpush1.bf16.msra.mxu0 %v1675
      %2308 = vmatprep.subr.bf16.mxu0 %v1678
      %2309 = vmatpush1.bf16.msra.mxu0 %v1677
      %2310 = vmatprep.mubr.bf16.mxu0 %v598
      %2311 = vmatmul.mubr.bf16.gmra.mrb[0].mxu0 %v597
      %v2312 = vpop.f32.mrb[0].mxu0
      %v2313 = vadd.f32 %v2270, %v2312
      %v2314 = vpop.f32.mrb[0].mxu0
      %v2315 = vadd.f32 %v2272, %v2314
      %v2316 = vpop.f32.mrb[0].mxu0
      %v2317 = vadd.f32 %v2274, %v2316
      %v2318 = vpop.f32.mrb[0].mxu0
      %v2319 = vadd.f32 %v2276, %v2318
      %2320 = vdwg.mxu0
      %2321 = vmatprep.subr.bf16.mxu0 %v1680
      %2322 = vmatpush1.bf16.msra.mxu0 %v1679
      %2323 = vmatprep.subr.bf16.mxu0 %v1682
      %2324 = vmatpush1.bf16.msra.mxu0 %v1681
      %2325 = vmatprep.subr.bf16.mxu0 %v1684
      %2326 = vmatpush1.bf16.msra.mxu0 %v1683
      %2327 = vmatprep.subr.bf16.mxu0 %v1686
      %2328 = vmatpush1.bf16.msra.mxu0 %v1685
      %2329 = vmatprep.subr.bf16.mxu0 %v1688
      %2330 = vmatpush1.bf16.msra.mxu0 %v1687
      %2331 = vmatprep.subr.bf16.mxu0 %v1690
      %2332 = vmatpush1.bf16.msra.mxu0 %v1689
      %2333 = vmatprep.subr.bf16.mxu0 %v1692
      %2334 = vmatpush1.bf16.msra.mxu0 %v1691
      %2335 = vmatprep.subr.bf16.mxu0 %v1694
      %2336 = vmatpush1.bf16.msra.mxu0 %v1693
      %2337 = vmatprep.subr.bf16.mxu0 %v1696
      %2338 = vmatpush1.bf16.msra.mxu0 %v1695
      %2339 = vmatprep.subr.bf16.mxu0 %v1698
      %2340 = vmatpush1.bf16.msra.mxu0 %v1697
      %2341 = vmatprep.subr.bf16.mxu0 %v1700
      %2342 = vmatpush1.bf16.msra.mxu0 %v1699
      %2343 = vmatprep.subr.bf16.mxu0 %v1702
      %2344 = vmatpush1.bf16.msra.mxu0 %v1701
      %2345 = vmatprep.subr.bf16.mxu0 %v1704
      %2346 = vmatpush1.bf16.msra.mxu0 %v1703
      %2347 = vmatprep.subr.bf16.mxu0 %v1706
      %2348 = vmatpush1.bf16.msra.mxu0 %v1705
      %2349 = vmatprep.subr.bf16.mxu0 %v1708
      %2350 = vmatpush1.bf16.msra.mxu0 %v1707
      %2351 = vmatprep.subr.bf16.mxu0 %v1710
      %2352 = vmatpush1.bf16.msra.mxu0 %v1709
      %2353 = vmatprep.mubr.bf16.mxu0 %v600
      %2354 = vmatmul.mubr.bf16.gmra.mrb[0].mxu0 %v599
      %v2355 = vpop.f32.mrb[0].mxu0
      %v2356 = vadd.f32 %v2313, %v2355
      %v2357 = vpop.f32.mrb[0].mxu0
      %v2358 = vadd.f32 %v2315, %v2357
      %v2359 = vpop.f32.mrb[0].mxu0
      %v2360 = vadd.f32 %v2317, %v2359
      %v2361 = vpop.f32.mrb[0].mxu0
      %v2362 = vadd.f32 %v2319, %v2361
      %2363 = vdwg.mxu0
      %2364 = vmatprep.subr.bf16.mxu0 %v1712
      %2365 = vmatpush1.bf16.msra.mxu0 %v1711
      %2366 = vmatprep.subr.bf16.mxu0 %v1714
      %2367 = vmatpush1.bf16.msra.mxu0 %v1713
      %2368 = vmatprep.subr.bf16.mxu0 %v1716
      %2369 = vmatpush1.bf16.msra.mxu0 %v1715
      %2370 = vmatprep.subr.bf16.mxu0 %v1718
      %2371 = vmatpush1.bf16.msra.mxu0 %v1717
      %2372 = vmatprep.subr.bf16.mxu0 %v1720
      %2373 = vmatpush1.bf16.msra.mxu0 %v1719
      %2374 = vmatprep.subr.bf16.mxu0 %v1722
      %2375 = vmatpush1.bf16.msra.mxu0 %v1721
      %2376 = vmatprep.subr.bf16.mxu0 %v1724
      %2377 = vmatpush1.bf16.msra.mxu0 %v1723
      %2378 = vmatprep.subr.bf16.mxu0 %v1726
      %2379 = vmatpush1.bf16.msra.mxu0 %v1725
      %2380 = vmatprep.subr.bf16.mxu0 %v1728
      %2381 = vmatpush1.bf16.msra.mxu0 %v1727
      %2382 = vmatprep.subr.bf16.mxu0 %v1730
      %2383 = vmatpush1.bf16.msra.mxu0 %v1729
      %2384 = vmatprep.subr.bf16.mxu0 %v1732
      %2385 = vmatpush1.bf16.msra.mxu0 %v1731
      %2386 = vmatprep.subr.bf16.mxu0 %v1734
      %2387 = vmatpush1.bf16.msra.mxu0 %v1733
      %2388 = vmatprep.subr.bf16.mxu0 %v1736
      %2389 = vmatpush1.bf16.msra.mxu0 %v1735
      %2390 = vmatprep.subr.bf16.mxu0 %v1738
      %2391 = vmatpush1.bf16.msra.mxu0 %v1737
      %2392 = vmatprep.subr.bf16.mxu0 %v1740
      %2393 = vmatpush1.bf16.msra.mxu0 %v1739
      %2394 = vmatprep.subr.bf16.mxu0 %v1742
      %2395 = vmatpush1.bf16.msra.mxu0 %v1741
      %2396 = vmatprep.mubr.bf16.mxu0 %v602
      %2397 = vmatmul.mubr.bf16.gmra.mrb[0].mxu0 %v601
      %v2398 = vpop.f32.mrb[0].mxu0
      %v2399 = vadd.f32 %v2356, %v2398
      %v2400 = vpop.f32.mrb[0].mxu0
      %v2401 = vadd.f32 %v2358, %v2400
      %v2402 = vpop.f32.mrb[0].mxu0
      %v2403 = vadd.f32 %v2360, %v2402
      %v2404 = vpop.f32.mrb[0].mxu0
      %v2405 = vadd.f32 %v2362, %v2404
      %2406 = vdwg.mxu0
      %2407 = vmatprep.subr.bf16.mxu0 %v1744
      %2408 = vmatpush1.bf16.msra.mxu0 %v1743
      %2409 = vmatprep.subr.bf16.mxu0 %v1746
      %2410 = vmatpush1.bf16.msra.mxu0 %v1745
      %2411 = vmatprep.subr.bf16.mxu0 %v1748
      %2412 = vmatpush1.bf16.msra.mxu0 %v1747
      %2413 = vmatprep.subr.bf16.mxu0 %v1750
      %2414 = vmatpush1.bf16.msra.mxu0 %v1749
      %2415 = vmatprep.subr.bf16.mxu0 %v1752
      %2416 = vmatpush1.bf16.msra.mxu0 %v1751
      %2417 = vmatprep.subr.bf16.mxu0 %v1754
      %2418 = vmatpush1.bf16.msra.mxu0 %v1753
      %2419 = vmatprep.subr.bf16.mxu0 %v1756
      %2420 = vmatpush1.bf16.msra.mxu0 %v1755
      %2421 = vmatprep.subr.bf16.mxu0 %v1758
      %2422 = vmatpush1.bf16.msra.mxu0 %v1757
      %2423 = vmatprep.subr.bf16.mxu0 %v1760
      %2424 = vmatpush1.bf16.msra.mxu0 %v1759
      %2425 = vmatprep.subr.bf16.mxu0 %v1762
      %2426 = vmatpush1.bf16.msra.mxu0 %v1761
      %2427 = vmatprep.subr.bf16.mxu0 %v1764
      %2428 = vmatpush1.bf16.msra.mxu0 %v1763
      %2429 = vmatprep.subr.bf16.mxu0 %v1766
      %2430 = vmatpush1.bf16.msra.mxu0 %v1765
      %2431 = vmatprep.subr.bf16.mxu0 %v1768
      %2432 = vmatpush1.bf16.msra.mxu0 %v1767
      %2433 = vmatprep.subr.bf16.mxu0 %v1770
      %2434 = vmatpush1.bf16.msra.mxu0 %v1769
      %2435 = vmatprep.subr.bf16.mxu0 %v1772
      %2436 = vmatpush1.bf16.msra.mxu0 %v1771
      %2437 = vmatprep.subr.bf16.mxu0 %v1774
      %2438 = vmatpush1.bf16.msra.mxu0 %v1773
      %2439 = vmatprep.mubr.bf16.mxu0 %v604
      %2440 = vmatmul.mubr.bf16.gmra.mrb[0].mxu0 %v603
      %v2441 = vpop.f32.mrb[0].mxu0
      %v2442 = vadd.f32 %v2399, %v2441
      %v2443 = vpop.f32.mrb[0].mxu0
      %v2444 = vadd.f32 %v2401, %v2443
      %v2445 = vpop.f32.mrb[0].mxu0
      %v2446 = vadd.f32 %v2403, %v2445
      %v2447 = vpop.f32.mrb[0].mxu0
      %v2448 = vadd.f32 %v2405, %v2447
      %2449 = vdwg.mxu0
      %v2450 = vmax.f32 %v2442, 0.0
      %v2451 = vmax.f32 %v2444, 0.0
      %v2452 = vmax.f32 %v2446, 0.0
      %v2453 = vmax.f32 %v2448, 0.0
      %v2454 = vpack.c.bf16 %v2452, %v2450
      %v2455 = vpack.c.bf16 %v2453, %v2451
      %v2458 = vunpack.c.l.b16 %v2454
      %v2459 = vunpack.c.l.b16 %v2455
      %v2460 = vunpack.c.h.b16 %v2454
      %v2461 = vunpack.c.h.b16 %v2455
      %v2462 = vpack.c.b16 %v2459, %v2458
      %v2463 = vpack.c.b16 %v2461, %v2460
      %2466 = vst [vmem:[%s213] sm:$0xff] %v2462
      %2467 = vst [vmem:[%s213 + $0x8] sm:$0xff] %v2463
      %s2468 = smul.u32 2, %s19
      %p2469 = scmp.lt.s32.totalorder %s18, 3
      %s2470 = scalar_select %p2469, %s18, 3
      %p2471 = scmp.lt.s32.totalorder %s2468, 1
      %s2472 = scalar_select %p2471, %s2468, 1
      %s2473 = smul.addr %s2472, 2
      %s2474 = smul.addr %s2470, 4
      %s2475 = sadd.s32 %s2473, %s2474
      %s2476 = smul.addr %s2475, 4
      %s2477 = scalar_lea.vmem %s3, %s2476
      // Predicated region
      $region33: #{perceptual_loss.17} parent=31 // pred_check
        %p2478 = pneg %p116
      $region34: #{perceptual_loss.17} parent=31 // pred_check_branch
        %2480 = sbr.rel (%p2478) target = $region36
      $region35: #{perceptual_loss.17} parent=31 // pred_region
        %s2481 = smul.u32 2, %s19
      $region36: #{perceptual_loss.17} parent=31 // pred_fallthru
        _
    $region32: #{perceptual_loss.17} parent=5 // pred_fallthru
      _
    %p2482 = scmp.le.s32.totalorder 2, %s9
    // Predicated region
    $region37: #{perceptual_loss.17} parent=5 // pred_check
      %p2483 = pneg %p2482
    $region38: #{perceptual_loss.17} parent=5 // pred_check_branch
      %2485 = sbr.rel (%p2483) target = $region40
    $region39: #{perceptual_loss.17} parent=5 // pred_region
      %s2486 = ssub.s32 %s9, 2
      // Predicated region
      $region41: #{perceptual_loss.17} parent=39 // pred_check
        %p2487 = pneg %p122
      $region42: #{perceptual_loss.17} parent=39 // pred_check_branch
        %2489 = sbr.rel (%p2487) target = $region44
      $region43: #{perceptual_loss.17} parent=39 // pred_region
        %s2490 = smul.u32 2, %s21
        %p2491 = scmp.lt.s32.totalorder %s20, 3
        %s2492 = scalar_select %p2491, %s20, 3
        %p2493 = scmp.lt.s32.totalorder %s2490, 1
        %s2494 = scalar_select %p2493, %s2490, 1
        %s2495 = smul.addr %s2494, 2
        %s2496 = smul.addr %s2492, 4
        %s2497 = sadd.s32 %s2495, %s2496
        %s2498 = smul.addr %s2497, 4
        %s2499 = scalar_lea.vmem %s3, %s2498
      $region44: #{perceptual_loss.17} parent=39 // pred_fallthru
        _
    $region40: #{perceptual_loss.17} parent=5 // pred_fallthru
      _
  $region6: #{perceptual_loss.17} parent=0 // loop_footer
    %s13 = sadd.s32 1, %s9
  $region7: #{perceptual_loss.17} parent=0 // loop_footer_branch
    %8 = sbr.rel target = $region3
  $region8: #{perceptual_loss.17} parent=0 // loop_exit
    _

</llo_original>
